<compile_context>
chip_gen: v6e
topology: v6e:2x2x1
jax: 0.10.0
libtpu: 0.0.40
codegen_flags: <defaults>
</compile_context>

<pallas_src>
import functools

import jax
import jax.numpy as jnp
from jax import lax
from jax.experimental import pallas as pl
from jax.experimental.pallas import tpu as pltpu


def _round_up(x, m):
    return (x + m - 1) // m * m


# -----------------------------------------------------------------------------
# Pallas kernel: per-image fused conv + BN + activation via in-VMEM tap
# accumulation over a flattened, spatially padded input slab.
#
#   w_ref     : (n_taps, Cout, Cg) bf16  BN-scale-folded per-tap weights (resident)
#   shift_ref : (Cout, 1)          f32   folded BN shift + conv bias     (resident)
#   x_ref     : (1, Cg, Lin)       bf16  one image, flattened (Hs*Ws) + zero pad
#   o_ref     : (1, Cout, L)       out   lane-dense wide output (Ho*Ws -> mult of 128)
#   acc_ref   : (Cout, L)          f32   VMEM accumulator scratch
#
# Tap t contributes  W_t(Cout, Cg) @ x[:, shift_t : shift_t + L]  — a contiguous
# window of the flattened padded image, so no im2col tensor ever hits HBM.
# -----------------------------------------------------------------------------
def _conv_bn_act_kernel(w_ref, shift_ref, x_ref, o_ref, acc_ref, *,
                        tap_shifts, out_cols, neg_slope):
    sh0 = tap_shifts[0]
    acc_ref[...] = jnp.dot(w_ref[0], x_ref[0, :, sh0:sh0 + out_cols],
                           preferred_element_type=jnp.float32)
    for t in range(1, len(tap_shifts)):
        sh = tap_shifts[t]
        acc_ref[...] += jnp.dot(w_ref[t], x_ref[0, :, sh:sh + out_cols],
                                preferred_element_type=jnp.float32)
    y = acc_ref[...] + shift_ref[...]                      # f32 epilogue
    o_ref[0] = jnp.where(y > 0, y, neg_slope * y).astype(o_ref.dtype)


def _vmem_limit_bytes(need_bytes):
    """Per-chip VMEM limit: computed need + headroom, capped at 3/4 of capacity
    (falls back to a v7x-safe 48 MiB if the hardware query is unavailable)."""
    cap = 48 * 1024 * 1024
    try:
        cap = int(pltpu.get_tpu_info().vmem_capacity_bytes * 3 // 4)
    except Exception:
        pass
    return int(min(max(need_bytes + (8 << 20), 32 << 20), cap))


# -----------------------------------------------------------------------------
# JAX-side glue (pure layout work, no compute)
# -----------------------------------------------------------------------------
def _fold_bn(W, b, gamma, beta, rmean, rvar, eps=1e-5):
    """Fold BatchNorm (running stats) + conv bias into (scaled weights, shift)."""
    scale = gamma / jnp.sqrt(rvar + eps)
    w_fold = W * scale[:, None, None, None]
    shift = beta - rmean * scale + b * scale
    return w_fold, shift


def _space_to_depth(xp, s):
    """(N, C, Hp, Wp) -> (N, s*s*C, Hs, Ws); channel index = (p*s + q)*C + c."""
    N, C, Hp, Wp = xp.shape
    Hp2, Wp2 = _round_up(Hp, s), _round_up(Wp, s)
    xp = jnp.pad(xp, ((0, 0), (0, 0), (0, Hp2 - Hp), (0, Wp2 - Wp)))
    Hs, Ws = Hp2 // s, Wp2 // s
    xs = xp.reshape(N, C, Hs, s, Ws, s)
    xs = xs.transpose(0, 3, 5, 1, 2, 4).reshape(N, s * s * C, Hs, Ws)
    return xs, Hs, Ws


def _tap_weights(w_fold, s):
    """(Cout, Cin, k, k) folded weights -> (kb*kb, Cout, s*s*Cin) per-tap matrices
    matching the space-to-depth channel ordering; kb = ceil(k/s)."""
    Cout, Cin, k, _ = w_fold.shape
    kb = -(-k // s)
    taps = []
    for a in range(kb):
        for bcol in range(kb):
            groups = []
            for p in range(s):
                for q in range(s):
                    di, dj = s * a + p, s * bcol + q
                    if di < k and dj < k:
                        groups.append(w_fold[:, :, di, dj])
                    else:
                        groups.append(jnp.zeros((Cout, Cin), w_fold.dtype))
            taps.append(jnp.concatenate(groups, axis=1))   # (Cout, s*s*Cin)
    return jnp.stack(taps, axis=0), kb                     # (kb*kb, Cout, Cg)


def conv_bn_act_layer(x, layer_params, stride, pad, neg_slope, out_dtype):
    """One Conv2d + BatchNorm2d (eval) + activation layer.
    x: (N, Cin, H, W)  ->  (N, Cout, Ho, Wo) in out_dtype."""
    Wt, b, gamma, beta, rmean, rvar = layer_params
    Cout, Cin, k, _ = Wt.shape
    N, C, H, Wd = x.shape
    assert C == Cin

    w_fold, shift = _fold_bn(Wt, b, gamma, beta, rmean, rvar)
    w_taps, kb = _tap_weights(w_fold, stride)               # (n_taps, Cout, Cg)
    w_taps = w_taps.astype(jnp.bfloat16)
    shift = shift.reshape(Cout, 1).astype(jnp.float32)

    Ho = (H + 2 * pad - k) // stride + 1
    Wo = (Wd + 2 * pad - k) // stride + 1

    # Spatial pad, then stride -> parity (space-to-depth), then flatten per image.
    xp = jnp.pad(x, ((0, 0), (0, 0), (pad, pad), (pad, pad)))
    xs, Hs, Ws = _space_to_depth(xp, stride)                # (N, Cg, Hs, Ws)
    Cg = stride * stride * Cin
    n_taps = kb * kb

    # Shifted-slab formulation: tap (a, b) reads the window starting at a*Ws+b
    # of the flattened (Hs*Ws) image.  The kernel computes a "wide" output of
    # Ho*Ws columns (the Ws-Wo right-edge columns per row are wrap-around
    # garbage, stripped below), padded to a 128-lane multiple -> lane-dense vst.
    tap_shifts = tuple(a * Ws + bcol for a in range(kb) for bcol in range(kb))
    out_cols = _round_up(Ho * Ws, 128)
    in_cols = _round_up(max(out_cols + tap_shifts[-1], Hs * Ws), 128)

    xflat = xs.reshape(N, Cg, Hs * Ws)
    xflat = jnp.pad(xflat, ((0, 0), (0, 0), (0, in_cols - Hs * Ws)))
    xflat = xflat.astype(jnp.bfloat16)                      # halve streamed bytes

    out_bytes = jnp.dtype(out_dtype).itemsize
    need = (2 * (Cg * in_cols * 2 + Cout * out_cols * out_bytes
                 + n_taps * Cout * Cg * 2 + Cout * 4)
            + Cout * out_cols * 4)

    kernel = functools.partial(_conv_bn_act_kernel, tap_shifts=tap_shifts,
                               out_cols=out_cols, neg_slope=neg_slope)
    out_wide = pl.pallas_call(
        kernel,
        out_shape=jax.ShapeDtypeStruct((N, Cout, out_cols), out_dtype),
        grid=(N,),
        in_specs=[
            pl.BlockSpec((n_taps, Cout, Cg), lambda n: (0, 0, 0)),  # resident
            pl.BlockSpec((Cout, 1), lambda n: (0, 0)),              # resident
            pl.BlockSpec((1, Cg, in_cols), lambda n: (n, 0, 0)),    # streamed
        ],
        out_specs=pl.BlockSpec((1, Cout, out_cols), lambda n: (n, 0, 0)),
        scratch_shapes=[pltpu.VMEM((Cout, out_cols), jnp.float32)],
        compiler_params=pltpu.CompilerParams(
            dimension_semantics=("parallel",),      # shard images across TCs
            vmem_limit_bytes=_vmem_limit_bytes(need),
        ),
    )(w_taps, shift, xflat)

    # Strip lane padding + wide-output wrap-around columns.  This slice fuses
    # with the next layer's pad/space-to-depth copy, so there is no extra
    # activation-sized round-trip beyond the unavoidable layout change.
    out = out_wide[:, :, :Ho * Ws].reshape(N, Cout, Ho, Ws)[:, :, :, :Wo]
    return out


def encoder_forward(x, params, activation='relu'):
    assert activation in ('relu', 'leaky')
    neg_slope = 0.0 if activation == 'relu' else 0.2        # module uses slope=0.2
    strides = (1, 2, 2, 2)
    pads = (3, 1, 1, 1)
    n_layers = len(params)
    for i, (layer_params, s, p) in enumerate(zip(params, strides, pads)):
        out_dtype = jnp.float32 if i == n_layers - 1 else jnp.bfloat16
        x = conv_bn_act_layer(x, layer_params, s, p, neg_slope, out_dtype)
        # Dropout2d in eval mode = identity.
    return x


# -----------------------------------------------------------------------------
# Deterministic parameter init (shapes match the PyTorch module __init__)
# -----------------------------------------------------------------------------
def init_params(key, in_dims, kernel_size):
    w_shapes = [
        (8, in_dims, 7, 7),
        (16, 8, kernel_size, kernel_size),
        (32, 16, kernel_size, kernel_size),
        (64, 32, kernel_size, kernel_size),
    ]
    params = []
    for ws in w_shapes:
        key, k1, k2, k3, k4, k5, k6 = jax.random.split(key, 7)
        Cout = ws[0]
        W = 0.1 * jax.random.normal(k1, ws, jnp.float32)
        b = 0.1 * jax.random.normal(k2, (Cout,), jnp.float32)
        gamma = 1.0 + 0.1 * jax.random.normal(k3, (Cout,), jnp.float32)
        beta = 0.1 * jax.random.normal(k4, (Cout,), jnp.float32)
        rmean = 0.1 * jax.random.normal(k5, (Cout,), jnp.float32)
        rvar = jnp.abs(jax.random.normal(k6, (Cout,), jnp.float32)) + 0.5
        params.append((W, b, gamma, beta, rmean, rvar))
    return params


# -----------------------------------------------------------------------------
# Pure-JAX reference with matching numerics (bf16 operands, f32 accumulation,
# same BN-folded weights) for the correctness check.
# -----------------------------------------------------------------------------
def reference_forward(x, params, neg_slope):
    strides = (1, 2, 2, 2)
    pads = (3, 1, 1, 1)
    for (Wt, b, gamma, beta, rmean, rvar), s, p in zip(params, strides, pads):
        w_fold, shift = _fold_bn(Wt, b, gamma, beta, rmean, rvar)
        y = lax.conv_general_dilated(
            x.astype(jnp.bfloat16), w_fold.astype(jnp.bfloat16),
            window_strides=(s, s), padding=[(p, p), (p, p)],
            dimension_numbers=('NCHW', 'OIHW', 'NCHW'),
            preferred_element_type=jnp.float32)
        y = y + shift[None, :, None, None]
        x = jnp.where(y > 0, y, neg_slope * y)
    return x


if __name__ == "__main__":
    key = jax.random.PRNGKey(0)
    kx, kp = jax.random.split(key)

    N, in_dims, H, W = 2, 4, 16, 16
    x = jax.random.normal(kx, (N, in_dims, H, W), jnp.float32)
    params = init_params(kp, in_dims=in_dims, kernel_size=3)

    fwd = jax.jit(functools.partial(encoder_forward, activation='relu'))
    out = jax.block_until_ready(fwd(x, params))

    assert out.shape == (N, 64, H // 8, W // 8), out.shape
    assert out.dtype == jnp.float32, out.dtype

    ref = reference_forward(x, params, neg_slope=0.0)
    max_err = float(jnp.max(jnp.abs(out - ref)))
    # bf16-operand / f32-accumulate on both sides; tolerance covers summation
    # order + rare bf16 requantization flips between layers.
    assert max_err < 2e-2, f"max abs error {max_err}"

    print("KERNEL_OK")
</pallas_src>

<mosaic_0001>
module attributes {stable_mosaic.version = 11 : i64} {
  func.func @_conv_bn_act_kernel(%arg0: i32, %arg1: memref<49x8x4xbf16, #tpu.memory_space<vmem>>, %arg2: memref<8x1xf32, #tpu.memory_space<vmem>>, %arg3: memref<1x4x640xbf16, #tpu.memory_space<vmem>>, %arg4: memref<1x8x384xbf16, #tpu.memory_space<vmem>>, %arg5: memref<8x384xf32, #tpu.memory_space<vmem>>) attributes {dimension_semantics = [#tpu.dimension_semantics<parallel>], iteration_bounds = array<i64: 2>, scalar_prefetch = 0 : i64, scratch_operands = 1 : i64, tpu.core_type = #tpu.core_type<tc>, window_params = [{pipeline_mode = #tpu.pipeline_mode<synchronous>, transform_indices = @transform_0, window_bounds = array<i64: 49, 8, 4>}, {pipeline_mode = #tpu.pipeline_mode<synchronous>, transform_indices = @transform_1, window_bounds = array<i64: 8, 1>}, {transform_indices = @transform_2, window_bounds = array<i64: 1, 4, 640>}, {transform_indices = @transform_3, window_bounds = array<i64: 1, 8, 384>}]} {
    %c0 = arith.constant 0 : index
    %c0_0 = arith.constant 0 : index
    %c0_1 = arith.constant 0 : index
    %0 = vector.load %arg1[%c0, %c0_0, %c0_1] : memref<49x8x4xbf16, #tpu.memory_space<vmem>>, vector<1x8x4xbf16>
    %1 = vector.shape_cast %0 : vector<1x8x4xbf16> to vector<8x4xbf16>
    %c0_2 = arith.constant 0 : index
    %c0_3 = arith.constant 0 : index
    %c0_4 = arith.constant 0 : index
    %2 = vector.load %arg3[%c0_2, %c0_3, %c0_4] : memref<1x4x640xbf16, #tpu.memory_space<vmem>>, vector<1x4x384xbf16>
    %3 = vector.shape_cast %2 : vector<1x4x384xbf16> to vector<4x384xbf16>
    %cst = arith.constant dense<0.000000e+00> : vector<8x384xf32>
    %4 = tpu.matmul %1, %3, %cst {dimension_numbers = #tpu.dot_dimension_numbers<[1], [0], [0], [1], [0, 0, 1, 1], [], []>} : vector<8x4xbf16>, vector<4x384xbf16>, vector<8x384xf32> -> vector<8x384xf32>
    %c0_5 = arith.constant 0 : index
    %c0_6 = arith.constant 0 : index
    %5 = vector.load %arg5[%c0_5, %c0_6] : memref<8x384xf32, #tpu.memory_space<vmem>>, vector<8x384xf32>
    tpu.vector_store %arg5[%c0_5, %c0_6], %4 {strides = array<i32>} : memref<8x384xf32, #tpu.memory_space<vmem>>, vector<8x384xf32>,
    %c0_7 = arith.constant 0 : index
    %c0_8 = arith.constant 0 : index
    %6 = vector.load %arg5[%c0_7, %c0_8] : memref<8x384xf32, #tpu.memory_space<vmem>>, vector<8x384xf32>
    %c1 = arith.constant 1 : index
    %c0_9 = arith.constant 0 : index
    %c0_10 = arith.constant 0 : index
    %7 = vector.load %arg1[%c1, %c0_9, %c0_10] : memref<49x8x4xbf16, #tpu.memory_space<vmem>>, vector<1x8x4xbf16>
    %8 = vector.shape_cast %7 : vector<1x8x4xbf16> to vector<8x4xbf16>
    %c0_11 = arith.constant 0 : index
    %c0_12 = arith.constant 0 : index
    %c1_13 = arith.constant 1 : index
    %9 = vector.load %arg3[%c0_11, %c0_12, %c1_13] : memref<1x4x640xbf16, #tpu.memory_space<vmem>>, vector<1x4x384xbf16>
    %10 = vector.shape_cast %9 : vector<1x4x384xbf16> to vector<4x384xbf16>
    %cst_14 = arith.constant dense<0.000000e+00> : vector<8x384xf32>
    %11 = tpu.matmul %8, %10, %cst_14 {dimension_numbers = #tpu.dot_dimension_numbers<[1], [0], [0], [1], [0, 0, 1, 1], [], []>} : vector<8x4xbf16>, vector<4x384xbf16>, vector<8x384xf32> -> vector<8x384xf32>
    %12 = arith.addf %6, %11 : vector<8x384xf32>
    %c0_15 = arith.constant 0 : index
    %c0_16 = arith.constant 0 : index
    %13 = vector.load %arg5[%c0_15, %c0_16] : memref<8x384xf32, #tpu.memory_space<vmem>>, vector<8x384xf32>
    tpu.vector_store %arg5[%c0_15, %c0_16], %12 {strides = array<i32>} : memref<8x384xf32, #tpu.memory_space<vmem>>, vector<8x384xf32>,
    %c0_17 = arith.constant 0 : index
    %c0_18 = arith.constant 0 : index
    %14 = vector.load %arg5[%c0_17, %c0_18] : memref<8x384xf32, #tpu.memory_space<vmem>>, vector<8x384xf32>
    %c2 = arith.constant 2 : index
    %c0_19 = arith.constant 0 : index
    %c0_20 = arith.constant 0 : index
    %15 = vector.load %arg1[%c2, %c0_19, %c0_20] : memref<49x8x4xbf16, #tpu.memory_space<vmem>>, vector<1x8x4xbf16>
    %16 = vector.shape_cast %15 : vector<1x8x4xbf16> to vector<8x4xbf16>
    %c0_21 = arith.constant 0 : index
    %c0_22 = arith.constant 0 : index
    %c2_23 = arith.constant 2 : index
    %17 = vector.load %arg3[%c0_21, %c0_22, %c2_23] : memref<1x4x640xbf16, #tpu.memory_space<vmem>>, vector<1x4x384xbf16>
    %18 = vector.shape_cast %17 : vector<1x4x384xbf16> to vector<4x384xbf16>
    %cst_24 = arith.constant dense<0.000000e+00> : vector<8x384xf32>
    %19 = tpu.matmul %16, %18, %cst_24 {dimension_numbers = #tpu.dot_dimension_numbers<[1], [0], [0], [1], [0, 0, 1, 1], [], []>} : vector<8x4xbf16>, vector<4x384xbf16>, vector<8x384xf32> -> vector<8x384xf32>
    %20 = arith.addf %14, %19 : vector<8x384xf32>
    %c0_25 = arith.constant 0 : index
    %c0_26 = arith.constant 0 : index
    %21 = vector.load %arg5[%c0_25, %c0_26] : memref<8x384xf32, #tpu.memory_space<vmem>>, vector<8x384xf32>
    tpu.vector_store %arg5[%c0_25, %c0_26], %20 {strides = array<i32>} : memref<8x384xf32, #tpu.memory_space<vmem>>, vector<8x384xf32>,
    %c0_27 = arith.constant 0 : index
    %c0_28 = arith.constant 0 : index
    %22 = vector.load %arg5[%c0_27, %c0_28] : memref<8x384xf32, #tpu.memory_space<vmem>>, vector<8x384xf32>
    %c3 = arith.constant 3 : index
    %c0_29 = arith.constant 0 : index
    %c0_30 = arith.constant 0 : index
    %23 = vector.load %arg1[%c3, %c0_29, %c0_30] : memref<49x8x4xbf16, #tpu.memory_space<vmem>>, vector<1x8x4xbf16>
    %24 = vector.shape_cast %23 : vector<1x8x4xbf16> to vector<8x4xbf16>
    %c0_31 = arith.constant 0 : index
    %c0_32 = arith.constant 0 : index
    %c3_33 = arith.constant 3 : index
    %25 = vector.load %arg3[%c0_31, %c0_32, %c3_33] : memref<1x4x640xbf16, #tpu.memory_space<vmem>>, vector<1x4x384xbf16>
    %26 = vector.shape_cast %25 : vector<1x4x384xbf16> to vector<4x384xbf16>
    %cst_34 = arith.constant dense<0.000000e+00> : vector<8x384xf32>
    %27 = tpu.matmul %24, %26, %cst_34 {dimension_numbers = #tpu.dot_dimension_numbers<[1], [0], [0], [1], [0, 0, 1, 1], [], []>} : vector<8x4xbf16>, vector<4x384xbf16>, vector<8x384xf32> -> vector<8x384xf32>
    %28 = arith.addf %22, %27 : vector<8x384xf32>
    %c0_35 = arith.constant 0 : index
    %c0_36 = arith.constant 0 : index
    %29 = vector.load %arg5[%c0_35, %c0_36] : memref<8x384xf32, #tpu.memory_space<vmem>>, vector<8x384xf32>
    tpu.vector_store %arg5[%c0_35, %c0_36], %28 {strides = array<i32>} : memref<8x384xf32, #tpu.memory_space<vmem>>, vector<8x384xf32>,
    %c0_37 = arith.constant 0 : index
    %c0_38 = arith.constant 0 : index
    %30 = vector.load %arg5[%c0_37, %c0_38] : memref<8x384xf32, #tpu.memory_space<vmem>>, vector<8x384xf32>
    %c4 = arith.constant 4 : index
    %c0_39 = arith.constant 0 : index
    %c0_40 = arith.constant 0 : index
    %31 = vector.load %arg1[%c4, %c0_39, %c0_40] : memref<49x8x4xbf16, #tpu.memory_space<vmem>>, vector<1x8x4xbf16>
    %32 = vector.shape_cast %31 : vector<1x8x4xbf16> to vector<8x4xbf16>
    %c0_41 = arith.constant 0 : index
    %c0_42 = arith.constant 0 : index
    %c4_43 = arith.constant 4 : index
    %33 = vector.load %arg3[%c0_41, %c0_42, %c4_43] : memref<1x4x640xbf16, #tpu.memory_space<vmem>>, vector<1x4x384xbf16>
    %34 = vector.shape_cast %33 : vector<1x4x384xbf16> to vector<4x384xbf16>
    %cst_44 = arith.constant dense<0.000000e+00> : vector<8x384xf32>
    %35 = tpu.matmul %32, %34, %cst_44 {dimension_numbers = #tpu.dot_dimension_numbers<[1], [0], [0], [1], [0, 0, 1, 1], [], []>} : vector<8x4xbf16>, vector<4x384xbf16>, vector<8x384xf32> -> vector<8x384xf32>
    %36 = arith.addf %30, %35 : vector<8x384xf32>
    %c0_45 = arith.constant 0 : index
    %c0_46 = arith.constant 0 : index
    %37 = vector.load %arg5[%c0_45, %c0_46] : memref<8x384xf32, #tpu.memory_space<vmem>>, vector<8x384xf32>
    tpu.vector_store %arg5[%c0_45, %c0_46], %36 {strides = array<i32>} : memref<8x384xf32, #tpu.memory_space<vmem>>, vector<8x384xf32>,
    %c0_47 = arith.constant 0 : index
    %c0_48 = arith.constant 0 : index
    %38 = vector.load %arg5[%c0_47, %c0_48] : memref<8x384xf32, #tpu.memory_space<vmem>>, vector<8x384xf32>
    %c5 = arith.constant 5 : index
    %c0_49 = arith.constant 0 : index
    %c0_50 = arith.constant 0 : index
    %39 = vector.load %arg1[%c5, %c0_49, %c0_50] : memref<49x8x4xbf16, #tpu.memory_space<vmem>>, vector<1x8x4xbf16>
    %40 = vector.shape_cast %39 : vector<1x8x4xbf16> to vector<8x4xbf16>
    %c0_51 = arith.constant 0 : index
    %c0_52 = arith.constant 0 : index
    %c5_53 = arith.constant 5 : index
    %41 = vector.load %arg3[%c0_51, %c0_52, %c5_53] : memref<1x4x640xbf16, #tpu.memory_space<vmem>>, vector<1x4x384xbf16>
    %42 = vector.shape_cast %41 : vector<1x4x384xbf16> to vector<4x384xbf16>
    %cst_54 = arith.constant dense<0.000000e+00> : vector<8x384xf32>
    %43 = tpu.matmul %40, %42, %cst_54 {dimension_numbers = #tpu.dot_dimension_numbers<[1], [0], [0], [1], [0, 0, 1, 1], [], []>} : vector<8x4xbf16>, vector<4x384xbf16>, vector<8x384xf32> -> vector<8x384xf32>
    %44 = arith.addf %38, %43 : vector<8x384xf32>
    %c0_55 = arith.constant 0 : index
    %c0_56 = arith.constant 0 : index
    %45 = vector.load %arg5[%c0_55, %c0_56] : memref<8x384xf32, #tpu.memory_space<vmem>>, vector<8x384xf32>
    tpu.vector_store %arg5[%c0_55, %c0_56], %44 {strides = array<i32>} : memref<8x384xf32, #tpu.memory_space<vmem>>, vector<8x384xf32>,
    %c0_57 = arith.constant 0 : index
    %c0_58 = arith.constant 0 : index
    %46 = vector.load %arg5[%c0_57, %c0_58] : memref<8x384xf32, #tpu.memory_space<vmem>>, vector<8x384xf32>
    %c6 = arith.constant 6 : index
    %c0_59 = arith.constant 0 : index
    %c0_60 = arith.constant 0 : index
    %47 = vector.load %arg1[%c6, %c0_59, %c0_60] : memref<49x8x4xbf16, #tpu.memory_space<vmem>>, vector<1x8x4xbf16>
    %48 = vector.shape_cast %47 : vector<1x8x4xbf16> to vector<8x4xbf16>
    %c0_61 = arith.constant 0 : index
    %c0_62 = arith.constant 0 : index
    %c6_63 = arith.constant 6 : index
    %49 = vector.load %arg3[%c0_61, %c0_62, %c6_63] : memref<1x4x640xbf16, #tpu.memory_space<vmem>>, vector<1x4x384xbf16>
    %50 = vector.shape_cast %49 : vector<1x4x384xbf16> to vector<4x384xbf16>
    %cst_64 = arith.constant dense<0.000000e+00> : vector<8x384xf32>
    %51 = tpu.matmul %48, %50, %cst_64 {dimension_numbers = #tpu.dot_dimension_numbers<[1], [0], [0], [1], [0, 0, 1, 1], [], []>} : vector<8x4xbf16>, vector<4x384xbf16>, vector<8x384xf32> -> vector<8x384xf32>
    %52 = arith.addf %46, %51 : vector<8x384xf32>
    %c0_65 = arith.constant 0 : index
    %c0_66 = arith.constant 0 : index
    %53 = vector.load %arg5[%c0_65, %c0_66] : memref<8x384xf32, #tpu.memory_space<vmem>>, vector<8x384xf32>
    tpu.vector_store %arg5[%c0_65, %c0_66], %52 {strides = array<i32>} : memref<8x384xf32, #tpu.memory_space<vmem>>, vector<8x384xf32>,
    %c0_67 = arith.constant 0 : index
    %c0_68 = arith.constant 0 : index
    %54 = vector.load %arg5[%c0_67, %c0_68] : memref<8x384xf32, #tpu.memory_space<vmem>>, vector<8x384xf32>
    %c7 = arith.constant 7 : index
    %c0_69 = arith.constant 0 : index
    %c0_70 = arith.constant 0 : index
    %55 = vector.load %arg1[%c7, %c0_69, %c0_70] : memref<49x8x4xbf16, #tpu.memory_space<vmem>>, vector<1x8x4xbf16>
    %56 = vector.shape_cast %55 : vector<1x8x4xbf16> to vector<8x4xbf16>
    %c0_71 = arith.constant 0 : index
    %c0_72 = arith.constant 0 : index
    %c22 = arith.constant 22 : index
    %57 = vector.load %arg3[%c0_71, %c0_72, %c22] : memref<1x4x640xbf16, #tpu.memory_space<vmem>>, vector<1x4x384xbf16>
    %58 = vector.shape_cast %57 : vector<1x4x384xbf16> to vector<4x384xbf16>
    %cst_73 = arith.constant dense<0.000000e+00> : vector<8x384xf32>
    %59 = tpu.matmul %56, %58, %cst_73 {dimension_numbers = #tpu.dot_dimension_numbers<[1], [0], [0], [1], [0, 0, 1, 1], [], []>} : vector<8x4xbf16>, vector<4x384xbf16>, vector<8x384xf32> -> vector<8x384xf32>
    %60 = arith.addf %54, %59 : vector<8x384xf32>
    %c0_74 = arith.constant 0 : index
    %c0_75 = arith.constant 0 : index
    %61 = vector.load %arg5[%c0_74, %c0_75] : memref<8x384xf32, #tpu.memory_space<vmem>>, vector<8x384xf32>
    tpu.vector_store %arg5[%c0_74, %c0_75], %60 {strides = array<i32>} : memref<8x384xf32, #tpu.memory_space<vmem>>, vector<8x384xf32>,
    %c0_76 = arith.constant 0 : index
    %c0_77 = arith.constant 0 : index
    %62 = vector.load %arg5[%c0_76, %c0_77] : memref<8x384xf32, #tpu.memory_space<vmem>>, vector<8x384xf32>
    %c8 = arith.constant 8 : index
    %c0_78 = arith.constant 0 : index
    %c0_79 = arith.constant 0 : index
    %63 = vector.load %arg1[%c8, %c0_78, %c0_79] : memref<49x8x4xbf16, #tpu.memory_space<vmem>>, vector<1x8x4xbf16>
    %64 = vector.shape_cast %63 : vector<1x8x4xbf16> to vector<8x4xbf16>
    %c0_80 = arith.constant 0 : index
    %c0_81 = arith.constant 0 : index
    %c23 = arith.constant 23 : index
    %65 = vector.load %arg3[%c0_80, %c0_81, %c23] : memref<1x4x640xbf16, #tpu.memory_space<vmem>>, vector<1x4x384xbf16>
    %66 = vector.shape_cast %65 : vector<1x4x384xbf16> to vector<4x384xbf16>
    %cst_82 = arith.constant dense<0.000000e+00> : vector<8x384xf32>
    %67 = tpu.matmul %64, %66, %cst_82 {dimension_numbers = #tpu.dot_dimension_numbers<[1], [0], [0], [1], [0, 0, 1, 1], [], []>} : vector<8x4xbf16>, vector<4x384xbf16>, vector<8x384xf32> -> vector<8x384xf32>
    %68 = arith.addf %62, %67 : vector<8x384xf32>
    %c0_83 = arith.constant 0 : index
    %c0_84 = arith.constant 0 : index
    %69 = vector.load %arg5[%c0_83, %c0_84] : memref<8x384xf32, #tpu.memory_space<vmem>>, vector<8x384xf32>
    tpu.vector_store %arg5[%c0_83, %c0_84], %68 {strides = array<i32>} : memref<8x384xf32, #tpu.memory_space<vmem>>, vector<8x384xf32>,
    %c0_85 = arith.constant 0 : index
    %c0_86 = arith.constant 0 : index
    %70 = vector.load %arg5[%c0_85, %c0_86] : memref<8x384xf32, #tpu.memory_space<vmem>>, vector<8x384xf32>
    %c9 = arith.constant 9 : index
    %c0_87 = arith.constant 0 : index
    %c0_88 = arith.constant 0 : index
    %71 = vector.load %arg1[%c9, %c0_87, %c0_88] : memref<49x8x4xbf16, #tpu.memory_space<vmem>>, vector<1x8x4xbf16>
    %72 = vector.shape_cast %71 : vector<1x8x4xbf16> to vector<8x4xbf16>
    %c0_89 = arith.constant 0 : index
    %c0_90 = arith.constant 0 : index
    %c24 = arith.constant 24 : index
    %73 = vector.load %arg3[%c0_89, %c0_90, %c24] : memref<1x4x640xbf16, #tpu.memory_space<vmem>>, vector<1x4x384xbf16>
    %74 = vector.shape_cast %73 : vector<1x4x384xbf16> to vector<4x384xbf16>
    %cst_91 = arith.constant dense<0.000000e+00> : vector<8x384xf32>
    %75 = tpu.matmul %72, %74, %cst_91 {dimension_numbers = #tpu.dot_dimension_numbers<[1], [0], [0], [1], [0, 0, 1, 1], [], []>} : vector<8x4xbf16>, vector<4x384xbf16>, vector<8x384xf32> -> vector<8x384xf32>
    %76 = arith.addf %70, %75 : vector<8x384xf32>
    %c0_92 = arith.constant 0 : index
    %c0_93 = arith.constant 0 : index
    %77 = vector.load %arg5[%c0_92, %c0_93] : memref<8x384xf32, #tpu.memory_space<vmem>>, vector<8x384xf32>
    tpu.vector_store %arg5[%c0_92, %c0_93], %76 {strides = array<i32>} : memref<8x384xf32, #tpu.memory_space<vmem>>, vector<8x384xf32>,
    %c0_94 = arith.constant 0 : index
    %c0_95 = arith.constant 0 : index
    %78 = vector.load %arg5[%c0_94, %c0_95] : memref<8x384xf32, #tpu.memory_space<vmem>>, vector<8x384xf32>
    %c10 = arith.constant 10 : index
    %c0_96 = arith.constant 0 : index
    %c0_97 = arith.constant 0 : index
    %79 = vector.load %arg1[%c10, %c0_96, %c0_97] : memref<49x8x4xbf16, #tpu.memory_space<vmem>>, vector<1x8x4xbf16>
    %80 = vector.shape_cast %79 : vector<1x8x4xbf16> to vector<8x4xbf16>
    %c0_98 = arith.constant 0 : index
    %c0_99 = arith.constant 0 : index
    %c25 = arith.constant 25 : index
    %81 = vector.load %arg3[%c0_98, %c0_99, %c25] : memref<1x4x640xbf16, #tpu.memory_space<vmem>>, vector<1x4x384xbf16>
    %82 = vector.shape_cast %81 : vector<1x4x384xbf16> to vector<4x384xbf16>
    %cst_100 = arith.constant dense<0.000000e+00> : vector<8x384xf32>
    %83 = tpu.matmul %80, %82, %cst_100 {dimension_numbers = #tpu.dot_dimension_numbers<[1], [0], [0], [1], [0, 0, 1, 1], [], []>} : vector<8x4xbf16>, vector<4x384xbf16>, vector<8x384xf32> -> vector<8x384xf32>
    %84 = arith.addf %78, %83 : vector<8x384xf32>
    %c0_101 = arith.constant 0 : index
    %c0_102 = arith.constant 0 : index
    %85 = vector.load %arg5[%c0_101, %c0_102] : memref<8x384xf32, #tpu.memory_space<vmem>>, vector<8x384xf32>
    tpu.vector_store %arg5[%c0_101, %c0_102], %84 {strides = array<i32>} : memref<8x384xf32, #tpu.memory_space<vmem>>, vector<8x384xf32>,
    %c0_103 = arith.constant 0 : index
    %c0_104 = arith.constant 0 : index
    %86 = vector.load %arg5[%c0_103, %c0_104] : memref<8x384xf32, #tpu.memory_space<vmem>>, vector<8x384xf32>
    %c11 = arith.constant 11 : index
    %c0_105 = arith.constant 0 : index
    %c0_106 = arith.constant 0 : index
    %87 = vector.load %arg1[%c11, %c0_105, %c0_106] : memref<49x8x4xbf16, #tpu.memory_space<vmem>>, vector<1x8x4xbf16>
    %88 = vector.shape_cast %87 : vector<1x8x4xbf16> to vector<8x4xbf16>
    %c0_107 = arith.constant 0 : index
    %c0_108 = arith.constant 0 : index
    %c26 = arith.constant 26 : index
    %89 = vector.load %arg3[%c0_107, %c0_108, %c26] : memref<1x4x640xbf16, #tpu.memory_space<vmem>>, vector<1x4x384xbf16>
    %90 = vector.shape_cast %89 : vector<1x4x384xbf16> to vector<4x384xbf16>
    %cst_109 = arith.constant dense<0.000000e+00> : vector<8x384xf32>
    %91 = tpu.matmul %88, %90, %cst_109 {dimension_numbers = #tpu.dot_dimension_numbers<[1], [0], [0], [1], [0, 0, 1, 1], [], []>} : vector<8x4xbf16>, vector<4x384xbf16>, vector<8x384xf32> -> vector<8x384xf32>
    %92 = arith.addf %86, %91 : vector<8x384xf32>
    %c0_110 = arith.constant 0 : index
    %c0_111 = arith.constant 0 : index
    %93 = vector.load %arg5[%c0_110, %c0_111] : memref<8x384xf32, #tpu.memory_space<vmem>>, vector<8x384xf32>
    tpu.vector_store %arg5[%c0_110, %c0_111], %92 {strides = array<i32>} : memref<8x384xf32, #tpu.memory_space<vmem>>, vector<8x384xf32>,
    %c0_112 = arith.constant 0 : index
    %c0_113 = arith.constant 0 : index
    %94 = vector.load %arg5[%c0_112, %c0_113] : memref<8x384xf32, #tpu.memory_space<vmem>>, vector<8x384xf32>
    %c12 = arith.constant 12 : index
    %c0_114 = arith.constant 0 : index
    %c0_115 = arith.constant 0 : index
    %95 = vector.load %arg1[%c12, %c0_114, %c0_115] : memref<49x8x4xbf16, #tpu.memory_space<vmem>>, vector<1x8x4xbf16>
    %96 = vector.shape_cast %95 : vector<1x8x4xbf16> to vector<8x4xbf16>
    %c0_116 = arith.constant 0 : index
    %c0_117 = arith.constant 0 : index
    %c27 = arith.constant 27 : index
    %97 = vector.load %arg3[%c0_116, %c0_117, %c27] : memref<1x4x640xbf16, #tpu.memory_space<vmem>>, vector<1x4x384xbf16>
    %98 = vector.shape_cast %97 : vector<1x4x384xbf16> to vector<4x384xbf16>
    %cst_118 = arith.constant dense<0.000000e+00> : vector<8x384xf32>
    %99 = tpu.matmul %96, %98, %cst_118 {dimension_numbers = #tpu.dot_dimension_numbers<[1], [0], [0], [1], [0, 0, 1, 1], [], []>} : vector<8x4xbf16>, vector<4x384xbf16>, vector<8x384xf32> -> vector<8x384xf32>
    %100 = arith.addf %94, %99 : vector<8x384xf32>
    %c0_119 = arith.constant 0 : index
    %c0_120 = arith.constant 0 : index
    %101 = vector.load %arg5[%c0_119, %c0_120] : memref<8x384xf32, #tpu.memory_space<vmem>>, vector<8x384xf32>
    tpu.vector_store %arg5[%c0_119, %c0_120], %100 {strides = array<i32>} : memref<8x384xf32, #tpu.memory_space<vmem>>, vector<8x384xf32>,
    %c0_121 = arith.constant 0 : index
    %c0_122 = arith.constant 0 : index
    %102 = vector.load %arg5[%c0_121, %c0_122] : memref<8x384xf32, #tpu.memory_space<vmem>>, vector<8x384xf32>
    %c13 = arith.constant 13 : index
    %c0_123 = arith.constant 0 : index
    %c0_124 = arith.constant 0 : index
    %103 = vector.load %arg1[%c13, %c0_123, %c0_124] : memref<49x8x4xbf16, #tpu.memory_space<vmem>>, vector<1x8x4xbf16>
    %104 = vector.shape_cast %103 : vector<1x8x4xbf16> to vector<8x4xbf16>
    %c0_125 = arith.constant 0 : index
    %c0_126 = arith.constant 0 : index
    %c28 = arith.constant 28 : index
    %105 = vector.load %arg3[%c0_125, %c0_126, %c28] : memref<1x4x640xbf16, #tpu.memory_space<vmem>>, vector<1x4x384xbf16>
    %106 = vector.shape_cast %105 : vector<1x4x384xbf16> to vector<4x384xbf16>
    %cst_127 = arith.constant dense<0.000000e+00> : vector<8x384xf32>
    %107 = tpu.matmul %104, %106, %cst_127 {dimension_numbers = #tpu.dot_dimension_numbers<[1], [0], [0], [1], [0, 0, 1, 1], [], []>} : vector<8x4xbf16>, vector<4x384xbf16>, vector<8x384xf32> -> vector<8x384xf32>
    %108 = arith.addf %102, %107 : vector<8x384xf32>
    %c0_128 = arith.constant 0 : index
    %c0_129 = arith.constant 0 : index
    %109 = vector.load %arg5[%c0_128, %c0_129] : memref<8x384xf32, #tpu.memory_space<vmem>>, vector<8x384xf32>
    tpu.vector_store %arg5[%c0_128, %c0_129], %108 {strides = array<i32>} : memref<8x384xf32, #tpu.memory_space<vmem>>, vector<8x384xf32>,
    %c0_130 = arith.constant 0 : index
    %c0_131 = arith.constant 0 : index
    %110 = vector.load %arg5[%c0_130, %c0_131] : memref<8x384xf32, #tpu.memory_space<vmem>>, vector<8x384xf32>
    %c14 = arith.constant 14 : index
    %c0_132 = arith.constant 0 : index
    %c0_133 = arith.constant 0 : index
    %111 = vector.load %arg1[%c14, %c0_132, %c0_133] : memref<49x8x4xbf16, #tpu.memory_space<vmem>>, vector<1x8x4xbf16>
    %112 = vector.shape_cast %111 : vector<1x8x4xbf16> to vector<8x4xbf16>
    %c0_134 = arith.constant 0 : index
    %c0_135 = arith.constant 0 : index
    %c44 = arith.constant 44 : index
    %113 = vector.load %arg3[%c0_134, %c0_135, %c44] : memref<1x4x640xbf16, #tpu.memory_space<vmem>>, vector<1x4x384xbf16>
    %114 = vector.shape_cast %113 : vector<1x4x384xbf16> to vector<4x384xbf16>
    %cst_136 = arith.constant dense<0.000000e+00> : vector<8x384xf32>
    %115 = tpu.matmul %112, %114, %cst_136 {dimension_numbers = #tpu.dot_dimension_numbers<[1], [0], [0], [1], [0, 0, 1, 1], [], []>} : vector<8x4xbf16>, vector<4x384xbf16>, vector<8x384xf32> -> vector<8x384xf32>
    %116 = arith.addf %110, %115 : vector<8x384xf32>
    %c0_137 = arith.constant 0 : index
    %c0_138 = arith.constant 0 : index
    %117 = vector.load %arg5[%c0_137, %c0_138] : memref<8x384xf32, #tpu.memory_space<vmem>>, vector<8x384xf32>
    tpu.vector_store %arg5[%c0_137, %c0_138], %116 {strides = array<i32>} : memref<8x384xf32, #tpu.memory_space<vmem>>, vector<8x384xf32>,
    %c0_139 = arith.constant 0 : index
    %c0_140 = arith.constant 0 : index
    %118 = vector.load %arg5[%c0_139, %c0_140] : memref<8x384xf32, #tpu.memory_space<vmem>>, vector<8x384xf32>
    %c15 = arith.constant 15 : index
    %c0_141 = arith.constant 0 : index
    %c0_142 = arith.constant 0 : index
    %119 = vector.load %arg1[%c15, %c0_141, %c0_142] : memref<49x8x4xbf16, #tpu.memory_space<vmem>>, vector<1x8x4xbf16>
    %120 = vector.shape_cast %119 : vector<1x8x4xbf16> to vector<8x4xbf16>
    %c0_143 = arith.constant 0 : index
    %c0_144 = arith.constant 0 : index
    %c45 = arith.constant 45 : index
    %121 = vector.load %arg3[%c0_143, %c0_144, %c45] : memref<1x4x640xbf16, #tpu.memory_space<vmem>>, vector<1x4x384xbf16>
    %122 = vector.shape_cast %121 : vector<1x4x384xbf16> to vector<4x384xbf16>
    %cst_145 = arith.constant dense<0.000000e+00> : vector<8x384xf32>
    %123 = tpu.matmul %120, %122, %cst_145 {dimension_numbers = #tpu.dot_dimension_numbers<[1], [0], [0], [1], [0, 0, 1, 1], [], []>} : vector<8x4xbf16>, vector<4x384xbf16>, vector<8x384xf32> -> vector<8x384xf32>
    %124 = arith.addf %118, %123 : vector<8x384xf32>
    %c0_146 = arith.constant 0 : index
    %c0_147 = arith.constant 0 : index
    %125 = vector.load %arg5[%c0_146, %c0_147] : memref<8x384xf32, #tpu.memory_space<vmem>>, vector<8x384xf32>
    tpu.vector_store %arg5[%c0_146, %c0_147], %124 {strides = array<i32>} : memref<8x384xf32, #tpu.memory_space<vmem>>, vector<8x384xf32>,
    %c0_148 = arith.constant 0 : index
    %c0_149 = arith.constant 0 : index
    %126 = vector.load %arg5[%c0_148, %c0_149] : memref<8x384xf32, #tpu.memory_space<vmem>>, vector<8x384xf32>
    %c16 = arith.constant 16 : index
    %c0_150 = arith.constant 0 : index
    %c0_151 = arith.constant 0 : index
    %127 = vector.load %arg1[%c16, %c0_150, %c0_151] : memref<49x8x4xbf16, #tpu.memory_space<vmem>>, vector<1x8x4xbf16>
    %128 = vector.shape_cast %127 : vector<1x8x4xbf16> to vector<8x4xbf16>
    %c0_152 = arith.constant 0 : index
    %c0_153 = arith.constant 0 : index
    %c46 = arith.constant 46 : index
    %129 = vector.load %arg3[%c0_152, %c0_153, %c46] : memref<1x4x640xbf16, #tpu.memory_space<vmem>>, vector<1x4x384xbf16>
    %130 = vector.shape_cast %129 : vector<1x4x384xbf16> to vector<4x384xbf16>
    %cst_154 = arith.constant dense<0.000000e+00> : vector<8x384xf32>
    %131 = tpu.matmul %128, %130, %cst_154 {dimension_numbers = #tpu.dot_dimension_numbers<[1], [0], [0], [1], [0, 0, 1, 1], [], []>} : vector<8x4xbf16>, vector<4x384xbf16>, vector<8x384xf32> -> vector<8x384xf32>
    %132 = arith.addf %126, %131 : vector<8x384xf32>
    %c0_155 = arith.constant 0 : index
    %c0_156 = arith.constant 0 : index
    %133 = vector.load %arg5[%c0_155, %c0_156] : memref<8x384xf32, #tpu.memory_space<vmem>>, vector<8x384xf32>
    tpu.vector_store %arg5[%c0_155, %c0_156], %132 {strides = array<i32>} : memref<8x384xf32, #tpu.memory_space<vmem>>, vector<8x384xf32>,
    %c0_157 = arith.constant 0 : index
    %c0_158 = arith.constant 0 : index
    %134 = vector.load %arg5[%c0_157, %c0_158] : memref<8x384xf32, #tpu.memory_space<vmem>>, vector<8x384xf32>
    %c17 = arith.constant 17 : index
    %c0_159 = arith.constant 0 : index
    %c0_160 = arith.constant 0 : index
    %135 = vector.load %arg1[%c17, %c0_159, %c0_160] : memref<49x8x4xbf16, #tpu.memory_space<vmem>>, vector<1x8x4xbf16>
    %136 = vector.shape_cast %135 : vector<1x8x4xbf16> to vector<8x4xbf16>
    %c0_161 = arith.constant 0 : index
    %c0_162 = arith.constant 0 : index
    %c47 = arith.constant 47 : index
    %137 = vector.load %arg3[%c0_161, %c0_162, %c47] : memref<1x4x640xbf16, #tpu.memory_space<vmem>>, vector<1x4x384xbf16>
    %138 = vector.shape_cast %137 : vector<1x4x384xbf16> to vector<4x384xbf16>
    %cst_163 = arith.constant dense<0.000000e+00> : vector<8x384xf32>
    %139 = tpu.matmul %136, %138, %cst_163 {dimension_numbers = #tpu.dot_dimension_numbers<[1], [0], [0], [1], [0, 0, 1, 1], [], []>} : vector<8x4xbf16>, vector<4x384xbf16>, vector<8x384xf32> -> vector<8x384xf32>
    %140 = arith.addf %134, %139 : vector<8x384xf32>
    %c0_164 = arith.constant 0 : index
    %c0_165 = arith.constant 0 : index
    %141 = vector.load %arg5[%c0_164, %c0_165] : memref<8x384xf32, #tpu.memory_space<vmem>>, vector<8x384xf32>
    tpu.vector_store %arg5[%c0_164, %c0_165], %140 {strides = array<i32>} : memref<8x384xf32, #tpu.memory_space<vmem>>, vector<8x384xf32>,
    %c0_166 = arith.constant 0 : index
    %c0_167 = arith.constant 0 : index
    %142 = vector.load %arg5[%c0_166, %c0_167] : memref<8x384xf32, #tpu.memory_space<vmem>>, vector<8x384xf32>
    %c18 = arith.constant 18 : index
    %c0_168 = arith.constant 0 : index
    %c0_169 = arith.constant 0 : index
    %143 = vector.load %arg1[%c18, %c0_168, %c0_169] : memref<49x8x4xbf16, #tpu.memory_space<vmem>>, vector<1x8x4xbf16>
    %144 = vector.shape_cast %143 : vector<1x8x4xbf16> to vector<8x4xbf16>
    %c0_170 = arith.constant 0 : index
    %c0_171 = arith.constant 0 : index
    %c48 = arith.constant 48 : index
    %145 = vector.load %arg3[%c0_170, %c0_171, %c48] : memref<1x4x640xbf16, #tpu.memory_space<vmem>>, vector<1x4x384xbf16>
    %146 = vector.shape_cast %145 : vector<1x4x384xbf16> to vector<4x384xbf16>
    %cst_172 = arith.constant dense<0.000000e+00> : vector<8x384xf32>
    %147 = tpu.matmul %144, %146, %cst_172 {dimension_numbers = #tpu.dot_dimension_numbers<[1], [0], [0], [1], [0, 0, 1, 1], [], []>} : vector<8x4xbf16>, vector<4x384xbf16>, vector<8x384xf32> -> vector<8x384xf32>
    %148 = arith.addf %142, %147 : vector<8x384xf32>
    %c0_173 = arith.constant 0 : index
    %c0_174 = arith.constant 0 : index
    %149 = vector.load %arg5[%c0_173, %c0_174] : memref<8x384xf32, #tpu.memory_space<vmem>>, vector<8x384xf32>
    tpu.vector_store %arg5[%c0_173, %c0_174], %148 {strides = array<i32>} : memref<8x384xf32, #tpu.memory_space<vmem>>, vector<8x384xf32>,
    %c0_175 = arith.constant 0 : index
    %c0_176 = arith.constant 0 : index
    %150 = vector.load %arg5[%c0_175, %c0_176] : memref<8x384xf32, #tpu.memory_space<vmem>>, vector<8x384xf32>
    %c19 = arith.constant 19 : index
    %c0_177 = arith.constant 0 : index
    %c0_178 = arith.constant 0 : index
    %151 = vector.load %arg1[%c19, %c0_177, %c0_178] : memref<49x8x4xbf16, #tpu.memory_space<vmem>>, vector<1x8x4xbf16>
    %152 = vector.shape_cast %151 : vector<1x8x4xbf16> to vector<8x4xbf16>
    %c0_179 = arith.constant 0 : index
    %c0_180 = arith.constant 0 : index
    %c49 = arith.constant 49 : index
    %153 = vector.load %arg3[%c0_179, %c0_180, %c49] : memref<1x4x640xbf16, #tpu.memory_space<vmem>>, vector<1x4x384xbf16>
    %154 = vector.shape_cast %153 : vector<1x4x384xbf16> to vector<4x384xbf16>
    %cst_181 = arith.constant dense<0.000000e+00> : vector<8x384xf32>
    %155 = tpu.matmul %152, %154, %cst_181 {dimension_numbers = #tpu.dot_dimension_numbers<[1], [0], [0], [1], [0, 0, 1, 1], [], []>} : vector<8x4xbf16>, vector<4x384xbf16>, vector<8x384xf32> -> vector<8x384xf32>
    %156 = arith.addf %150, %155 : vector<8x384xf32>
    %c0_182 = arith.constant 0 : index
    %c0_183 = arith.constant 0 : index
    %157 = vector.load %arg5[%c0_182, %c0_183] : memref<8x384xf32, #tpu.memory_space<vmem>>, vector<8x384xf32>
    tpu.vector_store %arg5[%c0_182, %c0_183], %156 {strides = array<i32>} : memref<8x384xf32, #tpu.memory_space<vmem>>, vector<8x384xf32>,
    %c0_184 = arith.constant 0 : index
    %c0_185 = arith.constant 0 : index
    %158 = vector.load %arg5[%c0_184, %c0_185] : memref<8x384xf32, #tpu.memory_space<vmem>>, vector<8x384xf32>
    %c20 = arith.constant 20 : index
    %c0_186 = arith.constant 0 : index
    %c0_187 = arith.constant 0 : index
    %159 = vector.load %arg1[%c20, %c0_186, %c0_187] : memref<49x8x4xbf16, #tpu.memory_space<vmem>>, vector<1x8x4xbf16>
    %160 = vector.shape_cast %159 : vector<1x8x4xbf16> to vector<8x4xbf16>
    %c0_188 = arith.constant 0 : index
    %c0_189 = arith.constant 0 : index
    %c50 = arith.constant 50 : index
    %161 = vector.load %arg3[%c0_188, %c0_189, %c50] : memref<1x4x640xbf16, #tpu.memory_space<vmem>>, vector<1x4x384xbf16>
    %162 = vector.shape_cast %161 : vector<1x4x384xbf16> to vector<4x384xbf16>
    %cst_190 = arith.constant dense<0.000000e+00> : vector<8x384xf32>
    %163 = tpu.matmul %160, %162, %cst_190 {dimension_numbers = #tpu.dot_dimension_numbers<[1], [0], [0], [1], [0, 0, 1, 1], [], []>} : vector<8x4xbf16>, vector<4x384xbf16>, vector<8x384xf32> -> vector<8x384xf32>
    %164 = arith.addf %158, %163 : vector<8x384xf32>
    %c0_191 = arith.constant 0 : index
    %c0_192 = arith.constant 0 : index
    %165 = vector.load %arg5[%c0_191, %c0_192] : memref<8x384xf32, #tpu.memory_space<vmem>>, vector<8x384xf32>
    tpu.vector_store %arg5[%c0_191, %c0_192], %164 {strides = array<i32>} : memref<8x384xf32, #tpu.memory_space<vmem>>, vector<8x384xf32>,
    %c0_193 = arith.constant 0 : index
    %c0_194 = arith.constant 0 : index
    %166 = vector.load %arg5[%c0_193, %c0_194] : memref<8x384xf32, #tpu.memory_space<vmem>>, vector<8x384xf32>
    %c21 = arith.constant 21 : index
    %c0_195 = arith.constant 0 : index
    %c0_196 = arith.constant 0 : index
    %167 = vector.load %arg1[%c21, %c0_195, %c0_196] : memref<49x8x4xbf16, #tpu.memory_space<vmem>>, vector<1x8x4xbf16>
    %168 = vector.shape_cast %167 : vector<1x8x4xbf16> to vector<8x4xbf16>
    %c0_197 = arith.constant 0 : index
    %c0_198 = arith.constant 0 : index
    %c66 = arith.constant 66 : index
    %169 = vector.load %arg3[%c0_197, %c0_198, %c66] : memref<1x4x640xbf16, #tpu.memory_space<vmem>>, vector<1x4x384xbf16>
    %170 = vector.shape_cast %169 : vector<1x4x384xbf16> to vector<4x384xbf16>
    %cst_199 = arith.constant dense<0.000000e+00> : vector<8x384xf32>
    %171 = tpu.matmul %168, %170, %cst_199 {dimension_numbers = #tpu.dot_dimension_numbers<[1], [0], [0], [1], [0, 0, 1, 1], [], []>} : vector<8x4xbf16>, vector<4x384xbf16>, vector<8x384xf32> -> vector<8x384xf32>
    %172 = arith.addf %166, %171 : vector<8x384xf32>
    %c0_200 = arith.constant 0 : index
    %c0_201 = arith.constant 0 : index
    %173 = vector.load %arg5[%c0_200, %c0_201] : memref<8x384xf32, #tpu.memory_space<vmem>>, vector<8x384xf32>
    tpu.vector_store %arg5[%c0_200, %c0_201], %172 {strides = array<i32>} : memref<8x384xf32, #tpu.memory_space<vmem>>, vector<8x384xf32>,
    %c0_202 = arith.constant 0 : index
    %c0_203 = arith.constant 0 : index
    %174 = vector.load %arg5[%c0_202, %c0_203] : memref<8x384xf32, #tpu.memory_space<vmem>>, vector<8x384xf32>
    %c22_204 = arith.constant 22 : index
    %c0_205 = arith.constant 0 : index
    %c0_206 = arith.constant 0 : index
    %175 = vector.load %arg1[%c22_204, %c0_205, %c0_206] : memref<49x8x4xbf16, #tpu.memory_space<vmem>>, vector<1x8x4xbf16>
    %176 = vector.shape_cast %175 : vector<1x8x4xbf16> to vector<8x4xbf16>
    %c0_207 = arith.constant 0 : index
    %c0_208 = arith.constant 0 : index
    %c67 = arith.constant 67 : index
    %177 = vector.load %arg3[%c0_207, %c0_208, %c67] : memref<1x4x640xbf16, #tpu.memory_space<vmem>>, vector<1x4x384xbf16>
    %178 = vector.shape_cast %177 : vector<1x4x384xbf16> to vector<4x384xbf16>
    %cst_209 = arith.constant dense<0.000000e+00> : vector<8x384xf32>
    %179 = tpu.matmul %176, %178, %cst_209 {dimension_numbers = #tpu.dot_dimension_numbers<[1], [0], [0], [1], [0, 0, 1, 1], [], []>} : vector<8x4xbf16>, vector<4x384xbf16>, vector<8x384xf32> -> vector<8x384xf32>
    %180 = arith.addf %174, %179 : vector<8x384xf32>
    %c0_210 = arith.constant 0 : index
    %c0_211 = arith.constant 0 : index
    %181 = vector.load %arg5[%c0_210, %c0_211] : memref<8x384xf32, #tpu.memory_space<vmem>>, vector<8x384xf32>
    tpu.vector_store %arg5[%c0_210, %c0_211], %180 {strides = array<i32>} : memref<8x384xf32, #tpu.memory_space<vmem>>, vector<8x384xf32>,
    %c0_212 = arith.constant 0 : index
    %c0_213 = arith.constant 0 : index
    %182 = vector.load %arg5[%c0_212, %c0_213] : memref<8x384xf32, #tpu.memory_space<vmem>>, vector<8x384xf32>
    %c23_214 = arith.constant 23 : index
    %c0_215 = arith.constant 0 : index
    %c0_216 = arith.constant 0 : index
    %183 = vector.load %arg1[%c23_214, %c0_215, %c0_216] : memref<49x8x4xbf16, #tpu.memory_space<vmem>>, vector<1x8x4xbf16>
    %184 = vector.shape_cast %183 : vector<1x8x4xbf16> to vector<8x4xbf16>
    %c0_217 = arith.constant 0 : index
    %c0_218 = arith.constant 0 : index
    %c68 = arith.constant 68 : index
    %185 = vector.load %arg3[%c0_217, %c0_218, %c68] : memref<1x4x640xbf16, #tpu.memory_space<vmem>>, vector<1x4x384xbf16>
    %186 = vector.shape_cast %185 : vector<1x4x384xbf16> to vector<4x384xbf16>
    %cst_219 = arith.constant dense<0.000000e+00> : vector<8x384xf32>
    %187 = tpu.matmul %184, %186, %cst_219 {dimension_numbers = #tpu.dot_dimension_numbers<[1], [0], [0], [1], [0, 0, 1, 1], [], []>} : vector<8x4xbf16>, vector<4x384xbf16>, vector<8x384xf32> -> vector<8x384xf32>
    %188 = arith.addf %182, %187 : vector<8x384xf32>
    %c0_220 = arith.constant 0 : index
    %c0_221 = arith.constant 0 : index
    %189 = vector.load %arg5[%c0_220, %c0_221] : memref<8x384xf32, #tpu.memory_space<vmem>>, vector<8x384xf32>
    tpu.vector_store %arg5[%c0_220, %c0_221], %188 {strides = array<i32>} : memref<8x384xf32, #tpu.memory_space<vmem>>, vector<8x384xf32>,
    %c0_222 = arith.constant 0 : index
    %c0_223 = arith.constant 0 : index
    %190 = vector.load %arg5[%c0_222, %c0_223] : memref<8x384xf32, #tpu.memory_space<vmem>>, vector<8x384xf32>
    %c24_224 = arith.constant 24 : index
    %c0_225 = arith.constant 0 : index
    %c0_226 = arith.constant 0 : index
    %191 = vector.load %arg1[%c24_224, %c0_225, %c0_226] : memref<49x8x4xbf16, #tpu.memory_space<vmem>>, vector<1x8x4xbf16>
    %192 = vector.shape_cast %191 : vector<1x8x4xbf16> to vector<8x4xbf16>
    %c0_227 = arith.constant 0 : index
    %c0_228 = arith.constant 0 : index
    %c69 = arith.constant 69 : index
    %193 = vector.load %arg3[%c0_227, %c0_228, %c69] : memref<1x4x640xbf16, #tpu.memory_space<vmem>>, vector<1x4x384xbf16>
    %194 = vector.shape_cast %193 : vector<1x4x384xbf16> to vector<4x384xbf16>
    %cst_229 = arith.constant dense<0.000000e+00> : vector<8x384xf32>
    %195 = tpu.matmul %192, %194, %cst_229 {dimension_numbers = #tpu.dot_dimension_numbers<[1], [0], [0], [1], [0, 0, 1, 1], [], []>} : vector<8x4xbf16>, vector<4x384xbf16>, vector<8x384xf32> -> vector<8x384xf32>
    %196 = arith.addf %190, %195 : vector<8x384xf32>
    %c0_230 = arith.constant 0 : index
    %c0_231 = arith.constant 0 : index
    %197 = vector.load %arg5[%c0_230, %c0_231] : memref<8x384xf32, #tpu.memory_space<vmem>>, vector<8x384xf32>
    tpu.vector_store %arg5[%c0_230, %c0_231], %196 {strides = array<i32>} : memref<8x384xf32, #tpu.memory_space<vmem>>, vector<8x384xf32>,
    %c0_232 = arith.constant 0 : index
    %c0_233 = arith.constant 0 : index
    %198 = vector.load %arg5[%c0_232, %c0_233] : memref<8x384xf32, #tpu.memory_space<vmem>>, vector<8x384xf32>
    %c25_234 = arith.constant 25 : index
    %c0_235 = arith.constant 0 : index
    %c0_236 = arith.constant 0 : index
    %199 = vector.load %arg1[%c25_234, %c0_235, %c0_236] : memref<49x8x4xbf16, #tpu.memory_space<vmem>>, vector<1x8x4xbf16>
    %200 = vector.shape_cast %199 : vector<1x8x4xbf16> to vector<8x4xbf16>
    %c0_237 = arith.constant 0 : index
    %c0_238 = arith.constant 0 : index
    %c70 = arith.constant 70 : index
    %201 = vector.load %arg3[%c0_237, %c0_238, %c70] : memref<1x4x640xbf16, #tpu.memory_space<vmem>>, vector<1x4x384xbf16>
    %202 = vector.shape_cast %201 : vector<1x4x384xbf16> to vector<4x384xbf16>
    %cst_239 = arith.constant dense<0.000000e+00> : vector<8x384xf32>
    %203 = tpu.matmul %200, %202, %cst_239 {dimension_numbers = #tpu.dot_dimension_numbers<[1], [0], [0], [1], [0, 0, 1, 1], [], []>} : vector<8x4xbf16>, vector<4x384xbf16>, vector<8x384xf32> -> vector<8x384xf32>
    %204 = arith.addf %198, %203 : vector<8x384xf32>
    %c0_240 = arith.constant 0 : index
    %c0_241 = arith.constant 0 : index
    %205 = vector.load %arg5[%c0_240, %c0_241] : memref<8x384xf32, #tpu.memory_space<vmem>>, vector<8x384xf32>
    tpu.vector_store %arg5[%c0_240, %c0_241], %204 {strides = array<i32>} : memref<8x384xf32, #tpu.memory_space<vmem>>, vector<8x384xf32>,
    %c0_242 = arith.constant 0 : index
    %c0_243 = arith.constant 0 : index
    %206 = vector.load %arg5[%c0_242, %c0_243] : memref<8x384xf32, #tpu.memory_space<vmem>>, vector<8x384xf32>
    %c26_244 = arith.constant 26 : index
    %c0_245 = arith.constant 0 : index
    %c0_246 = arith.constant 0 : index
    %207 = vector.load %arg1[%c26_244, %c0_245, %c0_246] : memref<49x8x4xbf16, #tpu.memory_space<vmem>>, vector<1x8x4xbf16>
    %208 = vector.shape_cast %207 : vector<1x8x4xbf16> to vector<8x4xbf16>
    %c0_247 = arith.constant 0 : index
    %c0_248 = arith.constant 0 : index
    %c71 = arith.constant 71 : index
    %209 = vector.load %arg3[%c0_247, %c0_248, %c71] : memref<1x4x640xbf16, #tpu.memory_space<vmem>>, vector<1x4x384xbf16>
    %210 = vector.shape_cast %209 : vector<1x4x384xbf16> to vector<4x384xbf16>
    %cst_249 = arith.constant dense<0.000000e+00> : vector<8x384xf32>
    %211 = tpu.matmul %208, %210, %cst_249 {dimension_numbers = #tpu.dot_dimension_numbers<[1], [0], [0], [1], [0, 0, 1, 1], [], []>} : vector<8x4xbf16>, vector<4x384xbf16>, vector<8x384xf32> -> vector<8x384xf32>
    %212 = arith.addf %206, %211 : vector<8x384xf32>
    %c0_250 = arith.constant 0 : index
    %c0_251 = arith.constant 0 : index
    %213 = vector.load %arg5[%c0_250, %c0_251] : memref<8x384xf32, #tpu.memory_space<vmem>>, vector<8x384xf32>
    tpu.vector_store %arg5[%c0_250, %c0_251], %212 {strides = array<i32>} : memref<8x384xf32, #tpu.memory_space<vmem>>, vector<8x384xf32>,
    %c0_252 = arith.constant 0 : index
    %c0_253 = arith.constant 0 : index
    %214 = vector.load %arg5[%c0_252, %c0_253] : memref<8x384xf32, #tpu.memory_space<vmem>>, vector<8x384xf32>
    %c27_254 = arith.constant 27 : index
    %c0_255 = arith.constant 0 : index
    %c0_256 = arith.constant 0 : index
    %215 = vector.load %arg1[%c27_254, %c0_255, %c0_256] : memref<49x8x4xbf16, #tpu.memory_space<vmem>>, vector<1x8x4xbf16>
    %216 = vector.shape_cast %215 : vector<1x8x4xbf16> to vector<8x4xbf16>
    %c0_257 = arith.constant 0 : index
    %c0_258 = arith.constant 0 : index
    %c72 = arith.constant 72 : index
    %217 = vector.load %arg3[%c0_257, %c0_258, %c72] : memref<1x4x640xbf16, #tpu.memory_space<vmem>>, vector<1x4x384xbf16>
    %218 = vector.shape_cast %217 : vector<1x4x384xbf16> to vector<4x384xbf16>
    %cst_259 = arith.constant dense<0.000000e+00> : vector<8x384xf32>
    %219 = tpu.matmul %216, %218, %cst_259 {dimension_numbers = #tpu.dot_dimension_numbers<[1], [0], [0], [1], [0, 0, 1, 1], [], []>} : vector<8x4xbf16>, vector<4x384xbf16>, vector<8x384xf32> -> vector<8x384xf32>
    %220 = arith.addf %214, %219 : vector<8x384xf32>
    %c0_260 = arith.constant 0 : index
    %c0_261 = arith.constant 0 : index
    %221 = vector.load %arg5[%c0_260, %c0_261] : memref<8x384xf32, #tpu.memory_space<vmem>>, vector<8x384xf32>
    tpu.vector_store %arg5[%c0_260, %c0_261], %220 {strides = array<i32>} : memref<8x384xf32, #tpu.memory_space<vmem>>, vector<8x384xf32>,
    %c0_262 = arith.constant 0 : index
    %c0_263 = arith.constant 0 : index
    %222 = vector.load %arg5[%c0_262, %c0_263] : memref<8x384xf32, #tpu.memory_space<vmem>>, vector<8x384xf32>
    %c28_264 = arith.constant 28 : index
    %c0_265 = arith.constant 0 : index
    %c0_266 = arith.constant 0 : index
    %223 = vector.load %arg1[%c28_264, %c0_265, %c0_266] : memref<49x8x4xbf16, #tpu.memory_space<vmem>>, vector<1x8x4xbf16>
    %224 = vector.shape_cast %223 : vector<1x8x4xbf16> to vector<8x4xbf16>
    %c0_267 = arith.constant 0 : index
    %c0_268 = arith.constant 0 : index
    %c88 = arith.constant 88 : index
    %225 = vector.load %arg3[%c0_267, %c0_268, %c88] : memref<1x4x640xbf16, #tpu.memory_space<vmem>>, vector<1x4x384xbf16>
    %226 = vector.shape_cast %225 : vector<1x4x384xbf16> to vector<4x384xbf16>
    %cst_269 = arith.constant dense<0.000000e+00> : vector<8x384xf32>
    %227 = tpu.matmul %224, %226, %cst_269 {dimension_numbers = #tpu.dot_dimension_numbers<[1], [0], [0], [1], [0, 0, 1, 1], [], []>} : vector<8x4xbf16>, vector<4x384xbf16>, vector<8x384xf32> -> vector<8x384xf32>
    %228 = arith.addf %222, %227 : vector<8x384xf32>
    %c0_270 = arith.constant 0 : index
    %c0_271 = arith.constant 0 : index
    %229 = vector.load %arg5[%c0_270, %c0_271] : memref<8x384xf32, #tpu.memory_space<vmem>>, vector<8x384xf32>
    tpu.vector_store %arg5[%c0_270, %c0_271], %228 {strides = array<i32>} : memref<8x384xf32, #tpu.memory_space<vmem>>, vector<8x384xf32>,
    %c0_272 = arith.constant 0 : index
    %c0_273 = arith.constant 0 : index
    %230 = vector.load %arg5[%c0_272, %c0_273] : memref<8x384xf32, #tpu.memory_space<vmem>>, vector<8x384xf32>
    %c29 = arith.constant 29 : index
    %c0_274 = arith.constant 0 : index
    %c0_275 = arith.constant 0 : index
    %231 = vector.load %arg1[%c29, %c0_274, %c0_275] : memref<49x8x4xbf16, #tpu.memory_space<vmem>>, vector<1x8x4xbf16>
    %232 = vector.shape_cast %231 : vector<1x8x4xbf16> to vector<8x4xbf16>
    %c0_276 = arith.constant 0 : index
    %c0_277 = arith.constant 0 : index
    %c89 = arith.constant 89 : index
    %233 = vector.load %arg3[%c0_276, %c0_277, %c89] : memref<1x4x640xbf16, #tpu.memory_space<vmem>>, vector<1x4x384xbf16>
    %234 = vector.shape_cast %233 : vector<1x4x384xbf16> to vector<4x384xbf16>
    %cst_278 = arith.constant dense<0.000000e+00> : vector<8x384xf32>
    %235 = tpu.matmul %232, %234, %cst_278 {dimension_numbers = #tpu.dot_dimension_numbers<[1], [0], [0], [1], [0, 0, 1, 1], [], []>} : vector<8x4xbf16>, vector<4x384xbf16>, vector<8x384xf32> -> vector<8x384xf32>
    %236 = arith.addf %230, %235 : vector<8x384xf32>
    %c0_279 = arith.constant 0 : index
    %c0_280 = arith.constant 0 : index
    %237 = vector.load %arg5[%c0_279, %c0_280] : memref<8x384xf32, #tpu.memory_space<vmem>>, vector<8x384xf32>
    tpu.vector_store %arg5[%c0_279, %c0_280], %236 {strides = array<i32>} : memref<8x384xf32, #tpu.memory_space<vmem>>, vector<8x384xf32>,
    %c0_281 = arith.constant 0 : index
    %c0_282 = arith.constant 0 : index
    %238 = vector.load %arg5[%c0_281, %c0_282] : memref<8x384xf32, #tpu.memory_space<vmem>>, vector<8x384xf32>
    %c30 = arith.constant 30 : index
    %c0_283 = arith.constant 0 : index
    %c0_284 = arith.constant 0 : index
    %239 = vector.load %arg1[%c30, %c0_283, %c0_284] : memref<49x8x4xbf16, #tpu.memory_space<vmem>>, vector<1x8x4xbf16>
    %240 = vector.shape_cast %239 : vector<1x8x4xbf16> to vector<8x4xbf16>
    %c0_285 = arith.constant 0 : index
    %c0_286 = arith.constant 0 : index
    %c90 = arith.constant 90 : index
    %241 = vector.load %arg3[%c0_285, %c0_286, %c90] : memref<1x4x640xbf16, #tpu.memory_space<vmem>>, vector<1x4x384xbf16>
    %242 = vector.shape_cast %241 : vector<1x4x384xbf16> to vector<4x384xbf16>
    %cst_287 = arith.constant dense<0.000000e+00> : vector<8x384xf32>
    %243 = tpu.matmul %240, %242, %cst_287 {dimension_numbers = #tpu.dot_dimension_numbers<[1], [0], [0], [1], [0, 0, 1, 1], [], []>} : vector<8x4xbf16>, vector<4x384xbf16>, vector<8x384xf32> -> vector<8x384xf32>
    %244 = arith.addf %238, %243 : vector<8x384xf32>
    %c0_288 = arith.constant 0 : index
    %c0_289 = arith.constant 0 : index
    %245 = vector.load %arg5[%c0_288, %c0_289] : memref<8x384xf32, #tpu.memory_space<vmem>>, vector<8x384xf32>
    tpu.vector_store %arg5[%c0_288, %c0_289], %244 {strides = array<i32>} : memref<8x384xf32, #tpu.memory_space<vmem>>, vector<8x384xf32>,
    %c0_290 = arith.constant 0 : index
    %c0_291 = arith.constant 0 : index
    %246 = vector.load %arg5[%c0_290, %c0_291] : memref<8x384xf32, #tpu.memory_space<vmem>>, vector<8x384xf32>
    %c31 = arith.constant 31 : index
    %c0_292 = arith.constant 0 : index
    %c0_293 = arith.constant 0 : index
    %247 = vector.load %arg1[%c31, %c0_292, %c0_293] : memref<49x8x4xbf16, #tpu.memory_space<vmem>>, vector<1x8x4xbf16>
    %248 = vector.shape_cast %247 : vector<1x8x4xbf16> to vector<8x4xbf16>
    %c0_294 = arith.constant 0 : index
    %c0_295 = arith.constant 0 : index
    %c91 = arith.constant 91 : index
    %249 = vector.load %arg3[%c0_294, %c0_295, %c91] : memref<1x4x640xbf16, #tpu.memory_space<vmem>>, vector<1x4x384xbf16>
    %250 = vector.shape_cast %249 : vector<1x4x384xbf16> to vector<4x384xbf16>
    %cst_296 = arith.constant dense<0.000000e+00> : vector<8x384xf32>
    %251 = tpu.matmul %248, %250, %cst_296 {dimension_numbers = #tpu.dot_dimension_numbers<[1], [0], [0], [1], [0, 0, 1, 1], [], []>} : vector<8x4xbf16>, vector<4x384xbf16>, vector<8x384xf32> -> vector<8x384xf32>
    %252 = arith.addf %246, %251 : vector<8x384xf32>
    %c0_297 = arith.constant 0 : index
    %c0_298 = arith.constant 0 : index
    %253 = vector.load %arg5[%c0_297, %c0_298] : memref<8x384xf32, #tpu.memory_space<vmem>>, vector<8x384xf32>
    tpu.vector_store %arg5[%c0_297, %c0_298], %252 {strides = array<i32>} : memref<8x384xf32, #tpu.memory_space<vmem>>, vector<8x384xf32>,
    %c0_299 = arith.constant 0 : index
    %c0_300 = arith.constant 0 : index
    %254 = vector.load %arg5[%c0_299, %c0_300] : memref<8x384xf32, #tpu.memory_space<vmem>>, vector<8x384xf32>
    %c32 = arith.constant 32 : index
    %c0_301 = arith.constant 0 : index
    %c0_302 = arith.constant 0 : index
    %255 = vector.load %arg1[%c32, %c0_301, %c0_302] : memref<49x8x4xbf16, #tpu.memory_space<vmem>>, vector<1x8x4xbf16>
    %256 = vector.shape_cast %255 : vector<1x8x4xbf16> to vector<8x4xbf16>
    %c0_303 = arith.constant 0 : index
    %c0_304 = arith.constant 0 : index
    %c92 = arith.constant 92 : index
    %257 = vector.load %arg3[%c0_303, %c0_304, %c92] : memref<1x4x640xbf16, #tpu.memory_space<vmem>>, vector<1x4x384xbf16>
    %258 = vector.shape_cast %257 : vector<1x4x384xbf16> to vector<4x384xbf16>
    %cst_305 = arith.constant dense<0.000000e+00> : vector<8x384xf32>
    %259 = tpu.matmul %256, %258, %cst_305 {dimension_numbers = #tpu.dot_dimension_numbers<[1], [0], [0], [1], [0, 0, 1, 1], [], []>} : vector<8x4xbf16>, vector<4x384xbf16>, vector<8x384xf32> -> vector<8x384xf32>
    %260 = arith.addf %254, %259 : vector<8x384xf32>
    %c0_306 = arith.constant 0 : index
    %c0_307 = arith.constant 0 : index
    %261 = vector.load %arg5[%c0_306, %c0_307] : memref<8x384xf32, #tpu.memory_space<vmem>>, vector<8x384xf32>
    tpu.vector_store %arg5[%c0_306, %c0_307], %260 {strides = array<i32>} : memref<8x384xf32, #tpu.memory_space<vmem>>, vector<8x384xf32>,
    %c0_308 = arith.constant 0 : index
    %c0_309 = arith.constant 0 : index
    %262 = vector.load %arg5[%c0_308, %c0_309] : memref<8x384xf32, #tpu.memory_space<vmem>>, vector<8x384xf32>
    %c33 = arith.constant 33 : index
    %c0_310 = arith.constant 0 : index
    %c0_311 = arith.constant 0 : index
    %263 = vector.load %arg1[%c33, %c0_310, %c0_311] : memref<49x8x4xbf16, #tpu.memory_space<vmem>>, vector<1x8x4xbf16>
    %264 = vector.shape_cast %263 : vector<1x8x4xbf16> to vector<8x4xbf16>
    %c0_312 = arith.constant 0 : index
    %c0_313 = arith.constant 0 : index
    %c93 = arith.constant 93 : index
    %265 = vector.load %arg3[%c0_312, %c0_313, %c93] : memref<1x4x640xbf16, #tpu.memory_space<vmem>>, vector<1x4x384xbf16>
    %266 = vector.shape_cast %265 : vector<1x4x384xbf16> to vector<4x384xbf16>
    %cst_314 = arith.constant dense<0.000000e+00> : vector<8x384xf32>
    %267 = tpu.matmul %264, %266, %cst_314 {dimension_numbers = #tpu.dot_dimension_numbers<[1], [0], [0], [1], [0, 0, 1, 1], [], []>} : vector<8x4xbf16>, vector<4x384xbf16>, vector<8x384xf32> -> vector<8x384xf32>
    %268 = arith.addf %262, %267 : vector<8x384xf32>
    %c0_315 = arith.constant 0 : index
    %c0_316 = arith.constant 0 : index
    %269 = vector.load %arg5[%c0_315, %c0_316] : memref<8x384xf32, #tpu.memory_space<vmem>>, vector<8x384xf32>
    tpu.vector_store %arg5[%c0_315, %c0_316], %268 {strides = array<i32>} : memref<8x384xf32, #tpu.memory_space<vmem>>, vector<8x384xf32>,
    %c0_317 = arith.constant 0 : index
    %c0_318 = arith.constant 0 : index
    %270 = vector.load %arg5[%c0_317, %c0_318] : memref<8x384xf32, #tpu.memory_space<vmem>>, vector<8x384xf32>
    %c34 = arith.constant 34 : index
    %c0_319 = arith.constant 0 : index
    %c0_320 = arith.constant 0 : index
    %271 = vector.load %arg1[%c34, %c0_319, %c0_320] : memref<49x8x4xbf16, #tpu.memory_space<vmem>>, vector<1x8x4xbf16>
    %272 = vector.shape_cast %271 : vector<1x8x4xbf16> to vector<8x4xbf16>
    %c0_321 = arith.constant 0 : index
    %c0_322 = arith.constant 0 : index
    %c94 = arith.constant 94 : index
    %273 = vector.load %arg3[%c0_321, %c0_322, %c94] : memref<1x4x640xbf16, #tpu.memory_space<vmem>>, vector<1x4x384xbf16>
    %274 = vector.shape_cast %273 : vector<1x4x384xbf16> to vector<4x384xbf16>
    %cst_323 = arith.constant dense<0.000000e+00> : vector<8x384xf32>
    %275 = tpu.matmul %272, %274, %cst_323 {dimension_numbers = #tpu.dot_dimension_numbers<[1], [0], [0], [1], [0, 0, 1, 1], [], []>} : vector<8x4xbf16>, vector<4x384xbf16>, vector<8x384xf32> -> vector<8x384xf32>
    %276 = arith.addf %270, %275 : vector<8x384xf32>
    %c0_324 = arith.constant 0 : index
    %c0_325 = arith.constant 0 : index
    %277 = vector.load %arg5[%c0_324, %c0_325] : memref<8x384xf32, #tpu.memory_space<vmem>>, vector<8x384xf32>
    tpu.vector_store %arg5[%c0_324, %c0_325], %276 {strides = array<i32>} : memref<8x384xf32, #tpu.memory_space<vmem>>, vector<8x384xf32>,
    %c0_326 = arith.constant 0 : index
    %c0_327 = arith.constant 0 : index
    %278 = vector.load %arg5[%c0_326, %c0_327] : memref<8x384xf32, #tpu.memory_space<vmem>>, vector<8x384xf32>
    %c35 = arith.constant 35 : index
    %c0_328 = arith.constant 0 : index
    %c0_329 = arith.constant 0 : index
    %279 = vector.load %arg1[%c35, %c0_328, %c0_329] : memref<49x8x4xbf16, #tpu.memory_space<vmem>>, vector<1x8x4xbf16>
    %280 = vector.shape_cast %279 : vector<1x8x4xbf16> to vector<8x4xbf16>
    %c0_330 = arith.constant 0 : index
    %c0_331 = arith.constant 0 : index
    %c110 = arith.constant 110 : index
    %281 = vector.load %arg3[%c0_330, %c0_331, %c110] : memref<1x4x640xbf16, #tpu.memory_space<vmem>>, vector<1x4x384xbf16>
    %282 = vector.shape_cast %281 : vector<1x4x384xbf16> to vector<4x384xbf16>
    %cst_332 = arith.constant dense<0.000000e+00> : vector<8x384xf32>
    %283 = tpu.matmul %280, %282, %cst_332 {dimension_numbers = #tpu.dot_dimension_numbers<[1], [0], [0], [1], [0, 0, 1, 1], [], []>} : vector<8x4xbf16>, vector<4x384xbf16>, vector<8x384xf32> -> vector<8x384xf32>
    %284 = arith.addf %278, %283 : vector<8x384xf32>
    %c0_333 = arith.constant 0 : index
    %c0_334 = arith.constant 0 : index
    %285 = vector.load %arg5[%c0_333, %c0_334] : memref<8x384xf32, #tpu.memory_space<vmem>>, vector<8x384xf32>
    tpu.vector_store %arg5[%c0_333, %c0_334], %284 {strides = array<i32>} : memref<8x384xf32, #tpu.memory_space<vmem>>, vector<8x384xf32>,
    %c0_335 = arith.constant 0 : index
    %c0_336 = arith.constant 0 : index
    %286 = vector.load %arg5[%c0_335, %c0_336] : memref<8x384xf32, #tpu.memory_space<vmem>>, vector<8x384xf32>
    %c36 = arith.constant 36 : index
    %c0_337 = arith.constant 0 : index
    %c0_338 = arith.constant 0 : index
    %287 = vector.load %arg1[%c36, %c0_337, %c0_338] : memref<49x8x4xbf16, #tpu.memory_space<vmem>>, vector<1x8x4xbf16>
    %288 = vector.shape_cast %287 : vector<1x8x4xbf16> to vector<8x4xbf16>
    %c0_339 = arith.constant 0 : index
    %c0_340 = arith.constant 0 : index
    %c111 = arith.constant 111 : index
    %289 = vector.load %arg3[%c0_339, %c0_340, %c111] : memref<1x4x640xbf16, #tpu.memory_space<vmem>>, vector<1x4x384xbf16>
    %290 = vector.shape_cast %289 : vector<1x4x384xbf16> to vector<4x384xbf16>
    %cst_341 = arith.constant dense<0.000000e+00> : vector<8x384xf32>
    %291 = tpu.matmul %288, %290, %cst_341 {dimension_numbers = #tpu.dot_dimension_numbers<[1], [0], [0], [1], [0, 0, 1, 1], [], []>} : vector<8x4xbf16>, vector<4x384xbf16>, vector<8x384xf32> -> vector<8x384xf32>
    %292 = arith.addf %286, %291 : vector<8x384xf32>
    %c0_342 = arith.constant 0 : index
    %c0_343 = arith.constant 0 : index
    %293 = vector.load %arg5[%c0_342, %c0_343] : memref<8x384xf32, #tpu.memory_space<vmem>>, vector<8x384xf32>
    tpu.vector_store %arg5[%c0_342, %c0_343], %292 {strides = array<i32>} : memref<8x384xf32, #tpu.memory_space<vmem>>, vector<8x384xf32>,
    %c0_344 = arith.constant 0 : index
    %c0_345 = arith.constant 0 : index
    %294 = vector.load %arg5[%c0_344, %c0_345] : memref<8x384xf32, #tpu.memory_space<vmem>>, vector<8x384xf32>
    %c37 = arith.constant 37 : index
    %c0_346 = arith.constant 0 : index
    %c0_347 = arith.constant 0 : index
    %295 = vector.load %arg1[%c37, %c0_346, %c0_347] : memref<49x8x4xbf16, #tpu.memory_space<vmem>>, vector<1x8x4xbf16>
    %296 = vector.shape_cast %295 : vector<1x8x4xbf16> to vector<8x4xbf16>
    %c0_348 = arith.constant 0 : index
    %c0_349 = arith.constant 0 : index
    %c112 = arith.constant 112 : index
    %297 = vector.load %arg3[%c0_348, %c0_349, %c112] : memref<1x4x640xbf16, #tpu.memory_space<vmem>>, vector<1x4x384xbf16>
    %298 = vector.shape_cast %297 : vector<1x4x384xbf16> to vector<4x384xbf16>
    %cst_350 = arith.constant dense<0.000000e+00> : vector<8x384xf32>
    %299 = tpu.matmul %296, %298, %cst_350 {dimension_numbers = #tpu.dot_dimension_numbers<[1], [0], [0], [1], [0, 0, 1, 1], [], []>} : vector<8x4xbf16>, vector<4x384xbf16>, vector<8x384xf32> -> vector<8x384xf32>
    %300 = arith.addf %294, %299 : vector<8x384xf32>
    %c0_351 = arith.constant 0 : index
    %c0_352 = arith.constant 0 : index
    %301 = vector.load %arg5[%c0_351, %c0_352] : memref<8x384xf32, #tpu.memory_space<vmem>>, vector<8x384xf32>
    tpu.vector_store %arg5[%c0_351, %c0_352], %300 {strides = array<i32>} : memref<8x384xf32, #tpu.memory_space<vmem>>, vector<8x384xf32>,
    %c0_353 = arith.constant 0 : index
    %c0_354 = arith.constant 0 : index
    %302 = vector.load %arg5[%c0_353, %c0_354] : memref<8x384xf32, #tpu.memory_space<vmem>>, vector<8x384xf32>
    %c38 = arith.constant 38 : index
    %c0_355 = arith.constant 0 : index
    %c0_356 = arith.constant 0 : index
    %303 = vector.load %arg1[%c38, %c0_355, %c0_356] : memref<49x8x4xbf16, #tpu.memory_space<vmem>>, vector<1x8x4xbf16>
    %304 = vector.shape_cast %303 : vector<1x8x4xbf16> to vector<8x4xbf16>
    %c0_357 = arith.constant 0 : index
    %c0_358 = arith.constant 0 : index
    %c113 = arith.constant 113 : index
    %305 = vector.load %arg3[%c0_357, %c0_358, %c113] : memref<1x4x640xbf16, #tpu.memory_space<vmem>>, vector<1x4x384xbf16>
    %306 = vector.shape_cast %305 : vector<1x4x384xbf16> to vector<4x384xbf16>
    %cst_359 = arith.constant dense<0.000000e+00> : vector<8x384xf32>
    %307 = tpu.matmul %304, %306, %cst_359 {dimension_numbers = #tpu.dot_dimension_numbers<[1], [0], [0], [1], [0, 0, 1, 1], [], []>} : vector<8x4xbf16>, vector<4x384xbf16>, vector<8x384xf32> -> vector<8x384xf32>
    %308 = arith.addf %302, %307 : vector<8x384xf32>
    %c0_360 = arith.constant 0 : index
    %c0_361 = arith.constant 0 : index
    %309 = vector.load %arg5[%c0_360, %c0_361] : memref<8x384xf32, #tpu.memory_space<vmem>>, vector<8x384xf32>
    tpu.vector_store %arg5[%c0_360, %c0_361], %308 {strides = array<i32>} : memref<8x384xf32, #tpu.memory_space<vmem>>, vector<8x384xf32>,
    %c0_362 = arith.constant 0 : index
    %c0_363 = arith.constant 0 : index
    %310 = vector.load %arg5[%c0_362, %c0_363] : memref<8x384xf32, #tpu.memory_space<vmem>>, vector<8x384xf32>
    %c39 = arith.constant 39 : index
    %c0_364 = arith.constant 0 : index
    %c0_365 = arith.constant 0 : index
    %311 = vector.load %arg1[%c39, %c0_364, %c0_365] : memref<49x8x4xbf16, #tpu.memory_space<vmem>>, vector<1x8x4xbf16>
    %312 = vector.shape_cast %311 : vector<1x8x4xbf16> to vector<8x4xbf16>
    %c0_366 = arith.constant 0 : index
    %c0_367 = arith.constant 0 : index
    %c114 = arith.constant 114 : index
    %313 = vector.load %arg3[%c0_366, %c0_367, %c114] : memref<1x4x640xbf16, #tpu.memory_space<vmem>>, vector<1x4x384xbf16>
    %314 = vector.shape_cast %313 : vector<1x4x384xbf16> to vector<4x384xbf16>
    %cst_368 = arith.constant dense<0.000000e+00> : vector<8x384xf32>
    %315 = tpu.matmul %312, %314, %cst_368 {dimension_numbers = #tpu.dot_dimension_numbers<[1], [0], [0], [1], [0, 0, 1, 1], [], []>} : vector<8x4xbf16>, vector<4x384xbf16>, vector<8x384xf32> -> vector<8x384xf32>
    %316 = arith.addf %310, %315 : vector<8x384xf32>
    %c0_369 = arith.constant 0 : index
    %c0_370 = arith.constant 0 : index
    %317 = vector.load %arg5[%c0_369, %c0_370] : memref<8x384xf32, #tpu.memory_space<vmem>>, vector<8x384xf32>
    tpu.vector_store %arg5[%c0_369, %c0_370], %316 {strides = array<i32>} : memref<8x384xf32, #tpu.memory_space<vmem>>, vector<8x384xf32>,
    %c0_371 = arith.constant 0 : index
    %c0_372 = arith.constant 0 : index
    %318 = vector.load %arg5[%c0_371, %c0_372] : memref<8x384xf32, #tpu.memory_space<vmem>>, vector<8x384xf32>
    %c40 = arith.constant 40 : index
    %c0_373 = arith.constant 0 : index
    %c0_374 = arith.constant 0 : index
    %319 = vector.load %arg1[%c40, %c0_373, %c0_374] : memref<49x8x4xbf16, #tpu.memory_space<vmem>>, vector<1x8x4xbf16>
    %320 = vector.shape_cast %319 : vector<1x8x4xbf16> to vector<8x4xbf16>
    %c0_375 = arith.constant 0 : index
    %c0_376 = arith.constant 0 : index
    %c115 = arith.constant 115 : index
    %321 = vector.load %arg3[%c0_375, %c0_376, %c115] : memref<1x4x640xbf16, #tpu.memory_space<vmem>>, vector<1x4x384xbf16>
    %322 = vector.shape_cast %321 : vector<1x4x384xbf16> to vector<4x384xbf16>
    %cst_377 = arith.constant dense<0.000000e+00> : vector<8x384xf32>
    %323 = tpu.matmul %320, %322, %cst_377 {dimension_numbers = #tpu.dot_dimension_numbers<[1], [0], [0], [1], [0, 0, 1, 1], [], []>} : vector<8x4xbf16>, vector<4x384xbf16>, vector<8x384xf32> -> vector<8x384xf32>
    %324 = arith.addf %318, %323 : vector<8x384xf32>
    %c0_378 = arith.constant 0 : index
    %c0_379 = arith.constant 0 : index
    %325 = vector.load %arg5[%c0_378, %c0_379] : memref<8x384xf32, #tpu.memory_space<vmem>>, vector<8x384xf32>
    tpu.vector_store %arg5[%c0_378, %c0_379], %324 {strides = array<i32>} : memref<8x384xf32, #tpu.memory_space<vmem>>, vector<8x384xf32>,
    %c0_380 = arith.constant 0 : index
    %c0_381 = arith.constant 0 : index
    %326 = vector.load %arg5[%c0_380, %c0_381] : memref<8x384xf32, #tpu.memory_space<vmem>>, vector<8x384xf32>
    %c41 = arith.constant 41 : index
    %c0_382 = arith.constant 0 : index
    %c0_383 = arith.constant 0 : index
    %327 = vector.load %arg1[%c41, %c0_382, %c0_383] : memref<49x8x4xbf16, #tpu.memory_space<vmem>>, vector<1x8x4xbf16>
    %328 = vector.shape_cast %327 : vector<1x8x4xbf16> to vector<8x4xbf16>
    %c0_384 = arith.constant 0 : index
    %c0_385 = arith.constant 0 : index
    %c116 = arith.constant 116 : index
    %329 = vector.load %arg3[%c0_384, %c0_385, %c116] : memref<1x4x640xbf16, #tpu.memory_space<vmem>>, vector<1x4x384xbf16>
    %330 = vector.shape_cast %329 : vector<1x4x384xbf16> to vector<4x384xbf16>
    %cst_386 = arith.constant dense<0.000000e+00> : vector<8x384xf32>
    %331 = tpu.matmul %328, %330, %cst_386 {dimension_numbers = #tpu.dot_dimension_numbers<[1], [0], [0], [1], [0, 0, 1, 1], [], []>} : vector<8x4xbf16>, vector<4x384xbf16>, vector<8x384xf32> -> vector<8x384xf32>
    %332 = arith.addf %326, %331 : vector<8x384xf32>
    %c0_387 = arith.constant 0 : index
    %c0_388 = arith.constant 0 : index
    %333 = vector.load %arg5[%c0_387, %c0_388] : memref<8x384xf32, #tpu.memory_space<vmem>>, vector<8x384xf32>
    tpu.vector_store %arg5[%c0_387, %c0_388], %332 {strides = array<i32>} : memref<8x384xf32, #tpu.memory_space<vmem>>, vector<8x384xf32>,
    %c0_389 = arith.constant 0 : index
    %c0_390 = arith.constant 0 : index
    %334 = vector.load %arg5[%c0_389, %c0_390] : memref<8x384xf32, #tpu.memory_space<vmem>>, vector<8x384xf32>
    %c42 = arith.constant 42 : index
    %c0_391 = arith.constant 0 : index
    %c0_392 = arith.constant 0 : index
    %335 = vector.load %arg1[%c42, %c0_391, %c0_392] : memref<49x8x4xbf16, #tpu.memory_space<vmem>>, vector<1x8x4xbf16>
    %336 = vector.shape_cast %335 : vector<1x8x4xbf16> to vector<8x4xbf16>
    %c0_393 = arith.constant 0 : index
    %c0_394 = arith.constant 0 : index
    %c132 = arith.constant 132 : index
    %337 = vector.load %arg3[%c0_393, %c0_394, %c132] : memref<1x4x640xbf16, #tpu.memory_space<vmem>>, vector<1x4x384xbf16>
    %338 = vector.shape_cast %337 : vector<1x4x384xbf16> to vector<4x384xbf16>
    %cst_395 = arith.constant dense<0.000000e+00> : vector<8x384xf32>
    %339 = tpu.matmul %336, %338, %cst_395 {dimension_numbers = #tpu.dot_dimension_numbers<[1], [0], [0], [1], [0, 0, 1, 1], [], []>} : vector<8x4xbf16>, vector<4x384xbf16>, vector<8x384xf32> -> vector<8x384xf32>
    %340 = arith.addf %334, %339 : vector<8x384xf32>
    %c0_396 = arith.constant 0 : index
    %c0_397 = arith.constant 0 : index
    %341 = vector.load %arg5[%c0_396, %c0_397] : memref<8x384xf32, #tpu.memory_space<vmem>>, vector<8x384xf32>
    tpu.vector_store %arg5[%c0_396, %c0_397], %340 {strides = array<i32>} : memref<8x384xf32, #tpu.memory_space<vmem>>, vector<8x384xf32>,
    %c0_398 = arith.constant 0 : index
    %c0_399 = arith.constant 0 : index
    %342 = vector.load %arg5[%c0_398, %c0_399] : memref<8x384xf32, #tpu.memory_space<vmem>>, vector<8x384xf32>
    %c43 = arith.constant 43 : index
    %c0_400 = arith.constant 0 : index
    %c0_401 = arith.constant 0 : index
    %343 = vector.load %arg1[%c43, %c0_400, %c0_401] : memref<49x8x4xbf16, #tpu.memory_space<vmem>>, vector<1x8x4xbf16>
    %344 = vector.shape_cast %343 : vector<1x8x4xbf16> to vector<8x4xbf16>
    %c0_402 = arith.constant 0 : index
    %c0_403 = arith.constant 0 : index
    %c133 = arith.constant 133 : index
    %345 = vector.load %arg3[%c0_402, %c0_403, %c133] : memref<1x4x640xbf16, #tpu.memory_space<vmem>>, vector<1x4x384xbf16>
    %346 = vector.shape_cast %345 : vector<1x4x384xbf16> to vector<4x384xbf16>
    %cst_404 = arith.constant dense<0.000000e+00> : vector<8x384xf32>
    %347 = tpu.matmul %344, %346, %cst_404 {dimension_numbers = #tpu.dot_dimension_numbers<[1], [0], [0], [1], [0, 0, 1, 1], [], []>} : vector<8x4xbf16>, vector<4x384xbf16>, vector<8x384xf32> -> vector<8x384xf32>
    %348 = arith.addf %342, %347 : vector<8x384xf32>
    %c0_405 = arith.constant 0 : index
    %c0_406 = arith.constant 0 : index
    %349 = vector.load %arg5[%c0_405, %c0_406] : memref<8x384xf32, #tpu.memory_space<vmem>>, vector<8x384xf32>
    tpu.vector_store %arg5[%c0_405, %c0_406], %348 {strides = array<i32>} : memref<8x384xf32, #tpu.memory_space<vmem>>, vector<8x384xf32>,
    %c0_407 = arith.constant 0 : index
    %c0_408 = arith.constant 0 : index
    %350 = vector.load %arg5[%c0_407, %c0_408] : memref<8x384xf32, #tpu.memory_space<vmem>>, vector<8x384xf32>
    %c44_409 = arith.constant 44 : index
    %c0_410 = arith.constant 0 : index
    %c0_411 = arith.constant 0 : index
    %351 = vector.load %arg1[%c44_409, %c0_410, %c0_411] : memref<49x8x4xbf16, #tpu.memory_space<vmem>>, vector<1x8x4xbf16>
    %352 = vector.shape_cast %351 : vector<1x8x4xbf16> to vector<8x4xbf16>
    %c0_412 = arith.constant 0 : index
    %c0_413 = arith.constant 0 : index
    %c134 = arith.constant 134 : index
    %353 = vector.load %arg3[%c0_412, %c0_413, %c134] : memref<1x4x640xbf16, #tpu.memory_space<vmem>>, vector<1x4x384xbf16>
    %354 = vector.shape_cast %353 : vector<1x4x384xbf16> to vector<4x384xbf16>
    %cst_414 = arith.constant dense<0.000000e+00> : vector<8x384xf32>
    %355 = tpu.matmul %352, %354, %cst_414 {dimension_numbers = #tpu.dot_dimension_numbers<[1], [0], [0], [1], [0, 0, 1, 1], [], []>} : vector<8x4xbf16>, vector<4x384xbf16>, vector<8x384xf32> -> vector<8x384xf32>
    %356 = arith.addf %350, %355 : vector<8x384xf32>
    %c0_415 = arith.constant 0 : index
    %c0_416 = arith.constant 0 : index
    %357 = vector.load %arg5[%c0_415, %c0_416] : memref<8x384xf32, #tpu.memory_space<vmem>>, vector<8x384xf32>
    tpu.vector_store %arg5[%c0_415, %c0_416], %356 {strides = array<i32>} : memref<8x384xf32, #tpu.memory_space<vmem>>, vector<8x384xf32>,
    %c0_417 = arith.constant 0 : index
    %c0_418 = arith.constant 0 : index
    %358 = vector.load %arg5[%c0_417, %c0_418] : memref<8x384xf32, #tpu.memory_space<vmem>>, vector<8x384xf32>
    %c45_419 = arith.constant 45 : index
    %c0_420 = arith.constant 0 : index
    %c0_421 = arith.constant 0 : index
    %359 = vector.load %arg1[%c45_419, %c0_420, %c0_421] : memref<49x8x4xbf16, #tpu.memory_space<vmem>>, vector<1x8x4xbf16>
    %360 = vector.shape_cast %359 : vector<1x8x4xbf16> to vector<8x4xbf16>
    %c0_422 = arith.constant 0 : index
    %c0_423 = arith.constant 0 : index
    %c135 = arith.constant 135 : index
    %361 = vector.load %arg3[%c0_422, %c0_423, %c135] : memref<1x4x640xbf16, #tpu.memory_space<vmem>>, vector<1x4x384xbf16>
    %362 = vector.shape_cast %361 : vector<1x4x384xbf16> to vector<4x384xbf16>
    %cst_424 = arith.constant dense<0.000000e+00> : vector<8x384xf32>
    %363 = tpu.matmul %360, %362, %cst_424 {dimension_numbers = #tpu.dot_dimension_numbers<[1], [0], [0], [1], [0, 0, 1, 1], [], []>} : vector<8x4xbf16>, vector<4x384xbf16>, vector<8x384xf32> -> vector<8x384xf32>
    %364 = arith.addf %358, %363 : vector<8x384xf32>
    %c0_425 = arith.constant 0 : index
    %c0_426 = arith.constant 0 : index
    %365 = vector.load %arg5[%c0_425, %c0_426] : memref<8x384xf32, #tpu.memory_space<vmem>>, vector<8x384xf32>
    tpu.vector_store %arg5[%c0_425, %c0_426], %364 {strides = array<i32>} : memref<8x384xf32, #tpu.memory_space<vmem>>, vector<8x384xf32>,
    %c0_427 = arith.constant 0 : index
    %c0_428 = arith.constant 0 : index
    %366 = vector.load %arg5[%c0_427, %c0_428] : memref<8x384xf32, #tpu.memory_space<vmem>>, vector<8x384xf32>
    %c46_429 = arith.constant 46 : index
    %c0_430 = arith.constant 0 : index
    %c0_431 = arith.constant 0 : index
    %367 = vector.load %arg1[%c46_429, %c0_430, %c0_431] : memref<49x8x4xbf16, #tpu.memory_space<vmem>>, vector<1x8x4xbf16>
    %368 = vector.shape_cast %367 : vector<1x8x4xbf16> to vector<8x4xbf16>
    %c0_432 = arith.constant 0 : index
    %c0_433 = arith.constant 0 : index
    %c136 = arith.constant 136 : index
    %369 = vector.load %arg3[%c0_432, %c0_433, %c136] : memref<1x4x640xbf16, #tpu.memory_space<vmem>>, vector<1x4x384xbf16>
    %370 = vector.shape_cast %369 : vector<1x4x384xbf16> to vector<4x384xbf16>
    %cst_434 = arith.constant dense<0.000000e+00> : vector<8x384xf32>
    %371 = tpu.matmul %368, %370, %cst_434 {dimension_numbers = #tpu.dot_dimension_numbers<[1], [0], [0], [1], [0, 0, 1, 1], [], []>} : vector<8x4xbf16>, vector<4x384xbf16>, vector<8x384xf32> -> vector<8x384xf32>
    %372 = arith.addf %366, %371 : vector<8x384xf32>
    %c0_435 = arith.constant 0 : index
    %c0_436 = arith.constant 0 : index
    %373 = vector.load %arg5[%c0_435, %c0_436] : memref<8x384xf32, #tpu.memory_space<vmem>>, vector<8x384xf32>
    tpu.vector_store %arg5[%c0_435, %c0_436], %372 {strides = array<i32>} : memref<8x384xf32, #tpu.memory_space<vmem>>, vector<8x384xf32>,
    %c0_437 = arith.constant 0 : index
    %c0_438 = arith.constant 0 : index
    %374 = vector.load %arg5[%c0_437, %c0_438] : memref<8x384xf32, #tpu.memory_space<vmem>>, vector<8x384xf32>
    %c47_439 = arith.constant 47 : index
    %c0_440 = arith.constant 0 : index
    %c0_441 = arith.constant 0 : index
    %375 = vector.load %arg1[%c47_439, %c0_440, %c0_441] : memref<49x8x4xbf16, #tpu.memory_space<vmem>>, vector<1x8x4xbf16>
    %376 = vector.shape_cast %375 : vector<1x8x4xbf16> to vector<8x4xbf16>
    %c0_442 = arith.constant 0 : index
    %c0_443 = arith.constant 0 : index
    %c137 = arith.constant 137 : index
    %377 = vector.load %arg3[%c0_442, %c0_443, %c137] : memref<1x4x640xbf16, #tpu.memory_space<vmem>>, vector<1x4x384xbf16>
    %378 = vector.shape_cast %377 : vector<1x4x384xbf16> to vector<4x384xbf16>
    %cst_444 = arith.constant dense<0.000000e+00> : vector<8x384xf32>
    %379 = tpu.matmul %376, %378, %cst_444 {dimension_numbers = #tpu.dot_dimension_numbers<[1], [0], [0], [1], [0, 0, 1, 1], [], []>} : vector<8x4xbf16>, vector<4x384xbf16>, vector<8x384xf32> -> vector<8x384xf32>
    %380 = arith.addf %374, %379 : vector<8x384xf32>
    %c0_445 = arith.constant 0 : index
    %c0_446 = arith.constant 0 : index
    %381 = vector.load %arg5[%c0_445, %c0_446] : memref<8x384xf32, #tpu.memory_space<vmem>>, vector<8x384xf32>
    tpu.vector_store %arg5[%c0_445, %c0_446], %380 {strides = array<i32>} : memref<8x384xf32, #tpu.memory_space<vmem>>, vector<8x384xf32>,
    %c0_447 = arith.constant 0 : index
    %c0_448 = arith.constant 0 : index
    %382 = vector.load %arg5[%c0_447, %c0_448] : memref<8x384xf32, #tpu.memory_space<vmem>>, vector<8x384xf32>
    %c48_449 = arith.constant 48 : index
    %c0_450 = arith.constant 0 : index
    %c0_451 = arith.constant 0 : index
    %383 = vector.load %arg1[%c48_449, %c0_450, %c0_451] : memref<49x8x4xbf16, #tpu.memory_space<vmem>>, vector<1x8x4xbf16>
    %384 = vector.shape_cast %383 : vector<1x8x4xbf16> to vector<8x4xbf16>
    %c0_452 = arith.constant 0 : index
    %c0_453 = arith.constant 0 : index
    %c138 = arith.constant 138 : index
    %385 = vector.load %arg3[%c0_452, %c0_453, %c138] : memref<1x4x640xbf16, #tpu.memory_space<vmem>>, vector<1x4x384xbf16>
    %386 = vector.shape_cast %385 : vector<1x4x384xbf16> to vector<4x384xbf16>
    %cst_454 = arith.constant dense<0.000000e+00> : vector<8x384xf32>
    %387 = tpu.matmul %384, %386, %cst_454 {dimension_numbers = #tpu.dot_dimension_numbers<[1], [0], [0], [1], [0, 0, 1, 1], [], []>} : vector<8x4xbf16>, vector<4x384xbf16>, vector<8x384xf32> -> vector<8x384xf32>
    %388 = arith.addf %382, %387 : vector<8x384xf32>
    %c0_455 = arith.constant 0 : index
    %c0_456 = arith.constant 0 : index
    %389 = vector.load %arg5[%c0_455, %c0_456] : memref<8x384xf32, #tpu.memory_space<vmem>>, vector<8x384xf32>
    tpu.vector_store %arg5[%c0_455, %c0_456], %388 {strides = array<i32>} : memref<8x384xf32, #tpu.memory_space<vmem>>, vector<8x384xf32>,
    %c0_457 = arith.constant 0 : index
    %c0_458 = arith.constant 0 : index
    %390 = vector.load %arg5[%c0_457, %c0_458] : memref<8x384xf32, #tpu.memory_space<vmem>>, vector<8x384xf32>
    %c0_459 = arith.constant 0 : index
    %c0_460 = arith.constant 0 : index
    %391 = vector.load %arg2[%c0_459, %c0_460] : memref<8x1xf32, #tpu.memory_space<vmem>>, vector<8x1xf32>
    %392 = vector.broadcast %391 : vector<8x1xf32> to vector<8x384xf32>
    %393 = arith.addf %390, %392 : vector<8x384xf32>
    %cst_461 = arith.constant 0.000000e+00 : f32
    %394 = vector.broadcast %cst_461 : f32 to vector<8x384xf32>
    %395 = arith.cmpf ogt, %393, %394 : vector<8x384xf32>
    %cst_462 = arith.constant 0.000000e+00 : f32
    %396 = vector.broadcast %cst_462 : f32 to vector<8x384xf32>
    %397 = arith.mulf %396, %393 : vector<8x384xf32>
    %398 = arith.select %395, %393, %397 : vector<8x384xi1>, vector<8x384xf32>
    %399 = arith.truncf %398 : vector<8x384xf32> to vector<8x384xbf16>
    %c0_463 = arith.constant 0 : index
    %c0_464 = arith.constant 0 : index
    %c0_465 = arith.constant 0 : index
    %400 = vector.load %arg4[%c0_463, %c0_464, %c0_465] : memref<1x8x384xbf16, #tpu.memory_space<vmem>>, vector<1x8x384xbf16>
    %401 = vector.shape_cast %400 : vector<1x8x384xbf16> to vector<8x384xbf16>
    %402 = vector.shape_cast %399 : vector<8x384xbf16> to vector<1x8x384xbf16>
    tpu.vector_store %arg4[%c0_463, %c0_464, %c0_465], %402 {strides = array<i32>} : memref<1x8x384xbf16, #tpu.memory_space<vmem>>, vector<1x8x384xbf16>,
    return
  }
  func.func @transform_0(%arg0: i32) -> (i32, i32, i32) {
    %c0_i32 = arith.constant 0 : i32
    %c0_i32_0 = arith.constant 0 : i32
    %c0_i32_1 = arith.constant 0 : i32
    %c0_i32_2 = arith.constant 0 : i32
    return %c0_i32, %c0_i32_0, %c0_i32_1 : i32, i32, i32
  }
  func.func @transform_1(%arg0: i32) -> (i32, i32) {
    %c0_i32 = arith.constant 0 : i32
    %c0_i32_0 = arith.constant 0 : i32
    %c0_i32_1 = arith.constant 0 : i32
    return %c0_i32, %c0_i32_0 : i32, i32
  }
  func.func @transform_2(%arg0: i32) -> (i32, i32, i32) {
    %c0_i32 = arith.constant 0 : i32
    %c0_i32_0 = arith.constant 0 : i32
    %c0_i32_1 = arith.constant 0 : i32
    return %arg0, %c0_i32, %c0_i32_0 : i32, i32, i32
  }
  func.func @transform_3(%arg0: i32) -> (i32, i32, i32) {
    %c0_i32 = arith.constant 0 : i32
    %c0_i32_0 = arith.constant 0 : i32
    %c0_i32_1 = arith.constant 0 : i32
    return %arg0, %c0_i32, %c0_i32_0 : i32, i32, i32
  }
}

module attributes {stable_mosaic.version = 11 : i64} {
  func.func @_conv_bn_act_kernel(%arg0: i32, %arg1: memref<4x16x32xbf16, #tpu.memory_space<vmem>>, %arg2: memref<16x1xf32, #tpu.memory_space<vmem>>, %arg3: memref<1x32x256xbf16, #tpu.memory_space<vmem>>, %arg4: memref<1x16x128xbf16, #tpu.memory_space<vmem>>, %arg5: memref<16x128xf32, #tpu.memory_space<vmem>>) attributes {dimension_semantics = [#tpu.dimension_semantics<parallel>], iteration_bounds = array<i64: 2>, scalar_prefetch = 0 : i64, scratch_operands = 1 : i64, tpu.core_type = #tpu.core_type<tc>, window_params = [{pipeline_mode = #tpu.pipeline_mode<synchronous>, transform_indices = @transform_0, window_bounds = array<i64: 4, 16, 32>}, {pipeline_mode = #tpu.pipeline_mode<synchronous>, transform_indices = @transform_1, window_bounds = array<i64: 16, 1>}, {transform_indices = @transform_2, window_bounds = array<i64: 1, 32, 256>}, {transform_indices = @transform_3, window_bounds = array<i64: 1, 16, 128>}]} {
    %c0 = arith.constant 0 : index
    %c0_0 = arith.constant 0 : index
    %c0_1 = arith.constant 0 : index
    %0 = vector.load %arg1[%c0, %c0_0, %c0_1] : memref<4x16x32xbf16, #tpu.memory_space<vmem>>, vector<1x16x32xbf16>
    %1 = vector.shape_cast %0 : vector<1x16x32xbf16> to vector<16x32xbf16>
    %c0_2 = arith.constant 0 : index
    %c0_3 = arith.constant 0 : index
    %c0_4 = arith.constant 0 : index
    %2 = vector.load %arg3[%c0_2, %c0_3, %c0_4] : memref<1x32x256xbf16, #tpu.memory_space<vmem>>, vector<1x32x128xbf16>
    %3 = vector.shape_cast %2 : vector<1x32x128xbf16> to vector<32x128xbf16>
    %cst = arith.constant dense<0.000000e+00> : vector<16x128xf32>
    %4 = tpu.matmul %1, %3, %cst {dimension_numbers = #tpu.dot_dimension_numbers<[1], [0], [0], [1], [0, 0, 1, 1], [], []>} : vector<16x32xbf16>, vector<32x128xbf16>, vector<16x128xf32> -> vector<16x128xf32>
    %c0_5 = arith.constant 0 : index
    %c0_6 = arith.constant 0 : index
    %5 = vector.load %arg5[%c0_5, %c0_6] : memref<16x128xf32, #tpu.memory_space<vmem>>, vector<16x128xf32>
    tpu.vector_store %arg5[%c0_5, %c0_6], %4 {strides = array<i32>} : memref<16x128xf32, #tpu.memory_space<vmem>>, vector<16x128xf32>,
    %c0_7 = arith.constant 0 : index
    %c0_8 = arith.constant 0 : index
    %6 = vector.load %arg5[%c0_7, %c0_8] : memref<16x128xf32, #tpu.memory_space<vmem>>, vector<16x128xf32>
    %c1 = arith.constant 1 : index
    %c0_9 = arith.constant 0 : index
    %c0_10 = arith.constant 0 : index
    %7 = vector.load %arg1[%c1, %c0_9, %c0_10] : memref<4x16x32xbf16, #tpu.memory_space<vmem>>, vector<1x16x32xbf16>
    %8 = vector.shape_cast %7 : vector<1x16x32xbf16> to vector<16x32xbf16>
    %c0_11 = arith.constant 0 : index
    %c0_12 = arith.constant 0 : index
    %c1_13 = arith.constant 1 : index
    %9 = vector.load %arg3[%c0_11, %c0_12, %c1_13] : memref<1x32x256xbf16, #tpu.memory_space<vmem>>, vector<1x32x128xbf16>
    %10 = vector.shape_cast %9 : vector<1x32x128xbf16> to vector<32x128xbf16>
    %cst_14 = arith.constant dense<0.000000e+00> : vector<16x128xf32>
    %11 = tpu.matmul %8, %10, %cst_14 {dimension_numbers = #tpu.dot_dimension_numbers<[1], [0], [0], [1], [0, 0, 1, 1], [], []>} : vector<16x32xbf16>, vector<32x128xbf16>, vector<16x128xf32> -> vector<16x128xf32>
    %12 = arith.addf %6, %11 : vector<16x128xf32>
    %c0_15 = arith.constant 0 : index
    %c0_16 = arith.constant 0 : index
    %13 = vector.load %arg5[%c0_15, %c0_16] : memref<16x128xf32, #tpu.memory_space<vmem>>, vector<16x128xf32>
    tpu.vector_store %arg5[%c0_15, %c0_16], %12 {strides = array<i32>} : memref<16x128xf32, #tpu.memory_space<vmem>>, vector<16x128xf32>,
    %c0_17 = arith.constant 0 : index
    %c0_18 = arith.constant 0 : index
    %14 = vector.load %arg5[%c0_17, %c0_18] : memref<16x128xf32, #tpu.memory_space<vmem>>, vector<16x128xf32>
    %c2 = arith.constant 2 : index
    %c0_19 = arith.constant 0 : index
    %c0_20 = arith.constant 0 : index
    %15 = vector.load %arg1[%c2, %c0_19, %c0_20] : memref<4x16x32xbf16, #tpu.memory_space<vmem>>, vector<1x16x32xbf16>
    %16 = vector.shape_cast %15 : vector<1x16x32xbf16> to vector<16x32xbf16>
    %c0_21 = arith.constant 0 : index
    %c0_22 = arith.constant 0 : index
    %c9 = arith.constant 9 : index
    %17 = vector.load %arg3[%c0_21, %c0_22, %c9] : memref<1x32x256xbf16, #tpu.memory_space<vmem>>, vector<1x32x128xbf16>
    %18 = vector.shape_cast %17 : vector<1x32x128xbf16> to vector<32x128xbf16>
    %cst_23 = arith.constant dense<0.000000e+00> : vector<16x128xf32>
    %19 = tpu.matmul %16, %18, %cst_23 {dimension_numbers = #tpu.dot_dimension_numbers<[1], [0], [0], [1], [0, 0, 1, 1], [], []>} : vector<16x32xbf16>, vector<32x128xbf16>, vector<16x128xf32> -> vector<16x128xf32>
    %20 = arith.addf %14, %19 : vector<16x128xf32>
    %c0_24 = arith.constant 0 : index
    %c0_25 = arith.constant 0 : index
    %21 = vector.load %arg5[%c0_24, %c0_25] : memref<16x128xf32, #tpu.memory_space<vmem>>, vector<16x128xf32>
    tpu.vector_store %arg5[%c0_24, %c0_25], %20 {strides = array<i32>} : memref<16x128xf32, #tpu.memory_space<vmem>>, vector<16x128xf32>,
    %c0_26 = arith.constant 0 : index
    %c0_27 = arith.constant 0 : index
    %22 = vector.load %arg5[%c0_26, %c0_27] : memref<16x128xf32, #tpu.memory_space<vmem>>, vector<16x128xf32>
    %c3 = arith.constant 3 : index
    %c0_28 = arith.constant 0 : index
    %c0_29 = arith.constant 0 : index
    %23 = vector.load %arg1[%c3, %c0_28, %c0_29] : memref<4x16x32xbf16, #tpu.memory_space<vmem>>, vector<1x16x32xbf16>
    %24 = vector.shape_cast %23 : vector<1x16x32xbf16> to vector<16x32xbf16>
    %c0_30 = arith.constant 0 : index
    %c0_31 = arith.constant 0 : index
    %c10 = arith.constant 10 : index
    %25 = vector.load %arg3[%c0_30, %c0_31, %c10] : memref<1x32x256xbf16, #tpu.memory_space<vmem>>, vector<1x32x128xbf16>
    %26 = vector.shape_cast %25 : vector<1x32x128xbf16> to vector<32x128xbf16>
    %cst_32 = arith.constant dense<0.000000e+00> : vector<16x128xf32>
    %27 = tpu.matmul %24, %26, %cst_32 {dimension_numbers = #tpu.dot_dimension_numbers<[1], [0], [0], [1], [0, 0, 1, 1], [], []>} : vector<16x32xbf16>, vector<32x128xbf16>, vector<16x128xf32> -> vector<16x128xf32>
    %28 = arith.addf %22, %27 : vector<16x128xf32>
    %c0_33 = arith.constant 0 : index
    %c0_34 = arith.constant 0 : index
    %29 = vector.load %arg5[%c0_33, %c0_34] : memref<16x128xf32, #tpu.memory_space<vmem>>, vector<16x128xf32>
    tpu.vector_store %arg5[%c0_33, %c0_34], %28 {strides = array<i32>} : memref<16x128xf32, #tpu.memory_space<vmem>>, vector<16x128xf32>,
    %c0_35 = arith.constant 0 : index
    %c0_36 = arith.constant 0 : index
    %30 = vector.load %arg5[%c0_35, %c0_36] : memref<16x128xf32, #tpu.memory_space<vmem>>, vector<16x128xf32>
    %c0_37 = arith.constant 0 : index
    %c0_38 = arith.constant 0 : index
    %31 = vector.load %arg2[%c0_37, %c0_38] : memref<16x1xf32, #tpu.memory_space<vmem>>, vector<16x1xf32>
    %32 = vector.broadcast %31 : vector<16x1xf32> to vector<16x128xf32>
    %33 = arith.addf %30, %32 : vector<16x128xf32>
    %cst_39 = arith.constant 0.000000e+00 : f32
    %34 = vector.broadcast %cst_39 : f32 to vector<16x128xf32>
    %35 = arith.cmpf ogt, %33, %34 : vector<16x128xf32>
    %cst_40 = arith.constant 0.000000e+00 : f32
    %36 = vector.broadcast %cst_40 : f32 to vector<16x128xf32>
    %37 = arith.mulf %36, %33 : vector<16x128xf32>
    %38 = arith.select %35, %33, %37 : vector<16x128xi1>, vector<16x128xf32>
    %39 = arith.truncf %38 : vector<16x128xf32> to vector<16x128xbf16>
    %c0_41 = arith.constant 0 : index
    %c0_42 = arith.constant 0 : index
    %c0_43 = arith.constant 0 : index
    %40 = vector.load %arg4[%c0_41, %c0_42, %c0_43] : memref<1x16x128xbf16, #tpu.memory_space<vmem>>, vector<1x16x128xbf16>
    %41 = vector.shape_cast %40 : vector<1x16x128xbf16> to vector<16x128xbf16>
    %42 = vector.shape_cast %39 : vector<16x128xbf16> to vector<1x16x128xbf16>
    tpu.vector_store %arg4[%c0_41, %c0_42, %c0_43], %42 {strides = array<i32>} : memref<1x16x128xbf16, #tpu.memory_space<vmem>>, vector<1x16x128xbf16>,
    return
  }
  func.func @transform_0(%arg0: i32) -> (i32, i32, i32) {
    %c0_i32 = arith.constant 0 : i32
    %c0_i32_0 = arith.constant 0 : i32
    %c0_i32_1 = arith.constant 0 : i32
    %c0_i32_2 = arith.constant 0 : i32
    return %c0_i32, %c0_i32_0, %c0_i32_1 : i32, i32, i32
  }
  func.func @transform_1(%arg0: i32) -> (i32, i32) {
    %c0_i32 = arith.constant 0 : i32
    %c0_i32_0 = arith.constant 0 : i32
    %c0_i32_1 = arith.constant 0 : i32
    return %c0_i32, %c0_i32_0 : i32, i32
  }
  func.func @transform_2(%arg0: i32) -> (i32, i32, i32) {
    %c0_i32 = arith.constant 0 : i32
    %c0_i32_0 = arith.constant 0 : i32
    %c0_i32_1 = arith.constant 0 : i32
    return %arg0, %c0_i32, %c0_i32_0 : i32, i32, i32
  }
  func.func @transform_3(%arg0: i32) -> (i32, i32, i32) {
    %c0_i32 = arith.constant 0 : i32
    %c0_i32_0 = arith.constant 0 : i32
    %c0_i32_1 = arith.constant 0 : i32
    return %arg0, %c0_i32, %c0_i32_0 : i32, i32, i32
  }
}

module attributes {stable_mosaic.version = 11 : i64} {
  func.func @_conv_bn_act_kernel(%arg0: i32, %arg1: memref<4x32x64xbf16, #tpu.memory_space<vmem>>, %arg2: memref<32x1xf32, #tpu.memory_space<vmem>>, %arg3: memref<1x64x256xbf16, #tpu.memory_space<vmem>>, %arg4: memref<1x32x128xbf16, #tpu.memory_space<vmem>>, %arg5: memref<32x128xf32, #tpu.memory_space<vmem>>) attributes {dimension_semantics = [#tpu.dimension_semantics<parallel>], iteration_bounds = array<i64: 2>, scalar_prefetch = 0 : i64, scratch_operands = 1 : i64, tpu.core_type = #tpu.core_type<tc>, window_params = [{pipeline_mode = #tpu.pipeline_mode<synchronous>, transform_indices = @transform_0, window_bounds = array<i64: 4, 32, 64>}, {pipeline_mode = #tpu.pipeline_mode<synchronous>, transform_indices = @transform_1, window_bounds = array<i64: 32, 1>}, {transform_indices = @transform_2, window_bounds = array<i64: 1, 64, 256>}, {transform_indices = @transform_3, window_bounds = array<i64: 1, 32, 128>}]} {
    %c0 = arith.constant 0 : index
    %c0_0 = arith.constant 0 : index
    %c0_1 = arith.constant 0 : index
    %0 = vector.load %arg1[%c0, %c0_0, %c0_1] : memref<4x32x64xbf16, #tpu.memory_space<vmem>>, vector<1x32x64xbf16>
    %1 = vector.shape_cast %0 : vector<1x32x64xbf16> to vector<32x64xbf16>
    %c0_2 = arith.constant 0 : index
    %c0_3 = arith.constant 0 : index
    %c0_4 = arith.constant 0 : index
    %2 = vector.load %arg3[%c0_2, %c0_3, %c0_4] : memref<1x64x256xbf16, #tpu.memory_space<vmem>>, vector<1x64x128xbf16>
    %3 = vector.shape_cast %2 : vector<1x64x128xbf16> to vector<64x128xbf16>
    %cst = arith.constant dense<0.000000e+00> : vector<32x128xf32>
    %4 = tpu.matmul %1, %3, %cst {dimension_numbers = #tpu.dot_dimension_numbers<[1], [0], [0], [1], [0, 0, 1, 1], [], []>} : vector<32x64xbf16>, vector<64x128xbf16>, vector<32x128xf32> -> vector<32x128xf32>
    %c0_5 = arith.constant 0 : index
    %c0_6 = arith.constant 0 : index
    %5 = vector.load %arg5[%c0_5, %c0_6] : memref<32x128xf32, #tpu.memory_space<vmem>>, vector<32x128xf32>
    tpu.vector_store %arg5[%c0_5, %c0_6], %4 {strides = array<i32>} : memref<32x128xf32, #tpu.memory_space<vmem>>, vector<32x128xf32>,
    %c0_7 = arith.constant 0 : index
    %c0_8 = arith.constant 0 : index
    %6 = vector.load %arg5[%c0_7, %c0_8] : memref<32x128xf32, #tpu.memory_space<vmem>>, vector<32x128xf32>
    %c1 = arith.constant 1 : index
    %c0_9 = arith.constant 0 : index
    %c0_10 = arith.constant 0 : index
    %7 = vector.load %arg1[%c1, %c0_9, %c0_10] : memref<4x32x64xbf16, #tpu.memory_space<vmem>>, vector<1x32x64xbf16>
    %8 = vector.shape_cast %7 : vector<1x32x64xbf16> to vector<32x64xbf16>
    %c0_11 = arith.constant 0 : index
    %c0_12 = arith.constant 0 : index
    %c1_13 = arith.constant 1 : index
    %9 = vector.load %arg3[%c0_11, %c0_12, %c1_13] : memref<1x64x256xbf16, #tpu.memory_space<vmem>>, vector<1x64x128xbf16>
    %10 = vector.shape_cast %9 : vector<1x64x128xbf16> to vector<64x128xbf16>
    %cst_14 = arith.constant dense<0.000000e+00> : vector<32x128xf32>
    %11 = tpu.matmul %8, %10, %cst_14 {dimension_numbers = #tpu.dot_dimension_numbers<[1], [0], [0], [1], [0, 0, 1, 1], [], []>} : vector<32x64xbf16>, vector<64x128xbf16>, vector<32x128xf32> -> vector<32x128xf32>
    %12 = arith.addf %6, %11 : vector<32x128xf32>
    %c0_15 = arith.constant 0 : index
    %c0_16 = arith.constant 0 : index
    %13 = vector.load %arg5[%c0_15, %c0_16] : memref<32x128xf32, #tpu.memory_space<vmem>>, vector<32x128xf32>
    tpu.vector_store %arg5[%c0_15, %c0_16], %12 {strides = array<i32>} : memref<32x128xf32, #tpu.memory_space<vmem>>, vector<32x128xf32>,
    %c0_17 = arith.constant 0 : index
    %c0_18 = arith.constant 0 : index
    %14 = vector.load %arg5[%c0_17, %c0_18] : memref<32x128xf32, #tpu.memory_space<vmem>>, vector<32x128xf32>
    %c2 = arith.constant 2 : index
    %c0_19 = arith.constant 0 : index
    %c0_20 = arith.constant 0 : index
    %15 = vector.load %arg1[%c2, %c0_19, %c0_20] : memref<4x32x64xbf16, #tpu.memory_space<vmem>>, vector<1x32x64xbf16>
    %16 = vector.shape_cast %15 : vector<1x32x64xbf16> to vector<32x64xbf16>
    %c0_21 = arith.constant 0 : index
    %c0_22 = arith.constant 0 : index
    %c5 = arith.constant 5 : index
    %17 = vector.load %arg3[%c0_21, %c0_22, %c5] : memref<1x64x256xbf16, #tpu.memory_space<vmem>>, vector<1x64x128xbf16>
    %18 = vector.shape_cast %17 : vector<1x64x128xbf16> to vector<64x128xbf16>
    %cst_23 = arith.constant dense<0.000000e+00> : vector<32x128xf32>
    %19 = tpu.matmul %16, %18, %cst_23 {dimension_numbers = #tpu.dot_dimension_numbers<[1], [0], [0], [1], [0, 0, 1, 1], [], []>} : vector<32x64xbf16>, vector<64x128xbf16>, vector<32x128xf32> -> vector<32x128xf32>
    %20 = arith.addf %14, %19 : vector<32x128xf32>
    %c0_24 = arith.constant 0 : index
    %c0_25 = arith.constant 0 : index
    %21 = vector.load %arg5[%c0_24, %c0_25] : memref<32x128xf32, #tpu.memory_space<vmem>>, vector<32x128xf32>
    tpu.vector_store %arg5[%c0_24, %c0_25], %20 {strides = array<i32>} : memref<32x128xf32, #tpu.memory_space<vmem>>, vector<32x128xf32>,
    %c0_26 = arith.constant 0 : index
    %c0_27 = arith.constant 0 : index
    %22 = vector.load %arg5[%c0_26, %c0_27] : memref<32x128xf32, #tpu.memory_space<vmem>>, vector<32x128xf32>
    %c3 = arith.constant 3 : index
    %c0_28 = arith.constant 0 : index
    %c0_29 = arith.constant 0 : index
    %23 = vector.load %arg1[%c3, %c0_28, %c0_29] : memref<4x32x64xbf16, #tpu.memory_space<vmem>>, vector<1x32x64xbf16>
    %24 = vector.shape_cast %23 : vector<1x32x64xbf16> to vector<32x64xbf16>
    %c0_30 = arith.constant 0 : index
    %c0_31 = arith.constant 0 : index
    %c6 = arith.constant 6 : index
    %25 = vector.load %arg3[%c0_30, %c0_31, %c6] : memref<1x64x256xbf16, #tpu.memory_space<vmem>>, vector<1x64x128xbf16>
    %26 = vector.shape_cast %25 : vector<1x64x128xbf16> to vector<64x128xbf16>
    %cst_32 = arith.constant dense<0.000000e+00> : vector<32x128xf32>
    %27 = tpu.matmul %24, %26, %cst_32 {dimension_numbers = #tpu.dot_dimension_numbers<[1], [0], [0], [1], [0, 0, 1, 1], [], []>} : vector<32x64xbf16>, vector<64x128xbf16>, vector<32x128xf32> -> vector<32x128xf32>
    %28 = arith.addf %22, %27 : vector<32x128xf32>
    %c0_33 = arith.constant 0 : index
    %c0_34 = arith.constant 0 : index
    %29 = vector.load %arg5[%c0_33, %c0_34] : memref<32x128xf32, #tpu.memory_space<vmem>>, vector<32x128xf32>
    tpu.vector_store %arg5[%c0_33, %c0_34], %28 {strides = array<i32>} : memref<32x128xf32, #tpu.memory_space<vmem>>, vector<32x128xf32>,
    %c0_35 = arith.constant 0 : index
    %c0_36 = arith.constant 0 : index
    %30 = vector.load %arg5[%c0_35, %c0_36] : memref<32x128xf32, #tpu.memory_space<vmem>>, vector<32x128xf32>
    %c0_37 = arith.constant 0 : index
    %c0_38 = arith.constant 0 : index
    %31 = vector.load %arg2[%c0_37, %c0_38] : memref<32x1xf32, #tpu.memory_space<vmem>>, vector<32x1xf32>
    %32 = vector.broadcast %31 : vector<32x1xf32> to vector<32x128xf32>
    %33 = arith.addf %30, %32 : vector<32x128xf32>
    %cst_39 = arith.constant 0.000000e+00 : f32
    %34 = vector.broadcast %cst_39 : f32 to vector<32x128xf32>
    %35 = arith.cmpf ogt, %33, %34 : vector<32x128xf32>
    %cst_40 = arith.constant 0.000000e+00 : f32
    %36 = vector.broadcast %cst_40 : f32 to vector<32x128xf32>
    %37 = arith.mulf %36, %33 : vector<32x128xf32>
    %38 = arith.select %35, %33, %37 : vector<32x128xi1>, vector<32x128xf32>
    %39 = arith.truncf %38 : vector<32x128xf32> to vector<32x128xbf16>
    %c0_41 = arith.constant 0 : index
    %c0_42 = arith.constant 0 : index
    %c0_43 = arith.constant 0 : index
    %40 = vector.load %arg4[%c0_41, %c0_42, %c0_43] : memref<1x32x128xbf16, #tpu.memory_space<vmem>>, vector<1x32x128xbf16>
    %41 = vector.shape_cast %40 : vector<1x32x128xbf16> to vector<32x128xbf16>
    %42 = vector.shape_cast %39 : vector<32x128xbf16> to vector<1x32x128xbf16>
    tpu.vector_store %arg4[%c0_41, %c0_42, %c0_43], %42 {strides = array<i32>} : memref<1x32x128xbf16, #tpu.memory_space<vmem>>, vector<1x32x128xbf16>,
    return
  }
  func.func @transform_0(%arg0: i32) -> (i32, i32, i32) {
    %c0_i32 = arith.constant 0 : i32
    %c0_i32_0 = arith.constant 0 : i32
    %c0_i32_1 = arith.constant 0 : i32
    %c0_i32_2 = arith.constant 0 : i32
    return %c0_i32, %c0_i32_0, %c0_i32_1 : i32, i32, i32
  }
  func.func @transform_1(%arg0: i32) -> (i32, i32) {
    %c0_i32 = arith.constant 0 : i32
    %c0_i32_0 = arith.constant 0 : i32
    %c0_i32_1 = arith.constant 0 : i32
    return %c0_i32, %c0_i32_0 : i32, i32
  }
  func.func @transform_2(%arg0: i32) -> (i32, i32, i32) {
    %c0_i32 = arith.constant 0 : i32
    %c0_i32_0 = arith.constant 0 : i32
    %c0_i32_1 = arith.constant 0 : i32
    return %arg0, %c0_i32, %c0_i32_0 : i32, i32, i32
  }
  func.func @transform_3(%arg0: i32) -> (i32, i32, i32) {
    %c0_i32 = arith.constant 0 : i32
    %c0_i32_0 = arith.constant 0 : i32
    %c0_i32_1 = arith.constant 0 : i32
    return %arg0, %c0_i32, %c0_i32_0 : i32, i32, i32
  }
}

module attributes {stable_mosaic.version = 11 : i64} {
  func.func @_conv_bn_act_kernel(%arg0: i32, %arg1: memref<4x64x128xbf16, #tpu.memory_space<vmem>>, %arg2: memref<64x1xf32, #tpu.memory_space<vmem>>, %arg3: memref<1x128x256xbf16, #tpu.memory_space<vmem>>, %arg4: memref<1x64x128xf32, #tpu.memory_space<vmem>>, %arg5: memref<64x128xf32, #tpu.memory_space<vmem>>) attributes {dimension_semantics = [#tpu.dimension_semantics<parallel>], iteration_bounds = array<i64: 2>, scalar_prefetch = 0 : i64, scratch_operands = 1 : i64, tpu.core_type = #tpu.core_type<tc>, window_params = [{pipeline_mode = #tpu.pipeline_mode<synchronous>, transform_indices = @transform_0, window_bounds = array<i64: 4, 64, 128>}, {pipeline_mode = #tpu.pipeline_mode<synchronous>, transform_indices = @transform_1, window_bounds = array<i64: 64, 1>}, {transform_indices = @transform_2, window_bounds = array<i64: 1, 128, 256>}, {transform_indices = @transform_3, window_bounds = array<i64: 1, 64, 128>}]} {
    %c0 = arith.constant 0 : index
    %c0_0 = arith.constant 0 : index
    %c0_1 = arith.constant 0 : index
    %0 = vector.load %arg1[%c0, %c0_0, %c0_1] : memref<4x64x128xbf16, #tpu.memory_space<vmem>>, vector<1x64x128xbf16>
    %1 = vector.shape_cast %0 : vector<1x64x128xbf16> to vector<64x128xbf16>
    %c0_2 = arith.constant 0 : index
    %c0_3 = arith.constant 0 : index
    %c0_4 = arith.constant 0 : index
    %2 = vector.load %arg3[%c0_2, %c0_3, %c0_4] : memref<1x128x256xbf16, #tpu.memory_space<vmem>>, vector<1x128x128xbf16>
    %3 = vector.shape_cast %2 : vector<1x128x128xbf16> to vector<128x128xbf16>
    %cst = arith.constant dense<0.000000e+00> : vector<64x128xf32>
    %4 = tpu.matmul %1, %3, %cst {dimension_numbers = #tpu.dot_dimension_numbers<[1], [0], [0], [1], [0, 0, 1, 1], [], []>} : vector<64x128xbf16>, vector<128x128xbf16>, vector<64x128xf32> -> vector<64x128xf32>
    %c0_5 = arith.constant 0 : index
    %c0_6 = arith.constant 0 : index
    %5 = vector.load %arg5[%c0_5, %c0_6] : memref<64x128xf32, #tpu.memory_space<vmem>>, vector<64x128xf32>
    tpu.vector_store %arg5[%c0_5, %c0_6], %4 {strides = array<i32>} : memref<64x128xf32, #tpu.memory_space<vmem>>, vector<64x128xf32>,
    %c0_7 = arith.constant 0 : index
    %c0_8 = arith.constant 0 : index
    %6 = vector.load %arg5[%c0_7, %c0_8] : memref<64x128xf32, #tpu.memory_space<vmem>>, vector<64x128xf32>
    %c1 = arith.constant 1 : index
    %c0_9 = arith.constant 0 : index
    %c0_10 = arith.constant 0 : index
    %7 = vector.load %arg1[%c1, %c0_9, %c0_10] : memref<4x64x128xbf16, #tpu.memory_space<vmem>>, vector<1x64x128xbf16>
    %8 = vector.shape_cast %7 : vector<1x64x128xbf16> to vector<64x128xbf16>
    %c0_11 = arith.constant 0 : index
    %c0_12 = arith.constant 0 : index
    %c1_13 = arith.constant 1 : index
    %9 = vector.load %arg3[%c0_11, %c0_12, %c1_13] : memref<1x128x256xbf16, #tpu.memory_space<vmem>>, vector<1x128x128xbf16>
    %10 = vector.shape_cast %9 : vector<1x128x128xbf16> to vector<128x128xbf16>
    %cst_14 = arith.constant dense<0.000000e+00> : vector<64x128xf32>
    %11 = tpu.matmul %8, %10, %cst_14 {dimension_numbers = #tpu.dot_dimension_numbers<[1], [0], [0], [1], [0, 0, 1, 1], [], []>} : vector<64x128xbf16>, vector<128x128xbf16>, vector<64x128xf32> -> vector<64x128xf32>
    %12 = arith.addf %6, %11 : vector<64x128xf32>
    %c0_15 = arith.constant 0 : index
    %c0_16 = arith.constant 0 : index
    %13 = vector.load %arg5[%c0_15, %c0_16] : memref<64x128xf32, #tpu.memory_space<vmem>>, vector<64x128xf32>
    tpu.vector_store %arg5[%c0_15, %c0_16], %12 {strides = array<i32>} : memref<64x128xf32, #tpu.memory_space<vmem>>, vector<64x128xf32>,
    %c0_17 = arith.constant 0 : index
    %c0_18 = arith.constant 0 : index
    %14 = vector.load %arg5[%c0_17, %c0_18] : memref<64x128xf32, #tpu.memory_space<vmem>>, vector<64x128xf32>
    %c2 = arith.constant 2 : index
    %c0_19 = arith.constant 0 : index
    %c0_20 = arith.constant 0 : index
    %15 = vector.load %arg1[%c2, %c0_19, %c0_20] : memref<4x64x128xbf16, #tpu.memory_space<vmem>>, vector<1x64x128xbf16>
    %16 = vector.shape_cast %15 : vector<1x64x128xbf16> to vector<64x128xbf16>
    %c0_21 = arith.constant 0 : index
    %c0_22 = arith.constant 0 : index
    %c3 = arith.constant 3 : index
    %17 = vector.load %arg3[%c0_21, %c0_22, %c3] : memref<1x128x256xbf16, #tpu.memory_space<vmem>>, vector<1x128x128xbf16>
    %18 = vector.shape_cast %17 : vector<1x128x128xbf16> to vector<128x128xbf16>
    %cst_23 = arith.constant dense<0.000000e+00> : vector<64x128xf32>
    %19 = tpu.matmul %16, %18, %cst_23 {dimension_numbers = #tpu.dot_dimension_numbers<[1], [0], [0], [1], [0, 0, 1, 1], [], []>} : vector<64x128xbf16>, vector<128x128xbf16>, vector<64x128xf32> -> vector<64x128xf32>
    %20 = arith.addf %14, %19 : vector<64x128xf32>
    %c0_24 = arith.constant 0 : index
    %c0_25 = arith.constant 0 : index
    %21 = vector.load %arg5[%c0_24, %c0_25] : memref<64x128xf32, #tpu.memory_space<vmem>>, vector<64x128xf32>
    tpu.vector_store %arg5[%c0_24, %c0_25], %20 {strides = array<i32>} : memref<64x128xf32, #tpu.memory_space<vmem>>, vector<64x128xf32>,
    %c0_26 = arith.constant 0 : index
    %c0_27 = arith.constant 0 : index
    %22 = vector.load %arg5[%c0_26, %c0_27] : memref<64x128xf32, #tpu.memory_space<vmem>>, vector<64x128xf32>
    %c3_28 = arith.constant 3 : index
    %c0_29 = arith.constant 0 : index
    %c0_30 = arith.constant 0 : index
    %23 = vector.load %arg1[%c3_28, %c0_29, %c0_30] : memref<4x64x128xbf16, #tpu.memory_space<vmem>>, vector<1x64x128xbf16>
    %24 = vector.shape_cast %23 : vector<1x64x128xbf16> to vector<64x128xbf16>
    %c0_31 = arith.constant 0 : index
    %c0_32 = arith.constant 0 : index
    %c4 = arith.constant 4 : index
    %25 = vector.load %arg3[%c0_31, %c0_32, %c4] : memref<1x128x256xbf16, #tpu.memory_space<vmem>>, vector<1x128x128xbf16>
    %26 = vector.shape_cast %25 : vector<1x128x128xbf16> to vector<128x128xbf16>
    %cst_33 = arith.constant dense<0.000000e+00> : vector<64x128xf32>
    %27 = tpu.matmul %24, %26, %cst_33 {dimension_numbers = #tpu.dot_dimension_numbers<[1], [0], [0], [1], [0, 0, 1, 1], [], []>} : vector<64x128xbf16>, vector<128x128xbf16>, vector<64x128xf32> -> vector<64x128xf32>
    %28 = arith.addf %22, %27 : vector<64x128xf32>
    %c0_34 = arith.constant 0 : index
    %c0_35 = arith.constant 0 : index
    %29 = vector.load %arg5[%c0_34, %c0_35] : memref<64x128xf32, #tpu.memory_space<vmem>>, vector<64x128xf32>
    tpu.vector_store %arg5[%c0_34, %c0_35], %28 {strides = array<i32>} : memref<64x128xf32, #tpu.memory_space<vmem>>, vector<64x128xf32>,
    %c0_36 = arith.constant 0 : index
    %c0_37 = arith.constant 0 : index
    %30 = vector.load %arg5[%c0_36, %c0_37] : memref<64x128xf32, #tpu.memory_space<vmem>>, vector<64x128xf32>
    %c0_38 = arith.constant 0 : index
    %c0_39 = arith.constant 0 : index
    %31 = vector.load %arg2[%c0_38, %c0_39] : memref<64x1xf32, #tpu.memory_space<vmem>>, vector<64x1xf32>
    %32 = vector.broadcast %31 : vector<64x1xf32> to vector<64x128xf32>
    %33 = arith.addf %30, %32 : vector<64x128xf32>
    %cst_40 = arith.constant 0.000000e+00 : f32
    %34 = vector.broadcast %cst_40 : f32 to vector<64x128xf32>
    %35 = arith.cmpf ogt, %33, %34 : vector<64x128xf32>
    %cst_41 = arith.constant 0.000000e+00 : f32
    %36 = vector.broadcast %cst_41 : f32 to vector<64x128xf32>
    %37 = arith.mulf %36, %33 : vector<64x128xf32>
    %38 = arith.select %35, %33, %37 : vector<64x128xi1>, vector<64x128xf32>
    %c0_42 = arith.constant 0 : index
    %c0_43 = arith.constant 0 : index
    %c0_44 = arith.constant 0 : index
    %39 = vector.load %arg4[%c0_42, %c0_43, %c0_44] : memref<1x64x128xf32, #tpu.memory_space<vmem>>, vector<1x64x128xf32>
    %40 = vector.shape_cast %39 : vector<1x64x128xf32> to vector<64x128xf32>
    %41 = vector.shape_cast %38 : vector<64x128xf32> to vector<1x64x128xf32>
    tpu.vector_store %arg4[%c0_42, %c0_43, %c0_44], %41 {strides = array<i32>} : memref<1x64x128xf32, #tpu.memory_space<vmem>>, vector<1x64x128xf32>,
    return
  }
  func.func @transform_0(%arg0: i32) -> (i32, i32, i32) {
    %c0_i32 = arith.constant 0 : i32
    %c0_i32_0 = arith.constant 0 : i32
    %c0_i32_1 = arith.constant 0 : i32
    %c0_i32_2 = arith.constant 0 : i32
    return %c0_i32, %c0_i32_0, %c0_i32_1 : i32, i32, i32
  }
  func.func @transform_1(%arg0: i32) -> (i32, i32) {
    %c0_i32 = arith.constant 0 : i32
    %c0_i32_0 = arith.constant 0 : i32
    %c0_i32_1 = arith.constant 0 : i32
    return %c0_i32, %c0_i32_0 : i32, i32
  }
  func.func @transform_2(%arg0: i32) -> (i32, i32, i32) {
    %c0_i32 = arith.constant 0 : i32
    %c0_i32_0 = arith.constant 0 : i32
    %c0_i32_1 = arith.constant 0 : i32
    return %arg0, %c0_i32, %c0_i32_0 : i32, i32, i32
  }
  func.func @transform_3(%arg0: i32) -> (i32, i32, i32) {
    %c0_i32 = arith.constant 0 : i32
    %c0_i32_0 = arith.constant 0 : i32
    %c0_i32_1 = arith.constant 0 : i32
    return %arg0, %c0_i32, %c0_i32_0 : i32, i32, i32
  }
}

</mosaic_0001>

<llo_original>
// kernel: encoder_forward.5
$region0: #{encoder_forward.5}
  #allocation0 [shape = 'u32[]', space=smem, size = 0x4, offset = 0x4, fixed_abs, tag = 'smem constant byte address 0x4 - core index']
  #allocation1 [shape = 'u32[144,128]{1,0:T(1,128)}', space=vmem, size = 0x12000, scoped, tag = 'internal scratch']
  #allocation2 [shape = 'f32[16,128]{1,0:T(8,128)}', space=vmem, size = 0x2000, scoped, tag = 'scratch operand']
  %s0 = inlined_call_operand.vmem [shape: bf16[4,16,32], index: 0, kind: input, shape index: {}]
  %s1 = inlined_call_operand.vmem [shape: f32[16,1], index: 1, kind: input, shape index: {}]
  %s2 = inlined_call_operand.vmem [shape: bf16[2,32,256], index: 2, kind: input, shape index: {}]
  %s3 = inlined_call_operand.vmem [shape: bf16[2,16,128], index: 3, kind: output, shape index: {}]
  %s4 = sld [smem:[#allocation0]]
  $region45: #{encoder_forward.5} parent=0
    _
  %s6 = ssub.s32 1, %s4
  %s7 = scalar_select 0, %s6, %s4
  loop: start=0, step=1, limit=4
  $region2: #{encoder_forward.5} parent=0 // loop_pre_header
    _
  $region3: #{encoder_forward.5} parent=0 // loop_header
    %s9 = sphi 0, %s13
    %p10 = scmp.ge.s32.totalorder %s9, 4
    %s17 = sphi 0, %s17
    %s19 = sphi 0, %s17
    %s20 = sphi 0, %s19
    %s34 = sphi 0, %s20
    %s38 = sphi 0, %s38
    %s40 = sphi 0, %s38
    %s41 = sphi 0, %s40
    %s55 = sphi 0, %s41
    %s61 = sphi 0, %s63
    %s64 = sphi 0, %s61
    %s65 = sphi 0, %s64
    %s81 = sphi 0, %s65
    %s87 = sphi 0, %s89
    %s90 = sphi 0, %s87
    %s91 = sphi 0, %s90
    %s107 = sphi 0, %s91
  $region4: #{encoder_forward.5} parent=0 // loop_header_branch
    %12 = sbr.rel (%p10) target = $region8
  $region5: #{encoder_forward.5} parent=0 // loop_body
    %s14 = ssub.s32 %s9, 1
    %s15 = ssub.s32 %s9, 2
    %s16 = sadd.s32 %s9, 1
    %s18 = sadd.s32 %s17, 1
    %p21 = scmp.eq.s32.totalorder %s9, 1
    %p22 = scmp.ne.s32.totalorder %s17, %s19
    %p23 = scmp.eq.s32.totalorder %s9, 0
    %p24 = por %p22, %p23
    %p25 = scmp.ne.s32.totalorder %s17, %s19
    %p26 = scmp.eq.s32.totalorder %s14, 1
    %p27 = por %p25, %p26
    %p28 = scmp.ne.s32.totalorder %s19, %s20
    %p29 = scmp.eq.s32.totalorder %s14, 0
    %p30 = por %p28, %p29
    %p31 = scmp.ne.s32.totalorder %s19, %s20
    %p32 = scmp.eq.s32.totalorder %s15, 1
    %p33 = por %p31, %p32
    %p35 = scmp.ne.s32.totalorder %s20, %s34
    %p36 = scmp.eq.s32.totalorder %s15, 0
    %p37 = por %p35, %p36
    %s39 = sadd.s32 %s38, 1
    %p42 = scmp.eq.s32.totalorder %s9, 1
    %p43 = scmp.ne.s32.totalorder %s38, %s40
    %p44 = scmp.eq.s32.totalorder %s9, 0
    %p45 = por %p43, %p44
    %p46 = scmp.ne.s32.totalorder %s38, %s40
    %p47 = scmp.eq.s32.totalorder %s14, 1
    %p48 = por %p46, %p47
    %p49 = scmp.ne.s32.totalorder %s40, %s41
    %p50 = scmp.eq.s32.totalorder %s14, 0
    %p51 = por %p49, %p50
    %p52 = scmp.ne.s32.totalorder %s40, %s41
    %p53 = scmp.eq.s32.totalorder %s15, 1
    %p54 = por %p52, %p53
    %p56 = scmp.ne.s32.totalorder %s41, %s55
    %p57 = scmp.eq.s32.totalorder %s15, 0
    %p58 = por %p56, %p57
    %s59 = ssub.s32 %s9, %s16
    %p60 = scmp.eq.s32.totalorder %s59, 0
    %s62 = sadd.s32 %s61, 1
    %s63 = scalar_select %p60, %s61, %s62
    %p66 = pneg %p60
    %p67 = scmp.eq.s32.totalorder %s9, 1
    %p68 = por %p66, %p67
    %p69 = scmp.ne.s32.totalorder %s61, %s64
    %p70 = scmp.eq.s32.totalorder %s9, 0
    %p71 = por %p69, %p70
    %p72 = scmp.ne.s32.totalorder %s61, %s64
    %p73 = scmp.eq.s32.totalorder %s14, 1
    %p74 = por %p72, %p73
    %p75 = scmp.ne.s32.totalorder %s64, %s65
    %p76 = scmp.eq.s32.totalorder %s14, 0
    %p77 = por %p75, %p76
    %p78 = scmp.ne.s32.totalorder %s64, %s65
    %p79 = scmp.eq.s32.totalorder %s15, 1
    %p80 = por %p78, %p79
    %p82 = scmp.ne.s32.totalorder %s65, %s81
    %p83 = scmp.eq.s32.totalorder %s15, 0
    %p84 = por %p82, %p83
    %s85 = ssub.s32 %s9, %s16
    %p86 = scmp.eq.s32.totalorder %s85, 0
    %s88 = sadd.s32 %s87, 1
    %s89 = scalar_select %p86, %s87, %s88
    %p92 = pneg %p86
    %p93 = scmp.eq.s32.totalorder %s9, 1
    %p94 = por %p92, %p93
    %p95 = scmp.ne.s32.totalorder %s87, %s90
    %p96 = scmp.eq.s32.totalorder %s9, 0
    %p97 = por %p95, %p96
    %p98 = scmp.ne.s32.totalorder %s87, %s90
    %p99 = scmp.eq.s32.totalorder %s14, 1
    %p100 = por %p98, %p99
    %p101 = scmp.ne.s32.totalorder %s90, %s91
    %p102 = scmp.eq.s32.totalorder %s14, 0
    %p103 = por %p101, %p102
    %p104 = scmp.ne.s32.totalorder %s90, %s91
    %p105 = scmp.eq.s32.totalorder %s15, 1
    %p106 = por %p104, %p105
    %p108 = scmp.ne.s32.totalorder %s91, %s107
    %p109 = scmp.eq.s32.totalorder %s15, 0
    %p110 = por %p108, %p109
    %p111 = scmp.le.s32.totalorder 1, %s9
    %p112 = scmp.lt.s32.totalorder %s9, 3
    %p113 = pnand %p111, %p112
    %p114 = pneg %p113
    // Predicated region
    $region9: #{encoder_forward.5} parent=5 // pred_check
      _
    $region10: #{encoder_forward.5} parent=5 // pred_check_branch
      %116 = sbr.rel (%p113) target = $region12
    $region11: #{encoder_forward.5} parent=5 // pred_region
      %s117 = ssub.s32 %s9, 1
      // Predicated region
      $region13: #{encoder_forward.5} parent=11 // pred_check
        %p118 = pneg %p30
      $region14: #{encoder_forward.5} parent=11 // pred_check_branch
        %120 = sbr.rel (%p118) target = $region16
      $region15: #{encoder_forward.5} parent=11 // pred_region
        _
      $region16: #{encoder_forward.5} parent=11 // pred_fallthru
        _
      // Predicated region
      $region17: #{encoder_forward.5} parent=11 // pred_check
        %p121 = pneg %p51
      $region18: #{encoder_forward.5} parent=11 // pred_check_branch
        %123 = sbr.rel (%p121) target = $region20
      $region19: #{encoder_forward.5} parent=11 // pred_region
        _
      $region20: #{encoder_forward.5} parent=11 // pred_fallthru
        _
    $region12: #{encoder_forward.5} parent=5 // pred_fallthru
      _
    %p124 = scmp.lt.s32.totalorder %s9, 2
    // Predicated region
    $region21: #{encoder_forward.5} parent=5 // pred_check
      %p125 = pneg %p124
    $region22: #{encoder_forward.5} parent=5 // pred_check_branch
      %127 = sbr.rel (%p125) target = $region24
    $region23: #{encoder_forward.5} parent=5 // pred_region
      // Predicated region
      $region25: #{encoder_forward.5} parent=23 // pred_check
        %p128 = pneg %p71
      $region26: #{encoder_forward.5} parent=23 // pred_check_branch
        %130 = sbr.rel (%p128) target = $region28
      $region27: #{encoder_forward.5} parent=23 // pred_region
        %p131 = scmp.lt.s32.totalorder %s9, 1
        %s132 = scalar_select %p131, %s9, 1
        %s133 = smul.addr %s132, 8
        %s134 = smul.addr %s133, 4
        %s135 = scalar_lea.vmem %s2, %s134
      $region28: #{encoder_forward.5} parent=23 // pred_fallthru
        _
    $region24: #{encoder_forward.5} parent=5 // pred_fallthru
      _
    %p136 = scmp.le.s32.totalorder 1, %s9
    %p137 = scmp.lt.s32.totalorder %s9, 3
    %p138 = pnand %p136, %p137
    %p139 = pneg %p138
    // Predicated region
    $region29: #{encoder_forward.5} parent=5 // pred_check
      _
    $region30: #{encoder_forward.5} parent=5 // pred_check_branch
      %141 = sbr.rel (%p138) target = $region32
    $region31: #{encoder_forward.5} parent=5 // pred_region
      %s142 = ssub.s32 %s9, 1
      %p143 = pneg %p30
      %p144 = pneg %p27
      %p145 = pneg %p51
      %p146 = pneg %p48
      %p147 = scmp.lt.s32.totalorder %s14, 1
      %s148 = scalar_select %p147, %s14, 1
      %s149 = smul.addr %s148, 8
      %s150 = smul.addr %s149, 4
      %s151 = scalar_lea.vmem %s2, %s150
      %p152 = pneg %p77
      %p153 = pneg %p74
      %p154 = pneg %p103
      %p155 = pneg %p100
      %p156 = scmp.lt.s32.totalorder %s14, 1
      %s157 = scalar_select %p156, %s14, 1
      %s158 = smul.addr %s157, 2
      %s159 = smul.addr %s158, 4
      %s160 = scalar_lea.vmem %s3, %s159
      %p161 = scmp.lt.s32.totalorder %s14, 1
      %s162 = scalar_select %p161, %s14, 1
      %s163 = smul.addr %s162, 8
      %s164 = smul.addr %s163, 4
      %s165 = scalar_lea.vmem %s2, %s164
      %p166 = scmp.lt.s32.totalorder %s14, 1
      %s167 = scalar_select %p166, %s14, 1
      %s168 = smul.addr %s167, 2
      %s169 = smul.addr %s168, 4
      %s170 = scalar_lea.vmem %s3, %s169
      %v172 = vld [vmem:[%s0] sm:$0xf]
      %v173 = vld [vmem:[%s0 + $0x4] sm:$0xf]
      %v174 = vld [vmem:[%s165] sm:$0xf]
      %v175 = vld [vmem:[%s165 + $0x8] sm:$0xf]
      %v176 = vld [vmem:[%s165 + $0x10] sm:$0xf]
      %v177 = vld [vmem:[%s165 + $0x18] sm:$0xf]
      %v180 = vunpack.c.l.b16 %v172
      %v181 = vunpack.c.l.b16 %v173
      %v182 = vpack.c.b16 %v181, %v180
      %v187 = vunpack.c.l.b16 %v174
      %v188 = vunpack.c.l.b16 %v175
      %v189 = vunpack.c.l.b16 %v176
      %v190 = vunpack.c.l.b16 %v177
      %v191 = vpack.c.b16 %v188, %v187
      %v192 = vpack.c.b16 %v190, %v189
      %vm195 = vcmask 261120
      %v197 = vsel %vm195, %v182, 0
      %199 = vmatprep.subr.bf16.mxu0 0
      %200 = vmatpush1.bf16.msra.mxu0 0
      %201 = vmatprep.subr.bf16.mxu0 0
      %202 = vmatpush1.bf16.msra.mxu0 0
      %203 = vmatprep.subr.bf16.mxu0 0
      %204 = vmatpush1.bf16.msra.mxu0 0
      %205 = vmatprep.subr.bf16.mxu0 0
      %206 = vmatpush1.bf16.msra.mxu0 0
      %207 = vmatprep.subr.bf16.mxu0 0
      %208 = vmatpush1.bf16.msra.mxu0 0
      %209 = vmatprep.subr.bf16.mxu0 0
      %210 = vmatpush1.bf16.msra.mxu0 0
      %211 = vmatprep.subr.bf16.mxu0 0
      %212 = vmatpush1.bf16.msra.mxu0 %v192
      %213 = vmatprep.subr.bf16.mxu0 0
      %214 = vmatpush1.bf16.msra.mxu0 %v191
      %215 = vmatprep.subr.bf16.mxu0 0
      %216 = vmatpush2.bf16.msra.mxu0 0
      %217 = vmatprep.subr.bf16.mxu0 0
      %218 = vmatpush2.bf16.msra.mxu0 0
      %219 = vmatprep.subr.bf16.mxu0 0
      %220 = vmatpush2.bf16.msra.mxu0 0
      %221 = vmatprep.subr.bf16.mxu0 0
      %222 = vmatpush2.bf16.msra.mxu0 0
      %223 = vmatprep.subr.bf16.mxu0 0
      %224 = vmatpush2.bf16.msra.mxu0 0
      %225 = vmatprep.subr.bf16.mxu0 0
      %226 = vmatpush2.bf16.msra.mxu0 0
      %227 = vmatprep.subr.bf16.mxu0 0
      %228 = vmatpush2.bf16.msra.mxu0 0
      %229 = vmatprep.subr.bf16.mxu0 0
      %230 = vmatpush2.bf16.msra.mxu0 0
      %231 = vmatprep.mubr.bf16.mxu0 0
      %232 = vmatmul.mubr.bf16.gmra.mxu0 %v197
      %v233 = vpop.f32.mrf.mxu0
      %v234 = vadd.f32 0.0, %v233
      %v235 = vpop.f32.mrf.mxu0
      %v236 = vpop.f32.mrf.mxu0
      %v237 = vadd.f32 0.0, %v236
      %v238 = vpop.f32.mrf.mxu0
      %239 = vdwg.mxu0
      %240 = vst [vmem:[#allocation2] sm:$0xff] %v234
      %241 = vst [vmem:[#allocation2 + $0x8] sm:$0xff] %v237
      %v242 = vld [vmem:[#allocation2] sm:$0xff]
      %v243 = vld [vmem:[#allocation2 + $0x8] sm:$0xff]
      %s244 = scalar_lea.vmem %s0, 8
      %v245 = vld [vmem:[%s244] sm:$0xf]
      %v246 = vld [vmem:[%s244 + $0x4] sm:$0xf]
      %v247 = vld [vmem:[%s165] sm:$0xff]
      %v248 = vld [vmem:[%s165 + $0x8] sm:$0xff]
      %v249 = vld [vmem:[%s165 + $0x10] sm:$0xff]
      %v250 = vld [vmem:[%s165 + $0x18] sm:$0xff]
      %v253 = vunpack.c.l.b16 %v245
      %v254 = vunpack.c.l.b16 %v246
      %v255 = vpack.c.b16 %v254, %v253
      %v260 = vunpack.c.l.b16 %v247
      %v261 = vunpack.c.h.b16 %v247
      %v262 = vunpack.c.l.b16 %v248
      %v263 = vunpack.c.h.b16 %v248
      %v264 = vunpack.c.l.b16 %v249
      %v265 = vunpack.c.h.b16 %v249
      %v266 = vunpack.c.l.b16 %v250
      %v267 = vunpack.c.h.b16 %v250
      %v268 = vpack.c.b16 %v262, %v260
      %v269 = vpack.c.b16 %v263, %v261
      %v270 = vpack.c.b16 %v266, %v264
      %v271 = vpack.c.b16 %v267, %v265
      %272 = vrot.lane.b32.xlu0 %v268, 127
      %v273 = vpop.permute.xlu0 %272
      %274 = vrot.lane.b32.xlu0 %v269, 127
      %v275 = vpop.permute.xlu0 %274
      %276 = vrot.lane.b32.xlu0 %v270, 127
      %v277 = vpop.permute.xlu0 %276
      %278 = vrot.lane.b32.xlu0 %v271, 127
      %v279 = vpop.permute.xlu0 %278
      %vm280 = vcmask 1039360
      %v281 = vsel %vm280, %v273, %v275
      %v282 = vsel %vm280, %v277, %v279
      %v286 = vsel %vm195, %v255, 0
      %288 = vmatprep.subr.bf16.mxu0 0
      %289 = vmatpush1.bf16.msra.mxu0 0
      %290 = vmatprep.subr.bf16.mxu0 0
      %291 = vmatpush1.bf16.msra.mxu0 0
      %292 = vmatprep.subr.bf16.mxu0 0
      %293 = vmatpush1.bf16.msra.mxu0 0
      %294 = vmatprep.subr.bf16.mxu0 0
      %295 = vmatpush1.bf16.msra.mxu0 0
      %296 = vmatprep.subr.bf16.mxu0 0
      %297 = vmatpush1.bf16.msra.mxu0 0
      %298 = vmatprep.subr.bf16.mxu0 0
      %299 = vmatpush1.bf16.msra.mxu0 0
      %300 = vmatprep.subr.bf16.mxu0 0
      %301 = vmatpush1.bf16.msra.mxu0 %v282
      %302 = vmatprep.subr.bf16.mxu0 0
      %303 = vmatpush1.bf16.msra.mxu0 %v281
      %304 = vmatprep.subr.bf16.mxu0 0
      %305 = vmatpush2.bf16.msra.mxu0 0
      %306 = vmatprep.subr.bf16.mxu0 0
      %307 = vmatpush2.bf16.msra.mxu0 0
      %308 = vmatprep.subr.bf16.mxu0 0
      %309 = vmatpush2.bf16.msra.mxu0 0
      %310 = vmatprep.subr.bf16.mxu0 0
      %311 = vmatpush2.bf16.msra.mxu0 0
      %312 = vmatprep.subr.bf16.mxu0 0
      %313 = vmatpush2.bf16.msra.mxu0 0
      %314 = vmatprep.subr.bf16.mxu0 0
      %315 = vmatpush2.bf16.msra.mxu0 0
      %316 = vmatprep.subr.bf16.mxu0 0
      %317 = vmatpush2.bf16.msra.mxu0 0
      %318 = vmatprep.subr.bf16.mxu0 0
      %319 = vmatpush2.bf16.msra.mxu0 0
      %320 = vmatprep.mubr.bf16.mxu0 0
      %321 = vmatmul.mubr.bf16.gmra.mxu0 %v286
      %v322 = vpop.f32.mrf.mxu0
      %v323 = vadd.f32 0.0, %v322
      %v324 = vpop.f32.mrf.mxu0
      %v325 = vpop.f32.mrf.mxu0
      %v326 = vadd.f32 0.0, %v325
      %v327 = vpop.f32.mrf.mxu0
      %328 = vdwg.mxu0
      %v329 = vadd.f32 %v242, %v323
      %v330 = vadd.f32 %v243, %v326
      %331 = vst [vmem:[#allocation2] sm:$0xff] %v329
      %332 = vst [vmem:[#allocation2 + $0x8] sm:$0xff] %v330
      %v333 = vld [vmem:[#allocation2] sm:$0xff]
      %v334 = vld [vmem:[#allocation2 + $0x8] sm:$0xff]
      %s335 = scalar_lea.vmem %s0, 16
      %v336 = vld [vmem:[%s335] sm:$0xf]
      %v337 = vld [vmem:[%s335 + $0x4] sm:$0xf]
      %v338 = vld [vmem:[%s165] sm:$0xff]
      %v339 = vld [vmem:[%s165 + $0x8] sm:$0xff]
      %v340 = vld [vmem:[%s165 + $0x10] sm:$0xff]
      %v341 = vld [vmem:[%s165 + $0x18] sm:$0xff]
      %v344 = vunpack.c.l.b16 %v336
      %v345 = vunpack.c.l.b16 %v337
      %v346 = vpack.c.b16 %v345, %v344
      %v351 = vunpack.c.l.b16 %v338
      %v352 = vunpack.c.h.b16 %v338
      %v353 = vunpack.c.l.b16 %v339
      %v354 = vunpack.c.h.b16 %v339
      %v355 = vunpack.c.l.b16 %v340
      %v356 = vunpack.c.h.b16 %v340
      %v357 = vunpack.c.l.b16 %v341
      %v358 = vunpack.c.h.b16 %v341
      %v359 = vpack.c.b16 %v353, %v351
      %v360 = vpack.c.b16 %v354, %v352
      %v361 = vpack.c.b16 %v357, %v355
      %v362 = vpack.c.b16 %v358, %v356
      %363 = vrot.lane.b32.xlu0 %v359, 119
      %v364 = vpop.permute.xlu0 %363
      %365 = vrot.lane.b32.xlu0 %v360, 119
      %v366 = vpop.permute.xlu0 %365
      %367 = vrot.lane.b32.xlu0 %v361, 119
      %v368 = vpop.permute.xlu0 %367
      %369 = vrot.lane.b32.xlu0 %v362, 119
      %v370 = vpop.permute.xlu0 %369
      %vm371 = vcmask 973824
      %v372 = vsel %vm371, %v364, %v366
      %v373 = vsel %vm371, %v368, %v370
      %v377 = vsel %vm195, %v346, 0
      %379 = vmatprep.subr.bf16.mxu0 0
      %380 = vmatpush1.bf16.msra.mxu0 0
      %381 = vmatprep.subr.bf16.mxu0 0
      %382 = vmatpush1.bf16.msra.mxu0 0
      %383 = vmatprep.subr.bf16.mxu0 0
      %384 = vmatpush1.bf16.msra.mxu0 0
      %385 = vmatprep.subr.bf16.mxu0 0
      %386 = vmatpush1.bf16.msra.mxu0 0
      %387 = vmatprep.subr.bf16.mxu0 0
      %388 = vmatpush1.bf16.msra.mxu0 0
      %389 = vmatprep.subr.bf16.mxu0 0
      %390 = vmatpush1.bf16.msra.mxu0 0
      %391 = vmatprep.subr.bf16.mxu0 0
      %392 = vmatpush1.bf16.msra.mxu0 %v373
      %393 = vmatprep.subr.bf16.mxu0 0
      %394 = vmatpush1.bf16.msra.mxu0 %v372
      %395 = vmatprep.subr.bf16.mxu0 0
      %396 = vmatpush2.bf16.msra.mxu0 0
      %397 = vmatprep.subr.bf16.mxu0 0
      %398 = vmatpush2.bf16.msra.mxu0 0
      %399 = vmatprep.subr.bf16.mxu0 0
      %400 = vmatpush2.bf16.msra.mxu0 0
      %401 = vmatprep.subr.bf16.mxu0 0
      %402 = vmatpush2.bf16.msra.mxu0 0
      %403 = vmatprep.subr.bf16.mxu0 0
      %404 = vmatpush2.bf16.msra.mxu0 0
      %405 = vmatprep.subr.bf16.mxu0 0
      %406 = vmatpush2.bf16.msra.mxu0 0
      %407 = vmatprep.subr.bf16.mxu0 0
      %408 = vmatpush2.bf16.msra.mxu0 0
      %409 = vmatprep.subr.bf16.mxu0 0
      %410 = vmatpush2.bf16.msra.mxu0 0
      %411 = vmatprep.mubr.bf16.mxu0 0
      %412 = vmatmul.mubr.bf16.gmra.mxu0 %v377
      %v413 = vpop.f32.mrf.mxu0
      %v414 = vadd.f32 0.0, %v413
      %v415 = vpop.f32.mrf.mxu0
      %v416 = vpop.f32.mrf.mxu0
      %v417 = vadd.f32 0.0, %v416
      %v418 = vpop.f32.mrf.mxu0
      %419 = vdwg.mxu0
      %v420 = vadd.f32 %v333, %v414
      %v421 = vadd.f32 %v334, %v417
      %422 = vst [vmem:[#allocation2] sm:$0xff] %v420
      %423 = vst [vmem:[#allocation2 + $0x8] sm:$0xff] %v421
      %v424 = vld [vmem:[#allocation2] sm:$0xff]
      %v425 = vld [vmem:[#allocation2 + $0x8] sm:$0xff]
      %s426 = scalar_lea.vmem %s0, 24
      %v427 = vld [vmem:[%s426] sm:$0xf]
      %v428 = vld [vmem:[%s426 + $0x4] sm:$0xf]
      %v429 = vld [vmem:[%s165] sm:$0xff]
      %v430 = vld [vmem:[%s165 + $0x8] sm:$0xff]
      %v431 = vld [vmem:[%s165 + $0x10] sm:$0xff]
      %v432 = vld [vmem:[%s165 + $0x18] sm:$0xff]
      %v435 = vunpack.c.l.b16 %v427
      %v436 = vunpack.c.l.b16 %v428
      %v437 = vpack.c.b16 %v436, %v435
      %v442 = vunpack.c.l.b16 %v429
      %v443 = vunpack.c.h.b16 %v429
      %v444 = vunpack.c.l.b16 %v430
      %v445 = vunpack.c.h.b16 %v430
      %v446 = vunpack.c.l.b16 %v431
      %v447 = vunpack.c.h.b16 %v431
      %v448 = vunpack.c.l.b16 %v432
      %v449 = vunpack.c.h.b16 %v432
      %v450 = vpack.c.b16 %v444, %v442
      %v451 = vpack.c.b16 %v445, %v443
      %v452 = vpack.c.b16 %v448, %v446
      %v453 = vpack.c.b16 %v449, %v447
      %454 = vrot.lane.b32.xlu0 %v450, 118
      %v455 = vpop.permute.xlu0 %454
      %456 = vrot.lane.b32.xlu0 %v451, 118
      %v457 = vpop.permute.xlu0 %456
      %458 = vrot.lane.b32.xlu0 %v452, 118
      %v459 = vpop.permute.xlu0 %458
      %460 = vrot.lane.b32.xlu0 %v453, 118
      %v461 = vpop.permute.xlu0 %460
      %vm462 = vcmask 965632
      %v463 = vsel %vm462, %v455, %v457
      %v464 = vsel %vm462, %v459, %v461
      %v468 = vsel %vm195, %v437, 0
      %470 = vmatprep.subr.bf16.mxu0 0
      %471 = vmatpush1.bf16.msra.mxu0 0
      %472 = vmatprep.subr.bf16.mxu0 0
      %473 = vmatpush1.bf16.msra.mxu0 0
      %474 = vmatprep.subr.bf16.mxu0 0
      %475 = vmatpush1.bf16.msra.mxu0 0
      %476 = vmatprep.subr.bf16.mxu0 0
      %477 = vmatpush1.bf16.msra.mxu0 0
      %478 = vmatprep.subr.bf16.mxu0 0
      %479 = vmatpush1.bf16.msra.mxu0 0
      %480 = vmatprep.subr.bf16.mxu0 0
      %481 = vmatpush1.bf16.msra.mxu0 0
      %482 = vmatprep.subr.bf16.mxu0 0
      %483 = vmatpush1.bf16.msra.mxu0 %v464
      %484 = vmatprep.subr.bf16.mxu0 0
      %485 = vmatpush1.bf16.msra.mxu0 %v463
      %486 = vmatprep.subr.bf16.mxu0 0
      %487 = vmatpush2.bf16.msra.mxu0 0
      %488 = vmatprep.subr.bf16.mxu0 0
      %489 = vmatpush2.bf16.msra.mxu0 0
      %490 = vmatprep.subr.bf16.mxu0 0
      %491 = vmatpush2.bf16.msra.mxu0 0
      %492 = vmatprep.subr.bf16.mxu0 0
      %493 = vmatpush2.bf16.msra.mxu0 0
      %494 = vmatprep.subr.bf16.mxu0 0
      %495 = vmatpush2.bf16.msra.mxu0 0
      %496 = vmatprep.subr.bf16.mxu0 0
      %497 = vmatpush2.bf16.msra.mxu0 0
      %498 = vmatprep.subr.bf16.mxu0 0
      %499 = vmatpush2.bf16.msra.mxu0 0
      %500 = vmatprep.subr.bf16.mxu0 0
      %501 = vmatpush2.bf16.msra.mxu0 0
      %502 = vmatprep.mubr.bf16.mxu0 0
      %503 = vmatmul.mubr.bf16.gmra.mxu0 %v468
      %v504 = vpop.f32.mrf.mxu0
      %v505 = vadd.f32 0.0, %v504
      %v506 = vpop.f32.mrf.mxu0
      %v507 = vpop.f32.mrf.mxu0
      %v508 = vadd.f32 0.0, %v507
      %v509 = vpop.f32.mrf.mxu0
      %510 = vdwg.mxu0
      %v511 = vadd.f32 %v424, %v505
      %v512 = vadd.f32 %v425, %v508
      %513 = vst [vmem:[#allocation2] sm:$0xff] %v511
      %514 = vst [vmem:[#allocation2 + $0x8] sm:$0xff] %v512
      %v515 = vld [vmem:[#allocation2] sm:$0xff]
      %v516 = vld [vmem:[#allocation2 + $0x8] sm:$0xff]
      %v517 = vld [vmem:[%s1] sm:$0xff]
      %v518 = vld [vmem:[%s1 + $0x8] sm:$0xff]
      %520 = vset.pattern.permute.xlu0 0
      %521 = vperm.xlu0 %520, %v517
      %v522 = vpop.permute.xlu0 %521
      %525 = vset.pattern.permute.xlu0 0
      %526 = vperm.xlu0 %525, %v518
      %v527 = vpop.permute.xlu0 %526
      %v529 = vadd.f32 %v515, %v522
      %v530 = vadd.f32 %v516, %v527
      %vm531 = vcmp.gt.f32.partialorder %v529, 0.0
      %vm532 = vcmp.gt.f32.partialorder %v530, 0.0
      %v533 = vmul.f32 %v529, 0.0
      %v534 = vmul.f32 %v530, 0.0
      %v535 = vsel %vm531, %v529, %v533
      %v536 = vsel %vm532, %v530, %v534
      %v537 = vpack.c.bf16 %v536, %v535
      %v539 = vunpack.c.l.b16 %v537
      %v540 = vunpack.c.h.b16 %v537
      %v541 = vpack.c.b16 %v539, %v539
      %v542 = vpack.c.b16 %v540, %v540
      %545 = vst [vmem:[%s170] sm:$0xf] %v541
      %546 = vst [vmem:[%s170 + $0x4] sm:$0xf] %v542
      %p547 = scmp.lt.s32.totalorder %s14, 1
      %s548 = scalar_select %p547, %s14, 1
      %s549 = smul.addr %s548, 2
      %s550 = smul.addr %s549, 4
      %s551 = scalar_lea.vmem %s3, %s550
      // Predicated region
      $region33: #{encoder_forward.5} parent=31 // pred_check
        %p552 = pneg %p100
      $region34: #{encoder_forward.5} parent=31 // pred_check_branch
        %554 = sbr.rel (%p552) target = $region36
      $region35: #{encoder_forward.5} parent=31 // pred_region
        _
      $region36: #{encoder_forward.5} parent=31 // pred_fallthru
        _
    $region32: #{encoder_forward.5} parent=5 // pred_fallthru
      _
    %p555 = scmp.le.s32.totalorder 2, %s9
    // Predicated region
    $region37: #{encoder_forward.5} parent=5 // pred_check
      %p556 = pneg %p555
    $region38: #{encoder_forward.5} parent=5 // pred_check_branch
      %558 = sbr.rel (%p556) target = $region40
    $region39: #{encoder_forward.5} parent=5 // pred_region
      %s559 = ssub.s32 %s9, 2
      // Predicated region
      $region41: #{encoder_forward.5} parent=39 // pred_check
        %p560 = pneg %p106
      $region42: #{encoder_forward.5} parent=39 // pred_check_branch
        %562 = sbr.rel (%p560) target = $region44
      $region43: #{encoder_forward.5} parent=39 // pred_region
        %p563 = scmp.lt.s32.totalorder %s15, 1
        %s564 = scalar_select %p563, %s15, 1
        %s565 = smul.addr %s564, 2
        %s566 = smul.addr %s565, 4
        %s567 = scalar_lea.vmem %s3, %s566
      $region44: #{encoder_forward.5} parent=39 // pred_fallthru
        _
    $region40: #{encoder_forward.5} parent=5 // pred_fallthru
      _
  $region6: #{encoder_forward.5} parent=0 // loop_footer
    %s13 = sadd.s32 1, %s9
  $region7: #{encoder_forward.5} parent=0 // loop_footer_branch
    %8 = sbr.rel target = $region3
  $region8: #{encoder_forward.5} parent=0 // loop_exit
    _

// kernel: encoder_forward.6
$region0: #{encoder_forward.6}
  #allocation0 [shape = 'u32[]', space=smem, size = 0x4, offset = 0x4, fixed_abs, tag = 'smem constant byte address 0x4 - core index']
  #allocation1 [shape = 'u32[144,128]{1,0:T(1,128)}', space=vmem, size = 0x12000, scoped, tag = 'internal scratch']
  #allocation2 [shape = 'f32[32,128]{1,0:T(8,128)}', space=vmem, size = 0x4000, scoped, tag = 'scratch operand']
  %s0 = inlined_call_operand.vmem [shape: bf16[4,32,64], index: 0, kind: input, shape index: {}]
  %s1 = inlined_call_operand.vmem [shape: f32[32,1], index: 1, kind: input, shape index: {}]
  %s2 = inlined_call_operand.vmem [shape: bf16[2,64,256], index: 2, kind: input, shape index: {}]
  %s3 = inlined_call_operand.vmem [shape: bf16[2,32,128], index: 3, kind: output, shape index: {}]
  %s4 = sld [smem:[#allocation0]]
  $region45: #{encoder_forward.6} parent=0
    _
  %s6 = ssub.s32 1, %s4
  %s7 = scalar_select 0, %s6, %s4
  loop: start=0, step=1, limit=4
  $region2: #{encoder_forward.6} parent=0 // loop_pre_header
    _
  $region3: #{encoder_forward.6} parent=0 // loop_header
    %s9 = sphi 0, %s13
    %p10 = scmp.ge.s32.totalorder %s9, 4
    %s17 = sphi 0, %s17
    %s19 = sphi 0, %s17
    %s20 = sphi 0, %s19
    %s34 = sphi 0, %s20
    %s38 = sphi 0, %s38
    %s40 = sphi 0, %s38
    %s41 = sphi 0, %s40
    %s55 = sphi 0, %s41
    %s61 = sphi 0, %s63
    %s64 = sphi 0, %s61
    %s65 = sphi 0, %s64
    %s81 = sphi 0, %s65
    %s87 = sphi 0, %s89
    %s90 = sphi 0, %s87
    %s91 = sphi 0, %s90
    %s107 = sphi 0, %s91
  $region4: #{encoder_forward.6} parent=0 // loop_header_branch
    %12 = sbr.rel (%p10) target = $region8
  $region5: #{encoder_forward.6} parent=0 // loop_body
    %s14 = ssub.s32 %s9, 1
    %s15 = ssub.s32 %s9, 2
    %s16 = sadd.s32 %s9, 1
    %s18 = sadd.s32 %s17, 1
    %p21 = scmp.eq.s32.totalorder %s9, 1
    %p22 = scmp.ne.s32.totalorder %s17, %s19
    %p23 = scmp.eq.s32.totalorder %s9, 0
    %p24 = por %p22, %p23
    %p25 = scmp.ne.s32.totalorder %s17, %s19
    %p26 = scmp.eq.s32.totalorder %s14, 1
    %p27 = por %p25, %p26
    %p28 = scmp.ne.s32.totalorder %s19, %s20
    %p29 = scmp.eq.s32.totalorder %s14, 0
    %p30 = por %p28, %p29
    %p31 = scmp.ne.s32.totalorder %s19, %s20
    %p32 = scmp.eq.s32.totalorder %s15, 1
    %p33 = por %p31, %p32
    %p35 = scmp.ne.s32.totalorder %s20, %s34
    %p36 = scmp.eq.s32.totalorder %s15, 0
    %p37 = por %p35, %p36
    %s39 = sadd.s32 %s38, 1
    %p42 = scmp.eq.s32.totalorder %s9, 1
    %p43 = scmp.ne.s32.totalorder %s38, %s40
    %p44 = scmp.eq.s32.totalorder %s9, 0
    %p45 = por %p43, %p44
    %p46 = scmp.ne.s32.totalorder %s38, %s40
    %p47 = scmp.eq.s32.totalorder %s14, 1
    %p48 = por %p46, %p47
    %p49 = scmp.ne.s32.totalorder %s40, %s41
    %p50 = scmp.eq.s32.totalorder %s14, 0
    %p51 = por %p49, %p50
    %p52 = scmp.ne.s32.totalorder %s40, %s41
    %p53 = scmp.eq.s32.totalorder %s15, 1
    %p54 = por %p52, %p53
    %p56 = scmp.ne.s32.totalorder %s41, %s55
    %p57 = scmp.eq.s32.totalorder %s15, 0
    %p58 = por %p56, %p57
    %s59 = ssub.s32 %s9, %s16
    %p60 = scmp.eq.s32.totalorder %s59, 0
    %s62 = sadd.s32 %s61, 1
    %s63 = scalar_select %p60, %s61, %s62
    %p66 = pneg %p60
    %p67 = scmp.eq.s32.totalorder %s9, 1
    %p68 = por %p66, %p67
    %p69 = scmp.ne.s32.totalorder %s61, %s64
    %p70 = scmp.eq.s32.totalorder %s9, 0
    %p71 = por %p69, %p70
    %p72 = scmp.ne.s32.totalorder %s61, %s64
    %p73 = scmp.eq.s32.totalorder %s14, 1
    %p74 = por %p72, %p73
    %p75 = scmp.ne.s32.totalorder %s64, %s65
    %p76 = scmp.eq.s32.totalorder %s14, 0
    %p77 = por %p75, %p76
    %p78 = scmp.ne.s32.totalorder %s64, %s65
    %p79 = scmp.eq.s32.totalorder %s15, 1
    %p80 = por %p78, %p79
    %p82 = scmp.ne.s32.totalorder %s65, %s81
    %p83 = scmp.eq.s32.totalorder %s15, 0
    %p84 = por %p82, %p83
    %s85 = ssub.s32 %s9, %s16
    %p86 = scmp.eq.s32.totalorder %s85, 0
    %s88 = sadd.s32 %s87, 1
    %s89 = scalar_select %p86, %s87, %s88
    %p92 = pneg %p86
    %p93 = scmp.eq.s32.totalorder %s9, 1
    %p94 = por %p92, %p93
    %p95 = scmp.ne.s32.totalorder %s87, %s90
    %p96 = scmp.eq.s32.totalorder %s9, 0
    %p97 = por %p95, %p96
    %p98 = scmp.ne.s32.totalorder %s87, %s90
    %p99 = scmp.eq.s32.totalorder %s14, 1
    %p100 = por %p98, %p99
    %p101 = scmp.ne.s32.totalorder %s90, %s91
    %p102 = scmp.eq.s32.totalorder %s14, 0
    %p103 = por %p101, %p102
    %p104 = scmp.ne.s32.totalorder %s90, %s91
    %p105 = scmp.eq.s32.totalorder %s15, 1
    %p106 = por %p104, %p105
    %p108 = scmp.ne.s32.totalorder %s91, %s107
    %p109 = scmp.eq.s32.totalorder %s15, 0
    %p110 = por %p108, %p109
    %p111 = scmp.le.s32.totalorder 1, %s9
    %p112 = scmp.lt.s32.totalorder %s9, 3
    %p113 = pnand %p111, %p112
    %p114 = pneg %p113
    // Predicated region
    $region9: #{encoder_forward.6} parent=5 // pred_check
      _
    $region10: #{encoder_forward.6} parent=5 // pred_check_branch
      %116 = sbr.rel (%p113) target = $region12
    $region11: #{encoder_forward.6} parent=5 // pred_region
      %s117 = ssub.s32 %s9, 1
      // Predicated region
      $region13: #{encoder_forward.6} parent=11 // pred_check
        %p118 = pneg %p30
      $region14: #{encoder_forward.6} parent=11 // pred_check_branch
        %120 = sbr.rel (%p118) target = $region16
      $region15: #{encoder_forward.6} parent=11 // pred_region
        _
      $region16: #{encoder_forward.6} parent=11 // pred_fallthru
        _
      // Predicated region
      $region17: #{encoder_forward.6} parent=11 // pred_check
        %p121 = pneg %p51
      $region18: #{encoder_forward.6} parent=11 // pred_check_branch
        %123 = sbr.rel (%p121) target = $region20
      $region19: #{encoder_forward.6} parent=11 // pred_region
        _
      $region20: #{encoder_forward.6} parent=11 // pred_fallthru
        _
    $region12: #{encoder_forward.6} parent=5 // pred_fallthru
      _
    %p124 = scmp.lt.s32.totalorder %s9, 2
    // Predicated region
    $region21: #{encoder_forward.6} parent=5 // pred_check
      %p125 = pneg %p124
    $region22: #{encoder_forward.6} parent=5 // pred_check_branch
      %127 = sbr.rel (%p125) target = $region24
    $region23: #{encoder_forward.6} parent=5 // pred_region
      // Predicated region
      $region25: #{encoder_forward.6} parent=23 // pred_check
        %p128 = pneg %p71
      $region26: #{encoder_forward.6} parent=23 // pred_check_branch
        %130 = sbr.rel (%p128) target = $region28
      $region27: #{encoder_forward.6} parent=23 // pred_region
        %p131 = scmp.lt.s32.totalorder %s9, 1
        %s132 = scalar_select %p131, %s9, 1
        %s133 = smul.addr %s132, 16
        %s134 = smul.addr %s133, 4
        %s135 = scalar_lea.vmem %s2, %s134
      $region28: #{encoder_forward.6} parent=23 // pred_fallthru
        _
    $region24: #{encoder_forward.6} parent=5 // pred_fallthru
      _
    %p136 = scmp.le.s32.totalorder 1, %s9
    %p137 = scmp.lt.s32.totalorder %s9, 3
    %p138 = pnand %p136, %p137
    %p139 = pneg %p138
    // Predicated region
    $region29: #{encoder_forward.6} parent=5 // pred_check
      _
    $region30: #{encoder_forward.6} parent=5 // pred_check_branch
      %141 = sbr.rel (%p138) target = $region32
    $region31: #{encoder_forward.6} parent=5 // pred_region
      %s142 = ssub.s32 %s9, 1
      %p143 = pneg %p30
      %p144 = pneg %p27
      %p145 = pneg %p51
      %p146 = pneg %p48
      %p147 = scmp.lt.s32.totalorder %s14, 1
      %s148 = scalar_select %p147, %s14, 1
      %s149 = smul.addr %s148, 16
      %s150 = smul.addr %s149, 4
      %s151 = scalar_lea.vmem %s2, %s150
      %p152 = pneg %p77
      %p153 = pneg %p74
      %p154 = pneg %p103
      %p155 = pneg %p100
      %p156 = scmp.lt.s32.totalorder %s14, 1
      %s157 = scalar_select %p156, %s14, 1
      %s158 = smul.addr %s157, 4
      %s159 = smul.addr %s158, 4
      %s160 = scalar_lea.vmem %s3, %s159
      %p161 = scmp.lt.s32.totalorder %s14, 1
      %s162 = scalar_select %p161, %s14, 1
      %s163 = smul.addr %s162, 16
      %s164 = smul.addr %s163, 4
      %s165 = scalar_lea.vmem %s2, %s164
      %p166 = scmp.lt.s32.totalorder %s14, 1
      %s167 = scalar_select %p166, %s14, 1
      %s168 = smul.addr %s167, 4
      %s169 = smul.addr %s168, 4
      %s170 = scalar_lea.vmem %s3, %s169
      %v172 = vld [vmem:[%s0] sm:$0xf]
      %v173 = vld [vmem:[%s0 + $0x4] sm:$0xf]
      %v174 = vld [vmem:[%s0 + $0x8] sm:$0xf]
      %v175 = vld [vmem:[%s0 + $0xc] sm:$0xf]
      %v176 = vld [vmem:[%s165] sm:$0xf]
      %v177 = vld [vmem:[%s165 + $0x8] sm:$0xf]
      %v178 = vld [vmem:[%s165 + $0x10] sm:$0xf]
      %v179 = vld [vmem:[%s165 + $0x18] sm:$0xf]
      %v180 = vld [vmem:[%s165 + $0x20] sm:$0xf]
      %v181 = vld [vmem:[%s165 + $0x28] sm:$0xf]
      %v182 = vld [vmem:[%s165 + $0x30] sm:$0xf]
      %v183 = vld [vmem:[%s165 + $0x38] sm:$0xf]
      %v188 = vunpack.c.l.b16 %v172
      %v189 = vunpack.c.l.b16 %v173
      %v190 = vunpack.c.l.b16 %v174
      %v191 = vunpack.c.l.b16 %v175
      %v192 = vpack.c.b16 %v189, %v188
      %v193 = vpack.c.b16 %v191, %v190
      %v202 = vunpack.c.l.b16 %v176
      %v203 = vunpack.c.l.b16 %v177
      %v204 = vunpack.c.l.b16 %v178
      %v205 = vunpack.c.l.b16 %v179
      %v206 = vunpack.c.l.b16 %v180
      %v207 = vunpack.c.l.b16 %v181
      %v208 = vunpack.c.l.b16 %v182
      %v209 = vunpack.c.l.b16 %v183
      %v210 = vpack.c.b16 %v203, %v202
      %v211 = vpack.c.b16 %v205, %v204
      %v212 = vpack.c.b16 %v207, %v206
      %v213 = vpack.c.b16 %v209, %v208
      %vm218 = vcmask 523264
      %v220 = vsel %vm218, %v192, 0
      %v223 = vsel %vm218, %v193, 0
      %225 = vmatprep.subr.bf16.mxu0 0
      %226 = vmatpush1.bf16.msra.mxu0 0
      %227 = vmatprep.subr.bf16.mxu0 0
      %228 = vmatpush1.bf16.msra.mxu0 0
      %229 = vmatprep.subr.bf16.mxu0 0
      %230 = vmatpush1.bf16.msra.mxu0 0
      %231 = vmatprep.subr.bf16.mxu0 0
      %232 = vmatpush1.bf16.msra.mxu0 0
      %233 = vmatprep.subr.bf16.mxu0 0
      %234 = vmatpush1.bf16.msra.mxu0 %v213
      %235 = vmatprep.subr.bf16.mxu0 0
      %236 = vmatpush1.bf16.msra.mxu0 %v212
      %237 = vmatprep.subr.bf16.mxu0 0
      %238 = vmatpush1.bf16.msra.mxu0 %v211
      %239 = vmatprep.subr.bf16.mxu0 0
      %240 = vmatpush1.bf16.msra.mxu0 %v210
      %241 = vmatprep.subr.bf16.mxu0 0
      %242 = vmatpush2.bf16.msra.mxu0 0
      %243 = vmatprep.subr.bf16.mxu0 0
      %244 = vmatpush2.bf16.msra.mxu0 0
      %245 = vmatprep.subr.bf16.mxu0 0
      %246 = vmatpush2.bf16.msra.mxu0 0
      %247 = vmatprep.subr.bf16.mxu0 0
      %248 = vmatpush2.bf16.msra.mxu0 0
      %249 = vmatprep.subr.bf16.mxu0 0
      %250 = vmatpush2.bf16.msra.mxu0 0
      %251 = vmatprep.subr.bf16.mxu0 0
      %252 = vmatpush2.bf16.msra.mxu0 0
      %253 = vmatprep.subr.bf16.mxu0 0
      %254 = vmatpush2.bf16.msra.mxu0 0
      %255 = vmatprep.subr.bf16.mxu0 0
      %256 = vmatpush2.bf16.msra.mxu0 0
      %257 = vmatprep.mubr.bf16.mxu0 0
      %258 = vmatmul.mubr.bf16.gmra.mxu0 %v220
      %v259 = vpop.f32.mrf.mxu0
      %v260 = vadd.f32 0.0, %v259
      %v261 = vpop.f32.mrf.mxu0
      %v262 = vpop.f32.mrf.mxu0
      %v263 = vadd.f32 0.0, %v262
      %v264 = vpop.f32.mrf.mxu0
      %265 = vmatprep.mubr.bf16.mxu0 0
      %266 = vmatmul.mubr.bf16.gmra.mxu0 %v223
      %v267 = vpop.f32.mrf.mxu0
      %v268 = vadd.f32 0.0, %v267
      %v269 = vpop.f32.mrf.mxu0
      %v270 = vpop.f32.mrf.mxu0
      %v271 = vadd.f32 0.0, %v270
      %v272 = vpop.f32.mrf.mxu0
      %273 = vdwg.mxu0
      %274 = vst [vmem:[#allocation2] sm:$0xff] %v260
      %275 = vst [vmem:[#allocation2 + $0x8] sm:$0xff] %v263
      %276 = vst [vmem:[#allocation2 + $0x10] sm:$0xff] %v268
      %277 = vst [vmem:[#allocation2 + $0x18] sm:$0xff] %v271
      %v278 = vld [vmem:[#allocation2] sm:$0xff]
      %v279 = vld [vmem:[#allocation2 + $0x8] sm:$0xff]
      %v280 = vld [vmem:[#allocation2 + $0x10] sm:$0xff]
      %v281 = vld [vmem:[#allocation2 + $0x18] sm:$0xff]
      %s282 = scalar_lea.vmem %s0, 16
      %v283 = vld [vmem:[%s282] sm:$0xf]
      %v284 = vld [vmem:[%s282 + $0x4] sm:$0xf]
      %v285 = vld [vmem:[%s282 + $0x8] sm:$0xf]
      %v286 = vld [vmem:[%s282 + $0xc] sm:$0xf]
      %v287 = vld [vmem:[%s165] sm:$0xff]
      %v288 = vld [vmem:[%s165 + $0x8] sm:$0xff]
      %v289 = vld [vmem:[%s165 + $0x10] sm:$0xff]
      %v290 = vld [vmem:[%s165 + $0x18] sm:$0xff]
      %v291 = vld [vmem:[%s165 + $0x20] sm:$0xff]
      %v292 = vld [vmem:[%s165 + $0x28] sm:$0xff]
      %v293 = vld [vmem:[%s165 + $0x30] sm:$0xff]
      %v294 = vld [vmem:[%s165 + $0x38] sm:$0xff]
      %v299 = vunpack.c.l.b16 %v283
      %v300 = vunpack.c.l.b16 %v284
      %v301 = vunpack.c.l.b16 %v285
      %v302 = vunpack.c.l.b16 %v286
      %v303 = vpack.c.b16 %v300, %v299
      %v304 = vpack.c.b16 %v302, %v301
      %v313 = vunpack.c.l.b16 %v287
      %v314 = vunpack.c.h.b16 %v287
      %v315 = vunpack.c.l.b16 %v288
      %v316 = vunpack.c.h.b16 %v288
      %v317 = vunpack.c.l.b16 %v289
      %v318 = vunpack.c.h.b16 %v289
      %v319 = vunpack.c.l.b16 %v290
      %v320 = vunpack.c.h.b16 %v290
      %v321 = vunpack.c.l.b16 %v291
      %v322 = vunpack.c.h.b16 %v291
      %v323 = vunpack.c.l.b16 %v292
      %v324 = vunpack.c.h.b16 %v292
      %v325 = vunpack.c.l.b16 %v293
      %v326 = vunpack.c.h.b16 %v293
      %v327 = vunpack.c.l.b16 %v294
      %v328 = vunpack.c.h.b16 %v294
      %v329 = vpack.c.b16 %v315, %v313
      %v330 = vpack.c.b16 %v316, %v314
      %v331 = vpack.c.b16 %v319, %v317
      %v332 = vpack.c.b16 %v320, %v318
      %v333 = vpack.c.b16 %v323, %v321
      %v334 = vpack.c.b16 %v324, %v322
      %v335 = vpack.c.b16 %v327, %v325
      %v336 = vpack.c.b16 %v328, %v326
      %337 = vrot.lane.b32.xlu0 %v329, 127
      %v338 = vpop.permute.xlu0 %337
      %339 = vrot.lane.b32.xlu0 %v330, 127
      %v340 = vpop.permute.xlu0 %339
      %341 = vrot.lane.b32.xlu0 %v331, 127
      %v342 = vpop.permute.xlu0 %341
      %343 = vrot.lane.b32.xlu0 %v332, 127
      %v344 = vpop.permute.xlu0 %343
      %345 = vrot.lane.b32.xlu0 %v333, 127
      %v346 = vpop.permute.xlu0 %345
      %347 = vrot.lane.b32.xlu0 %v334, 127
      %v348 = vpop.permute.xlu0 %347
      %349 = vrot.lane.b32.xlu0 %v335, 127
      %v350 = vpop.permute.xlu0 %349
      %351 = vrot.lane.b32.xlu0 %v336, 127
      %v352 = vpop.permute.xlu0 %351
      %vm353 = vcmask 1039360
      %v354 = vsel %vm353, %v338, %v340
      %v355 = vsel %vm353, %v342, %v344
      %v356 = vsel %vm353, %v346, %v348
      %v357 = vsel %vm353, %v350, %v352
      %v363 = vsel %vm218, %v303, 0
      %v366 = vsel %vm218, %v304, 0
      %368 = vmatprep.subr.bf16.mxu0 0
      %369 = vmatpush1.bf16.msra.mxu0 0
      %370 = vmatprep.subr.bf16.mxu0 0
      %371 = vmatpush1.bf16.msra.mxu0 0
      %372 = vmatprep.subr.bf16.mxu0 0
      %373 = vmatpush1.bf16.msra.mxu0 0
      %374 = vmatprep.subr.bf16.mxu0 0
      %375 = vmatpush1.bf16.msra.mxu0 0
      %376 = vmatprep.subr.bf16.mxu0 0
      %377 = vmatpush1.bf16.msra.mxu0 %v357
      %378 = vmatprep.subr.bf16.mxu0 0
      %379 = vmatpush1.bf16.msra.mxu0 %v356
      %380 = vmatprep.subr.bf16.mxu0 0
      %381 = vmatpush1.bf16.msra.mxu0 %v355
      %382 = vmatprep.subr.bf16.mxu0 0
      %383 = vmatpush1.bf16.msra.mxu0 %v354
      %384 = vmatprep.subr.bf16.mxu0 0
      %385 = vmatpush2.bf16.msra.mxu0 0
      %386 = vmatprep.subr.bf16.mxu0 0
      %387 = vmatpush2.bf16.msra.mxu0 0
      %388 = vmatprep.subr.bf16.mxu0 0
      %389 = vmatpush2.bf16.msra.mxu0 0
      %390 = vmatprep.subr.bf16.mxu0 0
      %391 = vmatpush2.bf16.msra.mxu0 0
      %392 = vmatprep.subr.bf16.mxu0 0
      %393 = vmatpush2.bf16.msra.mxu0 0
      %394 = vmatprep.subr.bf16.mxu0 0
      %395 = vmatpush2.bf16.msra.mxu0 0
      %396 = vmatprep.subr.bf16.mxu0 0
      %397 = vmatpush2.bf16.msra.mxu0 0
      %398 = vmatprep.subr.bf16.mxu0 0
      %399 = vmatpush2.bf16.msra.mxu0 0
      %400 = vmatprep.mubr.bf16.mxu0 0
      %401 = vmatmul.mubr.bf16.gmra.mxu0 %v363
      %v402 = vpop.f32.mrf.mxu0
      %v403 = vadd.f32 0.0, %v402
      %v404 = vpop.f32.mrf.mxu0
      %v405 = vpop.f32.mrf.mxu0
      %v406 = vadd.f32 0.0, %v405
      %v407 = vpop.f32.mrf.mxu0
      %408 = vmatprep.mubr.bf16.mxu0 0
      %409 = vmatmul.mubr.bf16.gmra.mxu0 %v366
      %v410 = vpop.f32.mrf.mxu0
      %v411 = vadd.f32 0.0, %v410
      %v412 = vpop.f32.mrf.mxu0
      %v413 = vpop.f32.mrf.mxu0
      %v414 = vadd.f32 0.0, %v413
      %v415 = vpop.f32.mrf.mxu0
      %416 = vdwg.mxu0
      %v417 = vadd.f32 %v278, %v403
      %v418 = vadd.f32 %v279, %v406
      %v419 = vadd.f32 %v280, %v411
      %v420 = vadd.f32 %v281, %v414
      %421 = vst [vmem:[#allocation2] sm:$0xff] %v417
      %422 = vst [vmem:[#allocation2 + $0x8] sm:$0xff] %v418
      %423 = vst [vmem:[#allocation2 + $0x10] sm:$0xff] %v419
      %424 = vst [vmem:[#allocation2 + $0x18] sm:$0xff] %v420
      %v425 = vld [vmem:[#allocation2] sm:$0xff]
      %v426 = vld [vmem:[#allocation2 + $0x8] sm:$0xff]
      %v427 = vld [vmem:[#allocation2 + $0x10] sm:$0xff]
      %v428 = vld [vmem:[#allocation2 + $0x18] sm:$0xff]
      %s429 = scalar_lea.vmem %s0, 32
      %v430 = vld [vmem:[%s429] sm:$0xf]
      %v431 = vld [vmem:[%s429 + $0x4] sm:$0xf]
      %v432 = vld [vmem:[%s429 + $0x8] sm:$0xf]
      %v433 = vld [vmem:[%s429 + $0xc] sm:$0xf]
      %v434 = vld [vmem:[%s165] sm:$0xff]
      %v435 = vld [vmem:[%s165 + $0x8] sm:$0xff]
      %v436 = vld [vmem:[%s165 + $0x10] sm:$0xff]
      %v437 = vld [vmem:[%s165 + $0x18] sm:$0xff]
      %v438 = vld [vmem:[%s165 + $0x20] sm:$0xff]
      %v439 = vld [vmem:[%s165 + $0x28] sm:$0xff]
      %v440 = vld [vmem:[%s165 + $0x30] sm:$0xff]
      %v441 = vld [vmem:[%s165 + $0x38] sm:$0xff]
      %v446 = vunpack.c.l.b16 %v430
      %v447 = vunpack.c.l.b16 %v431
      %v448 = vunpack.c.l.b16 %v432
      %v449 = vunpack.c.l.b16 %v433
      %v450 = vpack.c.b16 %v447, %v446
      %v451 = vpack.c.b16 %v449, %v448
      %v460 = vunpack.c.l.b16 %v434
      %v461 = vunpack.c.h.b16 %v434
      %v462 = vunpack.c.l.b16 %v435
      %v463 = vunpack.c.h.b16 %v435
      %v464 = vunpack.c.l.b16 %v436
      %v465 = vunpack.c.h.b16 %v436
      %v466 = vunpack.c.l.b16 %v437
      %v467 = vunpack.c.h.b16 %v437
      %v468 = vunpack.c.l.b16 %v438
      %v469 = vunpack.c.h.b16 %v438
      %v470 = vunpack.c.l.b16 %v439
      %v471 = vunpack.c.h.b16 %v439
      %v472 = vunpack.c.l.b16 %v440
      %v473 = vunpack.c.h.b16 %v440
      %v474 = vunpack.c.l.b16 %v441
      %v475 = vunpack.c.h.b16 %v441
      %v476 = vpack.c.b16 %v462, %v460
      %v477 = vpack.c.b16 %v463, %v461
      %v478 = vpack.c.b16 %v466, %v464
      %v479 = vpack.c.b16 %v467, %v465
      %v480 = vpack.c.b16 %v470, %v468
      %v481 = vpack.c.b16 %v471, %v469
      %v482 = vpack.c.b16 %v474, %v472
      %v483 = vpack.c.b16 %v475, %v473
      %484 = vrot.lane.b32.xlu0 %v476, 123
      %v485 = vpop.permute.xlu0 %484
      %486 = vrot.lane.b32.xlu0 %v477, 123
      %v487 = vpop.permute.xlu0 %486
      %488 = vrot.lane.b32.xlu0 %v478, 123
      %v489 = vpop.permute.xlu0 %488
      %490 = vrot.lane.b32.xlu0 %v479, 123
      %v491 = vpop.permute.xlu0 %490
      %492 = vrot.lane.b32.xlu0 %v480, 123
      %v493 = vpop.permute.xlu0 %492
      %494 = vrot.lane.b32.xlu0 %v481, 123
      %v495 = vpop.permute.xlu0 %494
      %496 = vrot.lane.b32.xlu0 %v482, 123
      %v497 = vpop.permute.xlu0 %496
      %498 = vrot.lane.b32.xlu0 %v483, 123
      %v499 = vpop.permute.xlu0 %498
      %vm500 = vcmask 1006592
      %v501 = vsel %vm500, %v485, %v487
      %v502 = vsel %vm500, %v489, %v491
      %v503 = vsel %vm500, %v493, %v495
      %v504 = vsel %vm500, %v497, %v499
      %v510 = vsel %vm218, %v450, 0
      %v513 = vsel %vm218, %v451, 0
      %515 = vmatprep.subr.bf16.mxu0 0
      %516 = vmatpush1.bf16.msra.mxu0 0
      %517 = vmatprep.subr.bf16.mxu0 0
      %518 = vmatpush1.bf16.msra.mxu0 0
      %519 = vmatprep.subr.bf16.mxu0 0
      %520 = vmatpush1.bf16.msra.mxu0 0
      %521 = vmatprep.subr.bf16.mxu0 0
      %522 = vmatpush1.bf16.msra.mxu0 0
      %523 = vmatprep.subr.bf16.mxu0 0
      %524 = vmatpush1.bf16.msra.mxu0 %v504
      %525 = vmatprep.subr.bf16.mxu0 0
      %526 = vmatpush1.bf16.msra.mxu0 %v503
      %527 = vmatprep.subr.bf16.mxu0 0
      %528 = vmatpush1.bf16.msra.mxu0 %v502
      %529 = vmatprep.subr.bf16.mxu0 0
      %530 = vmatpush1.bf16.msra.mxu0 %v501
      %531 = vmatprep.subr.bf16.mxu0 0
      %532 = vmatpush2.bf16.msra.mxu0 0
      %533 = vmatprep.subr.bf16.mxu0 0
      %534 = vmatpush2.bf16.msra.mxu0 0
      %535 = vmatprep.subr.bf16.mxu0 0
      %536 = vmatpush2.bf16.msra.mxu0 0
      %537 = vmatprep.subr.bf16.mxu0 0
      %538 = vmatpush2.bf16.msra.mxu0 0
      %539 = vmatprep.subr.bf16.mxu0 0
      %540 = vmatpush2.bf16.msra.mxu0 0
      %541 = vmatprep.subr.bf16.mxu0 0
      %542 = vmatpush2.bf16.msra.mxu0 0
      %543 = vmatprep.subr.bf16.mxu0 0
      %544 = vmatpush2.bf16.msra.mxu0 0
      %545 = vmatprep.subr.bf16.mxu0 0
      %546 = vmatpush2.bf16.msra.mxu0 0
      %547 = vmatprep.mubr.bf16.mxu0 0
      %548 = vmatmul.mubr.bf16.gmra.mxu0 %v510
      %v549 = vpop.f32.mrf.mxu0
      %v550 = vadd.f32 0.0, %v549
      %v551 = vpop.f32.mrf.mxu0
      %v552 = vpop.f32.mrf.mxu0
      %v553 = vadd.f32 0.0, %v552
      %v554 = vpop.f32.mrf.mxu0
      %555 = vmatprep.mubr.bf16.mxu0 0
      %556 = vmatmul.mubr.bf16.gmra.mxu0 %v513
      %v557 = vpop.f32.mrf.mxu0
      %v558 = vadd.f32 0.0, %v557
      %v559 = vpop.f32.mrf.mxu0
      %v560 = vpop.f32.mrf.mxu0
      %v561 = vadd.f32 0.0, %v560
      %v562 = vpop.f32.mrf.mxu0
      %563 = vdwg.mxu0
      %v564 = vadd.f32 %v425, %v550
      %v565 = vadd.f32 %v426, %v553
      %v566 = vadd.f32 %v427, %v558
      %v567 = vadd.f32 %v428, %v561
      %568 = vst [vmem:[#allocation2] sm:$0xff] %v564
      %569 = vst [vmem:[#allocation2 + $0x8] sm:$0xff] %v565
      %570 = vst [vmem:[#allocation2 + $0x10] sm:$0xff] %v566
      %571 = vst [vmem:[#allocation2 + $0x18] sm:$0xff] %v567
      %v572 = vld [vmem:[#allocation2] sm:$0xff]
      %v573 = vld [vmem:[#allocation2 + $0x8] sm:$0xff]
      %v574 = vld [vmem:[#allocation2 + $0x10] sm:$0xff]
      %v575 = vld [vmem:[#allocation2 + $0x18] sm:$0xff]
      %s576 = scalar_lea.vmem %s0, 48
      %v577 = vld [vmem:[%s576] sm:$0xf]
      %v578 = vld [vmem:[%s576 + $0x4] sm:$0xf]
      %v579 = vld [vmem:[%s576 + $0x8] sm:$0xf]
      %v580 = vld [vmem:[%s576 + $0xc] sm:$0xf]
      %v581 = vld [vmem:[%s165] sm:$0xff]
      %v582 = vld [vmem:[%s165 + $0x8] sm:$0xff]
      %v583 = vld [vmem:[%s165 + $0x10] sm:$0xff]
      %v584 = vld [vmem:[%s165 + $0x18] sm:$0xff]
      %v585 = vld [vmem:[%s165 + $0x20] sm:$0xff]
      %v586 = vld [vmem:[%s165 + $0x28] sm:$0xff]
      %v587 = vld [vmem:[%s165 + $0x30] sm:$0xff]
      %v588 = vld [vmem:[%s165 + $0x38] sm:$0xff]
      %v593 = vunpack.c.l.b16 %v577
      %v594 = vunpack.c.l.b16 %v578
      %v595 = vunpack.c.l.b16 %v579
      %v596 = vunpack.c.l.b16 %v580
      %v597 = vpack.c.b16 %v594, %v593
      %v598 = vpack.c.b16 %v596, %v595
      %v607 = vunpack.c.l.b16 %v581
      %v608 = vunpack.c.h.b16 %v581
      %v609 = vunpack.c.l.b16 %v582
      %v610 = vunpack.c.h.b16 %v582
      %v611 = vunpack.c.l.b16 %v583
      %v612 = vunpack.c.h.b16 %v583
      %v613 = vunpack.c.l.b16 %v584
      %v614 = vunpack.c.h.b16 %v584
      %v615 = vunpack.c.l.b16 %v585
      %v616 = vunpack.c.h.b16 %v585
      %v617 = vunpack.c.l.b16 %v586
      %v618 = vunpack.c.h.b16 %v586
      %v619 = vunpack.c.l.b16 %v587
      %v620 = vunpack.c.h.b16 %v587
      %v621 = vunpack.c.l.b16 %v588
      %v622 = vunpack.c.h.b16 %v588
      %v623 = vpack.c.b16 %v609, %v607
      %v624 = vpack.c.b16 %v610, %v608
      %v625 = vpack.c.b16 %v613, %v611
      %v626 = vpack.c.b16 %v614, %v612
      %v627 = vpack.c.b16 %v617, %v615
      %v628 = vpack.c.b16 %v618, %v616
      %v629 = vpack.c.b16 %v621, %v619
      %v630 = vpack.c.b16 %v622, %v620
      %631 = vrot.lane.b32.xlu0 %v623, 122
      %v632 = vpop.permute.xlu0 %631
      %633 = vrot.lane.b32.xlu0 %v624, 122
      %v634 = vpop.permute.xlu0 %633
      %635 = vrot.lane.b32.xlu0 %v625, 122
      %v636 = vpop.permute.xlu0 %635
      %637 = vrot.lane.b32.xlu0 %v626, 122
      %v638 = vpop.permute.xlu0 %637
      %639 = vrot.lane.b32.xlu0 %v627, 122
      %v640 = vpop.permute.xlu0 %639
      %641 = vrot.lane.b32.xlu0 %v628, 122
      %v642 = vpop.permute.xlu0 %641
      %643 = vrot.lane.b32.xlu0 %v629, 122
      %v644 = vpop.permute.xlu0 %643
      %645 = vrot.lane.b32.xlu0 %v630, 122
      %v646 = vpop.permute.xlu0 %645
      %vm647 = vcmask 998400
      %v648 = vsel %vm647, %v632, %v634
      %v649 = vsel %vm647, %v636, %v638
      %v650 = vsel %vm647, %v640, %v642
      %v651 = vsel %vm647, %v644, %v646
      %v657 = vsel %vm218, %v597, 0
      %v660 = vsel %vm218, %v598, 0
      %662 = vmatprep.subr.bf16.mxu0 0
      %663 = vmatpush1.bf16.msra.mxu0 0
      %664 = vmatprep.subr.bf16.mxu0 0
      %665 = vmatpush1.bf16.msra.mxu0 0
      %666 = vmatprep.subr.bf16.mxu0 0
      %667 = vmatpush1.bf16.msra.mxu0 0
      %668 = vmatprep.subr.bf16.mxu0 0
      %669 = vmatpush1.bf16.msra.mxu0 0
      %670 = vmatprep.subr.bf16.mxu0 0
      %671 = vmatpush1.bf16.msra.mxu0 %v651
      %672 = vmatprep.subr.bf16.mxu0 0
      %673 = vmatpush1.bf16.msra.mxu0 %v650
      %674 = vmatprep.subr.bf16.mxu0 0
      %675 = vmatpush1.bf16.msra.mxu0 %v649
      %676 = vmatprep.subr.bf16.mxu0 0
      %677 = vmatpush1.bf16.msra.mxu0 %v648
      %678 = vmatprep.subr.bf16.mxu0 0
      %679 = vmatpush2.bf16.msra.mxu0 0
      %680 = vmatprep.subr.bf16.mxu0 0
      %681 = vmatpush2.bf16.msra.mxu0 0
      %682 = vmatprep.subr.bf16.mxu0 0
      %683 = vmatpush2.bf16.msra.mxu0 0
      %684 = vmatprep.subr.bf16.mxu0 0
      %685 = vmatpush2.bf16.msra.mxu0 0
      %686 = vmatprep.subr.bf16.mxu0 0
      %687 = vmatpush2.bf16.msra.mxu0 0
      %688 = vmatprep.subr.bf16.mxu0 0
      %689 = vmatpush2.bf16.msra.mxu0 0
      %690 = vmatprep.subr.bf16.mxu0 0
      %691 = vmatpush2.bf16.msra.mxu0 0
      %692 = vmatprep.subr.bf16.mxu0 0
      %693 = vmatpush2.bf16.msra.mxu0 0
      %694 = vmatprep.mubr.bf16.mxu0 0
      %695 = vmatmul.mubr.bf16.gmra.mxu0 %v657
      %v696 = vpop.f32.mrf.mxu0
      %v697 = vadd.f32 0.0, %v696
      %v698 = vpop.f32.mrf.mxu0
      %v699 = vpop.f32.mrf.mxu0
      %v700 = vadd.f32 0.0, %v699
      %v701 = vpop.f32.mrf.mxu0
      %702 = vmatprep.mubr.bf16.mxu0 0
      %703 = vmatmul.mubr.bf16.gmra.mxu0 %v660
      %v704 = vpop.f32.mrf.mxu0
      %v705 = vadd.f32 0.0, %v704
      %v706 = vpop.f32.mrf.mxu0
      %v707 = vpop.f32.mrf.mxu0
      %v708 = vadd.f32 0.0, %v707
      %v709 = vpop.f32.mrf.mxu0
      %710 = vdwg.mxu0
      %v711 = vadd.f32 %v572, %v697
      %v712 = vadd.f32 %v573, %v700
      %v713 = vadd.f32 %v574, %v705
      %v714 = vadd.f32 %v575, %v708
      %715 = vst [vmem:[#allocation2] sm:$0xff] %v711
      %716 = vst [vmem:[#allocation2 + $0x8] sm:$0xff] %v712
      %717 = vst [vmem:[#allocation2 + $0x10] sm:$0xff] %v713
      %718 = vst [vmem:[#allocation2 + $0x18] sm:$0xff] %v714
      %v719 = vld [vmem:[#allocation2] sm:$0xff]
      %v720 = vld [vmem:[#allocation2 + $0x8] sm:$0xff]
      %v721 = vld [vmem:[#allocation2 + $0x10] sm:$0xff]
      %v722 = vld [vmem:[#allocation2 + $0x18] sm:$0xff]
      %v723 = vld [vmem:[%s1] sm:$0xff]
      %v724 = vld [vmem:[%s1 + $0x8] sm:$0xff]
      %v725 = vld [vmem:[%s1 + $0x10] sm:$0xff]
      %v726 = vld [vmem:[%s1 + $0x18] sm:$0xff]
      %728 = vset.pattern.permute.xlu0 0
      %729 = vperm.xlu0 %728, %v723
      %v730 = vpop.permute.xlu0 %729
      %733 = vset.pattern.permute.xlu0 0
      %734 = vperm.xlu0 %733, %v724
      %v735 = vpop.permute.xlu0 %734
      %738 = vset.pattern.permute.xlu0 0
      %739 = vperm.xlu0 %738, %v725
      %v740 = vpop.permute.xlu0 %739
      %743 = vset.pattern.permute.xlu0 0
      %744 = vperm.xlu0 %743, %v726
      %v745 = vpop.permute.xlu0 %744
      %v747 = vadd.f32 %v719, %v730
      %v748 = vadd.f32 %v720, %v735
      %v749 = vadd.f32 %v721, %v740
      %v750 = vadd.f32 %v722, %v745
      %vm751 = vcmp.gt.f32.partialorder %v747, 0.0
      %vm752 = vcmp.gt.f32.partialorder %v748, 0.0
      %vm753 = vcmp.gt.f32.partialorder %v749, 0.0
      %vm754 = vcmp.gt.f32.partialorder %v750, 0.0
      %v755 = vmul.f32 %v747, 0.0
      %v756 = vmul.f32 %v748, 0.0
      %v757 = vmul.f32 %v749, 0.0
      %v758 = vmul.f32 %v750, 0.0
      %v759 = vsel %vm751, %v747, %v755
      %v760 = vsel %vm752, %v748, %v756
      %v761 = vsel %vm753, %v749, %v757
      %v762 = vsel %vm754, %v750, %v758
      %v763 = vpack.c.bf16 %v760, %v759
      %v764 = vpack.c.bf16 %v762, %v761
      %v767 = vunpack.c.l.b16 %v763
      %v768 = vunpack.c.h.b16 %v763
      %v769 = vunpack.c.l.b16 %v764
      %v770 = vunpack.c.h.b16 %v764
      %v771 = vpack.c.b16 %v767, %v767
      %v772 = vpack.c.b16 %v768, %v768
      %v773 = vpack.c.b16 %v769, %v769
      %v774 = vpack.c.b16 %v770, %v770
      %779 = vst [vmem:[%s170] sm:$0xf] %v771
      %780 = vst [vmem:[%s170 + $0x4] sm:$0xf] %v772
      %781 = vst [vmem:[%s170 + $0x8] sm:$0xf] %v773
      %782 = vst [vmem:[%s170 + $0xc] sm:$0xf] %v774
      %p783 = scmp.lt.s32.totalorder %s14, 1
      %s784 = scalar_select %p783, %s14, 1
      %s785 = smul.addr %s784, 4
      %s786 = smul.addr %s785, 4
      %s787 = scalar_lea.vmem %s3, %s786
      // Predicated region
      $region33: #{encoder_forward.6} parent=31 // pred_check
        %p788 = pneg %p100
      $region34: #{encoder_forward.6} parent=31 // pred_check_branch
        %790 = sbr.rel (%p788) target = $region36
      $region35: #{encoder_forward.6} parent=31 // pred_region
        _
      $region36: #{encoder_forward.6} parent=31 // pred_fallthru
        _
    $region32: #{encoder_forward.6} parent=5 // pred_fallthru
      _
    %p791 = scmp.le.s32.totalorder 2, %s9
    // Predicated region
    $region37: #{encoder_forward.6} parent=5 // pred_check
      %p792 = pneg %p791
    $region38: #{encoder_forward.6} parent=5 // pred_check_branch
      %794 = sbr.rel (%p792) target = $region40
    $region39: #{encoder_forward.6} parent=5 // pred_region
      %s795 = ssub.s32 %s9, 2
      // Predicated region
      $region41: #{encoder_forward.6} parent=39 // pred_check
        %p796 = pneg %p106
      $region42: #{encoder_forward.6} parent=39 // pred_check_branch
        %798 = sbr.rel (%p796) target = $region44
      $region43: #{encoder_forward.6} parent=39 // pred_region
        %p799 = scmp.lt.s32.totalorder %s15, 1
        %s800 = scalar_select %p799, %s15, 1
        %s801 = smul.addr %s800, 4
        %s802 = smul.addr %s801, 4
        %s803 = scalar_lea.vmem %s3, %s802
      $region44: #{encoder_forward.6} parent=39 // pred_fallthru
        _
    $region40: #{encoder_forward.6} parent=5 // pred_fallthru
      _
  $region6: #{encoder_forward.6} parent=0 // loop_footer
    %s13 = sadd.s32 1, %s9
  $region7: #{encoder_forward.6} parent=0 // loop_footer_branch
    %8 = sbr.rel target = $region3
  $region8: #{encoder_forward.6} parent=0 // loop_exit
    _

// kernel: encoder_forward.4
$region0: #{encoder_forward.4}
  #allocation0 [shape = 'u32[]', space=smem, size = 0x4, offset = 0x4, fixed_abs, tag = 'smem constant byte address 0x4 - core index']
  #allocation1 [shape = 'u32[144,128]{1,0:T(1,128)}', space=vmem, size = 0x12000, scoped, tag = 'internal scratch']
  #allocation2 [shape = 'f32[8,384]{1,0:T(8,128)}', space=vmem, size = 0x3000, scoped, tag = 'scratch operand']
  %s0 = inlined_call_operand.vmem [shape: bf16[49,8,4], index: 0, kind: input, shape index: {}]
  %s1 = inlined_call_operand.vmem [shape: f32[8,1], index: 1, kind: input, shape index: {}]
  %s2 = inlined_call_operand.vmem [shape: bf16[2,4,640], index: 2, kind: input, shape index: {}]
  %s3 = inlined_call_operand.vmem [shape: bf16[2,8,384], index: 3, kind: output, shape index: {}]
  %s4 = sld [smem:[#allocation0]]
  $region45: #{encoder_forward.4} parent=0
    _
  %s6 = ssub.s32 1, %s4
  %s7 = scalar_select 0, %s6, %s4
  loop: start=0, step=1, limit=4
  $region2: #{encoder_forward.4} parent=0 // loop_pre_header
    _
  $region3: #{encoder_forward.4} parent=0 // loop_header
    %s9 = sphi 0, %s13
    %p10 = scmp.ge.s32.totalorder %s9, 4
    %s17 = sphi 0, %s17
    %s19 = sphi 0, %s17
    %s20 = sphi 0, %s19
    %s34 = sphi 0, %s20
    %s38 = sphi 0, %s38
    %s40 = sphi 0, %s38
    %s41 = sphi 0, %s40
    %s55 = sphi 0, %s41
    %s61 = sphi 0, %s63
    %s64 = sphi 0, %s61
    %s65 = sphi 0, %s64
    %s81 = sphi 0, %s65
    %s87 = sphi 0, %s89
    %s90 = sphi 0, %s87
    %s91 = sphi 0, %s90
    %s107 = sphi 0, %s91
  $region4: #{encoder_forward.4} parent=0 // loop_header_branch
    %12 = sbr.rel (%p10) target = $region8
  $region5: #{encoder_forward.4} parent=0 // loop_body
    %s14 = ssub.s32 %s9, 1
    %s15 = ssub.s32 %s9, 2
    %s16 = sadd.s32 %s9, 1
    %s18 = sadd.s32 %s17, 1
    %p21 = scmp.eq.s32.totalorder %s9, 1
    %p22 = scmp.ne.s32.totalorder %s17, %s19
    %p23 = scmp.eq.s32.totalorder %s9, 0
    %p24 = por %p22, %p23
    %p25 = scmp.ne.s32.totalorder %s17, %s19
    %p26 = scmp.eq.s32.totalorder %s14, 1
    %p27 = por %p25, %p26
    %p28 = scmp.ne.s32.totalorder %s19, %s20
    %p29 = scmp.eq.s32.totalorder %s14, 0
    %p30 = por %p28, %p29
    %p31 = scmp.ne.s32.totalorder %s19, %s20
    %p32 = scmp.eq.s32.totalorder %s15, 1
    %p33 = por %p31, %p32
    %p35 = scmp.ne.s32.totalorder %s20, %s34
    %p36 = scmp.eq.s32.totalorder %s15, 0
    %p37 = por %p35, %p36
    %s39 = sadd.s32 %s38, 1
    %p42 = scmp.eq.s32.totalorder %s9, 1
    %p43 = scmp.ne.s32.totalorder %s38, %s40
    %p44 = scmp.eq.s32.totalorder %s9, 0
    %p45 = por %p43, %p44
    %p46 = scmp.ne.s32.totalorder %s38, %s40
    %p47 = scmp.eq.s32.totalorder %s14, 1
    %p48 = por %p46, %p47
    %p49 = scmp.ne.s32.totalorder %s40, %s41
    %p50 = scmp.eq.s32.totalorder %s14, 0
    %p51 = por %p49, %p50
    %p52 = scmp.ne.s32.totalorder %s40, %s41
    %p53 = scmp.eq.s32.totalorder %s15, 1
    %p54 = por %p52, %p53
    %p56 = scmp.ne.s32.totalorder %s41, %s55
    %p57 = scmp.eq.s32.totalorder %s15, 0
    %p58 = por %p56, %p57
    %s59 = ssub.s32 %s9, %s16
    %p60 = scmp.eq.s32.totalorder %s59, 0
    %s62 = sadd.s32 %s61, 1
    %s63 = scalar_select %p60, %s61, %s62
    %p66 = pneg %p60
    %p67 = scmp.eq.s32.totalorder %s9, 1
    %p68 = por %p66, %p67
    %p69 = scmp.ne.s32.totalorder %s61, %s64
    %p70 = scmp.eq.s32.totalorder %s9, 0
    %p71 = por %p69, %p70
    %p72 = scmp.ne.s32.totalorder %s61, %s64
    %p73 = scmp.eq.s32.totalorder %s14, 1
    %p74 = por %p72, %p73
    %p75 = scmp.ne.s32.totalorder %s64, %s65
    %p76 = scmp.eq.s32.totalorder %s14, 0
    %p77 = por %p75, %p76
    %p78 = scmp.ne.s32.totalorder %s64, %s65
    %p79 = scmp.eq.s32.totalorder %s15, 1
    %p80 = por %p78, %p79
    %p82 = scmp.ne.s32.totalorder %s65, %s81
    %p83 = scmp.eq.s32.totalorder %s15, 0
    %p84 = por %p82, %p83
    %s85 = ssub.s32 %s9, %s16
    %p86 = scmp.eq.s32.totalorder %s85, 0
    %s88 = sadd.s32 %s87, 1
    %s89 = scalar_select %p86, %s87, %s88
    %p92 = pneg %p86
    %p93 = scmp.eq.s32.totalorder %s9, 1
    %p94 = por %p92, %p93
    %p95 = scmp.ne.s32.totalorder %s87, %s90
    %p96 = scmp.eq.s32.totalorder %s9, 0
    %p97 = por %p95, %p96
    %p98 = scmp.ne.s32.totalorder %s87, %s90
    %p99 = scmp.eq.s32.totalorder %s14, 1
    %p100 = por %p98, %p99
    %p101 = scmp.ne.s32.totalorder %s90, %s91
    %p102 = scmp.eq.s32.totalorder %s14, 0
    %p103 = por %p101, %p102
    %p104 = scmp.ne.s32.totalorder %s90, %s91
    %p105 = scmp.eq.s32.totalorder %s15, 1
    %p106 = por %p104, %p105
    %p108 = scmp.ne.s32.totalorder %s91, %s107
    %p109 = scmp.eq.s32.totalorder %s15, 0
    %p110 = por %p108, %p109
    %p111 = scmp.le.s32.totalorder 1, %s9
    %p112 = scmp.lt.s32.totalorder %s9, 3
    %p113 = pnand %p111, %p112
    %p114 = pneg %p113
    // Predicated region
    $region9: #{encoder_forward.4} parent=5 // pred_check
      _
    $region10: #{encoder_forward.4} parent=5 // pred_check_branch
      %116 = sbr.rel (%p113) target = $region12
    $region11: #{encoder_forward.4} parent=5 // pred_region
      %s117 = ssub.s32 %s9, 1
      // Predicated region
      $region13: #{encoder_forward.4} parent=11 // pred_check
        %p118 = pneg %p30
      $region14: #{encoder_forward.4} parent=11 // pred_check_branch
        %120 = sbr.rel (%p118) target = $region16
      $region15: #{encoder_forward.4} parent=11 // pred_region
        _
      $region16: #{encoder_forward.4} parent=11 // pred_fallthru
        _
      // Predicated region
      $region17: #{encoder_forward.4} parent=11 // pred_check
        %p121 = pneg %p51
      $region18: #{encoder_forward.4} parent=11 // pred_check_branch
        %123 = sbr.rel (%p121) target = $region20
      $region19: #{encoder_forward.4} parent=11 // pred_region
        _
      $region20: #{encoder_forward.4} parent=11 // pred_fallthru
        _
    $region12: #{encoder_forward.4} parent=5 // pred_fallthru
      _
    %p124 = scmp.lt.s32.totalorder %s9, 2
    // Predicated region
    $region21: #{encoder_forward.4} parent=5 // pred_check
      %p125 = pneg %p124
    $region22: #{encoder_forward.4} parent=5 // pred_check_branch
      %127 = sbr.rel (%p125) target = $region24
    $region23: #{encoder_forward.4} parent=5 // pred_region
      // Predicated region
      $region25: #{encoder_forward.4} parent=23 // pred_check
        %p128 = pneg %p71
      $region26: #{encoder_forward.4} parent=23 // pred_check_branch
        %130 = sbr.rel (%p128) target = $region28
      $region27: #{encoder_forward.4} parent=23 // pred_region
        %p131 = scmp.lt.s32.totalorder %s9, 1
        %s132 = scalar_select %p131, %s9, 1
        %s133 = smul.addr %s132, 5
        %s134 = smul.addr %s133, 2
        %s135 = scalar_lea.vmem %s2, %s134
      $region28: #{encoder_forward.4} parent=23 // pred_fallthru
        _
    $region24: #{encoder_forward.4} parent=5 // pred_fallthru
      _
    %p136 = scmp.le.s32.totalorder 1, %s9
    %p137 = scmp.lt.s32.totalorder %s9, 3
    %p138 = pnand %p136, %p137
    %p139 = pneg %p138
    // Predicated region
    $region29: #{encoder_forward.4} parent=5 // pred_check
      _
    $region30: #{encoder_forward.4} parent=5 // pred_check_branch
      %141 = sbr.rel (%p138) target = $region32
    $region31: #{encoder_forward.4} parent=5 // pred_region
      %s142 = ssub.s32 %s9, 1
      %p143 = pneg %p30
      %p144 = pneg %p27
      %p145 = pneg %p51
      %p146 = pneg %p48
      %p147 = scmp.lt.s32.totalorder %s14, 1
      %s148 = scalar_select %p147, %s14, 1
      %s149 = smul.addr %s148, 5
      %s150 = smul.addr %s149, 2
      %s151 = scalar_lea.vmem %s2, %s150
      %p152 = pneg %p77
      %p153 = pneg %p74
      %p154 = pneg %p103
      %p155 = pneg %p100
      %p156 = scmp.lt.s32.totalorder %s14, 1
      %s157 = scalar_select %p156, %s14, 1
      %s158 = smul.addr %s157, 3
      %s159 = smul.addr %s158, 4
      %s160 = scalar_lea.vmem %s3, %s159
      %p161 = scmp.lt.s32.totalorder %s14, 1
      %s162 = scalar_select %p161, %s14, 1
      %s163 = smul.addr %s162, 5
      %s164 = smul.addr %s163, 2
      %s165 = scalar_lea.vmem %s2, %s164
      %p166 = scmp.lt.s32.totalorder %s14, 1
      %s167 = scalar_select %p166, %s14, 1
      %s168 = smul.addr %s167, 3
      %s169 = smul.addr %s168, 4
      %s170 = scalar_lea.vmem %s3, %s169
      %v172 = vld [vmem:[%s0] sm:$0xf]
      %v173 = vld [vmem:[%s165] sm:$0x3f]
      %v175 = vcombine.high %v173, %v173
      %v177 = vunpack.c.l.s4 1983009808
      %v178 = vunpack.c.0.s8 %v177
      %v179 = vlaneseq
      %v180 = vshrl.u32 %v179, 7
      %v181 = vsub.s32 %v178, %v180
      %v182 = vrot.slane %v173, %v181
      %v184 = vunpack.c.l.s4 1983009808
      %v185 = vunpack.c.0.s8 %v184
      %v186 = vlaneseq
      %v187 = vshrl.u32 %v186, 7
      %v188 = vsub.s32 %v185, %v187
      %v189 = vrot.slane %v175, %v188
      %v190 = vcombine.high %v182, %v182
      %vm191 = vcmask 31744
      %v193 = vsel %vm191, %v172, 0
      %vm195 = vcmask 1041408
      %v197 = vsel %vm195, %v182, 0
      %v200 = vsel %vm195, %v190, 0
      %v203 = vsel %vm195, %v189, 0
      %205 = vmatprep.subr.bf16.mxu0 0
      %206 = vmatpush1.bf16.msra.mxu0 0
      %207 = vmatprep.subr.bf16.mxu0 0
      %208 = vmatpush1.bf16.msra.mxu0 0
      %209 = vmatprep.subr.bf16.mxu0 0
      %210 = vmatpush1.bf16.msra.mxu0 0
      %211 = vmatprep.subr.bf16.mxu0 0
      %212 = vmatpush1.bf16.msra.mxu0 0
      %213 = vmatprep.subr.bf16.mxu0 0
      %214 = vmatpush1.bf16.msra.mxu0 0
      %215 = vmatprep.subr.bf16.mxu0 0
      %216 = vmatpush1.bf16.msra.mxu0 0
      %217 = vmatprep.subr.bf16.mxu0 0
      %218 = vmatpush1.bf16.msra.mxu0 0
      %219 = vmatprep.subr.bf16.mxu0 %v200
      %220 = vmatpush1.bf16.msra.mxu0 %v197
      %221 = vmatprep.subr.bf16.mxu0 0
      %222 = vmatpush2.bf16.msra.mxu0 0
      %223 = vmatprep.subr.bf16.mxu0 0
      %224 = vmatpush2.bf16.msra.mxu0 0
      %225 = vmatprep.subr.bf16.mxu0 0
      %226 = vmatpush2.bf16.msra.mxu0 0
      %227 = vmatprep.subr.bf16.mxu0 0
      %228 = vmatpush2.bf16.msra.mxu0 0
      %229 = vmatprep.subr.bf16.mxu0 0
      %230 = vmatpush2.bf16.msra.mxu0 0
      %231 = vmatprep.subr.bf16.mxu0 0
      %232 = vmatpush2.bf16.msra.mxu0 0
      %233 = vmatprep.subr.bf16.mxu0 0
      %234 = vmatpush2.bf16.msra.mxu0 0
      %235 = vmatprep.subr.bf16.mxu0 0
      %236 = vmatpush2.bf16.msra.mxu0 0
      %237 = vmatprep.mubr.bf16.mxu0 0
      %238 = vmatmul.mubr.bf16.gmra.mxu0 %v193
      %v239 = vpop.f32.mrf.mxu0
      %v240 = vadd.f32 0.0, %v239
      %v241 = vpop.f32.mrf.mxu0
      %v242 = vadd.f32 0.0, %v241
      %v243 = vpop.f32.mrf.mxu0
      %v244 = vpop.f32.mrf.mxu0
      %245 = vdwg.mxu0
      %246 = vmatprep.subr.bf16.mxu0 0
      %247 = vmatpush1.bf16.msra.mxu0 0
      %248 = vmatprep.subr.bf16.mxu0 0
      %249 = vmatpush1.bf16.msra.mxu0 0
      %250 = vmatprep.subr.bf16.mxu0 0
      %251 = vmatpush1.bf16.msra.mxu0 0
      %252 = vmatprep.subr.bf16.mxu0 0
      %253 = vmatpush1.bf16.msra.mxu0 0
      %254 = vmatprep.subr.bf16.mxu0 0
      %255 = vmatpush1.bf16.msra.mxu0 0
      %256 = vmatprep.subr.bf16.mxu0 0
      %257 = vmatpush1.bf16.msra.mxu0 0
      %258 = vmatprep.subr.bf16.mxu0 0
      %259 = vmatpush1.bf16.msra.mxu0 0
      %260 = vmatprep.subr.bf16.mxu0 0
      %261 = vmatpush1.bf16.msra.mxu0 %v203
      %262 = vmatprep.subr.bf16.mxu0 0
      %263 = vmatpush2.bf16.msra.mxu0 0
      %264 = vmatprep.subr.bf16.mxu0 0
      %265 = vmatpush2.bf16.msra.mxu0 0
      %266 = vmatprep.subr.bf16.mxu0 0
      %267 = vmatpush2.bf16.msra.mxu0 0
      %268 = vmatprep.subr.bf16.mxu0 0
      %269 = vmatpush2.bf16.msra.mxu0 0
      %270 = vmatprep.subr.bf16.mxu0 0
      %271 = vmatpush2.bf16.msra.mxu0 0
      %272 = vmatprep.subr.bf16.mxu0 0
      %273 = vmatpush2.bf16.msra.mxu0 0
      %274 = vmatprep.subr.bf16.mxu0 0
      %275 = vmatpush2.bf16.msra.mxu0 0
      %276 = vmatprep.subr.bf16.mxu0 0
      %277 = vmatpush2.bf16.msra.mxu0 0
      %278 = vmatprep.mubr.bf16.mxu0 0
      %279 = vmatmul.mubr.bf16.gmra.mxu0 %v193
      %v280 = vpop.f32.mrf.mxu0
      %v281 = vadd.f32 0.0, %v280
      %v282 = vpop.f32.mrf.mxu0
      %v283 = vpop.f32.mrf.mxu0
      %v284 = vpop.f32.mrf.mxu0
      %285 = vdwg.mxu0
      %286 = vst [vmem:[#allocation2] sm:$0xff] %v240
      %287 = vst [vmem:[#allocation2 + $0x8] sm:$0xff] %v242
      %288 = vst [vmem:[#allocation2 + $0x10] sm:$0xff] %v281
      %v289 = vld [vmem:[#allocation2] sm:$0xff]
      %v290 = vld [vmem:[#allocation2 + $0x8] sm:$0xff]
      %v291 = vld [vmem:[#allocation2 + $0x10] sm:$0xff]
      %s292 = scalar_lea.vmem %s0, 4
      %v293 = vld [vmem:[%s292] sm:$0xf]
      %v294 = vld [vmem:[%s165] sm:$0xff]
      %v296 = vcombine.high %v294, %v294
      %v298 = vunpack.c.l.s4 1983009808
      %v299 = vunpack.c.0.s8 %v298
      %v300 = vlaneseq
      %v301 = vshrl.u32 %v300, 7
      %v302 = vsub.s32 %v299, %v301
      %v303 = vrot.slane %v294, %v302
      %v305 = vunpack.c.l.s4 1983009808
      %v306 = vunpack.c.0.s8 %v305
      %v307 = vlaneseq
      %v308 = vshrl.u32 %v307, 7
      %v309 = vsub.s32 %v306, %v308
      %v310 = vrot.slane %v296, %v309
      %v311 = vcombine.high %v303, %v303
      %v312 = vcombine.high %v310, %v310
      %313 = vrot.lane.b32.xlu0 %v303, 127
      %v314 = vpop.permute.xlu0 %313
      %315 = vrot.lane.b32.xlu0 %v311, 127
      %v316 = vpop.permute.xlu0 %315
      %317 = vrot.lane.b32.xlu0 %v310, 127
      %v318 = vpop.permute.xlu0 %317
      %319 = vrot.lane.b32.xlu0 %v312, 127
      %v320 = vpop.permute.xlu0 %319
      %vm321 = vcmask 1039360
      %v322 = vsel %vm321, %v314, %v316
      %v323 = vsel %vm321, %v316, %v318
      %v324 = vsel %vm321, %v318, %v320
      %v326 = vsel %vm191, %v293, 0
      %v329 = vsel %vm195, %v322, 0
      %v332 = vsel %vm195, %v323, 0
      %v335 = vsel %vm195, %v324, 0
      %337 = vmatprep.subr.bf16.mxu0 0
      %338 = vmatpush1.bf16.msra.mxu0 0
      %339 = vmatprep.subr.bf16.mxu0 0
      %340 = vmatpush1.bf16.msra.mxu0 0
      %341 = vmatprep.subr.bf16.mxu0 0
      %342 = vmatpush1.bf16.msra.mxu0 0
      %343 = vmatprep.subr.bf16.mxu0 0
      %344 = vmatpush1.bf16.msra.mxu0 0
      %345 = vmatprep.subr.bf16.mxu0 0
      %346 = vmatpush1.bf16.msra.mxu0 0
      %347 = vmatprep.subr.bf16.mxu0 0
      %348 = vmatpush1.bf16.msra.mxu0 0
      %349 = vmatprep.subr.bf16.mxu0 0
      %350 = vmatpush1.bf16.msra.mxu0 0
      %351 = vmatprep.subr.bf16.mxu0 %v332
      %352 = vmatpush1.bf16.msra.mxu0 %v329
      %353 = vmatprep.subr.bf16.mxu0 0
      %354 = vmatpush2.bf16.msra.mxu0 0
      %355 = vmatprep.subr.bf16.mxu0 0
      %356 = vmatpush2.bf16.msra.mxu0 0
      %357 = vmatprep.subr.bf16.mxu0 0
      %358 = vmatpush2.bf16.msra.mxu0 0
      %359 = vmatprep.subr.bf16.mxu0 0
      %360 = vmatpush2.bf16.msra.mxu0 0
      %361 = vmatprep.subr.bf16.mxu0 0
      %362 = vmatpush2.bf16.msra.mxu0 0
      %363 = vmatprep.subr.bf16.mxu0 0
      %364 = vmatpush2.bf16.msra.mxu0 0
      %365 = vmatprep.subr.bf16.mxu0 0
      %366 = vmatpush2.bf16.msra.mxu0 0
      %367 = vmatprep.subr.bf16.mxu0 0
      %368 = vmatpush2.bf16.msra.mxu0 0
      %369 = vmatprep.mubr.bf16.mxu0 0
      %370 = vmatmul.mubr.bf16.gmra.mxu0 %v326
      %v371 = vpop.f32.mrf.mxu0
      %v372 = vadd.f32 0.0, %v371
      %v373 = vpop.f32.mrf.mxu0
      %v374 = vadd.f32 0.0, %v373
      %v375 = vpop.f32.mrf.mxu0
      %v376 = vpop.f32.mrf.mxu0
      %377 = vdwg.mxu0
      %378 = vmatprep.subr.bf16.mxu0 0
      %379 = vmatpush1.bf16.msra.mxu0 0
      %380 = vmatprep.subr.bf16.mxu0 0
      %381 = vmatpush1.bf16.msra.mxu0 0
      %382 = vmatprep.subr.bf16.mxu0 0
      %383 = vmatpush1.bf16.msra.mxu0 0
      %384 = vmatprep.subr.bf16.mxu0 0
      %385 = vmatpush1.bf16.msra.mxu0 0
      %386 = vmatprep.subr.bf16.mxu0 0
      %387 = vmatpush1.bf16.msra.mxu0 0
      %388 = vmatprep.subr.bf16.mxu0 0
      %389 = vmatpush1.bf16.msra.mxu0 0
      %390 = vmatprep.subr.bf16.mxu0 0
      %391 = vmatpush1.bf16.msra.mxu0 0
      %392 = vmatprep.subr.bf16.mxu0 0
      %393 = vmatpush1.bf16.msra.mxu0 %v335
      %394 = vmatprep.subr.bf16.mxu0 0
      %395 = vmatpush2.bf16.msra.mxu0 0
      %396 = vmatprep.subr.bf16.mxu0 0
      %397 = vmatpush2.bf16.msra.mxu0 0
      %398 = vmatprep.subr.bf16.mxu0 0
      %399 = vmatpush2.bf16.msra.mxu0 0
      %400 = vmatprep.subr.bf16.mxu0 0
      %401 = vmatpush2.bf16.msra.mxu0 0
      %402 = vmatprep.subr.bf16.mxu0 0
      %403 = vmatpush2.bf16.msra.mxu0 0
      %404 = vmatprep.subr.bf16.mxu0 0
      %405 = vmatpush2.bf16.msra.mxu0 0
      %406 = vmatprep.subr.bf16.mxu0 0
      %407 = vmatpush2.bf16.msra.mxu0 0
      %408 = vmatprep.subr.bf16.mxu0 0
      %409 = vmatpush2.bf16.msra.mxu0 0
      %410 = vmatprep.mubr.bf16.mxu0 0
      %411 = vmatmul.mubr.bf16.gmra.mxu0 %v326
      %v412 = vpop.f32.mrf.mxu0
      %v413 = vadd.f32 0.0, %v412
      %v414 = vpop.f32.mrf.mxu0
      %v415 = vpop.f32.mrf.mxu0
      %v416 = vpop.f32.mrf.mxu0
      %417 = vdwg.mxu0
      %v418 = vadd.f32 %v289, %v372
      %v419 = vadd.f32 %v290, %v374
      %v420 = vadd.f32 %v291, %v413
      %421 = vst [vmem:[#allocation2] sm:$0xff] %v418
      %422 = vst [vmem:[#allocation2 + $0x8] sm:$0xff] %v419
      %423 = vst [vmem:[#allocation2 + $0x10] sm:$0xff] %v420
      %v424 = vld [vmem:[#allocation2] sm:$0xff]
      %v425 = vld [vmem:[#allocation2 + $0x8] sm:$0xff]
      %v426 = vld [vmem:[#allocation2 + $0x10] sm:$0xff]
      %s427 = scalar_lea.vmem %s0, 8
      %v428 = vld [vmem:[%s427] sm:$0xf]
      %v429 = vld [vmem:[%s165] sm:$0xff]
      %v431 = vcombine.high %v429, %v429
      %v433 = vunpack.c.l.s4 1983009808
      %v434 = vunpack.c.0.s8 %v433
      %v435 = vlaneseq
      %v436 = vshrl.u32 %v435, 7
      %v437 = vsub.s32 %v434, %v436
      %v438 = vrot.slane %v429, %v437
      %v440 = vunpack.c.l.s4 1983009808
      %v441 = vunpack.c.0.s8 %v440
      %v442 = vlaneseq
      %v443 = vshrl.u32 %v442, 7
      %v444 = vsub.s32 %v441, %v443
      %v445 = vrot.slane %v431, %v444
      %v446 = vcombine.high %v438, %v438
      %v447 = vcombine.high %v445, %v445
      %448 = vrot.lane.b32.xlu0 %v438, 126
      %v449 = vpop.permute.xlu0 %448
      %450 = vrot.lane.b32.xlu0 %v446, 126
      %v451 = vpop.permute.xlu0 %450
      %452 = vrot.lane.b32.xlu0 %v445, 126
      %v453 = vpop.permute.xlu0 %452
      %454 = vrot.lane.b32.xlu0 %v447, 126
      %v455 = vpop.permute.xlu0 %454
      %vm456 = vcmask 1031168
      %v457 = vsel %vm456, %v449, %v451
      %v458 = vsel %vm456, %v451, %v453
      %v459 = vsel %vm456, %v453, %v455
      %v461 = vsel %vm191, %v428, 0
      %v464 = vsel %vm195, %v457, 0
      %v467 = vsel %vm195, %v458, 0
      %v470 = vsel %vm195, %v459, 0
      %472 = vmatprep.subr.bf16.mxu0 0
      %473 = vmatpush1.bf16.msra.mxu0 0
      %474 = vmatprep.subr.bf16.mxu0 0
      %475 = vmatpush1.bf16.msra.mxu0 0
      %476 = vmatprep.subr.bf16.mxu0 0
      %477 = vmatpush1.bf16.msra.mxu0 0
      %478 = vmatprep.subr.bf16.mxu0 0
      %479 = vmatpush1.bf16.msra.mxu0 0
      %480 = vmatprep.subr.bf16.mxu0 0
      %481 = vmatpush1.bf16.msra.mxu0 0
      %482 = vmatprep.subr.bf16.mxu0 0
      %483 = vmatpush1.bf16.msra.mxu0 0
      %484 = vmatprep.subr.bf16.mxu0 0
      %485 = vmatpush1.bf16.msra.mxu0 0
      %486 = vmatprep.subr.bf16.mxu0 %v467
      %487 = vmatpush1.bf16.msra.mxu0 %v464
      %488 = vmatprep.subr.bf16.mxu0 0
      %489 = vmatpush2.bf16.msra.mxu0 0
      %490 = vmatprep.subr.bf16.mxu0 0
      %491 = vmatpush2.bf16.msra.mxu0 0
      %492 = vmatprep.subr.bf16.mxu0 0
      %493 = vmatpush2.bf16.msra.mxu0 0
      %494 = vmatprep.subr.bf16.mxu0 0
      %495 = vmatpush2.bf16.msra.mxu0 0
      %496 = vmatprep.subr.bf16.mxu0 0
      %497 = vmatpush2.bf16.msra.mxu0 0
      %498 = vmatprep.subr.bf16.mxu0 0
      %499 = vmatpush2.bf16.msra.mxu0 0
      %500 = vmatprep.subr.bf16.mxu0 0
      %501 = vmatpush2.bf16.msra.mxu0 0
      %502 = vmatprep.subr.bf16.mxu0 0
      %503 = vmatpush2.bf16.msra.mxu0 0
      %504 = vmatprep.mubr.bf16.mxu0 0
      %505 = vmatmul.mubr.bf16.gmra.mxu0 %v461
      %v506 = vpop.f32.mrf.mxu0
      %v507 = vadd.f32 0.0, %v506
      %v508 = vpop.f32.mrf.mxu0
      %v509 = vadd.f32 0.0, %v508
      %v510 = vpop.f32.mrf.mxu0
      %v511 = vpop.f32.mrf.mxu0
      %512 = vdwg.mxu0
      %513 = vmatprep.subr.bf16.mxu0 0
      %514 = vmatpush1.bf16.msra.mxu0 0
      %515 = vmatprep.subr.bf16.mxu0 0
      %516 = vmatpush1.bf16.msra.mxu0 0
      %517 = vmatprep.subr.bf16.mxu0 0
      %518 = vmatpush1.bf16.msra.mxu0 0
      %519 = vmatprep.subr.bf16.mxu0 0
      %520 = vmatpush1.bf16.msra.mxu0 0
      %521 = vmatprep.subr.bf16.mxu0 0
      %522 = vmatpush1.bf16.msra.mxu0 0
      %523 = vmatprep.subr.bf16.mxu0 0
      %524 = vmatpush1.bf16.msra.mxu0 0
      %525 = vmatprep.subr.bf16.mxu0 0
      %526 = vmatpush1.bf16.msra.mxu0 0
      %527 = vmatprep.subr.bf16.mxu0 0
      %528 = vmatpush1.bf16.msra.mxu0 %v470
      %529 = vmatprep.subr.bf16.mxu0 0
      %530 = vmatpush2.bf16.msra.mxu0 0
      %531 = vmatprep.subr.bf16.mxu0 0
      %532 = vmatpush2.bf16.msra.mxu0 0
      %533 = vmatprep.subr.bf16.mxu0 0
      %534 = vmatpush2.bf16.msra.mxu0 0
      %535 = vmatprep.subr.bf16.mxu0 0
      %536 = vmatpush2.bf16.msra.mxu0 0
      %537 = vmatprep.subr.bf16.mxu0 0
      %538 = vmatpush2.bf16.msra.mxu0 0
      %539 = vmatprep.subr.bf16.mxu0 0
      %540 = vmatpush2.bf16.msra.mxu0 0
      %541 = vmatprep.subr.bf16.mxu0 0
      %542 = vmatpush2.bf16.msra.mxu0 0
      %543 = vmatprep.subr.bf16.mxu0 0
      %544 = vmatpush2.bf16.msra.mxu0 0
      %545 = vmatprep.mubr.bf16.mxu0 0
      %546 = vmatmul.mubr.bf16.gmra.mxu0 %v461
      %v547 = vpop.f32.mrf.mxu0
      %v548 = vadd.f32 0.0, %v547
      %v549 = vpop.f32.mrf.mxu0
      %v550 = vpop.f32.mrf.mxu0
      %v551 = vpop.f32.mrf.mxu0
      %552 = vdwg.mxu0
      %v553 = vadd.f32 %v424, %v507
      %v554 = vadd.f32 %v425, %v509
      %v555 = vadd.f32 %v426, %v548
      %556 = vst [vmem:[#allocation2] sm:$0xff] %v553
      %557 = vst [vmem:[#allocation2 + $0x8] sm:$0xff] %v554
      %558 = vst [vmem:[#allocation2 + $0x10] sm:$0xff] %v555
      %v559 = vld [vmem:[#allocation2] sm:$0xff]
      %v560 = vld [vmem:[#allocation2 + $0x8] sm:$0xff]
      %v561 = vld [vmem:[#allocation2 + $0x10] sm:$0xff]
      %s562 = scalar_lea.vmem %s0, 12
      %v563 = vld [vmem:[%s562] sm:$0xf]
      %v564 = vld [vmem:[%s165] sm:$0xff]
      %v566 = vcombine.high %v564, %v564
      %v568 = vunpack.c.l.s4 1983009808
      %v569 = vunpack.c.0.s8 %v568
      %v570 = vlaneseq
      %v571 = vshrl.u32 %v570, 7
      %v572 = vsub.s32 %v569, %v571
      %v573 = vrot.slane %v564, %v572
      %v575 = vunpack.c.l.s4 1983009808
      %v576 = vunpack.c.0.s8 %v575
      %v577 = vlaneseq
      %v578 = vshrl.u32 %v577, 7
      %v579 = vsub.s32 %v576, %v578
      %v580 = vrot.slane %v566, %v579
      %v581 = vcombine.high %v573, %v573
      %v582 = vcombine.high %v580, %v580
      %583 = vrot.lane.b32.xlu0 %v573, 125
      %v584 = vpop.permute.xlu0 %583
      %585 = vrot.lane.b32.xlu0 %v581, 125
      %v586 = vpop.permute.xlu0 %585
      %587 = vrot.lane.b32.xlu0 %v580, 125
      %v588 = vpop.permute.xlu0 %587
      %589 = vrot.lane.b32.xlu0 %v582, 125
      %v590 = vpop.permute.xlu0 %589
      %vm591 = vcmask 1022976
      %v592 = vsel %vm591, %v584, %v586
      %v593 = vsel %vm591, %v586, %v588
      %v594 = vsel %vm591, %v588, %v590
      %v596 = vsel %vm191, %v563, 0
      %v599 = vsel %vm195, %v592, 0
      %v602 = vsel %vm195, %v593, 0
      %v605 = vsel %vm195, %v594, 0
      %607 = vmatprep.subr.bf16.mxu0 0
      %608 = vmatpush1.bf16.msra.mxu0 0
      %609 = vmatprep.subr.bf16.mxu0 0
      %610 = vmatpush1.bf16.msra.mxu0 0
      %611 = vmatprep.subr.bf16.mxu0 0
      %612 = vmatpush1.bf16.msra.mxu0 0
      %613 = vmatprep.subr.bf16.mxu0 0
      %614 = vmatpush1.bf16.msra.mxu0 0
      %615 = vmatprep.subr.bf16.mxu0 0
      %616 = vmatpush1.bf16.msra.mxu0 0
      %617 = vmatprep.subr.bf16.mxu0 0
      %618 = vmatpush1.bf16.msra.mxu0 0
      %619 = vmatprep.subr.bf16.mxu0 0
      %620 = vmatpush1.bf16.msra.mxu0 0
      %621 = vmatprep.subr.bf16.mxu0 %v602
      %622 = vmatpush1.bf16.msra.mxu0 %v599
      %623 = vmatprep.subr.bf16.mxu0 0
      %624 = vmatpush2.bf16.msra.mxu0 0
      %625 = vmatprep.subr.bf16.mxu0 0
      %626 = vmatpush2.bf16.msra.mxu0 0
      %627 = vmatprep.subr.bf16.mxu0 0
      %628 = vmatpush2.bf16.msra.mxu0 0
      %629 = vmatprep.subr.bf16.mxu0 0
      %630 = vmatpush2.bf16.msra.mxu0 0
      %631 = vmatprep.subr.bf16.mxu0 0
      %632 = vmatpush2.bf16.msra.mxu0 0
      %633 = vmatprep.subr.bf16.mxu0 0
      %634 = vmatpush2.bf16.msra.mxu0 0
      %635 = vmatprep.subr.bf16.mxu0 0
      %636 = vmatpush2.bf16.msra.mxu0 0
      %637 = vmatprep.subr.bf16.mxu0 0
      %638 = vmatpush2.bf16.msra.mxu0 0
      %639 = vmatprep.mubr.bf16.mxu0 0
      %640 = vmatmul.mubr.bf16.gmra.mxu0 %v596
      %v641 = vpop.f32.mrf.mxu0
      %v642 = vadd.f32 0.0, %v641
      %v643 = vpop.f32.mrf.mxu0
      %v644 = vadd.f32 0.0, %v643
      %v645 = vpop.f32.mrf.mxu0
      %v646 = vpop.f32.mrf.mxu0
      %647 = vdwg.mxu0
      %648 = vmatprep.subr.bf16.mxu0 0
      %649 = vmatpush1.bf16.msra.mxu0 0
      %650 = vmatprep.subr.bf16.mxu0 0
      %651 = vmatpush1.bf16.msra.mxu0 0
      %652 = vmatprep.subr.bf16.mxu0 0
      %653 = vmatpush1.bf16.msra.mxu0 0
      %654 = vmatprep.subr.bf16.mxu0 0
      %655 = vmatpush1.bf16.msra.mxu0 0
      %656 = vmatprep.subr.bf16.mxu0 0
      %657 = vmatpush1.bf16.msra.mxu0 0
      %658 = vmatprep.subr.bf16.mxu0 0
      %659 = vmatpush1.bf16.msra.mxu0 0
      %660 = vmatprep.subr.bf16.mxu0 0
      %661 = vmatpush1.bf16.msra.mxu0 0
      %662 = vmatprep.subr.bf16.mxu0 0
      %663 = vmatpush1.bf16.msra.mxu0 %v605
      %664 = vmatprep.subr.bf16.mxu0 0
      %665 = vmatpush2.bf16.msra.mxu0 0
      %666 = vmatprep.subr.bf16.mxu0 0
      %667 = vmatpush2.bf16.msra.mxu0 0
      %668 = vmatprep.subr.bf16.mxu0 0
      %669 = vmatpush2.bf16.msra.mxu0 0
      %670 = vmatprep.subr.bf16.mxu0 0
      %671 = vmatpush2.bf16.msra.mxu0 0
      %672 = vmatprep.subr.bf16.mxu0 0
      %673 = vmatpush2.bf16.msra.mxu0 0
      %674 = vmatprep.subr.bf16.mxu0 0
      %675 = vmatpush2.bf16.msra.mxu0 0
      %676 = vmatprep.subr.bf16.mxu0 0
      %677 = vmatpush2.bf16.msra.mxu0 0
      %678 = vmatprep.subr.bf16.mxu0 0
      %679 = vmatpush2.bf16.msra.mxu0 0
      %680 = vmatprep.mubr.bf16.mxu0 0
      %681 = vmatmul.mubr.bf16.gmra.mxu0 %v596
      %v682 = vpop.f32.mrf.mxu0
      %v683 = vadd.f32 0.0, %v682
      %v684 = vpop.f32.mrf.mxu0
      %v685 = vpop.f32.mrf.mxu0
      %v686 = vpop.f32.mrf.mxu0
      %687 = vdwg.mxu0
      %v688 = vadd.f32 %v559, %v642
      %v689 = vadd.f32 %v560, %v644
      %v690 = vadd.f32 %v561, %v683
      %691 = vst [vmem:[#allocation2] sm:$0xff] %v688
      %692 = vst [vmem:[#allocation2 + $0x8] sm:$0xff] %v689
      %693 = vst [vmem:[#allocation2 + $0x10] sm:$0xff] %v690
      %v694 = vld [vmem:[#allocation2] sm:$0xff]
      %v695 = vld [vmem:[#allocation2 + $0x8] sm:$0xff]
      %v696 = vld [vmem:[#allocation2 + $0x10] sm:$0xff]
      %s697 = scalar_lea.vmem %s0, 16
      %v698 = vld [vmem:[%s697] sm:$0xf]
      %v699 = vld [vmem:[%s165] sm:$0xff]
      %v701 = vcombine.high %v699, %v699
      %v703 = vunpack.c.l.s4 1983009808
      %v704 = vunpack.c.0.s8 %v703
      %v705 = vlaneseq
      %v706 = vshrl.u32 %v705, 7
      %v707 = vsub.s32 %v704, %v706
      %v708 = vrot.slane %v699, %v707
      %v710 = vunpack.c.l.s4 1983009808
      %v711 = vunpack.c.0.s8 %v710
      %v712 = vlaneseq
      %v713 = vshrl.u32 %v712, 7
      %v714 = vsub.s32 %v711, %v713
      %v715 = vrot.slane %v701, %v714
      %v716 = vcombine.high %v708, %v708
      %v717 = vcombine.high %v715, %v715
      %718 = vrot.lane.b32.xlu0 %v708, 124
      %v719 = vpop.permute.xlu0 %718
      %720 = vrot.lane.b32.xlu0 %v716, 124
      %v721 = vpop.permute.xlu0 %720
      %722 = vrot.lane.b32.xlu0 %v715, 124
      %v723 = vpop.permute.xlu0 %722
      %724 = vrot.lane.b32.xlu0 %v717, 124
      %v725 = vpop.permute.xlu0 %724
      %vm726 = vcmask 1014784
      %v727 = vsel %vm726, %v719, %v721
      %v728 = vsel %vm726, %v721, %v723
      %v729 = vsel %vm726, %v723, %v725
      %v731 = vsel %vm191, %v698, 0
      %v734 = vsel %vm195, %v727, 0
      %v737 = vsel %vm195, %v728, 0
      %v740 = vsel %vm195, %v729, 0
      %742 = vmatprep.subr.bf16.mxu0 0
      %743 = vmatpush1.bf16.msra.mxu0 0
      %744 = vmatprep.subr.bf16.mxu0 0
      %745 = vmatpush1.bf16.msra.mxu0 0
      %746 = vmatprep.subr.bf16.mxu0 0
      %747 = vmatpush1.bf16.msra.mxu0 0
      %748 = vmatprep.subr.bf16.mxu0 0
      %749 = vmatpush1.bf16.msra.mxu0 0
      %750 = vmatprep.subr.bf16.mxu0 0
      %751 = vmatpush1.bf16.msra.mxu0 0
      %752 = vmatprep.subr.bf16.mxu0 0
      %753 = vmatpush1.bf16.msra.mxu0 0
      %754 = vmatprep.subr.bf16.mxu0 0
      %755 = vmatpush1.bf16.msra.mxu0 0
      %756 = vmatprep.subr.bf16.mxu0 %v737
      %757 = vmatpush1.bf16.msra.mxu0 %v734
      %758 = vmatprep.subr.bf16.mxu0 0
      %759 = vmatpush2.bf16.msra.mxu0 0
      %760 = vmatprep.subr.bf16.mxu0 0
      %761 = vmatpush2.bf16.msra.mxu0 0
      %762 = vmatprep.subr.bf16.mxu0 0
      %763 = vmatpush2.bf16.msra.mxu0 0
      %764 = vmatprep.subr.bf16.mxu0 0
      %765 = vmatpush2.bf16.msra.mxu0 0
      %766 = vmatprep.subr.bf16.mxu0 0
      %767 = vmatpush2.bf16.msra.mxu0 0
      %768 = vmatprep.subr.bf16.mxu0 0
      %769 = vmatpush2.bf16.msra.mxu0 0
      %770 = vmatprep.subr.bf16.mxu0 0
      %771 = vmatpush2.bf16.msra.mxu0 0
      %772 = vmatprep.subr.bf16.mxu0 0
      %773 = vmatpush2.bf16.msra.mxu0 0
      %774 = vmatprep.mubr.bf16.mxu0 0
      %775 = vmatmul.mubr.bf16.gmra.mxu0 %v731
      %v776 = vpop.f32.mrf.mxu0
      %v777 = vadd.f32 0.0, %v776
      %v778 = vpop.f32.mrf.mxu0
      %v779 = vadd.f32 0.0, %v778
      %v780 = vpop.f32.mrf.mxu0
      %v781 = vpop.f32.mrf.mxu0
      %782 = vdwg.mxu0
      %783 = vmatprep.subr.bf16.mxu0 0
      %784 = vmatpush1.bf16.msra.mxu0 0
      %785 = vmatprep.subr.bf16.mxu0 0
      %786 = vmatpush1.bf16.msra.mxu0 0
      %787 = vmatprep.subr.bf16.mxu0 0
      %788 = vmatpush1.bf16.msra.mxu0 0
      %789 = vmatprep.subr.bf16.mxu0 0
      %790 = vmatpush1.bf16.msra.mxu0 0
      %791 = vmatprep.subr.bf16.mxu0 0
      %792 = vmatpush1.bf16.msra.mxu0 0
      %793 = vmatprep.subr.bf16.mxu0 0
      %794 = vmatpush1.bf16.msra.mxu0 0
      %795 = vmatprep.subr.bf16.mxu0 0
      %796 = vmatpush1.bf16.msra.mxu0 0
      %797 = vmatprep.subr.bf16.mxu0 0
      %798 = vmatpush1.bf16.msra.mxu0 %v740
      %799 = vmatprep.subr.bf16.mxu0 0
      %800 = vmatpush2.bf16.msra.mxu0 0
      %801 = vmatprep.subr.bf16.mxu0 0
      %802 = vmatpush2.bf16.msra.mxu0 0
      %803 = vmatprep.subr.bf16.mxu0 0
      %804 = vmatpush2.bf16.msra.mxu0 0
      %805 = vmatprep.subr.bf16.mxu0 0
      %806 = vmatpush2.bf16.msra.mxu0 0
      %807 = vmatprep.subr.bf16.mxu0 0
      %808 = vmatpush2.bf16.msra.mxu0 0
      %809 = vmatprep.subr.bf16.mxu0 0
      %810 = vmatpush2.bf16.msra.mxu0 0
      %811 = vmatprep.subr.bf16.mxu0 0
      %812 = vmatpush2.bf16.msra.mxu0 0
      %813 = vmatprep.subr.bf16.mxu0 0
      %814 = vmatpush2.bf16.msra.mxu0 0
      %815 = vmatprep.mubr.bf16.mxu0 0
      %816 = vmatmul.mubr.bf16.gmra.mxu0 %v731
      %v817 = vpop.f32.mrf.mxu0
      %v818 = vadd.f32 0.0, %v817
      %v819 = vpop.f32.mrf.mxu0
      %v820 = vpop.f32.mrf.mxu0
      %v821 = vpop.f32.mrf.mxu0
      %822 = vdwg.mxu0
      %v823 = vadd.f32 %v694, %v777
      %v824 = vadd.f32 %v695, %v779
      %v825 = vadd.f32 %v696, %v818
      %826 = vst [vmem:[#allocation2] sm:$0xff] %v823
      %827 = vst [vmem:[#allocation2 + $0x8] sm:$0xff] %v824
      %828 = vst [vmem:[#allocation2 + $0x10] sm:$0xff] %v825
      %v829 = vld [vmem:[#allocation2] sm:$0xff]
      %v830 = vld [vmem:[#allocation2 + $0x8] sm:$0xff]
      %v831 = vld [vmem:[#allocation2 + $0x10] sm:$0xff]
      %s832 = scalar_lea.vmem %s0, 20
      %v833 = vld [vmem:[%s832] sm:$0xf]
      %v834 = vld [vmem:[%s165] sm:$0xff]
      %v836 = vcombine.high %v834, %v834
      %v838 = vunpack.c.l.s4 1983009808
      %v839 = vunpack.c.0.s8 %v838
      %v840 = vlaneseq
      %v841 = vshrl.u32 %v840, 7
      %v842 = vsub.s32 %v839, %v841
      %v843 = vrot.slane %v834, %v842
      %v845 = vunpack.c.l.s4 1983009808
      %v846 = vunpack.c.0.s8 %v845
      %v847 = vlaneseq
      %v848 = vshrl.u32 %v847, 7
      %v849 = vsub.s32 %v846, %v848
      %v850 = vrot.slane %v836, %v849
      %v851 = vcombine.high %v843, %v843
      %v852 = vcombine.high %v850, %v850
      %853 = vrot.lane.b32.xlu0 %v843, 123
      %v854 = vpop.permute.xlu0 %853
      %855 = vrot.lane.b32.xlu0 %v851, 123
      %v856 = vpop.permute.xlu0 %855
      %857 = vrot.lane.b32.xlu0 %v850, 123
      %v858 = vpop.permute.xlu0 %857
      %859 = vrot.lane.b32.xlu0 %v852, 123
      %v860 = vpop.permute.xlu0 %859
      %vm861 = vcmask 1006592
      %v862 = vsel %vm861, %v854, %v856
      %v863 = vsel %vm861, %v856, %v858
      %v864 = vsel %vm861, %v858, %v860
      %v866 = vsel %vm191, %v833, 0
      %v869 = vsel %vm195, %v862, 0
      %v872 = vsel %vm195, %v863, 0
      %v875 = vsel %vm195, %v864, 0
      %877 = vmatprep.subr.bf16.mxu0 0
      %878 = vmatpush1.bf16.msra.mxu0 0
      %879 = vmatprep.subr.bf16.mxu0 0
      %880 = vmatpush1.bf16.msra.mxu0 0
      %881 = vmatprep.subr.bf16.mxu0 0
      %882 = vmatpush1.bf16.msra.mxu0 0
      %883 = vmatprep.subr.bf16.mxu0 0
      %884 = vmatpush1.bf16.msra.mxu0 0
      %885 = vmatprep.subr.bf16.mxu0 0
      %886 = vmatpush1.bf16.msra.mxu0 0
      %887 = vmatprep.subr.bf16.mxu0 0
      %888 = vmatpush1.bf16.msra.mxu0 0
      %889 = vmatprep.subr.bf16.mxu0 0
      %890 = vmatpush1.bf16.msra.mxu0 0
      %891 = vmatprep.subr.bf16.mxu0 %v872
      %892 = vmatpush1.bf16.msra.mxu0 %v869
      %893 = vmatprep.subr.bf16.mxu0 0
      %894 = vmatpush2.bf16.msra.mxu0 0
      %895 = vmatprep.subr.bf16.mxu0 0
      %896 = vmatpush2.bf16.msra.mxu0 0
      %897 = vmatprep.subr.bf16.mxu0 0
      %898 = vmatpush2.bf16.msra.mxu0 0
      %899 = vmatprep.subr.bf16.mxu0 0
      %900 = vmatpush2.bf16.msra.mxu0 0
      %901 = vmatprep.subr.bf16.mxu0 0
      %902 = vmatpush2.bf16.msra.mxu0 0
      %903 = vmatprep.subr.bf16.mxu0 0
      %904 = vmatpush2.bf16.msra.mxu0 0
      %905 = vmatprep.subr.bf16.mxu0 0
      %906 = vmatpush2.bf16.msra.mxu0 0
      %907 = vmatprep.subr.bf16.mxu0 0
      %908 = vmatpush2.bf16.msra.mxu0 0
      %909 = vmatprep.mubr.bf16.mxu0 0
      %910 = vmatmul.mubr.bf16.gmra.mxu0 %v866
      %v911 = vpop.f32.mrf.mxu0
      %v912 = vadd.f32 0.0, %v911
      %v913 = vpop.f32.mrf.mxu0
      %v914 = vadd.f32 0.0, %v913
      %v915 = vpop.f32.mrf.mxu0
      %v916 = vpop.f32.mrf.mxu0
      %917 = vdwg.mxu0
      %918 = vmatprep.subr.bf16.mxu0 0
      %919 = vmatpush1.bf16.msra.mxu0 0
      %920 = vmatprep.subr.bf16.mxu0 0
      %921 = vmatpush1.bf16.msra.mxu0 0
      %922 = vmatprep.subr.bf16.mxu0 0
      %923 = vmatpush1.bf16.msra.mxu0 0
      %924 = vmatprep.subr.bf16.mxu0 0
      %925 = vmatpush1.bf16.msra.mxu0 0
      %926 = vmatprep.subr.bf16.mxu0 0
      %927 = vmatpush1.bf16.msra.mxu0 0
      %928 = vmatprep.subr.bf16.mxu0 0
      %929 = vmatpush1.bf16.msra.mxu0 0
      %930 = vmatprep.subr.bf16.mxu0 0
      %931 = vmatpush1.bf16.msra.mxu0 0
      %932 = vmatprep.subr.bf16.mxu0 0
      %933 = vmatpush1.bf16.msra.mxu0 %v875
      %934 = vmatprep.subr.bf16.mxu0 0
      %935 = vmatpush2.bf16.msra.mxu0 0
      %936 = vmatprep.subr.bf16.mxu0 0
      %937 = vmatpush2.bf16.msra.mxu0 0
      %938 = vmatprep.subr.bf16.mxu0 0
      %939 = vmatpush2.bf16.msra.mxu0 0
      %940 = vmatprep.subr.bf16.mxu0 0
      %941 = vmatpush2.bf16.msra.mxu0 0
      %942 = vmatprep.subr.bf16.mxu0 0
      %943 = vmatpush2.bf16.msra.mxu0 0
      %944 = vmatprep.subr.bf16.mxu0 0
      %945 = vmatpush2.bf16.msra.mxu0 0
      %946 = vmatprep.subr.bf16.mxu0 0
      %947 = vmatpush2.bf16.msra.mxu0 0
      %948 = vmatprep.subr.bf16.mxu0 0
      %949 = vmatpush2.bf16.msra.mxu0 0
      %950 = vmatprep.mubr.bf16.mxu0 0
      %951 = vmatmul.mubr.bf16.gmra.mxu0 %v866
      %v952 = vpop.f32.mrf.mxu0
      %v953 = vadd.f32 0.0, %v952
      %v954 = vpop.f32.mrf.mxu0
      %v955 = vpop.f32.mrf.mxu0
      %v956 = vpop.f32.mrf.mxu0
      %957 = vdwg.mxu0
      %v958 = vadd.f32 %v829, %v912
      %v959 = vadd.f32 %v830, %v914
      %v960 = vadd.f32 %v831, %v953
      %961 = vst [vmem:[#allocation2] sm:$0xff] %v958
      %962 = vst [vmem:[#allocation2 + $0x8] sm:$0xff] %v959
      %963 = vst [vmem:[#allocation2 + $0x10] sm:$0xff] %v960
      %v964 = vld [vmem:[#allocation2] sm:$0xff]
      %v965 = vld [vmem:[#allocation2 + $0x8] sm:$0xff]
      %v966 = vld [vmem:[#allocation2 + $0x10] sm:$0xff]
      %s967 = scalar_lea.vmem %s0, 24
      %v968 = vld [vmem:[%s967] sm:$0xf]
      %v969 = vld [vmem:[%s165] sm:$0xff]
      %v971 = vcombine.high %v969, %v969
      %v973 = vunpack.c.l.s4 1983009808
      %v974 = vunpack.c.0.s8 %v973
      %v975 = vlaneseq
      %v976 = vshrl.u32 %v975, 7
      %v977 = vsub.s32 %v974, %v976
      %v978 = vrot.slane %v969, %v977
      %v980 = vunpack.c.l.s4 1983009808
      %v981 = vunpack.c.0.s8 %v980
      %v982 = vlaneseq
      %v983 = vshrl.u32 %v982, 7
      %v984 = vsub.s32 %v981, %v983
      %v985 = vrot.slane %v971, %v984
      %v986 = vcombine.high %v978, %v978
      %v987 = vcombine.high %v985, %v985
      %988 = vrot.lane.b32.xlu0 %v978, 122
      %v989 = vpop.permute.xlu0 %988
      %990 = vrot.lane.b32.xlu0 %v986, 122
      %v991 = vpop.permute.xlu0 %990
      %992 = vrot.lane.b32.xlu0 %v985, 122
      %v993 = vpop.permute.xlu0 %992
      %994 = vrot.lane.b32.xlu0 %v987, 122
      %v995 = vpop.permute.xlu0 %994
      %vm996 = vcmask 998400
      %v997 = vsel %vm996, %v989, %v991
      %v998 = vsel %vm996, %v991, %v993
      %v999 = vsel %vm996, %v993, %v995
      %v1001 = vsel %vm191, %v968, 0
      %v1004 = vsel %vm195, %v997, 0
      %v1007 = vsel %vm195, %v998, 0
      %v1010 = vsel %vm195, %v999, 0
      %1012 = vmatprep.subr.bf16.mxu0 0
      %1013 = vmatpush1.bf16.msra.mxu0 0
      %1014 = vmatprep.subr.bf16.mxu0 0
      %1015 = vmatpush1.bf16.msra.mxu0 0
      %1016 = vmatprep.subr.bf16.mxu0 0
      %1017 = vmatpush1.bf16.msra.mxu0 0
      %1018 = vmatprep.subr.bf16.mxu0 0
      %1019 = vmatpush1.bf16.msra.mxu0 0
      %1020 = vmatprep.subr.bf16.mxu0 0
      %1021 = vmatpush1.bf16.msra.mxu0 0
      %1022 = vmatprep.subr.bf16.mxu0 0
      %1023 = vmatpush1.bf16.msra.mxu0 0
      %1024 = vmatprep.subr.bf16.mxu0 0
      %1025 = vmatpush1.bf16.msra.mxu0 0
      %1026 = vmatprep.subr.bf16.mxu0 %v1007
      %1027 = vmatpush1.bf16.msra.mxu0 %v1004
      %1028 = vmatprep.subr.bf16.mxu0 0
      %1029 = vmatpush2.bf16.msra.mxu0 0
      %1030 = vmatprep.subr.bf16.mxu0 0
      %1031 = vmatpush2.bf16.msra.mxu0 0
      %1032 = vmatprep.subr.bf16.mxu0 0
      %1033 = vmatpush2.bf16.msra.mxu0 0
      %1034 = vmatprep.subr.bf16.mxu0 0
      %1035 = vmatpush2.bf16.msra.mxu0 0
      %1036 = vmatprep.subr.bf16.mxu0 0
      %1037 = vmatpush2.bf16.msra.mxu0 0
      %1038 = vmatprep.subr.bf16.mxu0 0
      %1039 = vmatpush2.bf16.msra.mxu0 0
      %1040 = vmatprep.subr.bf16.mxu0 0
      %1041 = vmatpush2.bf16.msra.mxu0 0
      %1042 = vmatprep.subr.bf16.mxu0 0
      %1043 = vmatpush2.bf16.msra.mxu0 0
      %1044 = vmatprep.mubr.bf16.mxu0 0
      %1045 = vmatmul.mubr.bf16.gmra.mxu0 %v1001
      %v1046 = vpop.f32.mrf.mxu0
      %v1047 = vadd.f32 0.0, %v1046
      %v1048 = vpop.f32.mrf.mxu0
      %v1049 = vadd.f32 0.0, %v1048
      %v1050 = vpop.f32.mrf.mxu0
      %v1051 = vpop.f32.mrf.mxu0
      %1052 = vdwg.mxu0
      %1053 = vmatprep.subr.bf16.mxu0 0
      %1054 = vmatpush1.bf16.msra.mxu0 0
      %1055 = vmatprep.subr.bf16.mxu0 0
      %1056 = vmatpush1.bf16.msra.mxu0 0
      %1057 = vmatprep.subr.bf16.mxu0 0
      %1058 = vmatpush1.bf16.msra.mxu0 0
      %1059 = vmatprep.subr.bf16.mxu0 0
      %1060 = vmatpush1.bf16.msra.mxu0 0
      %1061 = vmatprep.subr.bf16.mxu0 0
      %1062 = vmatpush1.bf16.msra.mxu0 0
      %1063 = vmatprep.subr.bf16.mxu0 0
      %1064 = vmatpush1.bf16.msra.mxu0 0
      %1065 = vmatprep.subr.bf16.mxu0 0
      %1066 = vmatpush1.bf16.msra.mxu0 0
      %1067 = vmatprep.subr.bf16.mxu0 0
      %1068 = vmatpush1.bf16.msra.mxu0 %v1010
      %1069 = vmatprep.subr.bf16.mxu0 0
      %1070 = vmatpush2.bf16.msra.mxu0 0
      %1071 = vmatprep.subr.bf16.mxu0 0
      %1072 = vmatpush2.bf16.msra.mxu0 0
      %1073 = vmatprep.subr.bf16.mxu0 0
      %1074 = vmatpush2.bf16.msra.mxu0 0
      %1075 = vmatprep.subr.bf16.mxu0 0
      %1076 = vmatpush2.bf16.msra.mxu0 0
      %1077 = vmatprep.subr.bf16.mxu0 0
      %1078 = vmatpush2.bf16.msra.mxu0 0
      %1079 = vmatprep.subr.bf16.mxu0 0
      %1080 = vmatpush2.bf16.msra.mxu0 0
      %1081 = vmatprep.subr.bf16.mxu0 0
      %1082 = vmatpush2.bf16.msra.mxu0 0
      %1083 = vmatprep.subr.bf16.mxu0 0
      %1084 = vmatpush2.bf16.msra.mxu0 0
      %1085 = vmatprep.mubr.bf16.mxu0 0
      %1086 = vmatmul.mubr.bf16.gmra.mxu0 %v1001
      %v1087 = vpop.f32.mrf.mxu0
      %v1088 = vadd.f32 0.0, %v1087
      %v1089 = vpop.f32.mrf.mxu0
      %v1090 = vpop.f32.mrf.mxu0
      %v1091 = vpop.f32.mrf.mxu0
      %1092 = vdwg.mxu0
      %v1093 = vadd.f32 %v964, %v1047
      %v1094 = vadd.f32 %v965, %v1049
      %v1095 = vadd.f32 %v966, %v1088
      %1096 = vst [vmem:[#allocation2] sm:$0xff] %v1093
      %1097 = vst [vmem:[#allocation2 + $0x8] sm:$0xff] %v1094
      %1098 = vst [vmem:[#allocation2 + $0x10] sm:$0xff] %v1095
      %v1099 = vld [vmem:[#allocation2] sm:$0xff]
      %v1100 = vld [vmem:[#allocation2 + $0x8] sm:$0xff]
      %v1101 = vld [vmem:[#allocation2 + $0x10] sm:$0xff]
      %s1102 = scalar_lea.vmem %s0, 28
      %v1103 = vld [vmem:[%s1102] sm:$0xf]
      %v1104 = vld [vmem:[%s165] sm:$0xff]
      %v1106 = vcombine.high %v1104, %v1104
      %v1108 = vunpack.c.l.s4 1983009808
      %v1109 = vunpack.c.0.s8 %v1108
      %v1110 = vlaneseq
      %v1111 = vshrl.u32 %v1110, 7
      %v1112 = vsub.s32 %v1109, %v1111
      %v1113 = vrot.slane %v1104, %v1112
      %v1115 = vunpack.c.l.s4 1983009808
      %v1116 = vunpack.c.0.s8 %v1115
      %v1117 = vlaneseq
      %v1118 = vshrl.u32 %v1117, 7
      %v1119 = vsub.s32 %v1116, %v1118
      %v1120 = vrot.slane %v1106, %v1119
      %v1121 = vcombine.high %v1113, %v1113
      %v1122 = vcombine.high %v1120, %v1120
      %1123 = vrot.lane.b32.xlu0 %v1113, 106
      %v1124 = vpop.permute.xlu0 %1123
      %1125 = vrot.lane.b32.xlu0 %v1121, 106
      %v1126 = vpop.permute.xlu0 %1125
      %1127 = vrot.lane.b32.xlu0 %v1120, 106
      %v1128 = vpop.permute.xlu0 %1127
      %1129 = vrot.lane.b32.xlu0 %v1122, 106
      %v1130 = vpop.permute.xlu0 %1129
      %vm1131 = vcmask 867328
      %v1132 = vsel %vm1131, %v1124, %v1126
      %v1133 = vsel %vm1131, %v1126, %v1128
      %v1134 = vsel %vm1131, %v1128, %v1130
      %v1136 = vsel %vm191, %v1103, 0
      %v1139 = vsel %vm195, %v1132, 0
      %v1142 = vsel %vm195, %v1133, 0
      %v1145 = vsel %vm195, %v1134, 0
      %1147 = vmatprep.subr.bf16.mxu0 0
      %1148 = vmatpush1.bf16.msra.mxu0 0
      %1149 = vmatprep.subr.bf16.mxu0 0
      %1150 = vmatpush1.bf16.msra.mxu0 0
      %1151 = vmatprep.subr.bf16.mxu0 0
      %1152 = vmatpush1.bf16.msra.mxu0 0
      %1153 = vmatprep.subr.bf16.mxu0 0
      %1154 = vmatpush1.bf16.msra.mxu0 0
      %1155 = vmatprep.subr.bf16.mxu0 0
      %1156 = vmatpush1.bf16.msra.mxu0 0
      %1157 = vmatprep.subr.bf16.mxu0 0
      %1158 = vmatpush1.bf16.msra.mxu0 0
      %1159 = vmatprep.subr.bf16.mxu0 0
      %1160 = vmatpush1.bf16.msra.mxu0 0
      %1161 = vmatprep.subr.bf16.mxu0 %v1142
      %1162 = vmatpush1.bf16.msra.mxu0 %v1139
      %1163 = vmatprep.subr.bf16.mxu0 0
      %1164 = vmatpush2.bf16.msra.mxu0 0
      %1165 = vmatprep.subr.bf16.mxu0 0
      %1166 = vmatpush2.bf16.msra.mxu0 0
      %1167 = vmatprep.subr.bf16.mxu0 0
      %1168 = vmatpush2.bf16.msra.mxu0 0
      %1169 = vmatprep.subr.bf16.mxu0 0
      %1170 = vmatpush2.bf16.msra.mxu0 0
      %1171 = vmatprep.subr.bf16.mxu0 0
      %1172 = vmatpush2.bf16.msra.mxu0 0
      %1173 = vmatprep.subr.bf16.mxu0 0
      %1174 = vmatpush2.bf16.msra.mxu0 0
      %1175 = vmatprep.subr.bf16.mxu0 0
      %1176 = vmatpush2.bf16.msra.mxu0 0
      %1177 = vmatprep.subr.bf16.mxu0 0
      %1178 = vmatpush2.bf16.msra.mxu0 0
      %1179 = vmatprep.mubr.bf16.mxu0 0
      %1180 = vmatmul.mubr.bf16.gmra.mxu0 %v1136
      %v1181 = vpop.f32.mrf.mxu0
      %v1182 = vadd.f32 0.0, %v1181
      %v1183 = vpop.f32.mrf.mxu0
      %v1184 = vadd.f32 0.0, %v1183
      %v1185 = vpop.f32.mrf.mxu0
      %v1186 = vpop.f32.mrf.mxu0
      %1187 = vdwg.mxu0
      %1188 = vmatprep.subr.bf16.mxu0 0
      %1189 = vmatpush1.bf16.msra.mxu0 0
      %1190 = vmatprep.subr.bf16.mxu0 0
      %1191 = vmatpush1.bf16.msra.mxu0 0
      %1192 = vmatprep.subr.bf16.mxu0 0
      %1193 = vmatpush1.bf16.msra.mxu0 0
      %1194 = vmatprep.subr.bf16.mxu0 0
      %1195 = vmatpush1.bf16.msra.mxu0 0
      %1196 = vmatprep.subr.bf16.mxu0 0
      %1197 = vmatpush1.bf16.msra.mxu0 0
      %1198 = vmatprep.subr.bf16.mxu0 0
      %1199 = vmatpush1.bf16.msra.mxu0 0
      %1200 = vmatprep.subr.bf16.mxu0 0
      %1201 = vmatpush1.bf16.msra.mxu0 0
      %1202 = vmatprep.subr.bf16.mxu0 0
      %1203 = vmatpush1.bf16.msra.mxu0 %v1145
      %1204 = vmatprep.subr.bf16.mxu0 0
      %1205 = vmatpush2.bf16.msra.mxu0 0
      %1206 = vmatprep.subr.bf16.mxu0 0
      %1207 = vmatpush2.bf16.msra.mxu0 0
      %1208 = vmatprep.subr.bf16.mxu0 0
      %1209 = vmatpush2.bf16.msra.mxu0 0
      %1210 = vmatprep.subr.bf16.mxu0 0
      %1211 = vmatpush2.bf16.msra.mxu0 0
      %1212 = vmatprep.subr.bf16.mxu0 0
      %1213 = vmatpush2.bf16.msra.mxu0 0
      %1214 = vmatprep.subr.bf16.mxu0 0
      %1215 = vmatpush2.bf16.msra.mxu0 0
      %1216 = vmatprep.subr.bf16.mxu0 0
      %1217 = vmatpush2.bf16.msra.mxu0 0
      %1218 = vmatprep.subr.bf16.mxu0 0
      %1219 = vmatpush2.bf16.msra.mxu0 0
      %1220 = vmatprep.mubr.bf16.mxu0 0
      %1221 = vmatmul.mubr.bf16.gmra.mxu0 %v1136
      %v1222 = vpop.f32.mrf.mxu0
      %v1223 = vadd.f32 0.0, %v1222
      %v1224 = vpop.f32.mrf.mxu0
      %v1225 = vpop.f32.mrf.mxu0
      %v1226 = vpop.f32.mrf.mxu0
      %1227 = vdwg.mxu0
      %v1228 = vadd.f32 %v1099, %v1182
      %v1229 = vadd.f32 %v1100, %v1184
      %v1230 = vadd.f32 %v1101, %v1223
      %1231 = vst [vmem:[#allocation2] sm:$0xff] %v1228
      %1232 = vst [vmem:[#allocation2 + $0x8] sm:$0xff] %v1229
      %1233 = vst [vmem:[#allocation2 + $0x10] sm:$0xff] %v1230
      %v1234 = vld [vmem:[#allocation2] sm:$0xff]
      %v1235 = vld [vmem:[#allocation2 + $0x8] sm:$0xff]
      %v1236 = vld [vmem:[#allocation2 + $0x10] sm:$0xff]
      %s1237 = scalar_lea.vmem %s0, 32
      %v1238 = vld [vmem:[%s1237] sm:$0xf]
      %v1239 = vld [vmem:[%s165] sm:$0xff]
      %v1241 = vcombine.high %v1239, %v1239
      %v1243 = vunpack.c.l.s4 1983009808
      %v1244 = vunpack.c.0.s8 %v1243
      %v1245 = vlaneseq
      %v1246 = vshrl.u32 %v1245, 7
      %v1247 = vsub.s32 %v1244, %v1246
      %v1248 = vrot.slane %v1239, %v1247
      %v1250 = vunpack.c.l.s4 1983009808
      %v1251 = vunpack.c.0.s8 %v1250
      %v1252 = vlaneseq
      %v1253 = vshrl.u32 %v1252, 7
      %v1254 = vsub.s32 %v1251, %v1253
      %v1255 = vrot.slane %v1241, %v1254
      %v1256 = vcombine.high %v1248, %v1248
      %v1257 = vcombine.high %v1255, %v1255
      %1258 = vrot.lane.b32.xlu0 %v1248, 105
      %v1259 = vpop.permute.xlu0 %1258
      %1260 = vrot.lane.b32.xlu0 %v1256, 105
      %v1261 = vpop.permute.xlu0 %1260
      %1262 = vrot.lane.b32.xlu0 %v1255, 105
      %v1263 = vpop.permute.xlu0 %1262
      %1264 = vrot.lane.b32.xlu0 %v1257, 105
      %v1265 = vpop.permute.xlu0 %1264
      %vm1266 = vcmask 859136
      %v1267 = vsel %vm1266, %v1259, %v1261
      %v1268 = vsel %vm1266, %v1261, %v1263
      %v1269 = vsel %vm1266, %v1263, %v1265
      %v1271 = vsel %vm191, %v1238, 0
      %v1274 = vsel %vm195, %v1267, 0
      %v1277 = vsel %vm195, %v1268, 0
      %v1280 = vsel %vm195, %v1269, 0
      %1282 = vmatprep.subr.bf16.mxu0 0
      %1283 = vmatpush1.bf16.msra.mxu0 0
      %1284 = vmatprep.subr.bf16.mxu0 0
      %1285 = vmatpush1.bf16.msra.mxu0 0
      %1286 = vmatprep.subr.bf16.mxu0 0
      %1287 = vmatpush1.bf16.msra.mxu0 0
      %1288 = vmatprep.subr.bf16.mxu0 0
      %1289 = vmatpush1.bf16.msra.mxu0 0
      %1290 = vmatprep.subr.bf16.mxu0 0
      %1291 = vmatpush1.bf16.msra.mxu0 0
      %1292 = vmatprep.subr.bf16.mxu0 0
      %1293 = vmatpush1.bf16.msra.mxu0 0
      %1294 = vmatprep.subr.bf16.mxu0 0
      %1295 = vmatpush1.bf16.msra.mxu0 0
      %1296 = vmatprep.subr.bf16.mxu0 %v1277
      %1297 = vmatpush1.bf16.msra.mxu0 %v1274
      %1298 = vmatprep.subr.bf16.mxu0 0
      %1299 = vmatpush2.bf16.msra.mxu0 0
      %1300 = vmatprep.subr.bf16.mxu0 0
      %1301 = vmatpush2.bf16.msra.mxu0 0
      %1302 = vmatprep.subr.bf16.mxu0 0
      %1303 = vmatpush2.bf16.msra.mxu0 0
      %1304 = vmatprep.subr.bf16.mxu0 0
      %1305 = vmatpush2.bf16.msra.mxu0 0
      %1306 = vmatprep.subr.bf16.mxu0 0
      %1307 = vmatpush2.bf16.msra.mxu0 0
      %1308 = vmatprep.subr.bf16.mxu0 0
      %1309 = vmatpush2.bf16.msra.mxu0 0
      %1310 = vmatprep.subr.bf16.mxu0 0
      %1311 = vmatpush2.bf16.msra.mxu0 0
      %1312 = vmatprep.subr.bf16.mxu0 0
      %1313 = vmatpush2.bf16.msra.mxu0 0
      %1314 = vmatprep.mubr.bf16.mxu0 0
      %1315 = vmatmul.mubr.bf16.gmra.mxu0 %v1271
      %v1316 = vpop.f32.mrf.mxu0
      %v1317 = vadd.f32 0.0, %v1316
      %v1318 = vpop.f32.mrf.mxu0
      %v1319 = vadd.f32 0.0, %v1318
      %v1320 = vpop.f32.mrf.mxu0
      %v1321 = vpop.f32.mrf.mxu0
      %1322 = vdwg.mxu0
      %1323 = vmatprep.subr.bf16.mxu0 0
      %1324 = vmatpush1.bf16.msra.mxu0 0
      %1325 = vmatprep.subr.bf16.mxu0 0
      %1326 = vmatpush1.bf16.msra.mxu0 0
      %1327 = vmatprep.subr.bf16.mxu0 0
      %1328 = vmatpush1.bf16.msra.mxu0 0
      %1329 = vmatprep.subr.bf16.mxu0 0
      %1330 = vmatpush1.bf16.msra.mxu0 0
      %1331 = vmatprep.subr.bf16.mxu0 0
      %1332 = vmatpush1.bf16.msra.mxu0 0
      %1333 = vmatprep.subr.bf16.mxu0 0
      %1334 = vmatpush1.bf16.msra.mxu0 0
      %1335 = vmatprep.subr.bf16.mxu0 0
      %1336 = vmatpush1.bf16.msra.mxu0 0
      %1337 = vmatprep.subr.bf16.mxu0 0
      %1338 = vmatpush1.bf16.msra.mxu0 %v1280
      %1339 = vmatprep.subr.bf16.mxu0 0
      %1340 = vmatpush2.bf16.msra.mxu0 0
      %1341 = vmatprep.subr.bf16.mxu0 0
      %1342 = vmatpush2.bf16.msra.mxu0 0
      %1343 = vmatprep.subr.bf16.mxu0 0
      %1344 = vmatpush2.bf16.msra.mxu0 0
      %1345 = vmatprep.subr.bf16.mxu0 0
      %1346 = vmatpush2.bf16.msra.mxu0 0
      %1347 = vmatprep.subr.bf16.mxu0 0
      %1348 = vmatpush2.bf16.msra.mxu0 0
      %1349 = vmatprep.subr.bf16.mxu0 0
      %1350 = vmatpush2.bf16.msra.mxu0 0
      %1351 = vmatprep.subr.bf16.mxu0 0
      %1352 = vmatpush2.bf16.msra.mxu0 0
      %1353 = vmatprep.subr.bf16.mxu0 0
      %1354 = vmatpush2.bf16.msra.mxu0 0
      %1355 = vmatprep.mubr.bf16.mxu0 0
      %1356 = vmatmul.mubr.bf16.gmra.mxu0 %v1271
      %v1357 = vpop.f32.mrf.mxu0
      %v1358 = vadd.f32 0.0, %v1357
      %v1359 = vpop.f32.mrf.mxu0
      %v1360 = vpop.f32.mrf.mxu0
      %v1361 = vpop.f32.mrf.mxu0
      %1362 = vdwg.mxu0
      %v1363 = vadd.f32 %v1234, %v1317
      %v1364 = vadd.f32 %v1235, %v1319
      %v1365 = vadd.f32 %v1236, %v1358
      %1366 = vst [vmem:[#allocation2] sm:$0xff] %v1363
      %1367 = vst [vmem:[#allocation2 + $0x8] sm:$0xff] %v1364
      %1368 = vst [vmem:[#allocation2 + $0x10] sm:$0xff] %v1365
      %v1369 = vld [vmem:[#allocation2] sm:$0xff]
      %v1370 = vld [vmem:[#allocation2 + $0x8] sm:$0xff]
      %v1371 = vld [vmem:[#allocation2 + $0x10] sm:$0xff]
      %s1372 = scalar_lea.vmem %s0, 36
      %v1373 = vld [vmem:[%s1372] sm:$0xf]
      %v1374 = vld [vmem:[%s165] sm:$0xff]
      %v1376 = vcombine.high %v1374, %v1374
      %v1378 = vunpack.c.l.s4 1983009808
      %v1379 = vunpack.c.0.s8 %v1378
      %v1380 = vlaneseq
      %v1381 = vshrl.u32 %v1380, 7
      %v1382 = vsub.s32 %v1379, %v1381
      %v1383 = vrot.slane %v1374, %v1382
      %v1385 = vunpack.c.l.s4 1983009808
      %v1386 = vunpack.c.0.s8 %v1385
      %v1387 = vlaneseq
      %v1388 = vshrl.u32 %v1387, 7
      %v1389 = vsub.s32 %v1386, %v1388
      %v1390 = vrot.slane %v1376, %v1389
      %v1391 = vcombine.high %v1383, %v1383
      %v1392 = vcombine.high %v1390, %v1390
      %1393 = vrot.lane.b32.xlu0 %v1383, 104
      %v1394 = vpop.permute.xlu0 %1393
      %1395 = vrot.lane.b32.xlu0 %v1391, 104
      %v1396 = vpop.permute.xlu0 %1395
      %1397 = vrot.lane.b32.xlu0 %v1390, 104
      %v1398 = vpop.permute.xlu0 %1397
      %1399 = vrot.lane.b32.xlu0 %v1392, 104
      %v1400 = vpop.permute.xlu0 %1399
      %vm1401 = vcmask 850944
      %v1402 = vsel %vm1401, %v1394, %v1396
      %v1403 = vsel %vm1401, %v1396, %v1398
      %v1404 = vsel %vm1401, %v1398, %v1400
      %v1406 = vsel %vm191, %v1373, 0
      %v1409 = vsel %vm195, %v1402, 0
      %v1412 = vsel %vm195, %v1403, 0
      %v1415 = vsel %vm195, %v1404, 0
      %1417 = vmatprep.subr.bf16.mxu0 0
      %1418 = vmatpush1.bf16.msra.mxu0 0
      %1419 = vmatprep.subr.bf16.mxu0 0
      %1420 = vmatpush1.bf16.msra.mxu0 0
      %1421 = vmatprep.subr.bf16.mxu0 0
      %1422 = vmatpush1.bf16.msra.mxu0 0
      %1423 = vmatprep.subr.bf16.mxu0 0
      %1424 = vmatpush1.bf16.msra.mxu0 0
      %1425 = vmatprep.subr.bf16.mxu0 0
      %1426 = vmatpush1.bf16.msra.mxu0 0
      %1427 = vmatprep.subr.bf16.mxu0 0
      %1428 = vmatpush1.bf16.msra.mxu0 0
      %1429 = vmatprep.subr.bf16.mxu0 0
      %1430 = vmatpush1.bf16.msra.mxu0 0
      %1431 = vmatprep.subr.bf16.mxu0 %v1412
      %1432 = vmatpush1.bf16.msra.mxu0 %v1409
      %1433 = vmatprep.subr.bf16.mxu0 0
      %1434 = vmatpush2.bf16.msra.mxu0 0
      %1435 = vmatprep.subr.bf16.mxu0 0
      %1436 = vmatpush2.bf16.msra.mxu0 0
      %1437 = vmatprep.subr.bf16.mxu0 0
      %1438 = vmatpush2.bf16.msra.mxu0 0
      %1439 = vmatprep.subr.bf16.mxu0 0
      %1440 = vmatpush2.bf16.msra.mxu0 0
      %1441 = vmatprep.subr.bf16.mxu0 0
      %1442 = vmatpush2.bf16.msra.mxu0 0
      %1443 = vmatprep.subr.bf16.mxu0 0
      %1444 = vmatpush2.bf16.msra.mxu0 0
      %1445 = vmatprep.subr.bf16.mxu0 0
      %1446 = vmatpush2.bf16.msra.mxu0 0
      %1447 = vmatprep.subr.bf16.mxu0 0
      %1448 = vmatpush2.bf16.msra.mxu0 0
      %1449 = vmatprep.mubr.bf16.mxu0 0
      %1450 = vmatmul.mubr.bf16.gmra.mxu0 %v1406
      %v1451 = vpop.f32.mrf.mxu0
      %v1452 = vadd.f32 0.0, %v1451
      %v1453 = vpop.f32.mrf.mxu0
      %v1454 = vadd.f32 0.0, %v1453
      %v1455 = vpop.f32.mrf.mxu0
      %v1456 = vpop.f32.mrf.mxu0
      %1457 = vdwg.mxu0
      %1458 = vmatprep.subr.bf16.mxu0 0
      %1459 = vmatpush1.bf16.msra.mxu0 0
      %1460 = vmatprep.subr.bf16.mxu0 0
      %1461 = vmatpush1.bf16.msra.mxu0 0
      %1462 = vmatprep.subr.bf16.mxu0 0
      %1463 = vmatpush1.bf16.msra.mxu0 0
      %1464 = vmatprep.subr.bf16.mxu0 0
      %1465 = vmatpush1.bf16.msra.mxu0 0
      %1466 = vmatprep.subr.bf16.mxu0 0
      %1467 = vmatpush1.bf16.msra.mxu0 0
      %1468 = vmatprep.subr.bf16.mxu0 0
      %1469 = vmatpush1.bf16.msra.mxu0 0
      %1470 = vmatprep.subr.bf16.mxu0 0
      %1471 = vmatpush1.bf16.msra.mxu0 0
      %1472 = vmatprep.subr.bf16.mxu0 0
      %1473 = vmatpush1.bf16.msra.mxu0 %v1415
      %1474 = vmatprep.subr.bf16.mxu0 0
      %1475 = vmatpush2.bf16.msra.mxu0 0
      %1476 = vmatprep.subr.bf16.mxu0 0
      %1477 = vmatpush2.bf16.msra.mxu0 0
      %1478 = vmatprep.subr.bf16.mxu0 0
      %1479 = vmatpush2.bf16.msra.mxu0 0
      %1480 = vmatprep.subr.bf16.mxu0 0
      %1481 = vmatpush2.bf16.msra.mxu0 0
      %1482 = vmatprep.subr.bf16.mxu0 0
      %1483 = vmatpush2.bf16.msra.mxu0 0
      %1484 = vmatprep.subr.bf16.mxu0 0
      %1485 = vmatpush2.bf16.msra.mxu0 0
      %1486 = vmatprep.subr.bf16.mxu0 0
      %1487 = vmatpush2.bf16.msra.mxu0 0
      %1488 = vmatprep.subr.bf16.mxu0 0
      %1489 = vmatpush2.bf16.msra.mxu0 0
      %1490 = vmatprep.mubr.bf16.mxu0 0
      %1491 = vmatmul.mubr.bf16.gmra.mxu0 %v1406
      %v1492 = vpop.f32.mrf.mxu0
      %v1493 = vadd.f32 0.0, %v1492
      %v1494 = vpop.f32.mrf.mxu0
      %v1495 = vpop.f32.mrf.mxu0
      %v1496 = vpop.f32.mrf.mxu0
      %1497 = vdwg.mxu0
      %v1498 = vadd.f32 %v1369, %v1452
      %v1499 = vadd.f32 %v1370, %v1454
      %v1500 = vadd.f32 %v1371, %v1493
      %1501 = vst [vmem:[#allocation2] sm:$0xff] %v1498
      %1502 = vst [vmem:[#allocation2 + $0x8] sm:$0xff] %v1499
      %1503 = vst [vmem:[#allocation2 + $0x10] sm:$0xff] %v1500
      %v1504 = vld [vmem:[#allocation2] sm:$0xff]
      %v1505 = vld [vmem:[#allocation2 + $0x8] sm:$0xff]
      %v1506 = vld [vmem:[#allocation2 + $0x10] sm:$0xff]
      %s1507 = scalar_lea.vmem %s0, 40
      %v1508 = vld [vmem:[%s1507] sm:$0xf]
      %v1509 = vld [vmem:[%s165] sm:$0xff]
      %v1511 = vcombine.high %v1509, %v1509
      %v1513 = vunpack.c.l.s4 1983009808
      %v1514 = vunpack.c.0.s8 %v1513
      %v1515 = vlaneseq
      %v1516 = vshrl.u32 %v1515, 7
      %v1517 = vsub.s32 %v1514, %v1516
      %v1518 = vrot.slane %v1509, %v1517
      %v1520 = vunpack.c.l.s4 1983009808
      %v1521 = vunpack.c.0.s8 %v1520
      %v1522 = vlaneseq
      %v1523 = vshrl.u32 %v1522, 7
      %v1524 = vsub.s32 %v1521, %v1523
      %v1525 = vrot.slane %v1511, %v1524
      %v1526 = vcombine.high %v1518, %v1518
      %v1527 = vcombine.high %v1525, %v1525
      %1528 = vrot.lane.b32.xlu0 %v1518, 103
      %v1529 = vpop.permute.xlu0 %1528
      %1530 = vrot.lane.b32.xlu0 %v1526, 103
      %v1531 = vpop.permute.xlu0 %1530
      %1532 = vrot.lane.b32.xlu0 %v1525, 103
      %v1533 = vpop.permute.xlu0 %1532
      %1534 = vrot.lane.b32.xlu0 %v1527, 103
      %v1535 = vpop.permute.xlu0 %1534
      %vm1536 = vcmask 842752
      %v1537 = vsel %vm1536, %v1529, %v1531
      %v1538 = vsel %vm1536, %v1531, %v1533
      %v1539 = vsel %vm1536, %v1533, %v1535
      %v1541 = vsel %vm191, %v1508, 0
      %v1544 = vsel %vm195, %v1537, 0
      %v1547 = vsel %vm195, %v1538, 0
      %v1550 = vsel %vm195, %v1539, 0
      %1552 = vmatprep.subr.bf16.mxu0 0
      %1553 = vmatpush1.bf16.msra.mxu0 0
      %1554 = vmatprep.subr.bf16.mxu0 0
      %1555 = vmatpush1.bf16.msra.mxu0 0
      %1556 = vmatprep.subr.bf16.mxu0 0
      %1557 = vmatpush1.bf16.msra.mxu0 0
      %1558 = vmatprep.subr.bf16.mxu0 0
      %1559 = vmatpush1.bf16.msra.mxu0 0
      %1560 = vmatprep.subr.bf16.mxu0 0
      %1561 = vmatpush1.bf16.msra.mxu0 0
      %1562 = vmatprep.subr.bf16.mxu0 0
      %1563 = vmatpush1.bf16.msra.mxu0 0
      %1564 = vmatprep.subr.bf16.mxu0 0
      %1565 = vmatpush1.bf16.msra.mxu0 0
      %1566 = vmatprep.subr.bf16.mxu0 %v1547
      %1567 = vmatpush1.bf16.msra.mxu0 %v1544
      %1568 = vmatprep.subr.bf16.mxu0 0
      %1569 = vmatpush2.bf16.msra.mxu0 0
      %1570 = vmatprep.subr.bf16.mxu0 0
      %1571 = vmatpush2.bf16.msra.mxu0 0
      %1572 = vmatprep.subr.bf16.mxu0 0
      %1573 = vmatpush2.bf16.msra.mxu0 0
      %1574 = vmatprep.subr.bf16.mxu0 0
      %1575 = vmatpush2.bf16.msra.mxu0 0
      %1576 = vmatprep.subr.bf16.mxu0 0
      %1577 = vmatpush2.bf16.msra.mxu0 0
      %1578 = vmatprep.subr.bf16.mxu0 0
      %1579 = vmatpush2.bf16.msra.mxu0 0
      %1580 = vmatprep.subr.bf16.mxu0 0
      %1581 = vmatpush2.bf16.msra.mxu0 0
      %1582 = vmatprep.subr.bf16.mxu0 0
      %1583 = vmatpush2.bf16.msra.mxu0 0
      %1584 = vmatprep.mubr.bf16.mxu0 0
      %1585 = vmatmul.mubr.bf16.gmra.mxu0 %v1541
      %v1586 = vpop.f32.mrf.mxu0
      %v1587 = vadd.f32 0.0, %v1586
      %v1588 = vpop.f32.mrf.mxu0
      %v1589 = vadd.f32 0.0, %v1588
      %v1590 = vpop.f32.mrf.mxu0
      %v1591 = vpop.f32.mrf.mxu0
      %1592 = vdwg.mxu0
      %1593 = vmatprep.subr.bf16.mxu0 0
      %1594 = vmatpush1.bf16.msra.mxu0 0
      %1595 = vmatprep.subr.bf16.mxu0 0
      %1596 = vmatpush1.bf16.msra.mxu0 0
      %1597 = vmatprep.subr.bf16.mxu0 0
      %1598 = vmatpush1.bf16.msra.mxu0 0
      %1599 = vmatprep.subr.bf16.mxu0 0
      %1600 = vmatpush1.bf16.msra.mxu0 0
      %1601 = vmatprep.subr.bf16.mxu0 0
      %1602 = vmatpush1.bf16.msra.mxu0 0
      %1603 = vmatprep.subr.bf16.mxu0 0
      %1604 = vmatpush1.bf16.msra.mxu0 0
      %1605 = vmatprep.subr.bf16.mxu0 0
      %1606 = vmatpush1.bf16.msra.mxu0 0
      %1607 = vmatprep.subr.bf16.mxu0 0
      %1608 = vmatpush1.bf16.msra.mxu0 %v1550
      %1609 = vmatprep.subr.bf16.mxu0 0
      %1610 = vmatpush2.bf16.msra.mxu0 0
      %1611 = vmatprep.subr.bf16.mxu0 0
      %1612 = vmatpush2.bf16.msra.mxu0 0
      %1613 = vmatprep.subr.bf16.mxu0 0
      %1614 = vmatpush2.bf16.msra.mxu0 0
      %1615 = vmatprep.subr.bf16.mxu0 0
      %1616 = vmatpush2.bf16.msra.mxu0 0
      %1617 = vmatprep.subr.bf16.mxu0 0
      %1618 = vmatpush2.bf16.msra.mxu0 0
      %1619 = vmatprep.subr.bf16.mxu0 0
      %1620 = vmatpush2.bf16.msra.mxu0 0
      %1621 = vmatprep.subr.bf16.mxu0 0
      %1622 = vmatpush2.bf16.msra.mxu0 0
      %1623 = vmatprep.subr.bf16.mxu0 0
      %1624 = vmatpush2.bf16.msra.mxu0 0
      %1625 = vmatprep.mubr.bf16.mxu0 0
      %1626 = vmatmul.mubr.bf16.gmra.mxu0 %v1541
      %v1627 = vpop.f32.mrf.mxu0
      %v1628 = vadd.f32 0.0, %v1627
      %v1629 = vpop.f32.mrf.mxu0
      %v1630 = vpop.f32.mrf.mxu0
      %v1631 = vpop.f32.mrf.mxu0
      %1632 = vdwg.mxu0
      %v1633 = vadd.f32 %v1504, %v1587
      %v1634 = vadd.f32 %v1505, %v1589
      %v1635 = vadd.f32 %v1506, %v1628
      %1636 = vst [vmem:[#allocation2] sm:$0xff] %v1633
      %1637 = vst [vmem:[#allocation2 + $0x8] sm:$0xff] %v1634
      %1638 = vst [vmem:[#allocation2 + $0x10] sm:$0xff] %v1635
      %v1639 = vld [vmem:[#allocation2] sm:$0xff]
      %v1640 = vld [vmem:[#allocation2 + $0x8] sm:$0xff]
      %v1641 = vld [vmem:[#allocation2 + $0x10] sm:$0xff]
      %s1642 = scalar_lea.vmem %s0, 44
      %v1643 = vld [vmem:[%s1642] sm:$0xf]
      %v1644 = vld [vmem:[%s165] sm:$0xff]
      %v1646 = vcombine.high %v1644, %v1644
      %v1648 = vunpack.c.l.s4 1983009808
      %v1649 = vunpack.c.0.s8 %v1648
      %v1650 = vlaneseq
      %v1651 = vshrl.u32 %v1650, 7
      %v1652 = vsub.s32 %v1649, %v1651
      %v1653 = vrot.slane %v1644, %v1652
      %v1655 = vunpack.c.l.s4 1983009808
      %v1656 = vunpack.c.0.s8 %v1655
      %v1657 = vlaneseq
      %v1658 = vshrl.u32 %v1657, 7
      %v1659 = vsub.s32 %v1656, %v1658
      %v1660 = vrot.slane %v1646, %v1659
      %v1661 = vcombine.high %v1653, %v1653
      %v1662 = vcombine.high %v1660, %v1660
      %1663 = vrot.lane.b32.xlu0 %v1653, 102
      %v1664 = vpop.permute.xlu0 %1663
      %1665 = vrot.lane.b32.xlu0 %v1661, 102
      %v1666 = vpop.permute.xlu0 %1665
      %1667 = vrot.lane.b32.xlu0 %v1660, 102
      %v1668 = vpop.permute.xlu0 %1667
      %1669 = vrot.lane.b32.xlu0 %v1662, 102
      %v1670 = vpop.permute.xlu0 %1669
      %vm1671 = vcmask 834560
      %v1672 = vsel %vm1671, %v1664, %v1666
      %v1673 = vsel %vm1671, %v1666, %v1668
      %v1674 = vsel %vm1671, %v1668, %v1670
      %v1676 = vsel %vm191, %v1643, 0
      %v1679 = vsel %vm195, %v1672, 0
      %v1682 = vsel %vm195, %v1673, 0
      %v1685 = vsel %vm195, %v1674, 0
      %1687 = vmatprep.subr.bf16.mxu0 0
      %1688 = vmatpush1.bf16.msra.mxu0 0
      %1689 = vmatprep.subr.bf16.mxu0 0
      %1690 = vmatpush1.bf16.msra.mxu0 0
      %1691 = vmatprep.subr.bf16.mxu0 0
      %1692 = vmatpush1.bf16.msra.mxu0 0
      %1693 = vmatprep.subr.bf16.mxu0 0
      %1694 = vmatpush1.bf16.msra.mxu0 0
      %1695 = vmatprep.subr.bf16.mxu0 0
      %1696 = vmatpush1.bf16.msra.mxu0 0
      %1697 = vmatprep.subr.bf16.mxu0 0
      %1698 = vmatpush1.bf16.msra.mxu0 0
      %1699 = vmatprep.subr.bf16.mxu0 0
      %1700 = vmatpush1.bf16.msra.mxu0 0
      %1701 = vmatprep.subr.bf16.mxu0 %v1682
      %1702 = vmatpush1.bf16.msra.mxu0 %v1679
      %1703 = vmatprep.subr.bf16.mxu0 0
      %1704 = vmatpush2.bf16.msra.mxu0 0
      %1705 = vmatprep.subr.bf16.mxu0 0
      %1706 = vmatpush2.bf16.msra.mxu0 0
      %1707 = vmatprep.subr.bf16.mxu0 0
      %1708 = vmatpush2.bf16.msra.mxu0 0
      %1709 = vmatprep.subr.bf16.mxu0 0
      %1710 = vmatpush2.bf16.msra.mxu0 0
      %1711 = vmatprep.subr.bf16.mxu0 0
      %1712 = vmatpush2.bf16.msra.mxu0 0
      %1713 = vmatprep.subr.bf16.mxu0 0
      %1714 = vmatpush2.bf16.msra.mxu0 0
      %1715 = vmatprep.subr.bf16.mxu0 0
      %1716 = vmatpush2.bf16.msra.mxu0 0
      %1717 = vmatprep.subr.bf16.mxu0 0
      %1718 = vmatpush2.bf16.msra.mxu0 0
      %1719 = vmatprep.mubr.bf16.mxu0 0
      %1720 = vmatmul.mubr.bf16.gmra.mxu0 %v1676
      %v1721 = vpop.f32.mrf.mxu0
      %v1722 = vadd.f32 0.0, %v1721
      %v1723 = vpop.f32.mrf.mxu0
      %v1724 = vadd.f32 0.0, %v1723
      %v1725 = vpop.f32.mrf.mxu0
      %v1726 = vpop.f32.mrf.mxu0
      %1727 = vdwg.mxu0
      %1728 = vmatprep.subr.bf16.mxu0 0
      %1729 = vmatpush1.bf16.msra.mxu0 0
      %1730 = vmatprep.subr.bf16.mxu0 0
      %1731 = vmatpush1.bf16.msra.mxu0 0
      %1732 = vmatprep.subr.bf16.mxu0 0
      %1733 = vmatpush1.bf16.msra.mxu0 0
      %1734 = vmatprep.subr.bf16.mxu0 0
      %1735 = vmatpush1.bf16.msra.mxu0 0
      %1736 = vmatprep.subr.bf16.mxu0 0
      %1737 = vmatpush1.bf16.msra.mxu0 0
      %1738 = vmatprep.subr.bf16.mxu0 0
      %1739 = vmatpush1.bf16.msra.mxu0 0
      %1740 = vmatprep.subr.bf16.mxu0 0
      %1741 = vmatpush1.bf16.msra.mxu0 0
      %1742 = vmatprep.subr.bf16.mxu0 0
      %1743 = vmatpush1.bf16.msra.mxu0 %v1685
      %1744 = vmatprep.subr.bf16.mxu0 0
      %1745 = vmatpush2.bf16.msra.mxu0 0
      %1746 = vmatprep.subr.bf16.mxu0 0
      %1747 = vmatpush2.bf16.msra.mxu0 0
      %1748 = vmatprep.subr.bf16.mxu0 0
      %1749 = vmatpush2.bf16.msra.mxu0 0
      %1750 = vmatprep.subr.bf16.mxu0 0
      %1751 = vmatpush2.bf16.msra.mxu0 0
      %1752 = vmatprep.subr.bf16.mxu0 0
      %1753 = vmatpush2.bf16.msra.mxu0 0
      %1754 = vmatprep.subr.bf16.mxu0 0
      %1755 = vmatpush2.bf16.msra.mxu0 0
      %1756 = vmatprep.subr.bf16.mxu0 0
      %1757 = vmatpush2.bf16.msra.mxu0 0
      %1758 = vmatprep.subr.bf16.mxu0 0
      %1759 = vmatpush2.bf16.msra.mxu0 0
      %1760 = vmatprep.mubr.bf16.mxu0 0
      %1761 = vmatmul.mubr.bf16.gmra.mxu0 %v1676
      %v1762 = vpop.f32.mrf.mxu0
      %v1763 = vadd.f32 0.0, %v1762
      %v1764 = vpop.f32.mrf.mxu0
      %v1765 = vpop.f32.mrf.mxu0
      %v1766 = vpop.f32.mrf.mxu0
      %1767 = vdwg.mxu0
      %v1768 = vadd.f32 %v1639, %v1722
      %v1769 = vadd.f32 %v1640, %v1724
      %v1770 = vadd.f32 %v1641, %v1763
      %1771 = vst [vmem:[#allocation2] sm:$0xff] %v1768
      %1772 = vst [vmem:[#allocation2 + $0x8] sm:$0xff] %v1769
      %1773 = vst [vmem:[#allocation2 + $0x10] sm:$0xff] %v1770
      %v1774 = vld [vmem:[#allocation2] sm:$0xff]
      %v1775 = vld [vmem:[#allocation2 + $0x8] sm:$0xff]
      %v1776 = vld [vmem:[#allocation2 + $0x10] sm:$0xff]
      %s1777 = scalar_lea.vmem %s0, 48
      %v1778 = vld [vmem:[%s1777] sm:$0xf]
      %v1779 = vld [vmem:[%s165] sm:$0xff]
      %v1781 = vcombine.high %v1779, %v1779
      %v1783 = vunpack.c.l.s4 1983009808
      %v1784 = vunpack.c.0.s8 %v1783
      %v1785 = vlaneseq
      %v1786 = vshrl.u32 %v1785, 7
      %v1787 = vsub.s32 %v1784, %v1786
      %v1788 = vrot.slane %v1779, %v1787
      %v1790 = vunpack.c.l.s4 1983009808
      %v1791 = vunpack.c.0.s8 %v1790
      %v1792 = vlaneseq
      %v1793 = vshrl.u32 %v1792, 7
      %v1794 = vsub.s32 %v1791, %v1793
      %v1795 = vrot.slane %v1781, %v1794
      %v1796 = vcombine.high %v1788, %v1788
      %v1797 = vcombine.high %v1795, %v1795
      %1798 = vrot.lane.b32.xlu0 %v1788, 101
      %v1799 = vpop.permute.xlu0 %1798
      %1800 = vrot.lane.b32.xlu0 %v1796, 101
      %v1801 = vpop.permute.xlu0 %1800
      %1802 = vrot.lane.b32.xlu0 %v1795, 101
      %v1803 = vpop.permute.xlu0 %1802
      %1804 = vrot.lane.b32.xlu0 %v1797, 101
      %v1805 = vpop.permute.xlu0 %1804
      %vm1806 = vcmask 826368
      %v1807 = vsel %vm1806, %v1799, %v1801
      %v1808 = vsel %vm1806, %v1801, %v1803
      %v1809 = vsel %vm1806, %v1803, %v1805
      %v1811 = vsel %vm191, %v1778, 0
      %v1814 = vsel %vm195, %v1807, 0
      %v1817 = vsel %vm195, %v1808, 0
      %v1820 = vsel %vm195, %v1809, 0
      %1822 = vmatprep.subr.bf16.mxu0 0
      %1823 = vmatpush1.bf16.msra.mxu0 0
      %1824 = vmatprep.subr.bf16.mxu0 0
      %1825 = vmatpush1.bf16.msra.mxu0 0
      %1826 = vmatprep.subr.bf16.mxu0 0
      %1827 = vmatpush1.bf16.msra.mxu0 0
      %1828 = vmatprep.subr.bf16.mxu0 0
      %1829 = vmatpush1.bf16.msra.mxu0 0
      %1830 = vmatprep.subr.bf16.mxu0 0
      %1831 = vmatpush1.bf16.msra.mxu0 0
      %1832 = vmatprep.subr.bf16.mxu0 0
      %1833 = vmatpush1.bf16.msra.mxu0 0
      %1834 = vmatprep.subr.bf16.mxu0 0
      %1835 = vmatpush1.bf16.msra.mxu0 0
      %1836 = vmatprep.subr.bf16.mxu0 %v1817
      %1837 = vmatpush1.bf16.msra.mxu0 %v1814
      %1838 = vmatprep.subr.bf16.mxu0 0
      %1839 = vmatpush2.bf16.msra.mxu0 0
      %1840 = vmatprep.subr.bf16.mxu0 0
      %1841 = vmatpush2.bf16.msra.mxu0 0
      %1842 = vmatprep.subr.bf16.mxu0 0
      %1843 = vmatpush2.bf16.msra.mxu0 0
      %1844 = vmatprep.subr.bf16.mxu0 0
      %1845 = vmatpush2.bf16.msra.mxu0 0
      %1846 = vmatprep.subr.bf16.mxu0 0
      %1847 = vmatpush2.bf16.msra.mxu0 0
      %1848 = vmatprep.subr.bf16.mxu0 0
      %1849 = vmatpush2.bf16.msra.mxu0 0
      %1850 = vmatprep.subr.bf16.mxu0 0
      %1851 = vmatpush2.bf16.msra.mxu0 0
      %1852 = vmatprep.subr.bf16.mxu0 0
      %1853 = vmatpush2.bf16.msra.mxu0 0
      %1854 = vmatprep.mubr.bf16.mxu0 0
      %1855 = vmatmul.mubr.bf16.gmra.mxu0 %v1811
      %v1856 = vpop.f32.mrf.mxu0
      %v1857 = vadd.f32 0.0, %v1856
      %v1858 = vpop.f32.mrf.mxu0
      %v1859 = vadd.f32 0.0, %v1858
      %v1860 = vpop.f32.mrf.mxu0
      %v1861 = vpop.f32.mrf.mxu0
      %1862 = vdwg.mxu0
      %1863 = vmatprep.subr.bf16.mxu0 0
      %1864 = vmatpush1.bf16.msra.mxu0 0
      %1865 = vmatprep.subr.bf16.mxu0 0
      %1866 = vmatpush1.bf16.msra.mxu0 0
      %1867 = vmatprep.subr.bf16.mxu0 0
      %1868 = vmatpush1.bf16.msra.mxu0 0
      %1869 = vmatprep.subr.bf16.mxu0 0
      %1870 = vmatpush1.bf16.msra.mxu0 0
      %1871 = vmatprep.subr.bf16.mxu0 0
      %1872 = vmatpush1.bf16.msra.mxu0 0
      %1873 = vmatprep.subr.bf16.mxu0 0
      %1874 = vmatpush1.bf16.msra.mxu0 0
      %1875 = vmatprep.subr.bf16.mxu0 0
      %1876 = vmatpush1.bf16.msra.mxu0 0
      %1877 = vmatprep.subr.bf16.mxu0 0
      %1878 = vmatpush1.bf16.msra.mxu0 %v1820
      %1879 = vmatprep.subr.bf16.mxu0 0
      %1880 = vmatpush2.bf16.msra.mxu0 0
      %1881 = vmatprep.subr.bf16.mxu0 0
      %1882 = vmatpush2.bf16.msra.mxu0 0
      %1883 = vmatprep.subr.bf16.mxu0 0
      %1884 = vmatpush2.bf16.msra.mxu0 0
      %1885 = vmatprep.subr.bf16.mxu0 0
      %1886 = vmatpush2.bf16.msra.mxu0 0
      %1887 = vmatprep.subr.bf16.mxu0 0
      %1888 = vmatpush2.bf16.msra.mxu0 0
      %1889 = vmatprep.subr.bf16.mxu0 0
      %1890 = vmatpush2.bf16.msra.mxu0 0
      %1891 = vmatprep.subr.bf16.mxu0 0
      %1892 = vmatpush2.bf16.msra.mxu0 0
      %1893 = vmatprep.subr.bf16.mxu0 0
      %1894 = vmatpush2.bf16.msra.mxu0 0
      %1895 = vmatprep.mubr.bf16.mxu0 0
      %1896 = vmatmul.mubr.bf16.gmra.mxu0 %v1811
      %v1897 = vpop.f32.mrf.mxu0
      %v1898 = vadd.f32 0.0, %v1897
      %v1899 = vpop.f32.mrf.mxu0
      %v1900 = vpop.f32.mrf.mxu0
      %v1901 = vpop.f32.mrf.mxu0
      %1902 = vdwg.mxu0
      %v1903 = vadd.f32 %v1774, %v1857
      %v1904 = vadd.f32 %v1775, %v1859
      %v1905 = vadd.f32 %v1776, %v1898
      %1906 = vst [vmem:[#allocation2] sm:$0xff] %v1903
      %1907 = vst [vmem:[#allocation2 + $0x8] sm:$0xff] %v1904
      %1908 = vst [vmem:[#allocation2 + $0x10] sm:$0xff] %v1905
      %v1909 = vld [vmem:[#allocation2] sm:$0xff]
      %v1910 = vld [vmem:[#allocation2 + $0x8] sm:$0xff]
      %v1911 = vld [vmem:[#allocation2 + $0x10] sm:$0xff]
      %s1912 = scalar_lea.vmem %s0, 52
      %v1913 = vld [vmem:[%s1912] sm:$0xf]
      %v1914 = vld [vmem:[%s165] sm:$0xff]
      %v1916 = vcombine.high %v1914, %v1914
      %v1918 = vunpack.c.l.s4 1983009808
      %v1919 = vunpack.c.0.s8 %v1918
      %v1920 = vlaneseq
      %v1921 = vshrl.u32 %v1920, 7
      %v1922 = vsub.s32 %v1919, %v1921
      %v1923 = vrot.slane %v1914, %v1922
      %v1925 = vunpack.c.l.s4 1983009808
      %v1926 = vunpack.c.0.s8 %v1925
      %v1927 = vlaneseq
      %v1928 = vshrl.u32 %v1927, 7
      %v1929 = vsub.s32 %v1926, %v1928
      %v1930 = vrot.slane %v1916, %v1929
      %v1931 = vcombine.high %v1923, %v1923
      %v1932 = vcombine.high %v1930, %v1930
      %1933 = vrot.lane.b32.xlu0 %v1923, 100
      %v1934 = vpop.permute.xlu0 %1933
      %1935 = vrot.lane.b32.xlu0 %v1931, 100
      %v1936 = vpop.permute.xlu0 %1935
      %1937 = vrot.lane.b32.xlu0 %v1930, 100
      %v1938 = vpop.permute.xlu0 %1937
      %1939 = vrot.lane.b32.xlu0 %v1932, 100
      %v1940 = vpop.permute.xlu0 %1939
      %vm1941 = vcmask 818176
      %v1942 = vsel %vm1941, %v1934, %v1936
      %v1943 = vsel %vm1941, %v1936, %v1938
      %v1944 = vsel %vm1941, %v1938, %v1940
      %v1946 = vsel %vm191, %v1913, 0
      %v1949 = vsel %vm195, %v1942, 0
      %v1952 = vsel %vm195, %v1943, 0
      %v1955 = vsel %vm195, %v1944, 0
      %1957 = vmatprep.subr.bf16.mxu0 0
      %1958 = vmatpush1.bf16.msra.mxu0 0
      %1959 = vmatprep.subr.bf16.mxu0 0
      %1960 = vmatpush1.bf16.msra.mxu0 0
      %1961 = vmatprep.subr.bf16.mxu0 0
      %1962 = vmatpush1.bf16.msra.mxu0 0
      %1963 = vmatprep.subr.bf16.mxu0 0
      %1964 = vmatpush1.bf16.msra.mxu0 0
      %1965 = vmatprep.subr.bf16.mxu0 0
      %1966 = vmatpush1.bf16.msra.mxu0 0
      %1967 = vmatprep.subr.bf16.mxu0 0
      %1968 = vmatpush1.bf16.msra.mxu0 0
      %1969 = vmatprep.subr.bf16.mxu0 0
      %1970 = vmatpush1.bf16.msra.mxu0 0
      %1971 = vmatprep.subr.bf16.mxu0 %v1952
      %1972 = vmatpush1.bf16.msra.mxu0 %v1949
      %1973 = vmatprep.subr.bf16.mxu0 0
      %1974 = vmatpush2.bf16.msra.mxu0 0
      %1975 = vmatprep.subr.bf16.mxu0 0
      %1976 = vmatpush2.bf16.msra.mxu0 0
      %1977 = vmatprep.subr.bf16.mxu0 0
      %1978 = vmatpush2.bf16.msra.mxu0 0
      %1979 = vmatprep.subr.bf16.mxu0 0
      %1980 = vmatpush2.bf16.msra.mxu0 0
      %1981 = vmatprep.subr.bf16.mxu0 0
      %1982 = vmatpush2.bf16.msra.mxu0 0
      %1983 = vmatprep.subr.bf16.mxu0 0
      %1984 = vmatpush2.bf16.msra.mxu0 0
      %1985 = vmatprep.subr.bf16.mxu0 0
      %1986 = vmatpush2.bf16.msra.mxu0 0
      %1987 = vmatprep.subr.bf16.mxu0 0
      %1988 = vmatpush2.bf16.msra.mxu0 0
      %1989 = vmatprep.mubr.bf16.mxu0 0
      %1990 = vmatmul.mubr.bf16.gmra.mxu0 %v1946
      %v1991 = vpop.f32.mrf.mxu0
      %v1992 = vadd.f32 0.0, %v1991
      %v1993 = vpop.f32.mrf.mxu0
      %v1994 = vadd.f32 0.0, %v1993
      %v1995 = vpop.f32.mrf.mxu0
      %v1996 = vpop.f32.mrf.mxu0
      %1997 = vdwg.mxu0
      %1998 = vmatprep.subr.bf16.mxu0 0
      %1999 = vmatpush1.bf16.msra.mxu0 0
      %2000 = vmatprep.subr.bf16.mxu0 0
      %2001 = vmatpush1.bf16.msra.mxu0 0
      %2002 = vmatprep.subr.bf16.mxu0 0
      %2003 = vmatpush1.bf16.msra.mxu0 0
      %2004 = vmatprep.subr.bf16.mxu0 0
      %2005 = vmatpush1.bf16.msra.mxu0 0
      %2006 = vmatprep.subr.bf16.mxu0 0
      %2007 = vmatpush1.bf16.msra.mxu0 0
      %2008 = vmatprep.subr.bf16.mxu0 0
      %2009 = vmatpush1.bf16.msra.mxu0 0
      %2010 = vmatprep.subr.bf16.mxu0 0
      %2011 = vmatpush1.bf16.msra.mxu0 0
      %2012 = vmatprep.subr.bf16.mxu0 0
      %2013 = vmatpush1.bf16.msra.mxu0 %v1955
      %2014 = vmatprep.subr.bf16.mxu0 0
      %2015 = vmatpush2.bf16.msra.mxu0 0
      %2016 = vmatprep.subr.bf16.mxu0 0
      %2017 = vmatpush2.bf16.msra.mxu0 0
      %2018 = vmatprep.subr.bf16.mxu0 0
      %2019 = vmatpush2.bf16.msra.mxu0 0
      %2020 = vmatprep.subr.bf16.mxu0 0
      %2021 = vmatpush2.bf16.msra.mxu0 0
      %2022 = vmatprep.subr.bf16.mxu0 0
      %2023 = vmatpush2.bf16.msra.mxu0 0
      %2024 = vmatprep.subr.bf16.mxu0 0
      %2025 = vmatpush2.bf16.msra.mxu0 0
      %2026 = vmatprep.subr.bf16.mxu0 0
      %2027 = vmatpush2.bf16.msra.mxu0 0
      %2028 = vmatprep.subr.bf16.mxu0 0
      %2029 = vmatpush2.bf16.msra.mxu0 0
      %2030 = vmatprep.mubr.bf16.mxu0 0
      %2031 = vmatmul.mubr.bf16.gmra.mxu0 %v1946
      %v2032 = vpop.f32.mrf.mxu0
      %v2033 = vadd.f32 0.0, %v2032
      %v2034 = vpop.f32.mrf.mxu0
      %v2035 = vpop.f32.mrf.mxu0
      %v2036 = vpop.f32.mrf.mxu0
      %2037 = vdwg.mxu0
      %v2038 = vadd.f32 %v1909, %v1992
      %v2039 = vadd.f32 %v1910, %v1994
      %v2040 = vadd.f32 %v1911, %v2033
      %2041 = vst [vmem:[#allocation2] sm:$0xff] %v2038
      %2042 = vst [vmem:[#allocation2 + $0x8] sm:$0xff] %v2039
      %2043 = vst [vmem:[#allocation2 + $0x10] sm:$0xff] %v2040
      %v2044 = vld [vmem:[#allocation2] sm:$0xff]
      %v2045 = vld [vmem:[#allocation2 + $0x8] sm:$0xff]
      %v2046 = vld [vmem:[#allocation2 + $0x10] sm:$0xff]
      %s2047 = scalar_lea.vmem %s0, 56
      %v2048 = vld [vmem:[%s2047] sm:$0xf]
      %v2049 = vld [vmem:[%s165] sm:$0xff]
      %v2051 = vcombine.high %v2049, %v2049
      %v2053 = vunpack.c.l.s4 1983009808
      %v2054 = vunpack.c.0.s8 %v2053
      %v2055 = vlaneseq
      %v2056 = vshrl.u32 %v2055, 7
      %v2057 = vsub.s32 %v2054, %v2056
      %v2058 = vrot.slane %v2049, %v2057
      %v2060 = vunpack.c.l.s4 1983009808
      %v2061 = vunpack.c.0.s8 %v2060
      %v2062 = vlaneseq
      %v2063 = vshrl.u32 %v2062, 7
      %v2064 = vsub.s32 %v2061, %v2063
      %v2065 = vrot.slane %v2051, %v2064
      %v2066 = vcombine.high %v2058, %v2058
      %v2067 = vcombine.high %v2065, %v2065
      %2068 = vrot.lane.b32.xlu0 %v2058, 84
      %v2069 = vpop.permute.xlu0 %2068
      %2070 = vrot.lane.b32.xlu0 %v2066, 84
      %v2071 = vpop.permute.xlu0 %2070
      %2072 = vrot.lane.b32.xlu0 %v2065, 84
      %v2073 = vpop.permute.xlu0 %2072
      %2074 = vrot.lane.b32.xlu0 %v2067, 84
      %v2075 = vpop.permute.xlu0 %2074
      %vm2076 = vcmask 687104
      %v2077 = vsel %vm2076, %v2069, %v2071
      %v2078 = vsel %vm2076, %v2071, %v2073
      %v2079 = vsel %vm2076, %v2073, %v2075
      %v2081 = vsel %vm191, %v2048, 0
      %v2084 = vsel %vm195, %v2077, 0
      %v2087 = vsel %vm195, %v2078, 0
      %v2090 = vsel %vm195, %v2079, 0
      %2092 = vmatprep.subr.bf16.mxu0 0
      %2093 = vmatpush1.bf16.msra.mxu0 0
      %2094 = vmatprep.subr.bf16.mxu0 0
      %2095 = vmatpush1.bf16.msra.mxu0 0
      %2096 = vmatprep.subr.bf16.mxu0 0
      %2097 = vmatpush1.bf16.msra.mxu0 0
      %2098 = vmatprep.subr.bf16.mxu0 0
      %2099 = vmatpush1.bf16.msra.mxu0 0
      %2100 = vmatprep.subr.bf16.mxu0 0
      %2101 = vmatpush1.bf16.msra.mxu0 0
      %2102 = vmatprep.subr.bf16.mxu0 0
      %2103 = vmatpush1.bf16.msra.mxu0 0
      %2104 = vmatprep.subr.bf16.mxu0 0
      %2105 = vmatpush1.bf16.msra.mxu0 0
      %2106 = vmatprep.subr.bf16.mxu0 %v2087
      %2107 = vmatpush1.bf16.msra.mxu0 %v2084
      %2108 = vmatprep.subr.bf16.mxu0 0
      %2109 = vmatpush2.bf16.msra.mxu0 0
      %2110 = vmatprep.subr.bf16.mxu0 0
      %2111 = vmatpush2.bf16.msra.mxu0 0
      %2112 = vmatprep.subr.bf16.mxu0 0
      %2113 = vmatpush2.bf16.msra.mxu0 0
      %2114 = vmatprep.subr.bf16.mxu0 0
      %2115 = vmatpush2.bf16.msra.mxu0 0
      %2116 = vmatprep.subr.bf16.mxu0 0
      %2117 = vmatpush2.bf16.msra.mxu0 0
      %2118 = vmatprep.subr.bf16.mxu0 0
      %2119 = vmatpush2.bf16.msra.mxu0 0
      %2120 = vmatprep.subr.bf16.mxu0 0
      %2121 = vmatpush2.bf16.msra.mxu0 0
      %2122 = vmatprep.subr.bf16.mxu0 0
      %2123 = vmatpush2.bf16.msra.mxu0 0
      %2124 = vmatprep.mubr.bf16.mxu0 0
      %2125 = vmatmul.mubr.bf16.gmra.mxu0 %v2081
      %v2126 = vpop.f32.mrf.mxu0
      %v2127 = vadd.f32 0.0, %v2126
      %v2128 = vpop.f32.mrf.mxu0
      %v2129 = vadd.f32 0.0, %v2128
      %v2130 = vpop.f32.mrf.mxu0
      %v2131 = vpop.f32.mrf.mxu0
      %2132 = vdwg.mxu0
      %2133 = vmatprep.subr.bf16.mxu0 0
      %2134 = vmatpush1.bf16.msra.mxu0 0
      %2135 = vmatprep.subr.bf16.mxu0 0
      %2136 = vmatpush1.bf16.msra.mxu0 0
      %2137 = vmatprep.subr.bf16.mxu0 0
      %2138 = vmatpush1.bf16.msra.mxu0 0
      %2139 = vmatprep.subr.bf16.mxu0 0
      %2140 = vmatpush1.bf16.msra.mxu0 0
      %2141 = vmatprep.subr.bf16.mxu0 0
      %2142 = vmatpush1.bf16.msra.mxu0 0
      %2143 = vmatprep.subr.bf16.mxu0 0
      %2144 = vmatpush1.bf16.msra.mxu0 0
      %2145 = vmatprep.subr.bf16.mxu0 0
      %2146 = vmatpush1.bf16.msra.mxu0 0
      %2147 = vmatprep.subr.bf16.mxu0 0
      %2148 = vmatpush1.bf16.msra.mxu0 %v2090
      %2149 = vmatprep.subr.bf16.mxu0 0
      %2150 = vmatpush2.bf16.msra.mxu0 0
      %2151 = vmatprep.subr.bf16.mxu0 0
      %2152 = vmatpush2.bf16.msra.mxu0 0
      %2153 = vmatprep.subr.bf16.mxu0 0
      %2154 = vmatpush2.bf16.msra.mxu0 0
      %2155 = vmatprep.subr.bf16.mxu0 0
      %2156 = vmatpush2.bf16.msra.mxu0 0
      %2157 = vmatprep.subr.bf16.mxu0 0
      %2158 = vmatpush2.bf16.msra.mxu0 0
      %2159 = vmatprep.subr.bf16.mxu0 0
      %2160 = vmatpush2.bf16.msra.mxu0 0
      %2161 = vmatprep.subr.bf16.mxu0 0
      %2162 = vmatpush2.bf16.msra.mxu0 0
      %2163 = vmatprep.subr.bf16.mxu0 0
      %2164 = vmatpush2.bf16.msra.mxu0 0
      %2165 = vmatprep.mubr.bf16.mxu0 0
      %2166 = vmatmul.mubr.bf16.gmra.mxu0 %v2081
      %v2167 = vpop.f32.mrf.mxu0
      %v2168 = vadd.f32 0.0, %v2167
      %v2169 = vpop.f32.mrf.mxu0
      %v2170 = vpop.f32.mrf.mxu0
      %v2171 = vpop.f32.mrf.mxu0
      %2172 = vdwg.mxu0
      %v2173 = vadd.f32 %v2044, %v2127
      %v2174 = vadd.f32 %v2045, %v2129
      %v2175 = vadd.f32 %v2046, %v2168
      %2176 = vst [vmem:[#allocation2] sm:$0xff] %v2173
      %2177 = vst [vmem:[#allocation2 + $0x8] sm:$0xff] %v2174
      %2178 = vst [vmem:[#allocation2 + $0x10] sm:$0xff] %v2175
      %v2179 = vld [vmem:[#allocation2] sm:$0xff]
      %v2180 = vld [vmem:[#allocation2 + $0x8] sm:$0xff]
      %v2181 = vld [vmem:[#allocation2 + $0x10] sm:$0xff]
      %s2182 = scalar_lea.vmem %s0, 60
      %v2183 = vld [vmem:[%s2182] sm:$0xf]
      %v2184 = vld [vmem:[%s165] sm:$0xff]
      %v2186 = vcombine.high %v2184, %v2184
      %v2188 = vunpack.c.l.s4 1983009808
      %v2189 = vunpack.c.0.s8 %v2188
      %v2190 = vlaneseq
      %v2191 = vshrl.u32 %v2190, 7
      %v2192 = vsub.s32 %v2189, %v2191
      %v2193 = vrot.slane %v2184, %v2192
      %v2195 = vunpack.c.l.s4 1983009808
      %v2196 = vunpack.c.0.s8 %v2195
      %v2197 = vlaneseq
      %v2198 = vshrl.u32 %v2197, 7
      %v2199 = vsub.s32 %v2196, %v2198
      %v2200 = vrot.slane %v2186, %v2199
      %v2201 = vcombine.high %v2193, %v2193
      %v2202 = vcombine.high %v2200, %v2200
      %2203 = vrot.lane.b32.xlu0 %v2193, 83
      %v2204 = vpop.permute.xlu0 %2203
      %2205 = vrot.lane.b32.xlu0 %v2201, 83
      %v2206 = vpop.permute.xlu0 %2205
      %2207 = vrot.lane.b32.xlu0 %v2200, 83
      %v2208 = vpop.permute.xlu0 %2207
      %2209 = vrot.lane.b32.xlu0 %v2202, 83
      %v2210 = vpop.permute.xlu0 %2209
      %vm2211 = vcmask 678912
      %v2212 = vsel %vm2211, %v2204, %v2206
      %v2213 = vsel %vm2211, %v2206, %v2208
      %v2214 = vsel %vm2211, %v2208, %v2210
      %v2216 = vsel %vm191, %v2183, 0
      %v2219 = vsel %vm195, %v2212, 0
      %v2222 = vsel %vm195, %v2213, 0
      %v2225 = vsel %vm195, %v2214, 0
      %2227 = vmatprep.subr.bf16.mxu0 0
      %2228 = vmatpush1.bf16.msra.mxu0 0
      %2229 = vmatprep.subr.bf16.mxu0 0
      %2230 = vmatpush1.bf16.msra.mxu0 0
      %2231 = vmatprep.subr.bf16.mxu0 0
      %2232 = vmatpush1.bf16.msra.mxu0 0
      %2233 = vmatprep.subr.bf16.mxu0 0
      %2234 = vmatpush1.bf16.msra.mxu0 0
      %2235 = vmatprep.subr.bf16.mxu0 0
      %2236 = vmatpush1.bf16.msra.mxu0 0
      %2237 = vmatprep.subr.bf16.mxu0 0
      %2238 = vmatpush1.bf16.msra.mxu0 0
      %2239 = vmatprep.subr.bf16.mxu0 0
      %2240 = vmatpush1.bf16.msra.mxu0 0
      %2241 = vmatprep.subr.bf16.mxu0 %v2222
      %2242 = vmatpush1.bf16.msra.mxu0 %v2219
      %2243 = vmatprep.subr.bf16.mxu0 0
      %2244 = vmatpush2.bf16.msra.mxu0 0
      %2245 = vmatprep.subr.bf16.mxu0 0
      %2246 = vmatpush2.bf16.msra.mxu0 0
      %2247 = vmatprep.subr.bf16.mxu0 0
      %2248 = vmatpush2.bf16.msra.mxu0 0
      %2249 = vmatprep.subr.bf16.mxu0 0
      %2250 = vmatpush2.bf16.msra.mxu0 0
      %2251 = vmatprep.subr.bf16.mxu0 0
      %2252 = vmatpush2.bf16.msra.mxu0 0
      %2253 = vmatprep.subr.bf16.mxu0 0
      %2254 = vmatpush2.bf16.msra.mxu0 0
      %2255 = vmatprep.subr.bf16.mxu0 0
      %2256 = vmatpush2.bf16.msra.mxu0 0
      %2257 = vmatprep.subr.bf16.mxu0 0
      %2258 = vmatpush2.bf16.msra.mxu0 0
      %2259 = vmatprep.mubr.bf16.mxu0 0
      %2260 = vmatmul.mubr.bf16.gmra.mxu0 %v2216
      %v2261 = vpop.f32.mrf.mxu0
      %v2262 = vadd.f32 0.0, %v2261
      %v2263 = vpop.f32.mrf.mxu0
      %v2264 = vadd.f32 0.0, %v2263
      %v2265 = vpop.f32.mrf.mxu0
      %v2266 = vpop.f32.mrf.mxu0
      %2267 = vdwg.mxu0
      %2268 = vmatprep.subr.bf16.mxu0 0
      %2269 = vmatpush1.bf16.msra.mxu0 0
      %2270 = vmatprep.subr.bf16.mxu0 0
      %2271 = vmatpush1.bf16.msra.mxu0 0
      %2272 = vmatprep.subr.bf16.mxu0 0
      %2273 = vmatpush1.bf16.msra.mxu0 0
      %2274 = vmatprep.subr.bf16.mxu0 0
      %2275 = vmatpush1.bf16.msra.mxu0 0
      %2276 = vmatprep.subr.bf16.mxu0 0
      %2277 = vmatpush1.bf16.msra.mxu0 0
      %2278 = vmatprep.subr.bf16.mxu0 0
      %2279 = vmatpush1.bf16.msra.mxu0 0
      %2280 = vmatprep.subr.bf16.mxu0 0
      %2281 = vmatpush1.bf16.msra.mxu0 0
      %2282 = vmatprep.subr.bf16.mxu0 0
      %2283 = vmatpush1.bf16.msra.mxu0 %v2225
      %2284 = vmatprep.subr.bf16.mxu0 0
      %2285 = vmatpush2.bf16.msra.mxu0 0
      %2286 = vmatprep.subr.bf16.mxu0 0
      %2287 = vmatpush2.bf16.msra.mxu0 0
      %2288 = vmatprep.subr.bf16.mxu0 0
      %2289 = vmatpush2.bf16.msra.mxu0 0
      %2290 = vmatprep.subr.bf16.mxu0 0
      %2291 = vmatpush2.bf16.msra.mxu0 0
      %2292 = vmatprep.subr.bf16.mxu0 0
      %2293 = vmatpush2.bf16.msra.mxu0 0
      %2294 = vmatprep.subr.bf16.mxu0 0
      %2295 = vmatpush2.bf16.msra.mxu0 0
      %2296 = vmatprep.subr.bf16.mxu0 0
      %2297 = vmatpush2.bf16.msra.mxu0 0
      %2298 = vmatprep.subr.bf16.mxu0 0
      %2299 = vmatpush2.bf16.msra.mxu0 0
      %2300 = vmatprep.mubr.bf16.mxu0 0
      %2301 = vmatmul.mubr.bf16.gmra.mxu0 %v2216
      %v2302 = vpop.f32.mrf.mxu0
      %v2303 = vadd.f32 0.0, %v2302
      %v2304 = vpop.f32.mrf.mxu0
      %v2305 = vpop.f32.mrf.mxu0
      %v2306 = vpop.f32.mrf.mxu0
      %2307 = vdwg.mxu0
      %v2308 = vadd.f32 %v2179, %v2262
      %v2309 = vadd.f32 %v2180, %v2264
      %v2310 = vadd.f32 %v2181, %v2303
      %2311 = vst [vmem:[#allocation2] sm:$0xff] %v2308
      %2312 = vst [vmem:[#allocation2 + $0x8] sm:$0xff] %v2309
      %2313 = vst [vmem:[#allocation2 + $0x10] sm:$0xff] %v2310
      %v2314 = vld [vmem:[#allocation2] sm:$0xff]
      %v2315 = vld [vmem:[#allocation2 + $0x8] sm:$0xff]
      %v2316 = vld [vmem:[#allocation2 + $0x10] sm:$0xff]
      %s2317 = scalar_lea.vmem %s0, 64
      %v2318 = vld [vmem:[%s2317] sm:$0xf]
      %v2319 = vld [vmem:[%s165] sm:$0xff]
      %v2321 = vcombine.high %v2319, %v2319
      %v2323 = vunpack.c.l.s4 1983009808
      %v2324 = vunpack.c.0.s8 %v2323
      %v2325 = vlaneseq
      %v2326 = vshrl.u32 %v2325, 7
      %v2327 = vsub.s32 %v2324, %v2326
      %v2328 = vrot.slane %v2319, %v2327
      %v2330 = vunpack.c.l.s4 1983009808
      %v2331 = vunpack.c.0.s8 %v2330
      %v2332 = vlaneseq
      %v2333 = vshrl.u32 %v2332, 7
      %v2334 = vsub.s32 %v2331, %v2333
      %v2335 = vrot.slane %v2321, %v2334
      %v2336 = vcombine.high %v2328, %v2328
      %v2337 = vcombine.high %v2335, %v2335
      %2338 = vrot.lane.b32.xlu0 %v2328, 82
      %v2339 = vpop.permute.xlu0 %2338
      %2340 = vrot.lane.b32.xlu0 %v2336, 82
      %v2341 = vpop.permute.xlu0 %2340
      %2342 = vrot.lane.b32.xlu0 %v2335, 82
      %v2343 = vpop.permute.xlu0 %2342
      %2344 = vrot.lane.b32.xlu0 %v2337, 82
      %v2345 = vpop.permute.xlu0 %2344
      %vm2346 = vcmask 670720
      %v2347 = vsel %vm2346, %v2339, %v2341
      %v2348 = vsel %vm2346, %v2341, %v2343
      %v2349 = vsel %vm2346, %v2343, %v2345
      %v2351 = vsel %vm191, %v2318, 0
      %v2354 = vsel %vm195, %v2347, 0
      %v2357 = vsel %vm195, %v2348, 0
      %v2360 = vsel %vm195, %v2349, 0
      %2362 = vmatprep.subr.bf16.mxu0 0
      %2363 = vmatpush1.bf16.msra.mxu0 0
      %2364 = vmatprep.subr.bf16.mxu0 0
      %2365 = vmatpush1.bf16.msra.mxu0 0
      %2366 = vmatprep.subr.bf16.mxu0 0
      %2367 = vmatpush1.bf16.msra.mxu0 0
      %2368 = vmatprep.subr.bf16.mxu0 0
      %2369 = vmatpush1.bf16.msra.mxu0 0
      %2370 = vmatprep.subr.bf16.mxu0 0
      %2371 = vmatpush1.bf16.msra.mxu0 0
      %2372 = vmatprep.subr.bf16.mxu0 0
      %2373 = vmatpush1.bf16.msra.mxu0 0
      %2374 = vmatprep.subr.bf16.mxu0 0
      %2375 = vmatpush1.bf16.msra.mxu0 0
      %2376 = vmatprep.subr.bf16.mxu0 %v2357
      %2377 = vmatpush1.bf16.msra.mxu0 %v2354
      %2378 = vmatprep.subr.bf16.mxu0 0
      %2379 = vmatpush2.bf16.msra.mxu0 0
      %2380 = vmatprep.subr.bf16.mxu0 0
      %2381 = vmatpush2.bf16.msra.mxu0 0
      %2382 = vmatprep.subr.bf16.mxu0 0
      %2383 = vmatpush2.bf16.msra.mxu0 0
      %2384 = vmatprep.subr.bf16.mxu0 0
      %2385 = vmatpush2.bf16.msra.mxu0 0
      %2386 = vmatprep.subr.bf16.mxu0 0
      %2387 = vmatpush2.bf16.msra.mxu0 0
      %2388 = vmatprep.subr.bf16.mxu0 0
      %2389 = vmatpush2.bf16.msra.mxu0 0
      %2390 = vmatprep.subr.bf16.mxu0 0
      %2391 = vmatpush2.bf16.msra.mxu0 0
      %2392 = vmatprep.subr.bf16.mxu0 0
      %2393 = vmatpush2.bf16.msra.mxu0 0
      %2394 = vmatprep.mubr.bf16.mxu0 0
      %2395 = vmatmul.mubr.bf16.gmra.mxu0 %v2351
      %v2396 = vpop.f32.mrf.mxu0
      %v2397 = vadd.f32 0.0, %v2396
      %v2398 = vpop.f32.mrf.mxu0
      %v2399 = vadd.f32 0.0, %v2398
      %v2400 = vpop.f32.mrf.mxu0
      %v2401 = vpop.f32.mrf.mxu0
      %2402 = vdwg.mxu0
      %2403 = vmatprep.subr.bf16.mxu0 0
      %2404 = vmatpush1.bf16.msra.mxu0 0
      %2405 = vmatprep.subr.bf16.mxu0 0
      %2406 = vmatpush1.bf16.msra.mxu0 0
      %2407 = vmatprep.subr.bf16.mxu0 0
      %2408 = vmatpush1.bf16.msra.mxu0 0
      %2409 = vmatprep.subr.bf16.mxu0 0
      %2410 = vmatpush1.bf16.msra.mxu0 0
      %2411 = vmatprep.subr.bf16.mxu0 0
      %2412 = vmatpush1.bf16.msra.mxu0 0
      %2413 = vmatprep.subr.bf16.mxu0 0
      %2414 = vmatpush1.bf16.msra.mxu0 0
      %2415 = vmatprep.subr.bf16.mxu0 0
      %2416 = vmatpush1.bf16.msra.mxu0 0
      %2417 = vmatprep.subr.bf16.mxu0 0
      %2418 = vmatpush1.bf16.msra.mxu0 %v2360
      %2419 = vmatprep.subr.bf16.mxu0 0
      %2420 = vmatpush2.bf16.msra.mxu0 0
      %2421 = vmatprep.subr.bf16.mxu0 0
      %2422 = vmatpush2.bf16.msra.mxu0 0
      %2423 = vmatprep.subr.bf16.mxu0 0
      %2424 = vmatpush2.bf16.msra.mxu0 0
      %2425 = vmatprep.subr.bf16.mxu0 0
      %2426 = vmatpush2.bf16.msra.mxu0 0
      %2427 = vmatprep.subr.bf16.mxu0 0
      %2428 = vmatpush2.bf16.msra.mxu0 0
      %2429 = vmatprep.subr.bf16.mxu0 0
      %2430 = vmatpush2.bf16.msra.mxu0 0
      %2431 = vmatprep.subr.bf16.mxu0 0
      %2432 = vmatpush2.bf16.msra.mxu0 0
      %2433 = vmatprep.subr.bf16.mxu0 0
      %2434 = vmatpush2.bf16.msra.mxu0 0
      %2435 = vmatprep.mubr.bf16.mxu0 0
      %2436 = vmatmul.mubr.bf16.gmra.mxu0 %v2351
      %v2437 = vpop.f32.mrf.mxu0
      %v2438 = vadd.f32 0.0, %v2437
      %v2439 = vpop.f32.mrf.mxu0
      %v2440 = vpop.f32.mrf.mxu0
      %v2441 = vpop.f32.mrf.mxu0
      %2442 = vdwg.mxu0
      %v2443 = vadd.f32 %v2314, %v2397
      %v2444 = vadd.f32 %v2315, %v2399
      %v2445 = vadd.f32 %v2316, %v2438
      %2446 = vst [vmem:[#allocation2] sm:$0xff] %v2443
      %2447 = vst [vmem:[#allocation2 + $0x8] sm:$0xff] %v2444
      %2448 = vst [vmem:[#allocation2 + $0x10] sm:$0xff] %v2445
      %v2449 = vld [vmem:[#allocation2] sm:$0xff]
      %v2450 = vld [vmem:[#allocation2 + $0x8] sm:$0xff]
      %v2451 = vld [vmem:[#allocation2 + $0x10] sm:$0xff]
      %s2452 = scalar_lea.vmem %s0, 68
      %v2453 = vld [vmem:[%s2452] sm:$0xf]
      %v2454 = vld [vmem:[%s165] sm:$0xff]
      %v2456 = vcombine.high %v2454, %v2454
      %v2458 = vunpack.c.l.s4 1983009808
      %v2459 = vunpack.c.0.s8 %v2458
      %v2460 = vlaneseq
      %v2461 = vshrl.u32 %v2460, 7
      %v2462 = vsub.s32 %v2459, %v2461
      %v2463 = vrot.slane %v2454, %v2462
      %v2465 = vunpack.c.l.s4 1983009808
      %v2466 = vunpack.c.0.s8 %v2465
      %v2467 = vlaneseq
      %v2468 = vshrl.u32 %v2467, 7
      %v2469 = vsub.s32 %v2466, %v2468
      %v2470 = vrot.slane %v2456, %v2469
      %v2471 = vcombine.high %v2463, %v2463
      %v2472 = vcombine.high %v2470, %v2470
      %2473 = vrot.lane.b32.xlu0 %v2463, 81
      %v2474 = vpop.permute.xlu0 %2473
      %2475 = vrot.lane.b32.xlu0 %v2471, 81
      %v2476 = vpop.permute.xlu0 %2475
      %2477 = vrot.lane.b32.xlu0 %v2470, 81
      %v2478 = vpop.permute.xlu0 %2477
      %2479 = vrot.lane.b32.xlu0 %v2472, 81
      %v2480 = vpop.permute.xlu0 %2479
      %vm2481 = vcmask 662528
      %v2482 = vsel %vm2481, %v2474, %v2476
      %v2483 = vsel %vm2481, %v2476, %v2478
      %v2484 = vsel %vm2481, %v2478, %v2480
      %v2486 = vsel %vm191, %v2453, 0
      %v2489 = vsel %vm195, %v2482, 0
      %v2492 = vsel %vm195, %v2483, 0
      %v2495 = vsel %vm195, %v2484, 0
      %2497 = vmatprep.subr.bf16.mxu0 0
      %2498 = vmatpush1.bf16.msra.mxu0 0
      %2499 = vmatprep.subr.bf16.mxu0 0
      %2500 = vmatpush1.bf16.msra.mxu0 0
      %2501 = vmatprep.subr.bf16.mxu0 0
      %2502 = vmatpush1.bf16.msra.mxu0 0
      %2503 = vmatprep.subr.bf16.mxu0 0
      %2504 = vmatpush1.bf16.msra.mxu0 0
      %2505 = vmatprep.subr.bf16.mxu0 0
      %2506 = vmatpush1.bf16.msra.mxu0 0
      %2507 = vmatprep.subr.bf16.mxu0 0
      %2508 = vmatpush1.bf16.msra.mxu0 0
      %2509 = vmatprep.subr.bf16.mxu0 0
      %2510 = vmatpush1.bf16.msra.mxu0 0
      %2511 = vmatprep.subr.bf16.mxu0 %v2492
      %2512 = vmatpush1.bf16.msra.mxu0 %v2489
      %2513 = vmatprep.subr.bf16.mxu0 0
      %2514 = vmatpush2.bf16.msra.mxu0 0
      %2515 = vmatprep.subr.bf16.mxu0 0
      %2516 = vmatpush2.bf16.msra.mxu0 0
      %2517 = vmatprep.subr.bf16.mxu0 0
      %2518 = vmatpush2.bf16.msra.mxu0 0
      %2519 = vmatprep.subr.bf16.mxu0 0
      %2520 = vmatpush2.bf16.msra.mxu0 0
      %2521 = vmatprep.subr.bf16.mxu0 0
      %2522 = vmatpush2.bf16.msra.mxu0 0
      %2523 = vmatprep.subr.bf16.mxu0 0
      %2524 = vmatpush2.bf16.msra.mxu0 0
      %2525 = vmatprep.subr.bf16.mxu0 0
      %2526 = vmatpush2.bf16.msra.mxu0 0
      %2527 = vmatprep.subr.bf16.mxu0 0
      %2528 = vmatpush2.bf16.msra.mxu0 0
      %2529 = vmatprep.mubr.bf16.mxu0 0
      %2530 = vmatmul.mubr.bf16.gmra.mxu0 %v2486
      %v2531 = vpop.f32.mrf.mxu0
      %v2532 = vadd.f32 0.0, %v2531
      %v2533 = vpop.f32.mrf.mxu0
      %v2534 = vadd.f32 0.0, %v2533
      %v2535 = vpop.f32.mrf.mxu0
      %v2536 = vpop.f32.mrf.mxu0
      %2537 = vdwg.mxu0
      %2538 = vmatprep.subr.bf16.mxu0 0
      %2539 = vmatpush1.bf16.msra.mxu0 0
      %2540 = vmatprep.subr.bf16.mxu0 0
      %2541 = vmatpush1.bf16.msra.mxu0 0
      %2542 = vmatprep.subr.bf16.mxu0 0
      %2543 = vmatpush1.bf16.msra.mxu0 0
      %2544 = vmatprep.subr.bf16.mxu0 0
      %2545 = vmatpush1.bf16.msra.mxu0 0
      %2546 = vmatprep.subr.bf16.mxu0 0
      %2547 = vmatpush1.bf16.msra.mxu0 0
      %2548 = vmatprep.subr.bf16.mxu0 0
      %2549 = vmatpush1.bf16.msra.mxu0 0
      %2550 = vmatprep.subr.bf16.mxu0 0
      %2551 = vmatpush1.bf16.msra.mxu0 0
      %2552 = vmatprep.subr.bf16.mxu0 0
      %2553 = vmatpush1.bf16.msra.mxu0 %v2495
      %2554 = vmatprep.subr.bf16.mxu0 0
      %2555 = vmatpush2.bf16.msra.mxu0 0
      %2556 = vmatprep.subr.bf16.mxu0 0
      %2557 = vmatpush2.bf16.msra.mxu0 0
      %2558 = vmatprep.subr.bf16.mxu0 0
      %2559 = vmatpush2.bf16.msra.mxu0 0
      %2560 = vmatprep.subr.bf16.mxu0 0
      %2561 = vmatpush2.bf16.msra.mxu0 0
      %2562 = vmatprep.subr.bf16.mxu0 0
      %2563 = vmatpush2.bf16.msra.mxu0 0
      %2564 = vmatprep.subr.bf16.mxu0 0
      %2565 = vmatpush2.bf16.msra.mxu0 0
      %2566 = vmatprep.subr.bf16.mxu0 0
      %2567 = vmatpush2.bf16.msra.mxu0 0
      %2568 = vmatprep.subr.bf16.mxu0 0
      %2569 = vmatpush2.bf16.msra.mxu0 0
      %2570 = vmatprep.mubr.bf16.mxu0 0
      %2571 = vmatmul.mubr.bf16.gmra.mxu0 %v2486
      %v2572 = vpop.f32.mrf.mxu0
      %v2573 = vadd.f32 0.0, %v2572
      %v2574 = vpop.f32.mrf.mxu0
      %v2575 = vpop.f32.mrf.mxu0
      %v2576 = vpop.f32.mrf.mxu0
      %2577 = vdwg.mxu0
      %v2578 = vadd.f32 %v2449, %v2532
      %v2579 = vadd.f32 %v2450, %v2534
      %v2580 = vadd.f32 %v2451, %v2573
      %2581 = vst [vmem:[#allocation2] sm:$0xff] %v2578
      %2582 = vst [vmem:[#allocation2 + $0x8] sm:$0xff] %v2579
      %2583 = vst [vmem:[#allocation2 + $0x10] sm:$0xff] %v2580
      %v2584 = vld [vmem:[#allocation2] sm:$0xff]
      %v2585 = vld [vmem:[#allocation2 + $0x8] sm:$0xff]
      %v2586 = vld [vmem:[#allocation2 + $0x10] sm:$0xff]
      %s2587 = scalar_lea.vmem %s0, 72
      %v2588 = vld [vmem:[%s2587] sm:$0xf]
      %v2589 = vld [vmem:[%s165] sm:$0xff]
      %v2591 = vcombine.high %v2589, %v2589
      %v2593 = vunpack.c.l.s4 1983009808
      %v2594 = vunpack.c.0.s8 %v2593
      %v2595 = vlaneseq
      %v2596 = vshrl.u32 %v2595, 7
      %v2597 = vsub.s32 %v2594, %v2596
      %v2598 = vrot.slane %v2589, %v2597
      %v2600 = vunpack.c.l.s4 1983009808
      %v2601 = vunpack.c.0.s8 %v2600
      %v2602 = vlaneseq
      %v2603 = vshrl.u32 %v2602, 7
      %v2604 = vsub.s32 %v2601, %v2603
      %v2605 = vrot.slane %v2591, %v2604
      %v2606 = vcombine.high %v2598, %v2598
      %v2607 = vcombine.high %v2605, %v2605
      %2608 = vrot.lane.b32.xlu0 %v2598, 80
      %v2609 = vpop.permute.xlu0 %2608
      %2610 = vrot.lane.b32.xlu0 %v2606, 80
      %v2611 = vpop.permute.xlu0 %2610
      %2612 = vrot.lane.b32.xlu0 %v2605, 80
      %v2613 = vpop.permute.xlu0 %2612
      %2614 = vrot.lane.b32.xlu0 %v2607, 80
      %v2615 = vpop.permute.xlu0 %2614
      %vm2616 = vcmask 654336
      %v2617 = vsel %vm2616, %v2609, %v2611
      %v2618 = vsel %vm2616, %v2611, %v2613
      %v2619 = vsel %vm2616, %v2613, %v2615
      %v2621 = vsel %vm191, %v2588, 0
      %v2624 = vsel %vm195, %v2617, 0
      %v2627 = vsel %vm195, %v2618, 0
      %v2630 = vsel %vm195, %v2619, 0
      %2632 = vmatprep.subr.bf16.mxu0 0
      %2633 = vmatpush1.bf16.msra.mxu0 0
      %2634 = vmatprep.subr.bf16.mxu0 0
      %2635 = vmatpush1.bf16.msra.mxu0 0
      %2636 = vmatprep.subr.bf16.mxu0 0
      %2637 = vmatpush1.bf16.msra.mxu0 0
      %2638 = vmatprep.subr.bf16.mxu0 0
      %2639 = vmatpush1.bf16.msra.mxu0 0
      %2640 = vmatprep.subr.bf16.mxu0 0
      %2641 = vmatpush1.bf16.msra.mxu0 0
      %2642 = vmatprep.subr.bf16.mxu0 0
      %2643 = vmatpush1.bf16.msra.mxu0 0
      %2644 = vmatprep.subr.bf16.mxu0 0
      %2645 = vmatpush1.bf16.msra.mxu0 0
      %2646 = vmatprep.subr.bf16.mxu0 %v2627
      %2647 = vmatpush1.bf16.msra.mxu0 %v2624
      %2648 = vmatprep.subr.bf16.mxu0 0
      %2649 = vmatpush2.bf16.msra.mxu0 0
      %2650 = vmatprep.subr.bf16.mxu0 0
      %2651 = vmatpush2.bf16.msra.mxu0 0
      %2652 = vmatprep.subr.bf16.mxu0 0
      %2653 = vmatpush2.bf16.msra.mxu0 0
      %2654 = vmatprep.subr.bf16.mxu0 0
      %2655 = vmatpush2.bf16.msra.mxu0 0
      %2656 = vmatprep.subr.bf16.mxu0 0
      %2657 = vmatpush2.bf16.msra.mxu0 0
      %2658 = vmatprep.subr.bf16.mxu0 0
      %2659 = vmatpush2.bf16.msra.mxu0 0
      %2660 = vmatprep.subr.bf16.mxu0 0
      %2661 = vmatpush2.bf16.msra.mxu0 0
      %2662 = vmatprep.subr.bf16.mxu0 0
      %2663 = vmatpush2.bf16.msra.mxu0 0
      %2664 = vmatprep.mubr.bf16.mxu0 0
      %2665 = vmatmul.mubr.bf16.gmra.mxu0 %v2621
      %v2666 = vpop.f32.mrf.mxu0
      %v2667 = vadd.f32 0.0, %v2666
      %v2668 = vpop.f32.mrf.mxu0
      %v2669 = vadd.f32 0.0, %v2668
      %v2670 = vpop.f32.mrf.mxu0
      %v2671 = vpop.f32.mrf.mxu0
      %2672 = vdwg.mxu0
      %2673 = vmatprep.subr.bf16.mxu0 0
      %2674 = vmatpush1.bf16.msra.mxu0 0
      %2675 = vmatprep.subr.bf16.mxu0 0
      %2676 = vmatpush1.bf16.msra.mxu0 0
      %2677 = vmatprep.subr.bf16.mxu0 0
      %2678 = vmatpush1.bf16.msra.mxu0 0
      %2679 = vmatprep.subr.bf16.mxu0 0
      %2680 = vmatpush1.bf16.msra.mxu0 0
      %2681 = vmatprep.subr.bf16.mxu0 0
      %2682 = vmatpush1.bf16.msra.mxu0 0
      %2683 = vmatprep.subr.bf16.mxu0 0
      %2684 = vmatpush1.bf16.msra.mxu0 0
      %2685 = vmatprep.subr.bf16.mxu0 0
      %2686 = vmatpush1.bf16.msra.mxu0 0
      %2687 = vmatprep.subr.bf16.mxu0 0
      %2688 = vmatpush1.bf16.msra.mxu0 %v2630
      %2689 = vmatprep.subr.bf16.mxu0 0
      %2690 = vmatpush2.bf16.msra.mxu0 0
      %2691 = vmatprep.subr.bf16.mxu0 0
      %2692 = vmatpush2.bf16.msra.mxu0 0
      %2693 = vmatprep.subr.bf16.mxu0 0
      %2694 = vmatpush2.bf16.msra.mxu0 0
      %2695 = vmatprep.subr.bf16.mxu0 0
      %2696 = vmatpush2.bf16.msra.mxu0 0
      %2697 = vmatprep.subr.bf16.mxu0 0
      %2698 = vmatpush2.bf16.msra.mxu0 0
      %2699 = vmatprep.subr.bf16.mxu0 0
      %2700 = vmatpush2.bf16.msra.mxu0 0
      %2701 = vmatprep.subr.bf16.mxu0 0
      %2702 = vmatpush2.bf16.msra.mxu0 0
      %2703 = vmatprep.subr.bf16.mxu0 0
      %2704 = vmatpush2.bf16.msra.mxu0 0
      %2705 = vmatprep.mubr.bf16.mxu0 0
      %2706 = vmatmul.mubr.bf16.gmra.mxu0 %v2621
      %v2707 = vpop.f32.mrf.mxu0
      %v2708 = vadd.f32 0.0, %v2707
      %v2709 = vpop.f32.mrf.mxu0
      %v2710 = vpop.f32.mrf.mxu0
      %v2711 = vpop.f32.mrf.mxu0
      %2712 = vdwg.mxu0
      %v2713 = vadd.f32 %v2584, %v2667
      %v2714 = vadd.f32 %v2585, %v2669
      %v2715 = vadd.f32 %v2586, %v2708
      %2716 = vst [vmem:[#allocation2] sm:$0xff] %v2713
      %2717 = vst [vmem:[#allocation2 + $0x8] sm:$0xff] %v2714
      %2718 = vst [vmem:[#allocation2 + $0x10] sm:$0xff] %v2715
      %v2719 = vld [vmem:[#allocation2] sm:$0xff]
      %v2720 = vld [vmem:[#allocation2 + $0x8] sm:$0xff]
      %v2721 = vld [vmem:[#allocation2 + $0x10] sm:$0xff]
      %s2722 = scalar_lea.vmem %s0, 76
      %v2723 = vld [vmem:[%s2722] sm:$0xf]
      %v2724 = vld [vmem:[%s165] sm:$0xff]
      %v2726 = vcombine.high %v2724, %v2724
      %v2728 = vunpack.c.l.s4 1983009808
      %v2729 = vunpack.c.0.s8 %v2728
      %v2730 = vlaneseq
      %v2731 = vshrl.u32 %v2730, 7
      %v2732 = vsub.s32 %v2729, %v2731
      %v2733 = vrot.slane %v2724, %v2732
      %v2735 = vunpack.c.l.s4 1983009808
      %v2736 = vunpack.c.0.s8 %v2735
      %v2737 = vlaneseq
      %v2738 = vshrl.u32 %v2737, 7
      %v2739 = vsub.s32 %v2736, %v2738
      %v2740 = vrot.slane %v2726, %v2739
      %v2741 = vcombine.high %v2733, %v2733
      %v2742 = vcombine.high %v2740, %v2740
      %2743 = vrot.lane.b32.xlu0 %v2733, 79
      %v2744 = vpop.permute.xlu0 %2743
      %2745 = vrot.lane.b32.xlu0 %v2741, 79
      %v2746 = vpop.permute.xlu0 %2745
      %2747 = vrot.lane.b32.xlu0 %v2740, 79
      %v2748 = vpop.permute.xlu0 %2747
      %2749 = vrot.lane.b32.xlu0 %v2742, 79
      %v2750 = vpop.permute.xlu0 %2749
      %vm2751 = vcmask 646144
      %v2752 = vsel %vm2751, %v2744, %v2746
      %v2753 = vsel %vm2751, %v2746, %v2748
      %v2754 = vsel %vm2751, %v2748, %v2750
      %v2756 = vsel %vm191, %v2723, 0
      %v2759 = vsel %vm195, %v2752, 0
      %v2762 = vsel %vm195, %v2753, 0
      %v2765 = vsel %vm195, %v2754, 0
      %2767 = vmatprep.subr.bf16.mxu0 0
      %2768 = vmatpush1.bf16.msra.mxu0 0
      %2769 = vmatprep.subr.bf16.mxu0 0
      %2770 = vmatpush1.bf16.msra.mxu0 0
      %2771 = vmatprep.subr.bf16.mxu0 0
      %2772 = vmatpush1.bf16.msra.mxu0 0
      %2773 = vmatprep.subr.bf16.mxu0 0
      %2774 = vmatpush1.bf16.msra.mxu0 0
      %2775 = vmatprep.subr.bf16.mxu0 0
      %2776 = vmatpush1.bf16.msra.mxu0 0
      %2777 = vmatprep.subr.bf16.mxu0 0
      %2778 = vmatpush1.bf16.msra.mxu0 0
      %2779 = vmatprep.subr.bf16.mxu0 0
      %2780 = vmatpush1.bf16.msra.mxu0 0
      %2781 = vmatprep.subr.bf16.mxu0 %v2762
      %2782 = vmatpush1.bf16.msra.mxu0 %v2759
      %2783 = vmatprep.subr.bf16.mxu0 0
      %2784 = vmatpush2.bf16.msra.mxu0 0
      %2785 = vmatprep.subr.bf16.mxu0 0
      %2786 = vmatpush2.bf16.msra.mxu0 0
      %2787 = vmatprep.subr.bf16.mxu0 0
      %2788 = vmatpush2.bf16.msra.mxu0 0
      %2789 = vmatprep.subr.bf16.mxu0 0
      %2790 = vmatpush2.bf16.msra.mxu0 0
      %2791 = vmatprep.subr.bf16.mxu0 0
      %2792 = vmatpush2.bf16.msra.mxu0 0
      %2793 = vmatprep.subr.bf16.mxu0 0
      %2794 = vmatpush2.bf16.msra.mxu0 0
      %2795 = vmatprep.subr.bf16.mxu0 0
      %2796 = vmatpush2.bf16.msra.mxu0 0
      %2797 = vmatprep.subr.bf16.mxu0 0
      %2798 = vmatpush2.bf16.msra.mxu0 0
      %2799 = vmatprep.mubr.bf16.mxu0 0
      %2800 = vmatmul.mubr.bf16.gmra.mxu0 %v2756
      %v2801 = vpop.f32.mrf.mxu0
      %v2802 = vadd.f32 0.0, %v2801
      %v2803 = vpop.f32.mrf.mxu0
      %v2804 = vadd.f32 0.0, %v2803
      %v2805 = vpop.f32.mrf.mxu0
      %v2806 = vpop.f32.mrf.mxu0
      %2807 = vdwg.mxu0
      %2808 = vmatprep.subr.bf16.mxu0 0
      %2809 = vmatpush1.bf16.msra.mxu0 0
      %2810 = vmatprep.subr.bf16.mxu0 0
      %2811 = vmatpush1.bf16.msra.mxu0 0
      %2812 = vmatprep.subr.bf16.mxu0 0
      %2813 = vmatpush1.bf16.msra.mxu0 0
      %2814 = vmatprep.subr.bf16.mxu0 0
      %2815 = vmatpush1.bf16.msra.mxu0 0
      %2816 = vmatprep.subr.bf16.mxu0 0
      %2817 = vmatpush1.bf16.msra.mxu0 0
      %2818 = vmatprep.subr.bf16.mxu0 0
      %2819 = vmatpush1.bf16.msra.mxu0 0
      %2820 = vmatprep.subr.bf16.mxu0 0
      %2821 = vmatpush1.bf16.msra.mxu0 0
      %2822 = vmatprep.subr.bf16.mxu0 0
      %2823 = vmatpush1.bf16.msra.mxu0 %v2765
      %2824 = vmatprep.subr.bf16.mxu0 0
      %2825 = vmatpush2.bf16.msra.mxu0 0
      %2826 = vmatprep.subr.bf16.mxu0 0
      %2827 = vmatpush2.bf16.msra.mxu0 0
      %2828 = vmatprep.subr.bf16.mxu0 0
      %2829 = vmatpush2.bf16.msra.mxu0 0
      %2830 = vmatprep.subr.bf16.mxu0 0
      %2831 = vmatpush2.bf16.msra.mxu0 0
      %2832 = vmatprep.subr.bf16.mxu0 0
      %2833 = vmatpush2.bf16.msra.mxu0 0
      %2834 = vmatprep.subr.bf16.mxu0 0
      %2835 = vmatpush2.bf16.msra.mxu0 0
      %2836 = vmatprep.subr.bf16.mxu0 0
      %2837 = vmatpush2.bf16.msra.mxu0 0
      %2838 = vmatprep.subr.bf16.mxu0 0
      %2839 = vmatpush2.bf16.msra.mxu0 0
      %2840 = vmatprep.mubr.bf16.mxu0 0
      %2841 = vmatmul.mubr.bf16.gmra.mxu0 %v2756
      %v2842 = vpop.f32.mrf.mxu0
      %v2843 = vadd.f32 0.0, %v2842
      %v2844 = vpop.f32.mrf.mxu0
      %v2845 = vpop.f32.mrf.mxu0
      %v2846 = vpop.f32.mrf.mxu0
      %2847 = vdwg.mxu0
      %v2848 = vadd.f32 %v2719, %v2802
      %v2849 = vadd.f32 %v2720, %v2804
      %v2850 = vadd.f32 %v2721, %v2843
      %2851 = vst [vmem:[#allocation2] sm:$0xff] %v2848
      %2852 = vst [vmem:[#allocation2 + $0x8] sm:$0xff] %v2849
      %2853 = vst [vmem:[#allocation2 + $0x10] sm:$0xff] %v2850
      %v2854 = vld [vmem:[#allocation2] sm:$0xff]
      %v2855 = vld [vmem:[#allocation2 + $0x8] sm:$0xff]
      %v2856 = vld [vmem:[#allocation2 + $0x10] sm:$0xff]
      %s2857 = scalar_lea.vmem %s0, 80
      %v2858 = vld [vmem:[%s2857] sm:$0xf]
      %v2859 = vld [vmem:[%s165] sm:$0xff]
      %v2861 = vcombine.high %v2859, %v2859
      %v2863 = vunpack.c.l.s4 1983009808
      %v2864 = vunpack.c.0.s8 %v2863
      %v2865 = vlaneseq
      %v2866 = vshrl.u32 %v2865, 7
      %v2867 = vsub.s32 %v2864, %v2866
      %v2868 = vrot.slane %v2859, %v2867
      %v2870 = vunpack.c.l.s4 1983009808
      %v2871 = vunpack.c.0.s8 %v2870
      %v2872 = vlaneseq
      %v2873 = vshrl.u32 %v2872, 7
      %v2874 = vsub.s32 %v2871, %v2873
      %v2875 = vrot.slane %v2861, %v2874
      %v2876 = vcombine.high %v2868, %v2868
      %v2877 = vcombine.high %v2875, %v2875
      %2878 = vrot.lane.b32.xlu0 %v2868, 78
      %v2879 = vpop.permute.xlu0 %2878
      %2880 = vrot.lane.b32.xlu0 %v2876, 78
      %v2881 = vpop.permute.xlu0 %2880
      %2882 = vrot.lane.b32.xlu0 %v2875, 78
      %v2883 = vpop.permute.xlu0 %2882
      %2884 = vrot.lane.b32.xlu0 %v2877, 78
      %v2885 = vpop.permute.xlu0 %2884
      %vm2886 = vcmask 637952
      %v2887 = vsel %vm2886, %v2879, %v2881
      %v2888 = vsel %vm2886, %v2881, %v2883
      %v2889 = vsel %vm2886, %v2883, %v2885
      %v2891 = vsel %vm191, %v2858, 0
      %v2894 = vsel %vm195, %v2887, 0
      %v2897 = vsel %vm195, %v2888, 0
      %v2900 = vsel %vm195, %v2889, 0
      %2902 = vmatprep.subr.bf16.mxu0 0
      %2903 = vmatpush1.bf16.msra.mxu0 0
      %2904 = vmatprep.subr.bf16.mxu0 0
      %2905 = vmatpush1.bf16.msra.mxu0 0
      %2906 = vmatprep.subr.bf16.mxu0 0
      %2907 = vmatpush1.bf16.msra.mxu0 0
      %2908 = vmatprep.subr.bf16.mxu0 0
      %2909 = vmatpush1.bf16.msra.mxu0 0
      %2910 = vmatprep.subr.bf16.mxu0 0
      %2911 = vmatpush1.bf16.msra.mxu0 0
      %2912 = vmatprep.subr.bf16.mxu0 0
      %2913 = vmatpush1.bf16.msra.mxu0 0
      %2914 = vmatprep.subr.bf16.mxu0 0
      %2915 = vmatpush1.bf16.msra.mxu0 0
      %2916 = vmatprep.subr.bf16.mxu0 %v2897
      %2917 = vmatpush1.bf16.msra.mxu0 %v2894
      %2918 = vmatprep.subr.bf16.mxu0 0
      %2919 = vmatpush2.bf16.msra.mxu0 0
      %2920 = vmatprep.subr.bf16.mxu0 0
      %2921 = vmatpush2.bf16.msra.mxu0 0
      %2922 = vmatprep.subr.bf16.mxu0 0
      %2923 = vmatpush2.bf16.msra.mxu0 0
      %2924 = vmatprep.subr.bf16.mxu0 0
      %2925 = vmatpush2.bf16.msra.mxu0 0
      %2926 = vmatprep.subr.bf16.mxu0 0
      %2927 = vmatpush2.bf16.msra.mxu0 0
      %2928 = vmatprep.subr.bf16.mxu0 0
      %2929 = vmatpush2.bf16.msra.mxu0 0
      %2930 = vmatprep.subr.bf16.mxu0 0
      %2931 = vmatpush2.bf16.msra.mxu0 0
      %2932 = vmatprep.subr.bf16.mxu0 0
      %2933 = vmatpush2.bf16.msra.mxu0 0
      %2934 = vmatprep.mubr.bf16.mxu0 0
      %2935 = vmatmul.mubr.bf16.gmra.mxu0 %v2891
      %v2936 = vpop.f32.mrf.mxu0
      %v2937 = vadd.f32 0.0, %v2936
      %v2938 = vpop.f32.mrf.mxu0
      %v2939 = vadd.f32 0.0, %v2938
      %v2940 = vpop.f32.mrf.mxu0
      %v2941 = vpop.f32.mrf.mxu0
      %2942 = vdwg.mxu0
      %2943 = vmatprep.subr.bf16.mxu0 0
      %2944 = vmatpush1.bf16.msra.mxu0 0
      %2945 = vmatprep.subr.bf16.mxu0 0
      %2946 = vmatpush1.bf16.msra.mxu0 0
      %2947 = vmatprep.subr.bf16.mxu0 0
      %2948 = vmatpush1.bf16.msra.mxu0 0
      %2949 = vmatprep.subr.bf16.mxu0 0
      %2950 = vmatpush1.bf16.msra.mxu0 0
      %2951 = vmatprep.subr.bf16.mxu0 0
      %2952 = vmatpush1.bf16.msra.mxu0 0
      %2953 = vmatprep.subr.bf16.mxu0 0
      %2954 = vmatpush1.bf16.msra.mxu0 0
      %2955 = vmatprep.subr.bf16.mxu0 0
      %2956 = vmatpush1.bf16.msra.mxu0 0
      %2957 = vmatprep.subr.bf16.mxu0 0
      %2958 = vmatpush1.bf16.msra.mxu0 %v2900
      %2959 = vmatprep.subr.bf16.mxu0 0
      %2960 = vmatpush2.bf16.msra.mxu0 0
      %2961 = vmatprep.subr.bf16.mxu0 0
      %2962 = vmatpush2.bf16.msra.mxu0 0
      %2963 = vmatprep.subr.bf16.mxu0 0
      %2964 = vmatpush2.bf16.msra.mxu0 0
      %2965 = vmatprep.subr.bf16.mxu0 0
      %2966 = vmatpush2.bf16.msra.mxu0 0
      %2967 = vmatprep.subr.bf16.mxu0 0
      %2968 = vmatpush2.bf16.msra.mxu0 0
      %2969 = vmatprep.subr.bf16.mxu0 0
      %2970 = vmatpush2.bf16.msra.mxu0 0
      %2971 = vmatprep.subr.bf16.mxu0 0
      %2972 = vmatpush2.bf16.msra.mxu0 0
      %2973 = vmatprep.subr.bf16.mxu0 0
      %2974 = vmatpush2.bf16.msra.mxu0 0
      %2975 = vmatprep.mubr.bf16.mxu0 0
      %2976 = vmatmul.mubr.bf16.gmra.mxu0 %v2891
      %v2977 = vpop.f32.mrf.mxu0
      %v2978 = vadd.f32 0.0, %v2977
      %v2979 = vpop.f32.mrf.mxu0
      %v2980 = vpop.f32.mrf.mxu0
      %v2981 = vpop.f32.mrf.mxu0
      %2982 = vdwg.mxu0
      %v2983 = vadd.f32 %v2854, %v2937
      %v2984 = vadd.f32 %v2855, %v2939
      %v2985 = vadd.f32 %v2856, %v2978
      %2986 = vst [vmem:[#allocation2] sm:$0xff] %v2983
      %2987 = vst [vmem:[#allocation2 + $0x8] sm:$0xff] %v2984
      %2988 = vst [vmem:[#allocation2 + $0x10] sm:$0xff] %v2985
      %v2989 = vld [vmem:[#allocation2] sm:$0xff]
      %v2990 = vld [vmem:[#allocation2 + $0x8] sm:$0xff]
      %v2991 = vld [vmem:[#allocation2 + $0x10] sm:$0xff]
      %s2992 = scalar_lea.vmem %s0, 84
      %v2993 = vld [vmem:[%s2992] sm:$0xf]
      %v2994 = vld [vmem:[%s165] sm:$0xff]
      %v2996 = vcombine.high %v2994, %v2994
      %v2998 = vunpack.c.l.s4 1983009808
      %v2999 = vunpack.c.0.s8 %v2998
      %v3000 = vlaneseq
      %v3001 = vshrl.u32 %v3000, 7
      %v3002 = vsub.s32 %v2999, %v3001
      %v3003 = vrot.slane %v2994, %v3002
      %v3005 = vunpack.c.l.s4 1983009808
      %v3006 = vunpack.c.0.s8 %v3005
      %v3007 = vlaneseq
      %v3008 = vshrl.u32 %v3007, 7
      %v3009 = vsub.s32 %v3006, %v3008
      %v3010 = vrot.slane %v2996, %v3009
      %v3011 = vcombine.high %v3003, %v3003
      %v3012 = vcombine.high %v3010, %v3010
      %3013 = vrot.lane.b32.xlu0 %v3003, 62
      %v3014 = vpop.permute.xlu0 %3013
      %3015 = vrot.lane.b32.xlu0 %v3011, 62
      %v3016 = vpop.permute.xlu0 %3015
      %3017 = vrot.lane.b32.xlu0 %v3010, 62
      %v3018 = vpop.permute.xlu0 %3017
      %3019 = vrot.lane.b32.xlu0 %v3012, 62
      %v3020 = vpop.permute.xlu0 %3019
      %vm3021 = vcmask 506880
      %v3022 = vsel %vm3021, %v3014, %v3016
      %v3023 = vsel %vm3021, %v3016, %v3018
      %v3024 = vsel %vm3021, %v3018, %v3020
      %v3026 = vsel %vm191, %v2993, 0
      %v3029 = vsel %vm195, %v3022, 0
      %v3032 = vsel %vm195, %v3023, 0
      %v3035 = vsel %vm195, %v3024, 0
      %3037 = vmatprep.subr.bf16.mxu0 0
      %3038 = vmatpush1.bf16.msra.mxu0 0
      %3039 = vmatprep.subr.bf16.mxu0 0
      %3040 = vmatpush1.bf16.msra.mxu0 0
      %3041 = vmatprep.subr.bf16.mxu0 0
      %3042 = vmatpush1.bf16.msra.mxu0 0
      %3043 = vmatprep.subr.bf16.mxu0 0
      %3044 = vmatpush1.bf16.msra.mxu0 0
      %3045 = vmatprep.subr.bf16.mxu0 0
      %3046 = vmatpush1.bf16.msra.mxu0 0
      %3047 = vmatprep.subr.bf16.mxu0 0
      %3048 = vmatpush1.bf16.msra.mxu0 0
      %3049 = vmatprep.subr.bf16.mxu0 0
      %3050 = vmatpush1.bf16.msra.mxu0 0
      %3051 = vmatprep.subr.bf16.mxu0 %v3032
      %3052 = vmatpush1.bf16.msra.mxu0 %v3029
      %3053 = vmatprep.subr.bf16.mxu0 0
      %3054 = vmatpush2.bf16.msra.mxu0 0
      %3055 = vmatprep.subr.bf16.mxu0 0
      %3056 = vmatpush2.bf16.msra.mxu0 0
      %3057 = vmatprep.subr.bf16.mxu0 0
      %3058 = vmatpush2.bf16.msra.mxu0 0
      %3059 = vmatprep.subr.bf16.mxu0 0
      %3060 = vmatpush2.bf16.msra.mxu0 0
      %3061 = vmatprep.subr.bf16.mxu0 0
      %3062 = vmatpush2.bf16.msra.mxu0 0
      %3063 = vmatprep.subr.bf16.mxu0 0
      %3064 = vmatpush2.bf16.msra.mxu0 0
      %3065 = vmatprep.subr.bf16.mxu0 0
      %3066 = vmatpush2.bf16.msra.mxu0 0
      %3067 = vmatprep.subr.bf16.mxu0 0
      %3068 = vmatpush2.bf16.msra.mxu0 0
      %3069 = vmatprep.mubr.bf16.mxu0 0
      %3070 = vmatmul.mubr.bf16.gmra.mxu0 %v3026
      %v3071 = vpop.f32.mrf.mxu0
      %v3072 = vadd.f32 0.0, %v3071
      %v3073 = vpop.f32.mrf.mxu0
      %v3074 = vadd.f32 0.0, %v3073
      %v3075 = vpop.f32.mrf.mxu0
      %v3076 = vpop.f32.mrf.mxu0
      %3077 = vdwg.mxu0
      %3078 = vmatprep.subr.bf16.mxu0 0
      %3079 = vmatpush1.bf16.msra.mxu0 0
      %3080 = vmatprep.subr.bf16.mxu0 0
      %3081 = vmatpush1.bf16.msra.mxu0 0
      %3082 = vmatprep.subr.bf16.mxu0 0
      %3083 = vmatpush1.bf16.msra.mxu0 0
      %3084 = vmatprep.subr.bf16.mxu0 0
      %3085 = vmatpush1.bf16.msra.mxu0 0
      %3086 = vmatprep.subr.bf16.mxu0 0
      %3087 = vmatpush1.bf16.msra.mxu0 0
      %3088 = vmatprep.subr.bf16.mxu0 0
      %3089 = vmatpush1.bf16.msra.mxu0 0
      %3090 = vmatprep.subr.bf16.mxu0 0
      %3091 = vmatpush1.bf16.msra.mxu0 0
      %3092 = vmatprep.subr.bf16.mxu0 0
      %3093 = vmatpush1.bf16.msra.mxu0 %v3035
      %3094 = vmatprep.subr.bf16.mxu0 0
      %3095 = vmatpush2.bf16.msra.mxu0 0
      %3096 = vmatprep.subr.bf16.mxu0 0
      %3097 = vmatpush2.bf16.msra.mxu0 0
      %3098 = vmatprep.subr.bf16.mxu0 0
      %3099 = vmatpush2.bf16.msra.mxu0 0
      %3100 = vmatprep.subr.bf16.mxu0 0
      %3101 = vmatpush2.bf16.msra.mxu0 0
      %3102 = vmatprep.subr.bf16.mxu0 0
      %3103 = vmatpush2.bf16.msra.mxu0 0
      %3104 = vmatprep.subr.bf16.mxu0 0
      %3105 = vmatpush2.bf16.msra.mxu0 0
      %3106 = vmatprep.subr.bf16.mxu0 0
      %3107 = vmatpush2.bf16.msra.mxu0 0
      %3108 = vmatprep.subr.bf16.mxu0 0
      %3109 = vmatpush2.bf16.msra.mxu0 0
      %3110 = vmatprep.mubr.bf16.mxu0 0
      %3111 = vmatmul.mubr.bf16.gmra.mxu0 %v3026
      %v3112 = vpop.f32.mrf.mxu0
      %v3113 = vadd.f32 0.0, %v3112
      %v3114 = vpop.f32.mrf.mxu0
      %v3115 = vpop.f32.mrf.mxu0
      %v3116 = vpop.f32.mrf.mxu0
      %3117 = vdwg.mxu0
      %v3118 = vadd.f32 %v2989, %v3072
      %v3119 = vadd.f32 %v2990, %v3074
      %v3120 = vadd.f32 %v2991, %v3113
      %3121 = vst [vmem:[#allocation2] sm:$0xff] %v3118
      %3122 = vst [vmem:[#allocation2 + $0x8] sm:$0xff] %v3119
      %3123 = vst [vmem:[#allocation2 + $0x10] sm:$0xff] %v3120
      %v3124 = vld [vmem:[#allocation2] sm:$0xff]
      %v3125 = vld [vmem:[#allocation2 + $0x8] sm:$0xff]
      %v3126 = vld [vmem:[#allocation2 + $0x10] sm:$0xff]
      %s3127 = scalar_lea.vmem %s0, 88
      %v3128 = vld [vmem:[%s3127] sm:$0xf]
      %v3129 = vld [vmem:[%s165] sm:$0xff]
      %v3131 = vcombine.high %v3129, %v3129
      %v3133 = vunpack.c.l.s4 1983009808
      %v3134 = vunpack.c.0.s8 %v3133
      %v3135 = vlaneseq
      %v3136 = vshrl.u32 %v3135, 7
      %v3137 = vsub.s32 %v3134, %v3136
      %v3138 = vrot.slane %v3129, %v3137
      %v3140 = vunpack.c.l.s4 1983009808
      %v3141 = vunpack.c.0.s8 %v3140
      %v3142 = vlaneseq
      %v3143 = vshrl.u32 %v3142, 7
      %v3144 = vsub.s32 %v3141, %v3143
      %v3145 = vrot.slane %v3131, %v3144
      %v3146 = vcombine.high %v3138, %v3138
      %v3147 = vcombine.high %v3145, %v3145
      %3148 = vrot.lane.b32.xlu0 %v3138, 61
      %v3149 = vpop.permute.xlu0 %3148
      %3150 = vrot.lane.b32.xlu0 %v3146, 61
      %v3151 = vpop.permute.xlu0 %3150
      %3152 = vrot.lane.b32.xlu0 %v3145, 61
      %v3153 = vpop.permute.xlu0 %3152
      %3154 = vrot.lane.b32.xlu0 %v3147, 61
      %v3155 = vpop.permute.xlu0 %3154
      %vm3156 = vcmask 498688
      %v3157 = vsel %vm3156, %v3149, %v3151
      %v3158 = vsel %vm3156, %v3151, %v3153
      %v3159 = vsel %vm3156, %v3153, %v3155
      %v3161 = vsel %vm191, %v3128, 0
      %v3164 = vsel %vm195, %v3157, 0
      %v3167 = vsel %vm195, %v3158, 0
      %v3170 = vsel %vm195, %v3159, 0
      %3172 = vmatprep.subr.bf16.mxu0 0
      %3173 = vmatpush1.bf16.msra.mxu0 0
      %3174 = vmatprep.subr.bf16.mxu0 0
      %3175 = vmatpush1.bf16.msra.mxu0 0
      %3176 = vmatprep.subr.bf16.mxu0 0
      %3177 = vmatpush1.bf16.msra.mxu0 0
      %3178 = vmatprep.subr.bf16.mxu0 0
      %3179 = vmatpush1.bf16.msra.mxu0 0
      %3180 = vmatprep.subr.bf16.mxu0 0
      %3181 = vmatpush1.bf16.msra.mxu0 0
      %3182 = vmatprep.subr.bf16.mxu0 0
      %3183 = vmatpush1.bf16.msra.mxu0 0
      %3184 = vmatprep.subr.bf16.mxu0 0
      %3185 = vmatpush1.bf16.msra.mxu0 0
      %3186 = vmatprep.subr.bf16.mxu0 %v3167
      %3187 = vmatpush1.bf16.msra.mxu0 %v3164
      %3188 = vmatprep.subr.bf16.mxu0 0
      %3189 = vmatpush2.bf16.msra.mxu0 0
      %3190 = vmatprep.subr.bf16.mxu0 0
      %3191 = vmatpush2.bf16.msra.mxu0 0
      %3192 = vmatprep.subr.bf16.mxu0 0
      %3193 = vmatpush2.bf16.msra.mxu0 0
      %3194 = vmatprep.subr.bf16.mxu0 0
      %3195 = vmatpush2.bf16.msra.mxu0 0
      %3196 = vmatprep.subr.bf16.mxu0 0
      %3197 = vmatpush2.bf16.msra.mxu0 0
      %3198 = vmatprep.subr.bf16.mxu0 0
      %3199 = vmatpush2.bf16.msra.mxu0 0
      %3200 = vmatprep.subr.bf16.mxu0 0
      %3201 = vmatpush2.bf16.msra.mxu0 0
      %3202 = vmatprep.subr.bf16.mxu0 0
      %3203 = vmatpush2.bf16.msra.mxu0 0
      %3204 = vmatprep.mubr.bf16.mxu0 0
      %3205 = vmatmul.mubr.bf16.gmra.mxu0 %v3161
      %v3206 = vpop.f32.mrf.mxu0
      %v3207 = vadd.f32 0.0, %v3206
      %v3208 = vpop.f32.mrf.mxu0
      %v3209 = vadd.f32 0.0, %v3208
      %v3210 = vpop.f32.mrf.mxu0
      %v3211 = vpop.f32.mrf.mxu0
      %3212 = vdwg.mxu0
      %3213 = vmatprep.subr.bf16.mxu0 0
      %3214 = vmatpush1.bf16.msra.mxu0 0
      %3215 = vmatprep.subr.bf16.mxu0 0
      %3216 = vmatpush1.bf16.msra.mxu0 0
      %3217 = vmatprep.subr.bf16.mxu0 0
      %3218 = vmatpush1.bf16.msra.mxu0 0
      %3219 = vmatprep.subr.bf16.mxu0 0
      %3220 = vmatpush1.bf16.msra.mxu0 0
      %3221 = vmatprep.subr.bf16.mxu0 0
      %3222 = vmatpush1.bf16.msra.mxu0 0
      %3223 = vmatprep.subr.bf16.mxu0 0
      %3224 = vmatpush1.bf16.msra.mxu0 0
      %3225 = vmatprep.subr.bf16.mxu0 0
      %3226 = vmatpush1.bf16.msra.mxu0 0
      %3227 = vmatprep.subr.bf16.mxu0 0
      %3228 = vmatpush1.bf16.msra.mxu0 %v3170
      %3229 = vmatprep.subr.bf16.mxu0 0
      %3230 = vmatpush2.bf16.msra.mxu0 0
      %3231 = vmatprep.subr.bf16.mxu0 0
      %3232 = vmatpush2.bf16.msra.mxu0 0
      %3233 = vmatprep.subr.bf16.mxu0 0
      %3234 = vmatpush2.bf16.msra.mxu0 0
      %3235 = vmatprep.subr.bf16.mxu0 0
      %3236 = vmatpush2.bf16.msra.mxu0 0
      %3237 = vmatprep.subr.bf16.mxu0 0
      %3238 = vmatpush2.bf16.msra.mxu0 0
      %3239 = vmatprep.subr.bf16.mxu0 0
      %3240 = vmatpush2.bf16.msra.mxu0 0
      %3241 = vmatprep.subr.bf16.mxu0 0
      %3242 = vmatpush2.bf16.msra.mxu0 0
      %3243 = vmatprep.subr.bf16.mxu0 0
      %3244 = vmatpush2.bf16.msra.mxu0 0
      %3245 = vmatprep.mubr.bf16.mxu0 0
      %3246 = vmatmul.mubr.bf16.gmra.mxu0 %v3161
      %v3247 = vpop.f32.mrf.mxu0
      %v3248 = vadd.f32 0.0, %v3247
      %v3249 = vpop.f32.mrf.mxu0
      %v3250 = vpop.f32.mrf.mxu0
      %v3251 = vpop.f32.mrf.mxu0
      %3252 = vdwg.mxu0
      %v3253 = vadd.f32 %v3124, %v3207
      %v3254 = vadd.f32 %v3125, %v3209
      %v3255 = vadd.f32 %v3126, %v3248
      %3256 = vst [vmem:[#allocation2] sm:$0xff] %v3253
      %3257 = vst [vmem:[#allocation2 + $0x8] sm:$0xff] %v3254
      %3258 = vst [vmem:[#allocation2 + $0x10] sm:$0xff] %v3255
      %v3259 = vld [vmem:[#allocation2] sm:$0xff]
      %v3260 = vld [vmem:[#allocation2 + $0x8] sm:$0xff]
      %v3261 = vld [vmem:[#allocation2 + $0x10] sm:$0xff]
      %s3262 = scalar_lea.vmem %s0, 92
      %v3263 = vld [vmem:[%s3262] sm:$0xf]
      %v3264 = vld [vmem:[%s165] sm:$0xff]
      %v3266 = vcombine.high %v3264, %v3264
      %v3268 = vunpack.c.l.s4 1983009808
      %v3269 = vunpack.c.0.s8 %v3268
      %v3270 = vlaneseq
      %v3271 = vshrl.u32 %v3270, 7
      %v3272 = vsub.s32 %v3269, %v3271
      %v3273 = vrot.slane %v3264, %v3272
      %v3275 = vunpack.c.l.s4 1983009808
      %v3276 = vunpack.c.0.s8 %v3275
      %v3277 = vlaneseq
      %v3278 = vshrl.u32 %v3277, 7
      %v3279 = vsub.s32 %v3276, %v3278
      %v3280 = vrot.slane %v3266, %v3279
      %v3281 = vcombine.high %v3273, %v3273
      %v3282 = vcombine.high %v3280, %v3280
      %3283 = vrot.lane.b32.xlu0 %v3273, 60
      %v3284 = vpop.permute.xlu0 %3283
      %3285 = vrot.lane.b32.xlu0 %v3281, 60
      %v3286 = vpop.permute.xlu0 %3285
      %3287 = vrot.lane.b32.xlu0 %v3280, 60
      %v3288 = vpop.permute.xlu0 %3287
      %3289 = vrot.lane.b32.xlu0 %v3282, 60
      %v3290 = vpop.permute.xlu0 %3289
      %vm3291 = vcmask 490496
      %v3292 = vsel %vm3291, %v3284, %v3286
      %v3293 = vsel %vm3291, %v3286, %v3288
      %v3294 = vsel %vm3291, %v3288, %v3290
      %v3296 = vsel %vm191, %v3263, 0
      %v3299 = vsel %vm195, %v3292, 0
      %v3302 = vsel %vm195, %v3293, 0
      %v3305 = vsel %vm195, %v3294, 0
      %3307 = vmatprep.subr.bf16.mxu0 0
      %3308 = vmatpush1.bf16.msra.mxu0 0
      %3309 = vmatprep.subr.bf16.mxu0 0
      %3310 = vmatpush1.bf16.msra.mxu0 0
      %3311 = vmatprep.subr.bf16.mxu0 0
      %3312 = vmatpush1.bf16.msra.mxu0 0
      %3313 = vmatprep.subr.bf16.mxu0 0
      %3314 = vmatpush1.bf16.msra.mxu0 0
      %3315 = vmatprep.subr.bf16.mxu0 0
      %3316 = vmatpush1.bf16.msra.mxu0 0
      %3317 = vmatprep.subr.bf16.mxu0 0
      %3318 = vmatpush1.bf16.msra.mxu0 0
      %3319 = vmatprep.subr.bf16.mxu0 0
      %3320 = vmatpush1.bf16.msra.mxu0 0
      %3321 = vmatprep.subr.bf16.mxu0 %v3302
      %3322 = vmatpush1.bf16.msra.mxu0 %v3299
      %3323 = vmatprep.subr.bf16.mxu0 0
      %3324 = vmatpush2.bf16.msra.mxu0 0
      %3325 = vmatprep.subr.bf16.mxu0 0
      %3326 = vmatpush2.bf16.msra.mxu0 0
      %3327 = vmatprep.subr.bf16.mxu0 0
      %3328 = vmatpush2.bf16.msra.mxu0 0
      %3329 = vmatprep.subr.bf16.mxu0 0
      %3330 = vmatpush2.bf16.msra.mxu0 0
      %3331 = vmatprep.subr.bf16.mxu0 0
      %3332 = vmatpush2.bf16.msra.mxu0 0
      %3333 = vmatprep.subr.bf16.mxu0 0
      %3334 = vmatpush2.bf16.msra.mxu0 0
      %3335 = vmatprep.subr.bf16.mxu0 0
      %3336 = vmatpush2.bf16.msra.mxu0 0
      %3337 = vmatprep.subr.bf16.mxu0 0
      %3338 = vmatpush2.bf16.msra.mxu0 0
      %3339 = vmatprep.mubr.bf16.mxu0 0
      %3340 = vmatmul.mubr.bf16.gmra.mxu0 %v3296
      %v3341 = vpop.f32.mrf.mxu0
      %v3342 = vadd.f32 0.0, %v3341
      %v3343 = vpop.f32.mrf.mxu0
      %v3344 = vadd.f32 0.0, %v3343
      %v3345 = vpop.f32.mrf.mxu0
      %v3346 = vpop.f32.mrf.mxu0
      %3347 = vdwg.mxu0
      %3348 = vmatprep.subr.bf16.mxu0 0
      %3349 = vmatpush1.bf16.msra.mxu0 0
      %3350 = vmatprep.subr.bf16.mxu0 0
      %3351 = vmatpush1.bf16.msra.mxu0 0
      %3352 = vmatprep.subr.bf16.mxu0 0
      %3353 = vmatpush1.bf16.msra.mxu0 0
      %3354 = vmatprep.subr.bf16.mxu0 0
      %3355 = vmatpush1.bf16.msra.mxu0 0
      %3356 = vmatprep.subr.bf16.mxu0 0
      %3357 = vmatpush1.bf16.msra.mxu0 0
      %3358 = vmatprep.subr.bf16.mxu0 0
      %3359 = vmatpush1.bf16.msra.mxu0 0
      %3360 = vmatprep.subr.bf16.mxu0 0
      %3361 = vmatpush1.bf16.msra.mxu0 0
      %3362 = vmatprep.subr.bf16.mxu0 0
      %3363 = vmatpush1.bf16.msra.mxu0 %v3305
      %3364 = vmatprep.subr.bf16.mxu0 0
      %3365 = vmatpush2.bf16.msra.mxu0 0
      %3366 = vmatprep.subr.bf16.mxu0 0
      %3367 = vmatpush2.bf16.msra.mxu0 0
      %3368 = vmatprep.subr.bf16.mxu0 0
      %3369 = vmatpush2.bf16.msra.mxu0 0
      %3370 = vmatprep.subr.bf16.mxu0 0
      %3371 = vmatpush2.bf16.msra.mxu0 0
      %3372 = vmatprep.subr.bf16.mxu0 0
      %3373 = vmatpush2.bf16.msra.mxu0 0
      %3374 = vmatprep.subr.bf16.mxu0 0
      %3375 = vmatpush2.bf16.msra.mxu0 0
      %3376 = vmatprep.subr.bf16.mxu0 0
      %3377 = vmatpush2.bf16.msra.mxu0 0
      %3378 = vmatprep.subr.bf16.mxu0 0
      %3379 = vmatpush2.bf16.msra.mxu0 0
      %3380 = vmatprep.mubr.bf16.mxu0 0
      %3381 = vmatmul.mubr.bf16.gmra.mxu0 %v3296
      %v3382 = vpop.f32.mrf.mxu0
      %v3383 = vadd.f32 0.0, %v3382
      %v3384 = vpop.f32.mrf.mxu0
      %v3385 = vpop.f32.mrf.mxu0
      %v3386 = vpop.f32.mrf.mxu0
      %3387 = vdwg.mxu0
      %v3388 = vadd.f32 %v3259, %v3342
      %v3389 = vadd.f32 %v3260, %v3344
      %v3390 = vadd.f32 %v3261, %v3383
      %3391 = vst [vmem:[#allocation2] sm:$0xff] %v3388
      %3392 = vst [vmem:[#allocation2 + $0x8] sm:$0xff] %v3389
      %3393 = vst [vmem:[#allocation2 + $0x10] sm:$0xff] %v3390
      %v3394 = vld [vmem:[#allocation2] sm:$0xff]
      %v3395 = vld [vmem:[#allocation2 + $0x8] sm:$0xff]
      %v3396 = vld [vmem:[#allocation2 + $0x10] sm:$0xff]
      %s3397 = scalar_lea.vmem %s0, 96
      %v3398 = vld [vmem:[%s3397] sm:$0xf]
      %v3399 = vld [vmem:[%s165] sm:$0xff]
      %v3401 = vcombine.high %v3399, %v3399
      %v3403 = vunpack.c.l.s4 1983009808
      %v3404 = vunpack.c.0.s8 %v3403
      %v3405 = vlaneseq
      %v3406 = vshrl.u32 %v3405, 7
      %v3407 = vsub.s32 %v3404, %v3406
      %v3408 = vrot.slane %v3399, %v3407
      %v3410 = vunpack.c.l.s4 1983009808
      %v3411 = vunpack.c.0.s8 %v3410
      %v3412 = vlaneseq
      %v3413 = vshrl.u32 %v3412, 7
      %v3414 = vsub.s32 %v3411, %v3413
      %v3415 = vrot.slane %v3401, %v3414
      %v3416 = vcombine.high %v3408, %v3408
      %v3417 = vcombine.high %v3415, %v3415
      %3418 = vrot.lane.b32.xlu0 %v3408, 59
      %v3419 = vpop.permute.xlu0 %3418
      %3420 = vrot.lane.b32.xlu0 %v3416, 59
      %v3421 = vpop.permute.xlu0 %3420
      %3422 = vrot.lane.b32.xlu0 %v3415, 59
      %v3423 = vpop.permute.xlu0 %3422
      %3424 = vrot.lane.b32.xlu0 %v3417, 59
      %v3425 = vpop.permute.xlu0 %3424
      %vm3426 = vcmask 482304
      %v3427 = vsel %vm3426, %v3419, %v3421
      %v3428 = vsel %vm3426, %v3421, %v3423
      %v3429 = vsel %vm3426, %v3423, %v3425
      %v3431 = vsel %vm191, %v3398, 0
      %v3434 = vsel %vm195, %v3427, 0
      %v3437 = vsel %vm195, %v3428, 0
      %v3440 = vsel %vm195, %v3429, 0
      %3442 = vmatprep.subr.bf16.mxu0 0
      %3443 = vmatpush1.bf16.msra.mxu0 0
      %3444 = vmatprep.subr.bf16.mxu0 0
      %3445 = vmatpush1.bf16.msra.mxu0 0
      %3446 = vmatprep.subr.bf16.mxu0 0
      %3447 = vmatpush1.bf16.msra.mxu0 0
      %3448 = vmatprep.subr.bf16.mxu0 0
      %3449 = vmatpush1.bf16.msra.mxu0 0
      %3450 = vmatprep.subr.bf16.mxu0 0
      %3451 = vmatpush1.bf16.msra.mxu0 0
      %3452 = vmatprep.subr.bf16.mxu0 0
      %3453 = vmatpush1.bf16.msra.mxu0 0
      %3454 = vmatprep.subr.bf16.mxu0 0
      %3455 = vmatpush1.bf16.msra.mxu0 0
      %3456 = vmatprep.subr.bf16.mxu0 %v3437
      %3457 = vmatpush1.bf16.msra.mxu0 %v3434
      %3458 = vmatprep.subr.bf16.mxu0 0
      %3459 = vmatpush2.bf16.msra.mxu0 0
      %3460 = vmatprep.subr.bf16.mxu0 0
      %3461 = vmatpush2.bf16.msra.mxu0 0
      %3462 = vmatprep.subr.bf16.mxu0 0
      %3463 = vmatpush2.bf16.msra.mxu0 0
      %3464 = vmatprep.subr.bf16.mxu0 0
      %3465 = vmatpush2.bf16.msra.mxu0 0
      %3466 = vmatprep.subr.bf16.mxu0 0
      %3467 = vmatpush2.bf16.msra.mxu0 0
      %3468 = vmatprep.subr.bf16.mxu0 0
      %3469 = vmatpush2.bf16.msra.mxu0 0
      %3470 = vmatprep.subr.bf16.mxu0 0
      %3471 = vmatpush2.bf16.msra.mxu0 0
      %3472 = vmatprep.subr.bf16.mxu0 0
      %3473 = vmatpush2.bf16.msra.mxu0 0
      %3474 = vmatprep.mubr.bf16.mxu0 0
      %3475 = vmatmul.mubr.bf16.gmra.mxu0 %v3431
      %v3476 = vpop.f32.mrf.mxu0
      %v3477 = vadd.f32 0.0, %v3476
      %v3478 = vpop.f32.mrf.mxu0
      %v3479 = vadd.f32 0.0, %v3478
      %v3480 = vpop.f32.mrf.mxu0
      %v3481 = vpop.f32.mrf.mxu0
      %3482 = vdwg.mxu0
      %3483 = vmatprep.subr.bf16.mxu0 0
      %3484 = vmatpush1.bf16.msra.mxu0 0
      %3485 = vmatprep.subr.bf16.mxu0 0
      %3486 = vmatpush1.bf16.msra.mxu0 0
      %3487 = vmatprep.subr.bf16.mxu0 0
      %3488 = vmatpush1.bf16.msra.mxu0 0
      %3489 = vmatprep.subr.bf16.mxu0 0
      %3490 = vmatpush1.bf16.msra.mxu0 0
      %3491 = vmatprep.subr.bf16.mxu0 0
      %3492 = vmatpush1.bf16.msra.mxu0 0
      %3493 = vmatprep.subr.bf16.mxu0 0
      %3494 = vmatpush1.bf16.msra.mxu0 0
      %3495 = vmatprep.subr.bf16.mxu0 0
      %3496 = vmatpush1.bf16.msra.mxu0 0
      %3497 = vmatprep.subr.bf16.mxu0 0
      %3498 = vmatpush1.bf16.msra.mxu0 %v3440
      %3499 = vmatprep.subr.bf16.mxu0 0
      %3500 = vmatpush2.bf16.msra.mxu0 0
      %3501 = vmatprep.subr.bf16.mxu0 0
      %3502 = vmatpush2.bf16.msra.mxu0 0
      %3503 = vmatprep.subr.bf16.mxu0 0
      %3504 = vmatpush2.bf16.msra.mxu0 0
      %3505 = vmatprep.subr.bf16.mxu0 0
      %3506 = vmatpush2.bf16.msra.mxu0 0
      %3507 = vmatprep.subr.bf16.mxu0 0
      %3508 = vmatpush2.bf16.msra.mxu0 0
      %3509 = vmatprep.subr.bf16.mxu0 0
      %3510 = vmatpush2.bf16.msra.mxu0 0
      %3511 = vmatprep.subr.bf16.mxu0 0
      %3512 = vmatpush2.bf16.msra.mxu0 0
      %3513 = vmatprep.subr.bf16.mxu0 0
      %3514 = vmatpush2.bf16.msra.mxu0 0
      %3515 = vmatprep.mubr.bf16.mxu0 0
      %3516 = vmatmul.mubr.bf16.gmra.mxu0 %v3431
      %v3517 = vpop.f32.mrf.mxu0
      %v3518 = vadd.f32 0.0, %v3517
      %v3519 = vpop.f32.mrf.mxu0
      %v3520 = vpop.f32.mrf.mxu0
      %v3521 = vpop.f32.mrf.mxu0
      %3522 = vdwg.mxu0
      %v3523 = vadd.f32 %v3394, %v3477
      %v3524 = vadd.f32 %v3395, %v3479
      %v3525 = vadd.f32 %v3396, %v3518
      %3526 = vst [vmem:[#allocation2] sm:$0xff] %v3523
      %3527 = vst [vmem:[#allocation2 + $0x8] sm:$0xff] %v3524
      %3528 = vst [vmem:[#allocation2 + $0x10] sm:$0xff] %v3525
      %v3529 = vld [vmem:[#allocation2] sm:$0xff]
      %v3530 = vld [vmem:[#allocation2 + $0x8] sm:$0xff]
      %v3531 = vld [vmem:[#allocation2 + $0x10] sm:$0xff]
      %s3532 = scalar_lea.vmem %s0, 100
      %v3533 = vld [vmem:[%s3532] sm:$0xf]
      %v3534 = vld [vmem:[%s165] sm:$0xff]
      %v3536 = vcombine.high %v3534, %v3534
      %v3538 = vunpack.c.l.s4 1983009808
      %v3539 = vunpack.c.0.s8 %v3538
      %v3540 = vlaneseq
      %v3541 = vshrl.u32 %v3540, 7
      %v3542 = vsub.s32 %v3539, %v3541
      %v3543 = vrot.slane %v3534, %v3542
      %v3545 = vunpack.c.l.s4 1983009808
      %v3546 = vunpack.c.0.s8 %v3545
      %v3547 = vlaneseq
      %v3548 = vshrl.u32 %v3547, 7
      %v3549 = vsub.s32 %v3546, %v3548
      %v3550 = vrot.slane %v3536, %v3549
      %v3551 = vcombine.high %v3543, %v3543
      %v3552 = vcombine.high %v3550, %v3550
      %3553 = vrot.lane.b32.xlu0 %v3543, 58
      %v3554 = vpop.permute.xlu0 %3553
      %3555 = vrot.lane.b32.xlu0 %v3551, 58
      %v3556 = vpop.permute.xlu0 %3555
      %3557 = vrot.lane.b32.xlu0 %v3550, 58
      %v3558 = vpop.permute.xlu0 %3557
      %3559 = vrot.lane.b32.xlu0 %v3552, 58
      %v3560 = vpop.permute.xlu0 %3559
      %vm3561 = vcmask 474112
      %v3562 = vsel %vm3561, %v3554, %v3556
      %v3563 = vsel %vm3561, %v3556, %v3558
      %v3564 = vsel %vm3561, %v3558, %v3560
      %v3566 = vsel %vm191, %v3533, 0
      %v3569 = vsel %vm195, %v3562, 0
      %v3572 = vsel %vm195, %v3563, 0
      %v3575 = vsel %vm195, %v3564, 0
      %3577 = vmatprep.subr.bf16.mxu0 0
      %3578 = vmatpush1.bf16.msra.mxu0 0
      %3579 = vmatprep.subr.bf16.mxu0 0
      %3580 = vmatpush1.bf16.msra.mxu0 0
      %3581 = vmatprep.subr.bf16.mxu0 0
      %3582 = vmatpush1.bf16.msra.mxu0 0
      %3583 = vmatprep.subr.bf16.mxu0 0
      %3584 = vmatpush1.bf16.msra.mxu0 0
      %3585 = vmatprep.subr.bf16.mxu0 0
      %3586 = vmatpush1.bf16.msra.mxu0 0
      %3587 = vmatprep.subr.bf16.mxu0 0
      %3588 = vmatpush1.bf16.msra.mxu0 0
      %3589 = vmatprep.subr.bf16.mxu0 0
      %3590 = vmatpush1.bf16.msra.mxu0 0
      %3591 = vmatprep.subr.bf16.mxu0 %v3572
      %3592 = vmatpush1.bf16.msra.mxu0 %v3569
      %3593 = vmatprep.subr.bf16.mxu0 0
      %3594 = vmatpush2.bf16.msra.mxu0 0
      %3595 = vmatprep.subr.bf16.mxu0 0
      %3596 = vmatpush2.bf16.msra.mxu0 0
      %3597 = vmatprep.subr.bf16.mxu0 0
      %3598 = vmatpush2.bf16.msra.mxu0 0
      %3599 = vmatprep.subr.bf16.mxu0 0
      %3600 = vmatpush2.bf16.msra.mxu0 0
      %3601 = vmatprep.subr.bf16.mxu0 0
      %3602 = vmatpush2.bf16.msra.mxu0 0
      %3603 = vmatprep.subr.bf16.mxu0 0
      %3604 = vmatpush2.bf16.msra.mxu0 0
      %3605 = vmatprep.subr.bf16.mxu0 0
      %3606 = vmatpush2.bf16.msra.mxu0 0
      %3607 = vmatprep.subr.bf16.mxu0 0
      %3608 = vmatpush2.bf16.msra.mxu0 0
      %3609 = vmatprep.mubr.bf16.mxu0 0
      %3610 = vmatmul.mubr.bf16.gmra.mxu0 %v3566
      %v3611 = vpop.f32.mrf.mxu0
      %v3612 = vadd.f32 0.0, %v3611
      %v3613 = vpop.f32.mrf.mxu0
      %v3614 = vadd.f32 0.0, %v3613
      %v3615 = vpop.f32.mrf.mxu0
      %v3616 = vpop.f32.mrf.mxu0
      %3617 = vdwg.mxu0
      %3618 = vmatprep.subr.bf16.mxu0 0
      %3619 = vmatpush1.bf16.msra.mxu0 0
      %3620 = vmatprep.subr.bf16.mxu0 0
      %3621 = vmatpush1.bf16.msra.mxu0 0
      %3622 = vmatprep.subr.bf16.mxu0 0
      %3623 = vmatpush1.bf16.msra.mxu0 0
      %3624 = vmatprep.subr.bf16.mxu0 0
      %3625 = vmatpush1.bf16.msra.mxu0 0
      %3626 = vmatprep.subr.bf16.mxu0 0
      %3627 = vmatpush1.bf16.msra.mxu0 0
      %3628 = vmatprep.subr.bf16.mxu0 0
      %3629 = vmatpush1.bf16.msra.mxu0 0
      %3630 = vmatprep.subr.bf16.mxu0 0
      %3631 = vmatpush1.bf16.msra.mxu0 0
      %3632 = vmatprep.subr.bf16.mxu0 0
      %3633 = vmatpush1.bf16.msra.mxu0 %v3575
      %3634 = vmatprep.subr.bf16.mxu0 0
      %3635 = vmatpush2.bf16.msra.mxu0 0
      %3636 = vmatprep.subr.bf16.mxu0 0
      %3637 = vmatpush2.bf16.msra.mxu0 0
      %3638 = vmatprep.subr.bf16.mxu0 0
      %3639 = vmatpush2.bf16.msra.mxu0 0
      %3640 = vmatprep.subr.bf16.mxu0 0
      %3641 = vmatpush2.bf16.msra.mxu0 0
      %3642 = vmatprep.subr.bf16.mxu0 0
      %3643 = vmatpush2.bf16.msra.mxu0 0
      %3644 = vmatprep.subr.bf16.mxu0 0
      %3645 = vmatpush2.bf16.msra.mxu0 0
      %3646 = vmatprep.subr.bf16.mxu0 0
      %3647 = vmatpush2.bf16.msra.mxu0 0
      %3648 = vmatprep.subr.bf16.mxu0 0
      %3649 = vmatpush2.bf16.msra.mxu0 0
      %3650 = vmatprep.mubr.bf16.mxu0 0
      %3651 = vmatmul.mubr.bf16.gmra.mxu0 %v3566
      %v3652 = vpop.f32.mrf.mxu0
      %v3653 = vadd.f32 0.0, %v3652
      %v3654 = vpop.f32.mrf.mxu0
      %v3655 = vpop.f32.mrf.mxu0
      %v3656 = vpop.f32.mrf.mxu0
      %3657 = vdwg.mxu0
      %v3658 = vadd.f32 %v3529, %v3612
      %v3659 = vadd.f32 %v3530, %v3614
      %v3660 = vadd.f32 %v3531, %v3653
      %3661 = vst [vmem:[#allocation2] sm:$0xff] %v3658
      %3662 = vst [vmem:[#allocation2 + $0x8] sm:$0xff] %v3659
      %3663 = vst [vmem:[#allocation2 + $0x10] sm:$0xff] %v3660
      %v3664 = vld [vmem:[#allocation2] sm:$0xff]
      %v3665 = vld [vmem:[#allocation2 + $0x8] sm:$0xff]
      %v3666 = vld [vmem:[#allocation2 + $0x10] sm:$0xff]
      %s3667 = scalar_lea.vmem %s0, 104
      %v3668 = vld [vmem:[%s3667] sm:$0xf]
      %v3669 = vld [vmem:[%s165] sm:$0xff]
      %v3671 = vcombine.high %v3669, %v3669
      %v3673 = vunpack.c.l.s4 1983009808
      %v3674 = vunpack.c.0.s8 %v3673
      %v3675 = vlaneseq
      %v3676 = vshrl.u32 %v3675, 7
      %v3677 = vsub.s32 %v3674, %v3676
      %v3678 = vrot.slane %v3669, %v3677
      %v3680 = vunpack.c.l.s4 1983009808
      %v3681 = vunpack.c.0.s8 %v3680
      %v3682 = vlaneseq
      %v3683 = vshrl.u32 %v3682, 7
      %v3684 = vsub.s32 %v3681, %v3683
      %v3685 = vrot.slane %v3671, %v3684
      %v3686 = vcombine.high %v3678, %v3678
      %v3687 = vcombine.high %v3685, %v3685
      %3688 = vrot.lane.b32.xlu0 %v3678, 57
      %v3689 = vpop.permute.xlu0 %3688
      %3690 = vrot.lane.b32.xlu0 %v3686, 57
      %v3691 = vpop.permute.xlu0 %3690
      %3692 = vrot.lane.b32.xlu0 %v3685, 57
      %v3693 = vpop.permute.xlu0 %3692
      %3694 = vrot.lane.b32.xlu0 %v3687, 57
      %v3695 = vpop.permute.xlu0 %3694
      %vm3696 = vcmask 465920
      %v3697 = vsel %vm3696, %v3689, %v3691
      %v3698 = vsel %vm3696, %v3691, %v3693
      %v3699 = vsel %vm3696, %v3693, %v3695
      %v3701 = vsel %vm191, %v3668, 0
      %v3704 = vsel %vm195, %v3697, 0
      %v3707 = vsel %vm195, %v3698, 0
      %v3710 = vsel %vm195, %v3699, 0
      %3712 = vmatprep.subr.bf16.mxu0 0
      %3713 = vmatpush1.bf16.msra.mxu0 0
      %3714 = vmatprep.subr.bf16.mxu0 0
      %3715 = vmatpush1.bf16.msra.mxu0 0
      %3716 = vmatprep.subr.bf16.mxu0 0
      %3717 = vmatpush1.bf16.msra.mxu0 0
      %3718 = vmatprep.subr.bf16.mxu0 0
      %3719 = vmatpush1.bf16.msra.mxu0 0
      %3720 = vmatprep.subr.bf16.mxu0 0
      %3721 = vmatpush1.bf16.msra.mxu0 0
      %3722 = vmatprep.subr.bf16.mxu0 0
      %3723 = vmatpush1.bf16.msra.mxu0 0
      %3724 = vmatprep.subr.bf16.mxu0 0
      %3725 = vmatpush1.bf16.msra.mxu0 0
      %3726 = vmatprep.subr.bf16.mxu0 %v3707
      %3727 = vmatpush1.bf16.msra.mxu0 %v3704
      %3728 = vmatprep.subr.bf16.mxu0 0
      %3729 = vmatpush2.bf16.msra.mxu0 0
      %3730 = vmatprep.subr.bf16.mxu0 0
      %3731 = vmatpush2.bf16.msra.mxu0 0
      %3732 = vmatprep.subr.bf16.mxu0 0
      %3733 = vmatpush2.bf16.msra.mxu0 0
      %3734 = vmatprep.subr.bf16.mxu0 0
      %3735 = vmatpush2.bf16.msra.mxu0 0
      %3736 = vmatprep.subr.bf16.mxu0 0
      %3737 = vmatpush2.bf16.msra.mxu0 0
      %3738 = vmatprep.subr.bf16.mxu0 0
      %3739 = vmatpush2.bf16.msra.mxu0 0
      %3740 = vmatprep.subr.bf16.mxu0 0
      %3741 = vmatpush2.bf16.msra.mxu0 0
      %3742 = vmatprep.subr.bf16.mxu0 0
      %3743 = vmatpush2.bf16.msra.mxu0 0
      %3744 = vmatprep.mubr.bf16.mxu0 0
      %3745 = vmatmul.mubr.bf16.gmra.mxu0 %v3701
      %v3746 = vpop.f32.mrf.mxu0
      %v3747 = vadd.f32 0.0, %v3746
      %v3748 = vpop.f32.mrf.mxu0
      %v3749 = vadd.f32 0.0, %v3748
      %v3750 = vpop.f32.mrf.mxu0
      %v3751 = vpop.f32.mrf.mxu0
      %3752 = vdwg.mxu0
      %3753 = vmatprep.subr.bf16.mxu0 0
      %3754 = vmatpush1.bf16.msra.mxu0 0
      %3755 = vmatprep.subr.bf16.mxu0 0
      %3756 = vmatpush1.bf16.msra.mxu0 0
      %3757 = vmatprep.subr.bf16.mxu0 0
      %3758 = vmatpush1.bf16.msra.mxu0 0
      %3759 = vmatprep.subr.bf16.mxu0 0
      %3760 = vmatpush1.bf16.msra.mxu0 0
      %3761 = vmatprep.subr.bf16.mxu0 0
      %3762 = vmatpush1.bf16.msra.mxu0 0
      %3763 = vmatprep.subr.bf16.mxu0 0
      %3764 = vmatpush1.bf16.msra.mxu0 0
      %3765 = vmatprep.subr.bf16.mxu0 0
      %3766 = vmatpush1.bf16.msra.mxu0 0
      %3767 = vmatprep.subr.bf16.mxu0 0
      %3768 = vmatpush1.bf16.msra.mxu0 %v3710
      %3769 = vmatprep.subr.bf16.mxu0 0
      %3770 = vmatpush2.bf16.msra.mxu0 0
      %3771 = vmatprep.subr.bf16.mxu0 0
      %3772 = vmatpush2.bf16.msra.mxu0 0
      %3773 = vmatprep.subr.bf16.mxu0 0
      %3774 = vmatpush2.bf16.msra.mxu0 0
      %3775 = vmatprep.subr.bf16.mxu0 0
      %3776 = vmatpush2.bf16.msra.mxu0 0
      %3777 = vmatprep.subr.bf16.mxu0 0
      %3778 = vmatpush2.bf16.msra.mxu0 0
      %3779 = vmatprep.subr.bf16.mxu0 0
      %3780 = vmatpush2.bf16.msra.mxu0 0
      %3781 = vmatprep.subr.bf16.mxu0 0
      %3782 = vmatpush2.bf16.msra.mxu0 0
      %3783 = vmatprep.subr.bf16.mxu0 0
      %3784 = vmatpush2.bf16.msra.mxu0 0
      %3785 = vmatprep.mubr.bf16.mxu0 0
      %3786 = vmatmul.mubr.bf16.gmra.mxu0 %v3701
      %v3787 = vpop.f32.mrf.mxu0
      %v3788 = vadd.f32 0.0, %v3787
      %v3789 = vpop.f32.mrf.mxu0
      %v3790 = vpop.f32.mrf.mxu0
      %v3791 = vpop.f32.mrf.mxu0
      %3792 = vdwg.mxu0
      %v3793 = vadd.f32 %v3664, %v3747
      %v3794 = vadd.f32 %v3665, %v3749
      %v3795 = vadd.f32 %v3666, %v3788
      %3796 = vst [vmem:[#allocation2] sm:$0xff] %v3793
      %3797 = vst [vmem:[#allocation2 + $0x8] sm:$0xff] %v3794
      %3798 = vst [vmem:[#allocation2 + $0x10] sm:$0xff] %v3795
      %v3799 = vld [vmem:[#allocation2] sm:$0xff]
      %v3800 = vld [vmem:[#allocation2 + $0x8] sm:$0xff]
      %v3801 = vld [vmem:[#allocation2 + $0x10] sm:$0xff]
      %s3802 = scalar_lea.vmem %s0, 108
      %v3803 = vld [vmem:[%s3802] sm:$0xf]
      %v3804 = vld [vmem:[%s165] sm:$0xff]
      %v3806 = vcombine.high %v3804, %v3804
      %v3808 = vunpack.c.l.s4 1983009808
      %v3809 = vunpack.c.0.s8 %v3808
      %v3810 = vlaneseq
      %v3811 = vshrl.u32 %v3810, 7
      %v3812 = vsub.s32 %v3809, %v3811
      %v3813 = vrot.slane %v3804, %v3812
      %v3815 = vunpack.c.l.s4 1983009808
      %v3816 = vunpack.c.0.s8 %v3815
      %v3817 = vlaneseq
      %v3818 = vshrl.u32 %v3817, 7
      %v3819 = vsub.s32 %v3816, %v3818
      %v3820 = vrot.slane %v3806, %v3819
      %v3821 = vcombine.high %v3813, %v3813
      %v3822 = vcombine.high %v3820, %v3820
      %3823 = vrot.lane.b32.xlu0 %v3813, 56
      %v3824 = vpop.permute.xlu0 %3823
      %3825 = vrot.lane.b32.xlu0 %v3821, 56
      %v3826 = vpop.permute.xlu0 %3825
      %3827 = vrot.lane.b32.xlu0 %v3820, 56
      %v3828 = vpop.permute.xlu0 %3827
      %3829 = vrot.lane.b32.xlu0 %v3822, 56
      %v3830 = vpop.permute.xlu0 %3829
      %vm3831 = vcmask 457728
      %v3832 = vsel %vm3831, %v3824, %v3826
      %v3833 = vsel %vm3831, %v3826, %v3828
      %v3834 = vsel %vm3831, %v3828, %v3830
      %v3836 = vsel %vm191, %v3803, 0
      %v3839 = vsel %vm195, %v3832, 0
      %v3842 = vsel %vm195, %v3833, 0
      %v3845 = vsel %vm195, %v3834, 0
      %3847 = vmatprep.subr.bf16.mxu0 0
      %3848 = vmatpush1.bf16.msra.mxu0 0
      %3849 = vmatprep.subr.bf16.mxu0 0
      %3850 = vmatpush1.bf16.msra.mxu0 0
      %3851 = vmatprep.subr.bf16.mxu0 0
      %3852 = vmatpush1.bf16.msra.mxu0 0
      %3853 = vmatprep.subr.bf16.mxu0 0
      %3854 = vmatpush1.bf16.msra.mxu0 0
      %3855 = vmatprep.subr.bf16.mxu0 0
      %3856 = vmatpush1.bf16.msra.mxu0 0
      %3857 = vmatprep.subr.bf16.mxu0 0
      %3858 = vmatpush1.bf16.msra.mxu0 0
      %3859 = vmatprep.subr.bf16.mxu0 0
      %3860 = vmatpush1.bf16.msra.mxu0 0
      %3861 = vmatprep.subr.bf16.mxu0 %v3842
      %3862 = vmatpush1.bf16.msra.mxu0 %v3839
      %3863 = vmatprep.subr.bf16.mxu0 0
      %3864 = vmatpush2.bf16.msra.mxu0 0
      %3865 = vmatprep.subr.bf16.mxu0 0
      %3866 = vmatpush2.bf16.msra.mxu0 0
      %3867 = vmatprep.subr.bf16.mxu0 0
      %3868 = vmatpush2.bf16.msra.mxu0 0
      %3869 = vmatprep.subr.bf16.mxu0 0
      %3870 = vmatpush2.bf16.msra.mxu0 0
      %3871 = vmatprep.subr.bf16.mxu0 0
      %3872 = vmatpush2.bf16.msra.mxu0 0
      %3873 = vmatprep.subr.bf16.mxu0 0
      %3874 = vmatpush2.bf16.msra.mxu0 0
      %3875 = vmatprep.subr.bf16.mxu0 0
      %3876 = vmatpush2.bf16.msra.mxu0 0
      %3877 = vmatprep.subr.bf16.mxu0 0
      %3878 = vmatpush2.bf16.msra.mxu0 0
      %3879 = vmatprep.mubr.bf16.mxu0 0
      %3880 = vmatmul.mubr.bf16.gmra.mxu0 %v3836
      %v3881 = vpop.f32.mrf.mxu0
      %v3882 = vadd.f32 0.0, %v3881
      %v3883 = vpop.f32.mrf.mxu0
      %v3884 = vadd.f32 0.0, %v3883
      %v3885 = vpop.f32.mrf.mxu0
      %v3886 = vpop.f32.mrf.mxu0
      %3887 = vdwg.mxu0
      %3888 = vmatprep.subr.bf16.mxu0 0
      %3889 = vmatpush1.bf16.msra.mxu0 0
      %3890 = vmatprep.subr.bf16.mxu0 0
      %3891 = vmatpush1.bf16.msra.mxu0 0
      %3892 = vmatprep.subr.bf16.mxu0 0
      %3893 = vmatpush1.bf16.msra.mxu0 0
      %3894 = vmatprep.subr.bf16.mxu0 0
      %3895 = vmatpush1.bf16.msra.mxu0 0
      %3896 = vmatprep.subr.bf16.mxu0 0
      %3897 = vmatpush1.bf16.msra.mxu0 0
      %3898 = vmatprep.subr.bf16.mxu0 0
      %3899 = vmatpush1.bf16.msra.mxu0 0
      %3900 = vmatprep.subr.bf16.mxu0 0
      %3901 = vmatpush1.bf16.msra.mxu0 0
      %3902 = vmatprep.subr.bf16.mxu0 0
      %3903 = vmatpush1.bf16.msra.mxu0 %v3845
      %3904 = vmatprep.subr.bf16.mxu0 0
      %3905 = vmatpush2.bf16.msra.mxu0 0
      %3906 = vmatprep.subr.bf16.mxu0 0
      %3907 = vmatpush2.bf16.msra.mxu0 0
      %3908 = vmatprep.subr.bf16.mxu0 0
      %3909 = vmatpush2.bf16.msra.mxu0 0
      %3910 = vmatprep.subr.bf16.mxu0 0
      %3911 = vmatpush2.bf16.msra.mxu0 0
      %3912 = vmatprep.subr.bf16.mxu0 0
      %3913 = vmatpush2.bf16.msra.mxu0 0
      %3914 = vmatprep.subr.bf16.mxu0 0
      %3915 = vmatpush2.bf16.msra.mxu0 0
      %3916 = vmatprep.subr.bf16.mxu0 0
      %3917 = vmatpush2.bf16.msra.mxu0 0
      %3918 = vmatprep.subr.bf16.mxu0 0
      %3919 = vmatpush2.bf16.msra.mxu0 0
      %3920 = vmatprep.mubr.bf16.mxu0 0
      %3921 = vmatmul.mubr.bf16.gmra.mxu0 %v3836
      %v3922 = vpop.f32.mrf.mxu0
      %v3923 = vadd.f32 0.0, %v3922
      %v3924 = vpop.f32.mrf.mxu0
      %v3925 = vpop.f32.mrf.mxu0
      %v3926 = vpop.f32.mrf.mxu0
      %3927 = vdwg.mxu0
      %v3928 = vadd.f32 %v3799, %v3882
      %v3929 = vadd.f32 %v3800, %v3884
      %v3930 = vadd.f32 %v3801, %v3923
      %3931 = vst [vmem:[#allocation2] sm:$0xff] %v3928
      %3932 = vst [vmem:[#allocation2 + $0x8] sm:$0xff] %v3929
      %3933 = vst [vmem:[#allocation2 + $0x10] sm:$0xff] %v3930
      %v3934 = vld [vmem:[#allocation2] sm:$0xff]
      %v3935 = vld [vmem:[#allocation2 + $0x8] sm:$0xff]
      %v3936 = vld [vmem:[#allocation2 + $0x10] sm:$0xff]
      %s3937 = scalar_lea.vmem %s0, 112
      %v3938 = vld [vmem:[%s3937] sm:$0xf]
      %v3939 = vld [vmem:[%s165] sm:$0xff]
      %v3941 = vcombine.high %v3939, %v3939
      %v3943 = vunpack.c.l.s4 1983009808
      %v3944 = vunpack.c.0.s8 %v3943
      %v3945 = vlaneseq
      %v3946 = vshrl.u32 %v3945, 7
      %v3947 = vsub.s32 %v3944, %v3946
      %v3948 = vrot.slane %v3939, %v3947
      %v3950 = vunpack.c.l.s4 1983009808
      %v3951 = vunpack.c.0.s8 %v3950
      %v3952 = vlaneseq
      %v3953 = vshrl.u32 %v3952, 7
      %v3954 = vsub.s32 %v3951, %v3953
      %v3955 = vrot.slane %v3941, %v3954
      %v3956 = vcombine.high %v3948, %v3948
      %v3957 = vcombine.high %v3955, %v3955
      %3958 = vrot.lane.b32.xlu0 %v3948, 40
      %v3959 = vpop.permute.xlu0 %3958
      %3960 = vrot.lane.b32.xlu0 %v3956, 40
      %v3961 = vpop.permute.xlu0 %3960
      %3962 = vrot.lane.b32.xlu0 %v3955, 40
      %v3963 = vpop.permute.xlu0 %3962
      %3964 = vrot.lane.b32.xlu0 %v3957, 40
      %v3965 = vpop.permute.xlu0 %3964
      %vm3966 = vcmask 326656
      %v3967 = vsel %vm3966, %v3959, %v3961
      %v3968 = vsel %vm3966, %v3961, %v3963
      %v3969 = vsel %vm3966, %v3963, %v3965
      %v3971 = vsel %vm191, %v3938, 0
      %v3974 = vsel %vm195, %v3967, 0
      %v3977 = vsel %vm195, %v3968, 0
      %v3980 = vsel %vm195, %v3969, 0
      %3982 = vmatprep.subr.bf16.mxu0 0
      %3983 = vmatpush1.bf16.msra.mxu0 0
      %3984 = vmatprep.subr.bf16.mxu0 0
      %3985 = vmatpush1.bf16.msra.mxu0 0
      %3986 = vmatprep.subr.bf16.mxu0 0
      %3987 = vmatpush1.bf16.msra.mxu0 0
      %3988 = vmatprep.subr.bf16.mxu0 0
      %3989 = vmatpush1.bf16.msra.mxu0 0
      %3990 = vmatprep.subr.bf16.mxu0 0
      %3991 = vmatpush1.bf16.msra.mxu0 0
      %3992 = vmatprep.subr.bf16.mxu0 0
      %3993 = vmatpush1.bf16.msra.mxu0 0
      %3994 = vmatprep.subr.bf16.mxu0 0
      %3995 = vmatpush1.bf16.msra.mxu0 0
      %3996 = vmatprep.subr.bf16.mxu0 %v3977
      %3997 = vmatpush1.bf16.msra.mxu0 %v3974
      %3998 = vmatprep.subr.bf16.mxu0 0
      %3999 = vmatpush2.bf16.msra.mxu0 0
      %4000 = vmatprep.subr.bf16.mxu0 0
      %4001 = vmatpush2.bf16.msra.mxu0 0
      %4002 = vmatprep.subr.bf16.mxu0 0
      %4003 = vmatpush2.bf16.msra.mxu0 0
      %4004 = vmatprep.subr.bf16.mxu0 0
      %4005 = vmatpush2.bf16.msra.mxu0 0
      %4006 = vmatprep.subr.bf16.mxu0 0
      %4007 = vmatpush2.bf16.msra.mxu0 0
      %4008 = vmatprep.subr.bf16.mxu0 0
      %4009 = vmatpush2.bf16.msra.mxu0 0
      %4010 = vmatprep.subr.bf16.mxu0 0
      %4011 = vmatpush2.bf16.msra.mxu0 0
      %4012 = vmatprep.subr.bf16.mxu0 0
      %4013 = vmatpush2.bf16.msra.mxu0 0
      %4014 = vmatprep.mubr.bf16.mxu0 0
      %4015 = vmatmul.mubr.bf16.gmra.mxu0 %v3971
      %v4016 = vpop.f32.mrf.mxu0
      %v4017 = vadd.f32 0.0, %v4016
      %v4018 = vpop.f32.mrf.mxu0
      %v4019 = vadd.f32 0.0, %v4018
      %v4020 = vpop.f32.mrf.mxu0
      %v4021 = vpop.f32.mrf.mxu0
      %4022 = vdwg.mxu0
      %4023 = vmatprep.subr.bf16.mxu0 0
      %4024 = vmatpush1.bf16.msra.mxu0 0
      %4025 = vmatprep.subr.bf16.mxu0 0
      %4026 = vmatpush1.bf16.msra.mxu0 0
      %4027 = vmatprep.subr.bf16.mxu0 0
      %4028 = vmatpush1.bf16.msra.mxu0 0
      %4029 = vmatprep.subr.bf16.mxu0 0
      %4030 = vmatpush1.bf16.msra.mxu0 0
      %4031 = vmatprep.subr.bf16.mxu0 0
      %4032 = vmatpush1.bf16.msra.mxu0 0
      %4033 = vmatprep.subr.bf16.mxu0 0
      %4034 = vmatpush1.bf16.msra.mxu0 0
      %4035 = vmatprep.subr.bf16.mxu0 0
      %4036 = vmatpush1.bf16.msra.mxu0 0
      %4037 = vmatprep.subr.bf16.mxu0 0
      %4038 = vmatpush1.bf16.msra.mxu0 %v3980
      %4039 = vmatprep.subr.bf16.mxu0 0
      %4040 = vmatpush2.bf16.msra.mxu0 0
      %4041 = vmatprep.subr.bf16.mxu0 0
      %4042 = vmatpush2.bf16.msra.mxu0 0
      %4043 = vmatprep.subr.bf16.mxu0 0
      %4044 = vmatpush2.bf16.msra.mxu0 0
      %4045 = vmatprep.subr.bf16.mxu0 0
      %4046 = vmatpush2.bf16.msra.mxu0 0
      %4047 = vmatprep.subr.bf16.mxu0 0
      %4048 = vmatpush2.bf16.msra.mxu0 0
      %4049 = vmatprep.subr.bf16.mxu0 0
      %4050 = vmatpush2.bf16.msra.mxu0 0
      %4051 = vmatprep.subr.bf16.mxu0 0
      %4052 = vmatpush2.bf16.msra.mxu0 0
      %4053 = vmatprep.subr.bf16.mxu0 0
      %4054 = vmatpush2.bf16.msra.mxu0 0
      %4055 = vmatprep.mubr.bf16.mxu0 0
      %4056 = vmatmul.mubr.bf16.gmra.mxu0 %v3971
      %v4057 = vpop.f32.mrf.mxu0
      %v4058 = vadd.f32 0.0, %v4057
      %v4059 = vpop.f32.mrf.mxu0
      %v4060 = vpop.f32.mrf.mxu0
      %v4061 = vpop.f32.mrf.mxu0
      %4062 = vdwg.mxu0
      %v4063 = vadd.f32 %v3934, %v4017
      %v4064 = vadd.f32 %v3935, %v4019
      %v4065 = vadd.f32 %v3936, %v4058
      %4066 = vst [vmem:[#allocation2] sm:$0xff] %v4063
      %4067 = vst [vmem:[#allocation2 + $0x8] sm:$0xff] %v4064
      %4068 = vst [vmem:[#allocation2 + $0x10] sm:$0xff] %v4065
      %v4069 = vld [vmem:[#allocation2] sm:$0xff]
      %v4070 = vld [vmem:[#allocation2 + $0x8] sm:$0xff]
      %v4071 = vld [vmem:[#allocation2 + $0x10] sm:$0xff]
      %s4072 = scalar_lea.vmem %s0, 116
      %v4073 = vld [vmem:[%s4072] sm:$0xf]
      %v4074 = vld [vmem:[%s165] sm:$0xff]
      %v4076 = vcombine.high %v4074, %v4074
      %v4078 = vunpack.c.l.s4 1983009808
      %v4079 = vunpack.c.0.s8 %v4078
      %v4080 = vlaneseq
      %v4081 = vshrl.u32 %v4080, 7
      %v4082 = vsub.s32 %v4079, %v4081
      %v4083 = vrot.slane %v4074, %v4082
      %v4085 = vunpack.c.l.s4 1983009808
      %v4086 = vunpack.c.0.s8 %v4085
      %v4087 = vlaneseq
      %v4088 = vshrl.u32 %v4087, 7
      %v4089 = vsub.s32 %v4086, %v4088
      %v4090 = vrot.slane %v4076, %v4089
      %v4091 = vcombine.high %v4083, %v4083
      %v4092 = vcombine.high %v4090, %v4090
      %4093 = vrot.lane.b32.xlu0 %v4083, 39
      %v4094 = vpop.permute.xlu0 %4093
      %4095 = vrot.lane.b32.xlu0 %v4091, 39
      %v4096 = vpop.permute.xlu0 %4095
      %4097 = vrot.lane.b32.xlu0 %v4090, 39
      %v4098 = vpop.permute.xlu0 %4097
      %4099 = vrot.lane.b32.xlu0 %v4092, 39
      %v4100 = vpop.permute.xlu0 %4099
      %vm4101 = vcmask 318464
      %v4102 = vsel %vm4101, %v4094, %v4096
      %v4103 = vsel %vm4101, %v4096, %v4098
      %v4104 = vsel %vm4101, %v4098, %v4100
      %v4106 = vsel %vm191, %v4073, 0
      %v4109 = vsel %vm195, %v4102, 0
      %v4112 = vsel %vm195, %v4103, 0
      %v4115 = vsel %vm195, %v4104, 0
      %4117 = vmatprep.subr.bf16.mxu0 0
      %4118 = vmatpush1.bf16.msra.mxu0 0
      %4119 = vmatprep.subr.bf16.mxu0 0
      %4120 = vmatpush1.bf16.msra.mxu0 0
      %4121 = vmatprep.subr.bf16.mxu0 0
      %4122 = vmatpush1.bf16.msra.mxu0 0
      %4123 = vmatprep.subr.bf16.mxu0 0
      %4124 = vmatpush1.bf16.msra.mxu0 0
      %4125 = vmatprep.subr.bf16.mxu0 0
      %4126 = vmatpush1.bf16.msra.mxu0 0
      %4127 = vmatprep.subr.bf16.mxu0 0
      %4128 = vmatpush1.bf16.msra.mxu0 0
      %4129 = vmatprep.subr.bf16.mxu0 0
      %4130 = vmatpush1.bf16.msra.mxu0 0
      %4131 = vmatprep.subr.bf16.mxu0 %v4112
      %4132 = vmatpush1.bf16.msra.mxu0 %v4109
      %4133 = vmatprep.subr.bf16.mxu0 0
      %4134 = vmatpush2.bf16.msra.mxu0 0
      %4135 = vmatprep.subr.bf16.mxu0 0
      %4136 = vmatpush2.bf16.msra.mxu0 0
      %4137 = vmatprep.subr.bf16.mxu0 0
      %4138 = vmatpush2.bf16.msra.mxu0 0
      %4139 = vmatprep.subr.bf16.mxu0 0
      %4140 = vmatpush2.bf16.msra.mxu0 0
      %4141 = vmatprep.subr.bf16.mxu0 0
      %4142 = vmatpush2.bf16.msra.mxu0 0
      %4143 = vmatprep.subr.bf16.mxu0 0
      %4144 = vmatpush2.bf16.msra.mxu0 0
      %4145 = vmatprep.subr.bf16.mxu0 0
      %4146 = vmatpush2.bf16.msra.mxu0 0
      %4147 = vmatprep.subr.bf16.mxu0 0
      %4148 = vmatpush2.bf16.msra.mxu0 0
      %4149 = vmatprep.mubr.bf16.mxu0 0
      %4150 = vmatmul.mubr.bf16.gmra.mxu0 %v4106
      %v4151 = vpop.f32.mrf.mxu0
      %v4152 = vadd.f32 0.0, %v4151
      %v4153 = vpop.f32.mrf.mxu0
      %v4154 = vadd.f32 0.0, %v4153
      %v4155 = vpop.f32.mrf.mxu0
      %v4156 = vpop.f32.mrf.mxu0
      %4157 = vdwg.mxu0
      %4158 = vmatprep.subr.bf16.mxu0 0
      %4159 = vmatpush1.bf16.msra.mxu0 0
      %4160 = vmatprep.subr.bf16.mxu0 0
      %4161 = vmatpush1.bf16.msra.mxu0 0
      %4162 = vmatprep.subr.bf16.mxu0 0
      %4163 = vmatpush1.bf16.msra.mxu0 0
      %4164 = vmatprep.subr.bf16.mxu0 0
      %4165 = vmatpush1.bf16.msra.mxu0 0
      %4166 = vmatprep.subr.bf16.mxu0 0
      %4167 = vmatpush1.bf16.msra.mxu0 0
      %4168 = vmatprep.subr.bf16.mxu0 0
      %4169 = vmatpush1.bf16.msra.mxu0 0
      %4170 = vmatprep.subr.bf16.mxu0 0
      %4171 = vmatpush1.bf16.msra.mxu0 0
      %4172 = vmatprep.subr.bf16.mxu0 0
      %4173 = vmatpush1.bf16.msra.mxu0 %v4115
      %4174 = vmatprep.subr.bf16.mxu0 0
      %4175 = vmatpush2.bf16.msra.mxu0 0
      %4176 = vmatprep.subr.bf16.mxu0 0
      %4177 = vmatpush2.bf16.msra.mxu0 0
      %4178 = vmatprep.subr.bf16.mxu0 0
      %4179 = vmatpush2.bf16.msra.mxu0 0
      %4180 = vmatprep.subr.bf16.mxu0 0
      %4181 = vmatpush2.bf16.msra.mxu0 0
      %4182 = vmatprep.subr.bf16.mxu0 0
      %4183 = vmatpush2.bf16.msra.mxu0 0
      %4184 = vmatprep.subr.bf16.mxu0 0
      %4185 = vmatpush2.bf16.msra.mxu0 0
      %4186 = vmatprep.subr.bf16.mxu0 0
      %4187 = vmatpush2.bf16.msra.mxu0 0
      %4188 = vmatprep.subr.bf16.mxu0 0
      %4189 = vmatpush2.bf16.msra.mxu0 0
      %4190 = vmatprep.mubr.bf16.mxu0 0
      %4191 = vmatmul.mubr.bf16.gmra.mxu0 %v4106
      %v4192 = vpop.f32.mrf.mxu0
      %v4193 = vadd.f32 0.0, %v4192
      %v4194 = vpop.f32.mrf.mxu0
      %v4195 = vpop.f32.mrf.mxu0
      %v4196 = vpop.f32.mrf.mxu0
      %4197 = vdwg.mxu0
      %v4198 = vadd.f32 %v4069, %v4152
      %v4199 = vadd.f32 %v4070, %v4154
      %v4200 = vadd.f32 %v4071, %v4193
      %4201 = vst [vmem:[#allocation2] sm:$0xff] %v4198
      %4202 = vst [vmem:[#allocation2 + $0x8] sm:$0xff] %v4199
      %4203 = vst [vmem:[#allocation2 + $0x10] sm:$0xff] %v4200
      %v4204 = vld [vmem:[#allocation2] sm:$0xff]
      %v4205 = vld [vmem:[#allocation2 + $0x8] sm:$0xff]
      %v4206 = vld [vmem:[#allocation2 + $0x10] sm:$0xff]
      %s4207 = scalar_lea.vmem %s0, 120
      %v4208 = vld [vmem:[%s4207] sm:$0xf]
      %v4209 = vld [vmem:[%s165] sm:$0xff]
      %v4211 = vcombine.high %v4209, %v4209
      %v4213 = vunpack.c.l.s4 1983009808
      %v4214 = vunpack.c.0.s8 %v4213
      %v4215 = vlaneseq
      %v4216 = vshrl.u32 %v4215, 7
      %v4217 = vsub.s32 %v4214, %v4216
      %v4218 = vrot.slane %v4209, %v4217
      %v4220 = vunpack.c.l.s4 1983009808
      %v4221 = vunpack.c.0.s8 %v4220
      %v4222 = vlaneseq
      %v4223 = vshrl.u32 %v4222, 7
      %v4224 = vsub.s32 %v4221, %v4223
      %v4225 = vrot.slane %v4211, %v4224
      %v4226 = vcombine.high %v4218, %v4218
      %v4227 = vcombine.high %v4225, %v4225
      %4228 = vrot.lane.b32.xlu0 %v4218, 38
      %v4229 = vpop.permute.xlu0 %4228
      %4230 = vrot.lane.b32.xlu0 %v4226, 38
      %v4231 = vpop.permute.xlu0 %4230
      %4232 = vrot.lane.b32.xlu0 %v4225, 38
      %v4233 = vpop.permute.xlu0 %4232
      %4234 = vrot.lane.b32.xlu0 %v4227, 38
      %v4235 = vpop.permute.xlu0 %4234
      %vm4236 = vcmask 310272
      %v4237 = vsel %vm4236, %v4229, %v4231
      %v4238 = vsel %vm4236, %v4231, %v4233
      %v4239 = vsel %vm4236, %v4233, %v4235
      %v4241 = vsel %vm191, %v4208, 0
      %v4244 = vsel %vm195, %v4237, 0
      %v4247 = vsel %vm195, %v4238, 0
      %v4250 = vsel %vm195, %v4239, 0
      %4252 = vmatprep.subr.bf16.mxu0 0
      %4253 = vmatpush1.bf16.msra.mxu0 0
      %4254 = vmatprep.subr.bf16.mxu0 0
      %4255 = vmatpush1.bf16.msra.mxu0 0
      %4256 = vmatprep.subr.bf16.mxu0 0
      %4257 = vmatpush1.bf16.msra.mxu0 0
      %4258 = vmatprep.subr.bf16.mxu0 0
      %4259 = vmatpush1.bf16.msra.mxu0 0
      %4260 = vmatprep.subr.bf16.mxu0 0
      %4261 = vmatpush1.bf16.msra.mxu0 0
      %4262 = vmatprep.subr.bf16.mxu0 0
      %4263 = vmatpush1.bf16.msra.mxu0 0
      %4264 = vmatprep.subr.bf16.mxu0 0
      %4265 = vmatpush1.bf16.msra.mxu0 0
      %4266 = vmatprep.subr.bf16.mxu0 %v4247
      %4267 = vmatpush1.bf16.msra.mxu0 %v4244
      %4268 = vmatprep.subr.bf16.mxu0 0
      %4269 = vmatpush2.bf16.msra.mxu0 0
      %4270 = vmatprep.subr.bf16.mxu0 0
      %4271 = vmatpush2.bf16.msra.mxu0 0
      %4272 = vmatprep.subr.bf16.mxu0 0
      %4273 = vmatpush2.bf16.msra.mxu0 0
      %4274 = vmatprep.subr.bf16.mxu0 0
      %4275 = vmatpush2.bf16.msra.mxu0 0
      %4276 = vmatprep.subr.bf16.mxu0 0
      %4277 = vmatpush2.bf16.msra.mxu0 0
      %4278 = vmatprep.subr.bf16.mxu0 0
      %4279 = vmatpush2.bf16.msra.mxu0 0
      %4280 = vmatprep.subr.bf16.mxu0 0
      %4281 = vmatpush2.bf16.msra.mxu0 0
      %4282 = vmatprep.subr.bf16.mxu0 0
      %4283 = vmatpush2.bf16.msra.mxu0 0
      %4284 = vmatprep.mubr.bf16.mxu0 0
      %4285 = vmatmul.mubr.bf16.gmra.mxu0 %v4241
      %v4286 = vpop.f32.mrf.mxu0
      %v4287 = vadd.f32 0.0, %v4286
      %v4288 = vpop.f32.mrf.mxu0
      %v4289 = vadd.f32 0.0, %v4288
      %v4290 = vpop.f32.mrf.mxu0
      %v4291 = vpop.f32.mrf.mxu0
      %4292 = vdwg.mxu0
      %4293 = vmatprep.subr.bf16.mxu0 0
      %4294 = vmatpush1.bf16.msra.mxu0 0
      %4295 = vmatprep.subr.bf16.mxu0 0
      %4296 = vmatpush1.bf16.msra.mxu0 0
      %4297 = vmatprep.subr.bf16.mxu0 0
      %4298 = vmatpush1.bf16.msra.mxu0 0
      %4299 = vmatprep.subr.bf16.mxu0 0
      %4300 = vmatpush1.bf16.msra.mxu0 0
      %4301 = vmatprep.subr.bf16.mxu0 0
      %4302 = vmatpush1.bf16.msra.mxu0 0
      %4303 = vmatprep.subr.bf16.mxu0 0
      %4304 = vmatpush1.bf16.msra.mxu0 0
      %4305 = vmatprep.subr.bf16.mxu0 0
      %4306 = vmatpush1.bf16.msra.mxu0 0
      %4307 = vmatprep.subr.bf16.mxu0 0
      %4308 = vmatpush1.bf16.msra.mxu0 %v4250
      %4309 = vmatprep.subr.bf16.mxu0 0
      %4310 = vmatpush2.bf16.msra.mxu0 0
      %4311 = vmatprep.subr.bf16.mxu0 0
      %4312 = vmatpush2.bf16.msra.mxu0 0
      %4313 = vmatprep.subr.bf16.mxu0 0
      %4314 = vmatpush2.bf16.msra.mxu0 0
      %4315 = vmatprep.subr.bf16.mxu0 0
      %4316 = vmatpush2.bf16.msra.mxu0 0
      %4317 = vmatprep.subr.bf16.mxu0 0
      %4318 = vmatpush2.bf16.msra.mxu0 0
      %4319 = vmatprep.subr.bf16.mxu0 0
      %4320 = vmatpush2.bf16.msra.mxu0 0
      %4321 = vmatprep.subr.bf16.mxu0 0
      %4322 = vmatpush2.bf16.msra.mxu0 0
      %4323 = vmatprep.subr.bf16.mxu0 0
      %4324 = vmatpush2.bf16.msra.mxu0 0
      %4325 = vmatprep.mubr.bf16.mxu0 0
      %4326 = vmatmul.mubr.bf16.gmra.mxu0 %v4241
      %v4327 = vpop.f32.mrf.mxu0
      %v4328 = vadd.f32 0.0, %v4327
      %v4329 = vpop.f32.mrf.mxu0
      %v4330 = vpop.f32.mrf.mxu0
      %v4331 = vpop.f32.mrf.mxu0
      %4332 = vdwg.mxu0
      %v4333 = vadd.f32 %v4204, %v4287
      %v4334 = vadd.f32 %v4205, %v4289
      %v4335 = vadd.f32 %v4206, %v4328
      %4336 = vst [vmem:[#allocation2] sm:$0xff] %v4333
      %4337 = vst [vmem:[#allocation2 + $0x8] sm:$0xff] %v4334
      %4338 = vst [vmem:[#allocation2 + $0x10] sm:$0xff] %v4335
      %v4339 = vld [vmem:[#allocation2] sm:$0xff]
      %v4340 = vld [vmem:[#allocation2 + $0x8] sm:$0xff]
      %v4341 = vld [vmem:[#allocation2 + $0x10] sm:$0xff]
      %s4342 = scalar_lea.vmem %s0, 124
      %v4343 = vld [vmem:[%s4342] sm:$0xf]
      %v4344 = vld [vmem:[%s165] sm:$0xff]
      %v4346 = vcombine.high %v4344, %v4344
      %v4348 = vunpack.c.l.s4 1983009808
      %v4349 = vunpack.c.0.s8 %v4348
      %v4350 = vlaneseq
      %v4351 = vshrl.u32 %v4350, 7
      %v4352 = vsub.s32 %v4349, %v4351
      %v4353 = vrot.slane %v4344, %v4352
      %v4355 = vunpack.c.l.s4 1983009808
      %v4356 = vunpack.c.0.s8 %v4355
      %v4357 = vlaneseq
      %v4358 = vshrl.u32 %v4357, 7
      %v4359 = vsub.s32 %v4356, %v4358
      %v4360 = vrot.slane %v4346, %v4359
      %v4361 = vcombine.high %v4353, %v4353
      %v4362 = vcombine.high %v4360, %v4360
      %4363 = vrot.lane.b32.xlu0 %v4353, 37
      %v4364 = vpop.permute.xlu0 %4363
      %4365 = vrot.lane.b32.xlu0 %v4361, 37
      %v4366 = vpop.permute.xlu0 %4365
      %4367 = vrot.lane.b32.xlu0 %v4360, 37
      %v4368 = vpop.permute.xlu0 %4367
      %4369 = vrot.lane.b32.xlu0 %v4362, 37
      %v4370 = vpop.permute.xlu0 %4369
      %vm4371 = vcmask 302080
      %v4372 = vsel %vm4371, %v4364, %v4366
      %v4373 = vsel %vm4371, %v4366, %v4368
      %v4374 = vsel %vm4371, %v4368, %v4370
      %v4376 = vsel %vm191, %v4343, 0
      %v4379 = vsel %vm195, %v4372, 0
      %v4382 = vsel %vm195, %v4373, 0
      %v4385 = vsel %vm195, %v4374, 0
      %4387 = vmatprep.subr.bf16.mxu0 0
      %4388 = vmatpush1.bf16.msra.mxu0 0
      %4389 = vmatprep.subr.bf16.mxu0 0
      %4390 = vmatpush1.bf16.msra.mxu0 0
      %4391 = vmatprep.subr.bf16.mxu0 0
      %4392 = vmatpush1.bf16.msra.mxu0 0
      %4393 = vmatprep.subr.bf16.mxu0 0
      %4394 = vmatpush1.bf16.msra.mxu0 0
      %4395 = vmatprep.subr.bf16.mxu0 0
      %4396 = vmatpush1.bf16.msra.mxu0 0
      %4397 = vmatprep.subr.bf16.mxu0 0
      %4398 = vmatpush1.bf16.msra.mxu0 0
      %4399 = vmatprep.subr.bf16.mxu0 0
      %4400 = vmatpush1.bf16.msra.mxu0 0
      %4401 = vmatprep.subr.bf16.mxu0 %v4382
      %4402 = vmatpush1.bf16.msra.mxu0 %v4379
      %4403 = vmatprep.subr.bf16.mxu0 0
      %4404 = vmatpush2.bf16.msra.mxu0 0
      %4405 = vmatprep.subr.bf16.mxu0 0
      %4406 = vmatpush2.bf16.msra.mxu0 0
      %4407 = vmatprep.subr.bf16.mxu0 0
      %4408 = vmatpush2.bf16.msra.mxu0 0
      %4409 = vmatprep.subr.bf16.mxu0 0
      %4410 = vmatpush2.bf16.msra.mxu0 0
      %4411 = vmatprep.subr.bf16.mxu0 0
      %4412 = vmatpush2.bf16.msra.mxu0 0
      %4413 = vmatprep.subr.bf16.mxu0 0
      %4414 = vmatpush2.bf16.msra.mxu0 0
      %4415 = vmatprep.subr.bf16.mxu0 0
      %4416 = vmatpush2.bf16.msra.mxu0 0
      %4417 = vmatprep.subr.bf16.mxu0 0
      %4418 = vmatpush2.bf16.msra.mxu0 0
      %4419 = vmatprep.mubr.bf16.mxu0 0
      %4420 = vmatmul.mubr.bf16.gmra.mxu0 %v4376
      %v4421 = vpop.f32.mrf.mxu0
      %v4422 = vadd.f32 0.0, %v4421
      %v4423 = vpop.f32.mrf.mxu0
      %v4424 = vadd.f32 0.0, %v4423
      %v4425 = vpop.f32.mrf.mxu0
      %v4426 = vpop.f32.mrf.mxu0
      %4427 = vdwg.mxu0
      %4428 = vmatprep.subr.bf16.mxu0 0
      %4429 = vmatpush1.bf16.msra.mxu0 0
      %4430 = vmatprep.subr.bf16.mxu0 0
      %4431 = vmatpush1.bf16.msra.mxu0 0
      %4432 = vmatprep.subr.bf16.mxu0 0
      %4433 = vmatpush1.bf16.msra.mxu0 0
      %4434 = vmatprep.subr.bf16.mxu0 0
      %4435 = vmatpush1.bf16.msra.mxu0 0
      %4436 = vmatprep.subr.bf16.mxu0 0
      %4437 = vmatpush1.bf16.msra.mxu0 0
      %4438 = vmatprep.subr.bf16.mxu0 0
      %4439 = vmatpush1.bf16.msra.mxu0 0
      %4440 = vmatprep.subr.bf16.mxu0 0
      %4441 = vmatpush1.bf16.msra.mxu0 0
      %4442 = vmatprep.subr.bf16.mxu0 0
      %4443 = vmatpush1.bf16.msra.mxu0 %v4385
      %4444 = vmatprep.subr.bf16.mxu0 0
      %4445 = vmatpush2.bf16.msra.mxu0 0
      %4446 = vmatprep.subr.bf16.mxu0 0
      %4447 = vmatpush2.bf16.msra.mxu0 0
      %4448 = vmatprep.subr.bf16.mxu0 0
      %4449 = vmatpush2.bf16.msra.mxu0 0
      %4450 = vmatprep.subr.bf16.mxu0 0
      %4451 = vmatpush2.bf16.msra.mxu0 0
      %4452 = vmatprep.subr.bf16.mxu0 0
      %4453 = vmatpush2.bf16.msra.mxu0 0
      %4454 = vmatprep.subr.bf16.mxu0 0
      %4455 = vmatpush2.bf16.msra.mxu0 0
      %4456 = vmatprep.subr.bf16.mxu0 0
      %4457 = vmatpush2.bf16.msra.mxu0 0
      %4458 = vmatprep.subr.bf16.mxu0 0
      %4459 = vmatpush2.bf16.msra.mxu0 0
      %4460 = vmatprep.mubr.bf16.mxu0 0
      %4461 = vmatmul.mubr.bf16.gmra.mxu0 %v4376
      %v4462 = vpop.f32.mrf.mxu0
      %v4463 = vadd.f32 0.0, %v4462
      %v4464 = vpop.f32.mrf.mxu0
      %v4465 = vpop.f32.mrf.mxu0
      %v4466 = vpop.f32.mrf.mxu0
      %4467 = vdwg.mxu0
      %v4468 = vadd.f32 %v4339, %v4422
      %v4469 = vadd.f32 %v4340, %v4424
      %v4470 = vadd.f32 %v4341, %v4463
      %4471 = vst [vmem:[#allocation2] sm:$0xff] %v4468
      %4472 = vst [vmem:[#allocation2 + $0x8] sm:$0xff] %v4469
      %4473 = vst [vmem:[#allocation2 + $0x10] sm:$0xff] %v4470
      %v4474 = vld [vmem:[#allocation2] sm:$0xff]
      %v4475 = vld [vmem:[#allocation2 + $0x8] sm:$0xff]
      %v4476 = vld [vmem:[#allocation2 + $0x10] sm:$0xff]
      %s4477 = scalar_lea.vmem %s0, 128
      %v4478 = vld [vmem:[%s4477] sm:$0xf]
      %v4479 = vld [vmem:[%s165] sm:$0xff]
      %v4481 = vcombine.high %v4479, %v4479
      %v4483 = vunpack.c.l.s4 1983009808
      %v4484 = vunpack.c.0.s8 %v4483
      %v4485 = vlaneseq
      %v4486 = vshrl.u32 %v4485, 7
      %v4487 = vsub.s32 %v4484, %v4486
      %v4488 = vrot.slane %v4479, %v4487
      %v4490 = vunpack.c.l.s4 1983009808
      %v4491 = vunpack.c.0.s8 %v4490
      %v4492 = vlaneseq
      %v4493 = vshrl.u32 %v4492, 7
      %v4494 = vsub.s32 %v4491, %v4493
      %v4495 = vrot.slane %v4481, %v4494
      %v4496 = vcombine.high %v4488, %v4488
      %v4497 = vcombine.high %v4495, %v4495
      %4498 = vrot.lane.b32.xlu0 %v4488, 36
      %v4499 = vpop.permute.xlu0 %4498
      %4500 = vrot.lane.b32.xlu0 %v4496, 36
      %v4501 = vpop.permute.xlu0 %4500
      %4502 = vrot.lane.b32.xlu0 %v4495, 36
      %v4503 = vpop.permute.xlu0 %4502
      %4504 = vrot.lane.b32.xlu0 %v4497, 36
      %v4505 = vpop.permute.xlu0 %4504
      %vm4506 = vcmask 293888
      %v4507 = vsel %vm4506, %v4499, %v4501
      %v4508 = vsel %vm4506, %v4501, %v4503
      %v4509 = vsel %vm4506, %v4503, %v4505
      %v4511 = vsel %vm191, %v4478, 0
      %v4514 = vsel %vm195, %v4507, 0
      %v4517 = vsel %vm195, %v4508, 0
      %v4520 = vsel %vm195, %v4509, 0
      %4522 = vmatprep.subr.bf16.mxu0 0
      %4523 = vmatpush1.bf16.msra.mxu0 0
      %4524 = vmatprep.subr.bf16.mxu0 0
      %4525 = vmatpush1.bf16.msra.mxu0 0
      %4526 = vmatprep.subr.bf16.mxu0 0
      %4527 = vmatpush1.bf16.msra.mxu0 0
      %4528 = vmatprep.subr.bf16.mxu0 0
      %4529 = vmatpush1.bf16.msra.mxu0 0
      %4530 = vmatprep.subr.bf16.mxu0 0
      %4531 = vmatpush1.bf16.msra.mxu0 0
      %4532 = vmatprep.subr.bf16.mxu0 0
      %4533 = vmatpush1.bf16.msra.mxu0 0
      %4534 = vmatprep.subr.bf16.mxu0 0
      %4535 = vmatpush1.bf16.msra.mxu0 0
      %4536 = vmatprep.subr.bf16.mxu0 %v4517
      %4537 = vmatpush1.bf16.msra.mxu0 %v4514
      %4538 = vmatprep.subr.bf16.mxu0 0
      %4539 = vmatpush2.bf16.msra.mxu0 0
      %4540 = vmatprep.subr.bf16.mxu0 0
      %4541 = vmatpush2.bf16.msra.mxu0 0
      %4542 = vmatprep.subr.bf16.mxu0 0
      %4543 = vmatpush2.bf16.msra.mxu0 0
      %4544 = vmatprep.subr.bf16.mxu0 0
      %4545 = vmatpush2.bf16.msra.mxu0 0
      %4546 = vmatprep.subr.bf16.mxu0 0
      %4547 = vmatpush2.bf16.msra.mxu0 0
      %4548 = vmatprep.subr.bf16.mxu0 0
      %4549 = vmatpush2.bf16.msra.mxu0 0
      %4550 = vmatprep.subr.bf16.mxu0 0
      %4551 = vmatpush2.bf16.msra.mxu0 0
      %4552 = vmatprep.subr.bf16.mxu0 0
      %4553 = vmatpush2.bf16.msra.mxu0 0
      %4554 = vmatprep.mubr.bf16.mxu0 0
      %4555 = vmatmul.mubr.bf16.gmra.mxu0 %v4511
      %v4556 = vpop.f32.mrf.mxu0
      %v4557 = vadd.f32 0.0, %v4556
      %v4558 = vpop.f32.mrf.mxu0
      %v4559 = vadd.f32 0.0, %v4558
      %v4560 = vpop.f32.mrf.mxu0
      %v4561 = vpop.f32.mrf.mxu0
      %4562 = vdwg.mxu0
      %4563 = vmatprep.subr.bf16.mxu0 0
      %4564 = vmatpush1.bf16.msra.mxu0 0
      %4565 = vmatprep.subr.bf16.mxu0 0
      %4566 = vmatpush1.bf16.msra.mxu0 0
      %4567 = vmatprep.subr.bf16.mxu0 0
      %4568 = vmatpush1.bf16.msra.mxu0 0
      %4569 = vmatprep.subr.bf16.mxu0 0
      %4570 = vmatpush1.bf16.msra.mxu0 0
      %4571 = vmatprep.subr.bf16.mxu0 0
      %4572 = vmatpush1.bf16.msra.mxu0 0
      %4573 = vmatprep.subr.bf16.mxu0 0
      %4574 = vmatpush1.bf16.msra.mxu0 0
      %4575 = vmatprep.subr.bf16.mxu0 0
      %4576 = vmatpush1.bf16.msra.mxu0 0
      %4577 = vmatprep.subr.bf16.mxu0 0
      %4578 = vmatpush1.bf16.msra.mxu0 %v4520
      %4579 = vmatprep.subr.bf16.mxu0 0
      %4580 = vmatpush2.bf16.msra.mxu0 0
      %4581 = vmatprep.subr.bf16.mxu0 0
      %4582 = vmatpush2.bf16.msra.mxu0 0
      %4583 = vmatprep.subr.bf16.mxu0 0
      %4584 = vmatpush2.bf16.msra.mxu0 0
      %4585 = vmatprep.subr.bf16.mxu0 0
      %4586 = vmatpush2.bf16.msra.mxu0 0
      %4587 = vmatprep.subr.bf16.mxu0 0
      %4588 = vmatpush2.bf16.msra.mxu0 0
      %4589 = vmatprep.subr.bf16.mxu0 0
      %4590 = vmatpush2.bf16.msra.mxu0 0
      %4591 = vmatprep.subr.bf16.mxu0 0
      %4592 = vmatpush2.bf16.msra.mxu0 0
      %4593 = vmatprep.subr.bf16.mxu0 0
      %4594 = vmatpush2.bf16.msra.mxu0 0
      %4595 = vmatprep.mubr.bf16.mxu0 0
      %4596 = vmatmul.mubr.bf16.gmra.mxu0 %v4511
      %v4597 = vpop.f32.mrf.mxu0
      %v4598 = vadd.f32 0.0, %v4597
      %v4599 = vpop.f32.mrf.mxu0
      %v4600 = vpop.f32.mrf.mxu0
      %v4601 = vpop.f32.mrf.mxu0
      %4602 = vdwg.mxu0
      %v4603 = vadd.f32 %v4474, %v4557
      %v4604 = vadd.f32 %v4475, %v4559
      %v4605 = vadd.f32 %v4476, %v4598
      %4606 = vst [vmem:[#allocation2] sm:$0xff] %v4603
      %4607 = vst [vmem:[#allocation2 + $0x8] sm:$0xff] %v4604
      %4608 = vst [vmem:[#allocation2 + $0x10] sm:$0xff] %v4605
      %v4609 = vld [vmem:[#allocation2] sm:$0xff]
      %v4610 = vld [vmem:[#allocation2 + $0x8] sm:$0xff]
      %v4611 = vld [vmem:[#allocation2 + $0x10] sm:$0xff]
      %s4612 = scalar_lea.vmem %s0, 132
      %v4613 = vld [vmem:[%s4612] sm:$0xf]
      %v4614 = vld [vmem:[%s165] sm:$0xff]
      %v4616 = vcombine.high %v4614, %v4614
      %v4618 = vunpack.c.l.s4 1983009808
      %v4619 = vunpack.c.0.s8 %v4618
      %v4620 = vlaneseq
      %v4621 = vshrl.u32 %v4620, 7
      %v4622 = vsub.s32 %v4619, %v4621
      %v4623 = vrot.slane %v4614, %v4622
      %v4625 = vunpack.c.l.s4 1983009808
      %v4626 = vunpack.c.0.s8 %v4625
      %v4627 = vlaneseq
      %v4628 = vshrl.u32 %v4627, 7
      %v4629 = vsub.s32 %v4626, %v4628
      %v4630 = vrot.slane %v4616, %v4629
      %v4631 = vcombine.high %v4623, %v4623
      %v4632 = vcombine.high %v4630, %v4630
      %4633 = vrot.lane.b32.xlu0 %v4623, 35
      %v4634 = vpop.permute.xlu0 %4633
      %4635 = vrot.lane.b32.xlu0 %v4631, 35
      %v4636 = vpop.permute.xlu0 %4635
      %4637 = vrot.lane.b32.xlu0 %v4630, 35
      %v4638 = vpop.permute.xlu0 %4637
      %4639 = vrot.lane.b32.xlu0 %v4632, 35
      %v4640 = vpop.permute.xlu0 %4639
      %vm4641 = vcmask 285696
      %v4642 = vsel %vm4641, %v4634, %v4636
      %v4643 = vsel %vm4641, %v4636, %v4638
      %v4644 = vsel %vm4641, %v4638, %v4640
      %v4646 = vsel %vm191, %v4613, 0
      %v4649 = vsel %vm195, %v4642, 0
      %v4652 = vsel %vm195, %v4643, 0
      %v4655 = vsel %vm195, %v4644, 0
      %4657 = vmatprep.subr.bf16.mxu0 0
      %4658 = vmatpush1.bf16.msra.mxu0 0
      %4659 = vmatprep.subr.bf16.mxu0 0
      %4660 = vmatpush1.bf16.msra.mxu0 0
      %4661 = vmatprep.subr.bf16.mxu0 0
      %4662 = vmatpush1.bf16.msra.mxu0 0
      %4663 = vmatprep.subr.bf16.mxu0 0
      %4664 = vmatpush1.bf16.msra.mxu0 0
      %4665 = vmatprep.subr.bf16.mxu0 0
      %4666 = vmatpush1.bf16.msra.mxu0 0
      %4667 = vmatprep.subr.bf16.mxu0 0
      %4668 = vmatpush1.bf16.msra.mxu0 0
      %4669 = vmatprep.subr.bf16.mxu0 0
      %4670 = vmatpush1.bf16.msra.mxu0 0
      %4671 = vmatprep.subr.bf16.mxu0 %v4652
      %4672 = vmatpush1.bf16.msra.mxu0 %v4649
      %4673 = vmatprep.subr.bf16.mxu0 0
      %4674 = vmatpush2.bf16.msra.mxu0 0
      %4675 = vmatprep.subr.bf16.mxu0 0
      %4676 = vmatpush2.bf16.msra.mxu0 0
      %4677 = vmatprep.subr.bf16.mxu0 0
      %4678 = vmatpush2.bf16.msra.mxu0 0
      %4679 = vmatprep.subr.bf16.mxu0 0
      %4680 = vmatpush2.bf16.msra.mxu0 0
      %4681 = vmatprep.subr.bf16.mxu0 0
      %4682 = vmatpush2.bf16.msra.mxu0 0
      %4683 = vmatprep.subr.bf16.mxu0 0
      %4684 = vmatpush2.bf16.msra.mxu0 0
      %4685 = vmatprep.subr.bf16.mxu0 0
      %4686 = vmatpush2.bf16.msra.mxu0 0
      %4687 = vmatprep.subr.bf16.mxu0 0
      %4688 = vmatpush2.bf16.msra.mxu0 0
      %4689 = vmatprep.mubr.bf16.mxu0 0
      %4690 = vmatmul.mubr.bf16.gmra.mxu0 %v4646
      %v4691 = vpop.f32.mrf.mxu0
      %v4692 = vadd.f32 0.0, %v4691
      %v4693 = vpop.f32.mrf.mxu0
      %v4694 = vadd.f32 0.0, %v4693
      %v4695 = vpop.f32.mrf.mxu0
      %v4696 = vpop.f32.mrf.mxu0
      %4697 = vdwg.mxu0
      %4698 = vmatprep.subr.bf16.mxu0 0
      %4699 = vmatpush1.bf16.msra.mxu0 0
      %4700 = vmatprep.subr.bf16.mxu0 0
      %4701 = vmatpush1.bf16.msra.mxu0 0
      %4702 = vmatprep.subr.bf16.mxu0 0
      %4703 = vmatpush1.bf16.msra.mxu0 0
      %4704 = vmatprep.subr.bf16.mxu0 0
      %4705 = vmatpush1.bf16.msra.mxu0 0
      %4706 = vmatprep.subr.bf16.mxu0 0
      %4707 = vmatpush1.bf16.msra.mxu0 0
      %4708 = vmatprep.subr.bf16.mxu0 0
      %4709 = vmatpush1.bf16.msra.mxu0 0
      %4710 = vmatprep.subr.bf16.mxu0 0
      %4711 = vmatpush1.bf16.msra.mxu0 0
      %4712 = vmatprep.subr.bf16.mxu0 0
      %4713 = vmatpush1.bf16.msra.mxu0 %v4655
      %4714 = vmatprep.subr.bf16.mxu0 0
      %4715 = vmatpush2.bf16.msra.mxu0 0
      %4716 = vmatprep.subr.bf16.mxu0 0
      %4717 = vmatpush2.bf16.msra.mxu0 0
      %4718 = vmatprep.subr.bf16.mxu0 0
      %4719 = vmatpush2.bf16.msra.mxu0 0
      %4720 = vmatprep.subr.bf16.mxu0 0
      %4721 = vmatpush2.bf16.msra.mxu0 0
      %4722 = vmatprep.subr.bf16.mxu0 0
      %4723 = vmatpush2.bf16.msra.mxu0 0
      %4724 = vmatprep.subr.bf16.mxu0 0
      %4725 = vmatpush2.bf16.msra.mxu0 0
      %4726 = vmatprep.subr.bf16.mxu0 0
      %4727 = vmatpush2.bf16.msra.mxu0 0
      %4728 = vmatprep.subr.bf16.mxu0 0
      %4729 = vmatpush2.bf16.msra.mxu0 0
      %4730 = vmatprep.mubr.bf16.mxu0 0
      %4731 = vmatmul.mubr.bf16.gmra.mxu0 %v4646
      %v4732 = vpop.f32.mrf.mxu0
      %v4733 = vadd.f32 0.0, %v4732
      %v4734 = vpop.f32.mrf.mxu0
      %v4735 = vpop.f32.mrf.mxu0
      %v4736 = vpop.f32.mrf.mxu0
      %4737 = vdwg.mxu0
      %v4738 = vadd.f32 %v4609, %v4692
      %v4739 = vadd.f32 %v4610, %v4694
      %v4740 = vadd.f32 %v4611, %v4733
      %4741 = vst [vmem:[#allocation2] sm:$0xff] %v4738
      %4742 = vst [vmem:[#allocation2 + $0x8] sm:$0xff] %v4739
      %4743 = vst [vmem:[#allocation2 + $0x10] sm:$0xff] %v4740
      %v4744 = vld [vmem:[#allocation2] sm:$0xff]
      %v4745 = vld [vmem:[#allocation2 + $0x8] sm:$0xff]
      %v4746 = vld [vmem:[#allocation2 + $0x10] sm:$0xff]
      %s4747 = scalar_lea.vmem %s0, 136
      %v4748 = vld [vmem:[%s4747] sm:$0xf]
      %v4749 = vld [vmem:[%s165] sm:$0xff]
      %v4751 = vcombine.high %v4749, %v4749
      %v4753 = vunpack.c.l.s4 1983009808
      %v4754 = vunpack.c.0.s8 %v4753
      %v4755 = vlaneseq
      %v4756 = vshrl.u32 %v4755, 7
      %v4757 = vsub.s32 %v4754, %v4756
      %v4758 = vrot.slane %v4749, %v4757
      %v4760 = vunpack.c.l.s4 1983009808
      %v4761 = vunpack.c.0.s8 %v4760
      %v4762 = vlaneseq
      %v4763 = vshrl.u32 %v4762, 7
      %v4764 = vsub.s32 %v4761, %v4763
      %v4765 = vrot.slane %v4751, %v4764
      %v4766 = vcombine.high %v4758, %v4758
      %v4767 = vcombine.high %v4765, %v4765
      %4768 = vrot.lane.b32.xlu0 %v4758, 34
      %v4769 = vpop.permute.xlu0 %4768
      %4770 = vrot.lane.b32.xlu0 %v4766, 34
      %v4771 = vpop.permute.xlu0 %4770
      %4772 = vrot.lane.b32.xlu0 %v4765, 34
      %v4773 = vpop.permute.xlu0 %4772
      %4774 = vrot.lane.b32.xlu0 %v4767, 34
      %v4775 = vpop.permute.xlu0 %4774
      %vm4776 = vcmask 277504
      %v4777 = vsel %vm4776, %v4769, %v4771
      %v4778 = vsel %vm4776, %v4771, %v4773
      %v4779 = vsel %vm4776, %v4773, %v4775
      %v4781 = vsel %vm191, %v4748, 0
      %v4784 = vsel %vm195, %v4777, 0
      %v4787 = vsel %vm195, %v4778, 0
      %v4790 = vsel %vm195, %v4779, 0
      %4792 = vmatprep.subr.bf16.mxu0 0
      %4793 = vmatpush1.bf16.msra.mxu0 0
      %4794 = vmatprep.subr.bf16.mxu0 0
      %4795 = vmatpush1.bf16.msra.mxu0 0
      %4796 = vmatprep.subr.bf16.mxu0 0
      %4797 = vmatpush1.bf16.msra.mxu0 0
      %4798 = vmatprep.subr.bf16.mxu0 0
      %4799 = vmatpush1.bf16.msra.mxu0 0
      %4800 = vmatprep.subr.bf16.mxu0 0
      %4801 = vmatpush1.bf16.msra.mxu0 0
      %4802 = vmatprep.subr.bf16.mxu0 0
      %4803 = vmatpush1.bf16.msra.mxu0 0
      %4804 = vmatprep.subr.bf16.mxu0 0
      %4805 = vmatpush1.bf16.msra.mxu0 0
      %4806 = vmatprep.subr.bf16.mxu0 %v4787
      %4807 = vmatpush1.bf16.msra.mxu0 %v4784
      %4808 = vmatprep.subr.bf16.mxu0 0
      %4809 = vmatpush2.bf16.msra.mxu0 0
      %4810 = vmatprep.subr.bf16.mxu0 0
      %4811 = vmatpush2.bf16.msra.mxu0 0
      %4812 = vmatprep.subr.bf16.mxu0 0
      %4813 = vmatpush2.bf16.msra.mxu0 0
      %4814 = vmatprep.subr.bf16.mxu0 0
      %4815 = vmatpush2.bf16.msra.mxu0 0
      %4816 = vmatprep.subr.bf16.mxu0 0
      %4817 = vmatpush2.bf16.msra.mxu0 0
      %4818 = vmatprep.subr.bf16.mxu0 0
      %4819 = vmatpush2.bf16.msra.mxu0 0
      %4820 = vmatprep.subr.bf16.mxu0 0
      %4821 = vmatpush2.bf16.msra.mxu0 0
      %4822 = vmatprep.subr.bf16.mxu0 0
      %4823 = vmatpush2.bf16.msra.mxu0 0
      %4824 = vmatprep.mubr.bf16.mxu0 0
      %4825 = vmatmul.mubr.bf16.gmra.mxu0 %v4781
      %v4826 = vpop.f32.mrf.mxu0
      %v4827 = vadd.f32 0.0, %v4826
      %v4828 = vpop.f32.mrf.mxu0
      %v4829 = vadd.f32 0.0, %v4828
      %v4830 = vpop.f32.mrf.mxu0
      %v4831 = vpop.f32.mrf.mxu0
      %4832 = vdwg.mxu0
      %4833 = vmatprep.subr.bf16.mxu0 0
      %4834 = vmatpush1.bf16.msra.mxu0 0
      %4835 = vmatprep.subr.bf16.mxu0 0
      %4836 = vmatpush1.bf16.msra.mxu0 0
      %4837 = vmatprep.subr.bf16.mxu0 0
      %4838 = vmatpush1.bf16.msra.mxu0 0
      %4839 = vmatprep.subr.bf16.mxu0 0
      %4840 = vmatpush1.bf16.msra.mxu0 0
      %4841 = vmatprep.subr.bf16.mxu0 0
      %4842 = vmatpush1.bf16.msra.mxu0 0
      %4843 = vmatprep.subr.bf16.mxu0 0
      %4844 = vmatpush1.bf16.msra.mxu0 0
      %4845 = vmatprep.subr.bf16.mxu0 0
      %4846 = vmatpush1.bf16.msra.mxu0 0
      %4847 = vmatprep.subr.bf16.mxu0 0
      %4848 = vmatpush1.bf16.msra.mxu0 %v4790
      %4849 = vmatprep.subr.bf16.mxu0 0
      %4850 = vmatpush2.bf16.msra.mxu0 0
      %4851 = vmatprep.subr.bf16.mxu0 0
      %4852 = vmatpush2.bf16.msra.mxu0 0
      %4853 = vmatprep.subr.bf16.mxu0 0
      %4854 = vmatpush2.bf16.msra.mxu0 0
      %4855 = vmatprep.subr.bf16.mxu0 0
      %4856 = vmatpush2.bf16.msra.mxu0 0
      %4857 = vmatprep.subr.bf16.mxu0 0
      %4858 = vmatpush2.bf16.msra.mxu0 0
      %4859 = vmatprep.subr.bf16.mxu0 0
      %4860 = vmatpush2.bf16.msra.mxu0 0
      %4861 = vmatprep.subr.bf16.mxu0 0
      %4862 = vmatpush2.bf16.msra.mxu0 0
      %4863 = vmatprep.subr.bf16.mxu0 0
      %4864 = vmatpush2.bf16.msra.mxu0 0
      %4865 = vmatprep.mubr.bf16.mxu0 0
      %4866 = vmatmul.mubr.bf16.gmra.mxu0 %v4781
      %v4867 = vpop.f32.mrf.mxu0
      %v4868 = vadd.f32 0.0, %v4867
      %v4869 = vpop.f32.mrf.mxu0
      %v4870 = vpop.f32.mrf.mxu0
      %v4871 = vpop.f32.mrf.mxu0
      %4872 = vdwg.mxu0
      %v4873 = vadd.f32 %v4744, %v4827
      %v4874 = vadd.f32 %v4745, %v4829
      %v4875 = vadd.f32 %v4746, %v4868
      %4876 = vst [vmem:[#allocation2] sm:$0xff] %v4873
      %4877 = vst [vmem:[#allocation2 + $0x8] sm:$0xff] %v4874
      %4878 = vst [vmem:[#allocation2 + $0x10] sm:$0xff] %v4875
      %v4879 = vld [vmem:[#allocation2] sm:$0xff]
      %v4880 = vld [vmem:[#allocation2 + $0x8] sm:$0xff]
      %v4881 = vld [vmem:[#allocation2 + $0x10] sm:$0xff]
      %s4882 = scalar_lea.vmem %s0, 140
      %v4883 = vld [vmem:[%s4882] sm:$0xf]
      %v4884 = vld [vmem:[%s165] sm:$0xff]
      %v4886 = vcombine.high %v4884, %v4884
      %v4888 = vunpack.c.l.s4 1983009808
      %v4889 = vunpack.c.0.s8 %v4888
      %v4890 = vlaneseq
      %v4891 = vshrl.u32 %v4890, 7
      %v4892 = vsub.s32 %v4889, %v4891
      %v4893 = vrot.slane %v4884, %v4892
      %v4895 = vunpack.c.l.s4 1983009808
      %v4896 = vunpack.c.0.s8 %v4895
      %v4897 = vlaneseq
      %v4898 = vshrl.u32 %v4897, 7
      %v4899 = vsub.s32 %v4896, %v4898
      %v4900 = vrot.slane %v4886, %v4899
      %v4901 = vcombine.high %v4893, %v4893
      %v4902 = vcombine.high %v4900, %v4900
      %4903 = vrot.lane.b32.xlu0 %v4893, 18
      %v4904 = vpop.permute.xlu0 %4903
      %4905 = vrot.lane.b32.xlu0 %v4901, 18
      %v4906 = vpop.permute.xlu0 %4905
      %4907 = vrot.lane.b32.xlu0 %v4900, 18
      %v4908 = vpop.permute.xlu0 %4907
      %4909 = vrot.lane.b32.xlu0 %v4902, 18
      %v4910 = vpop.permute.xlu0 %4909
      %vm4911 = vcmask 146432
      %v4912 = vsel %vm4911, %v4904, %v4906
      %v4913 = vsel %vm4911, %v4906, %v4908
      %v4914 = vsel %vm4911, %v4908, %v4910
      %v4916 = vsel %vm191, %v4883, 0
      %v4919 = vsel %vm195, %v4912, 0
      %v4922 = vsel %vm195, %v4913, 0
      %v4925 = vsel %vm195, %v4914, 0
      %4927 = vmatprep.subr.bf16.mxu0 0
      %4928 = vmatpush1.bf16.msra.mxu0 0
      %4929 = vmatprep.subr.bf16.mxu0 0
      %4930 = vmatpush1.bf16.msra.mxu0 0
      %4931 = vmatprep.subr.bf16.mxu0 0
      %4932 = vmatpush1.bf16.msra.mxu0 0
      %4933 = vmatprep.subr.bf16.mxu0 0
      %4934 = vmatpush1.bf16.msra.mxu0 0
      %4935 = vmatprep.subr.bf16.mxu0 0
      %4936 = vmatpush1.bf16.msra.mxu0 0
      %4937 = vmatprep.subr.bf16.mxu0 0
      %4938 = vmatpush1.bf16.msra.mxu0 0
      %4939 = vmatprep.subr.bf16.mxu0 0
      %4940 = vmatpush1.bf16.msra.mxu0 0
      %4941 = vmatprep.subr.bf16.mxu0 %v4922
      %4942 = vmatpush1.bf16.msra.mxu0 %v4919
      %4943 = vmatprep.subr.bf16.mxu0 0
      %4944 = vmatpush2.bf16.msra.mxu0 0
      %4945 = vmatprep.subr.bf16.mxu0 0
      %4946 = vmatpush2.bf16.msra.mxu0 0
      %4947 = vmatprep.subr.bf16.mxu0 0
      %4948 = vmatpush2.bf16.msra.mxu0 0
      %4949 = vmatprep.subr.bf16.mxu0 0
      %4950 = vmatpush2.bf16.msra.mxu0 0
      %4951 = vmatprep.subr.bf16.mxu0 0
      %4952 = vmatpush2.bf16.msra.mxu0 0
      %4953 = vmatprep.subr.bf16.mxu0 0
      %4954 = vmatpush2.bf16.msra.mxu0 0
      %4955 = vmatprep.subr.bf16.mxu0 0
      %4956 = vmatpush2.bf16.msra.mxu0 0
      %4957 = vmatprep.subr.bf16.mxu0 0
      %4958 = vmatpush2.bf16.msra.mxu0 0
      %4959 = vmatprep.mubr.bf16.mxu0 0
      %4960 = vmatmul.mubr.bf16.gmra.mxu0 %v4916
      %v4961 = vpop.f32.mrf.mxu0
      %v4962 = vadd.f32 0.0, %v4961
      %v4963 = vpop.f32.mrf.mxu0
      %v4964 = vadd.f32 0.0, %v4963
      %v4965 = vpop.f32.mrf.mxu0
      %v4966 = vpop.f32.mrf.mxu0
      %4967 = vdwg.mxu0
      %4968 = vmatprep.subr.bf16.mxu0 0
      %4969 = vmatpush1.bf16.msra.mxu0 0
      %4970 = vmatprep.subr.bf16.mxu0 0
      %4971 = vmatpush1.bf16.msra.mxu0 0
      %4972 = vmatprep.subr.bf16.mxu0 0
      %4973 = vmatpush1.bf16.msra.mxu0 0
      %4974 = vmatprep.subr.bf16.mxu0 0
      %4975 = vmatpush1.bf16.msra.mxu0 0
      %4976 = vmatprep.subr.bf16.mxu0 0
      %4977 = vmatpush1.bf16.msra.mxu0 0
      %4978 = vmatprep.subr.bf16.mxu0 0
      %4979 = vmatpush1.bf16.msra.mxu0 0
      %4980 = vmatprep.subr.bf16.mxu0 0
      %4981 = vmatpush1.bf16.msra.mxu0 0
      %4982 = vmatprep.subr.bf16.mxu0 0
      %4983 = vmatpush1.bf16.msra.mxu0 %v4925
      %4984 = vmatprep.subr.bf16.mxu0 0
      %4985 = vmatpush2.bf16.msra.mxu0 0
      %4986 = vmatprep.subr.bf16.mxu0 0
      %4987 = vmatpush2.bf16.msra.mxu0 0
      %4988 = vmatprep.subr.bf16.mxu0 0
      %4989 = vmatpush2.bf16.msra.mxu0 0
      %4990 = vmatprep.subr.bf16.mxu0 0
      %4991 = vmatpush2.bf16.msra.mxu0 0
      %4992 = vmatprep.subr.bf16.mxu0 0
      %4993 = vmatpush2.bf16.msra.mxu0 0
      %4994 = vmatprep.subr.bf16.mxu0 0
      %4995 = vmatpush2.bf16.msra.mxu0 0
      %4996 = vmatprep.subr.bf16.mxu0 0
      %4997 = vmatpush2.bf16.msra.mxu0 0
      %4998 = vmatprep.subr.bf16.mxu0 0
      %4999 = vmatpush2.bf16.msra.mxu0 0
      %5000 = vmatprep.mubr.bf16.mxu0 0
      %5001 = vmatmul.mubr.bf16.gmra.mxu0 %v4916
      %v5002 = vpop.f32.mrf.mxu0
      %v5003 = vadd.f32 0.0, %v5002
      %v5004 = vpop.f32.mrf.mxu0
      %v5005 = vpop.f32.mrf.mxu0
      %v5006 = vpop.f32.mrf.mxu0
      %5007 = vdwg.mxu0
      %v5008 = vadd.f32 %v4879, %v4962
      %v5009 = vadd.f32 %v4880, %v4964
      %v5010 = vadd.f32 %v4881, %v5003
      %5011 = vst [vmem:[#allocation2] sm:$0xff] %v5008
      %5012 = vst [vmem:[#allocation2 + $0x8] sm:$0xff] %v5009
      %5013 = vst [vmem:[#allocation2 + $0x10] sm:$0xff] %v5010
      %v5014 = vld [vmem:[#allocation2] sm:$0xff]
      %v5015 = vld [vmem:[#allocation2 + $0x8] sm:$0xff]
      %v5016 = vld [vmem:[#allocation2 + $0x10] sm:$0xff]
      %s5017 = scalar_lea.vmem %s0, 144
      %v5018 = vld [vmem:[%s5017] sm:$0xf]
      %v5019 = vld [vmem:[%s165] sm:$0xff]
      %v5021 = vcombine.high %v5019, %v5019
      %v5023 = vunpack.c.l.s4 1983009808
      %v5024 = vunpack.c.0.s8 %v5023
      %v5025 = vlaneseq
      %v5026 = vshrl.u32 %v5025, 7
      %v5027 = vsub.s32 %v5024, %v5026
      %v5028 = vrot.slane %v5019, %v5027
      %v5030 = vunpack.c.l.s4 1983009808
      %v5031 = vunpack.c.0.s8 %v5030
      %v5032 = vlaneseq
      %v5033 = vshrl.u32 %v5032, 7
      %v5034 = vsub.s32 %v5031, %v5033
      %v5035 = vrot.slane %v5021, %v5034
      %v5036 = vcombine.high %v5028, %v5028
      %v5037 = vcombine.high %v5035, %v5035
      %5038 = vrot.lane.b32.xlu0 %v5028, 17
      %v5039 = vpop.permute.xlu0 %5038
      %5040 = vrot.lane.b32.xlu0 %v5036, 17
      %v5041 = vpop.permute.xlu0 %5040
      %5042 = vrot.lane.b32.xlu0 %v5035, 17
      %v5043 = vpop.permute.xlu0 %5042
      %5044 = vrot.lane.b32.xlu0 %v5037, 17
      %v5045 = vpop.permute.xlu0 %5044
      %vm5046 = vcmask 138240
      %v5047 = vsel %vm5046, %v5039, %v5041
      %v5048 = vsel %vm5046, %v5041, %v5043
      %v5049 = vsel %vm5046, %v5043, %v5045
      %v5051 = vsel %vm191, %v5018, 0
      %v5054 = vsel %vm195, %v5047, 0
      %v5057 = vsel %vm195, %v5048, 0
      %v5060 = vsel %vm195, %v5049, 0
      %5062 = vmatprep.subr.bf16.mxu0 0
      %5063 = vmatpush1.bf16.msra.mxu0 0
      %5064 = vmatprep.subr.bf16.mxu0 0
      %5065 = vmatpush1.bf16.msra.mxu0 0
      %5066 = vmatprep.subr.bf16.mxu0 0
      %5067 = vmatpush1.bf16.msra.mxu0 0
      %5068 = vmatprep.subr.bf16.mxu0 0
      %5069 = vmatpush1.bf16.msra.mxu0 0
      %5070 = vmatprep.subr.bf16.mxu0 0
      %5071 = vmatpush1.bf16.msra.mxu0 0
      %5072 = vmatprep.subr.bf16.mxu0 0
      %5073 = vmatpush1.bf16.msra.mxu0 0
      %5074 = vmatprep.subr.bf16.mxu0 0
      %5075 = vmatpush1.bf16.msra.mxu0 0
      %5076 = vmatprep.subr.bf16.mxu0 %v5057
      %5077 = vmatpush1.bf16.msra.mxu0 %v5054
      %5078 = vmatprep.subr.bf16.mxu0 0
      %5079 = vmatpush2.bf16.msra.mxu0 0
      %5080 = vmatprep.subr.bf16.mxu0 0
      %5081 = vmatpush2.bf16.msra.mxu0 0
      %5082 = vmatprep.subr.bf16.mxu0 0
      %5083 = vmatpush2.bf16.msra.mxu0 0
      %5084 = vmatprep.subr.bf16.mxu0 0
      %5085 = vmatpush2.bf16.msra.mxu0 0
      %5086 = vmatprep.subr.bf16.mxu0 0
      %5087 = vmatpush2.bf16.msra.mxu0 0
      %5088 = vmatprep.subr.bf16.mxu0 0
      %5089 = vmatpush2.bf16.msra.mxu0 0
      %5090 = vmatprep.subr.bf16.mxu0 0
      %5091 = vmatpush2.bf16.msra.mxu0 0
      %5092 = vmatprep.subr.bf16.mxu0 0
      %5093 = vmatpush2.bf16.msra.mxu0 0
      %5094 = vmatprep.mubr.bf16.mxu0 0
      %5095 = vmatmul.mubr.bf16.gmra.mxu0 %v5051
      %v5096 = vpop.f32.mrf.mxu0
      %v5097 = vadd.f32 0.0, %v5096
      %v5098 = vpop.f32.mrf.mxu0
      %v5099 = vadd.f32 0.0, %v5098
      %v5100 = vpop.f32.mrf.mxu0
      %v5101 = vpop.f32.mrf.mxu0
      %5102 = vdwg.mxu0
      %5103 = vmatprep.subr.bf16.mxu0 0
      %5104 = vmatpush1.bf16.msra.mxu0 0
      %5105 = vmatprep.subr.bf16.mxu0 0
      %5106 = vmatpush1.bf16.msra.mxu0 0
      %5107 = vmatprep.subr.bf16.mxu0 0
      %5108 = vmatpush1.bf16.msra.mxu0 0
      %5109 = vmatprep.subr.bf16.mxu0 0
      %5110 = vmatpush1.bf16.msra.mxu0 0
      %5111 = vmatprep.subr.bf16.mxu0 0
      %5112 = vmatpush1.bf16.msra.mxu0 0
      %5113 = vmatprep.subr.bf16.mxu0 0
      %5114 = vmatpush1.bf16.msra.mxu0 0
      %5115 = vmatprep.subr.bf16.mxu0 0
      %5116 = vmatpush1.bf16.msra.mxu0 0
      %5117 = vmatprep.subr.bf16.mxu0 0
      %5118 = vmatpush1.bf16.msra.mxu0 %v5060
      %5119 = vmatprep.subr.bf16.mxu0 0
      %5120 = vmatpush2.bf16.msra.mxu0 0
      %5121 = vmatprep.subr.bf16.mxu0 0
      %5122 = vmatpush2.bf16.msra.mxu0 0
      %5123 = vmatprep.subr.bf16.mxu0 0
      %5124 = vmatpush2.bf16.msra.mxu0 0
      %5125 = vmatprep.subr.bf16.mxu0 0
      %5126 = vmatpush2.bf16.msra.mxu0 0
      %5127 = vmatprep.subr.bf16.mxu0 0
      %5128 = vmatpush2.bf16.msra.mxu0 0
      %5129 = vmatprep.subr.bf16.mxu0 0
      %5130 = vmatpush2.bf16.msra.mxu0 0
      %5131 = vmatprep.subr.bf16.mxu0 0
      %5132 = vmatpush2.bf16.msra.mxu0 0
      %5133 = vmatprep.subr.bf16.mxu0 0
      %5134 = vmatpush2.bf16.msra.mxu0 0
      %5135 = vmatprep.mubr.bf16.mxu0 0
      %5136 = vmatmul.mubr.bf16.gmra.mxu0 %v5051
      %v5137 = vpop.f32.mrf.mxu0
      %v5138 = vadd.f32 0.0, %v5137
      %v5139 = vpop.f32.mrf.mxu0
      %v5140 = vpop.f32.mrf.mxu0
      %v5141 = vpop.f32.mrf.mxu0
      %5142 = vdwg.mxu0
      %v5143 = vadd.f32 %v5014, %v5097
      %v5144 = vadd.f32 %v5015, %v5099
      %v5145 = vadd.f32 %v5016, %v5138
      %5146 = vst [vmem:[#allocation2] sm:$0xff] %v5143
      %5147 = vst [vmem:[#allocation2 + $0x8] sm:$0xff] %v5144
      %5148 = vst [vmem:[#allocation2 + $0x10] sm:$0xff] %v5145
      %v5149 = vld [vmem:[#allocation2] sm:$0xff]
      %v5150 = vld [vmem:[#allocation2 + $0x8] sm:$0xff]
      %v5151 = vld [vmem:[#allocation2 + $0x10] sm:$0xff]
      %s5152 = scalar_lea.vmem %s0, 148
      %v5153 = vld [vmem:[%s5152] sm:$0xf]
      %v5154 = vld [vmem:[%s165] sm:$0xff]
      %v5156 = vcombine.high %v5154, %v5154
      %v5158 = vunpack.c.l.s4 1983009808
      %v5159 = vunpack.c.0.s8 %v5158
      %v5160 = vlaneseq
      %v5161 = vshrl.u32 %v5160, 7
      %v5162 = vsub.s32 %v5159, %v5161
      %v5163 = vrot.slane %v5154, %v5162
      %v5165 = vunpack.c.l.s4 1983009808
      %v5166 = vunpack.c.0.s8 %v5165
      %v5167 = vlaneseq
      %v5168 = vshrl.u32 %v5167, 7
      %v5169 = vsub.s32 %v5166, %v5168
      %v5170 = vrot.slane %v5156, %v5169
      %v5171 = vcombine.high %v5163, %v5163
      %v5172 = vcombine.high %v5170, %v5170
      %5173 = vrot.lane.b32.xlu0 %v5163, 16
      %v5174 = vpop.permute.xlu0 %5173
      %5175 = vrot.lane.b32.xlu0 %v5171, 16
      %v5176 = vpop.permute.xlu0 %5175
      %5177 = vrot.lane.b32.xlu0 %v5170, 16
      %v5178 = vpop.permute.xlu0 %5177
      %5179 = vrot.lane.b32.xlu0 %v5172, 16
      %v5180 = vpop.permute.xlu0 %5179
      %vm5181 = vcmask 130048
      %v5182 = vsel %vm5181, %v5174, %v5176
      %v5183 = vsel %vm5181, %v5176, %v5178
      %v5184 = vsel %vm5181, %v5178, %v5180
      %v5186 = vsel %vm191, %v5153, 0
      %v5189 = vsel %vm195, %v5182, 0
      %v5192 = vsel %vm195, %v5183, 0
      %v5195 = vsel %vm195, %v5184, 0
      %5197 = vmatprep.subr.bf16.mxu0 0
      %5198 = vmatpush1.bf16.msra.mxu0 0
      %5199 = vmatprep.subr.bf16.mxu0 0
      %5200 = vmatpush1.bf16.msra.mxu0 0
      %5201 = vmatprep.subr.bf16.mxu0 0
      %5202 = vmatpush1.bf16.msra.mxu0 0
      %5203 = vmatprep.subr.bf16.mxu0 0
      %5204 = vmatpush1.bf16.msra.mxu0 0
      %5205 = vmatprep.subr.bf16.mxu0 0
      %5206 = vmatpush1.bf16.msra.mxu0 0
      %5207 = vmatprep.subr.bf16.mxu0 0
      %5208 = vmatpush1.bf16.msra.mxu0 0
      %5209 = vmatprep.subr.bf16.mxu0 0
      %5210 = vmatpush1.bf16.msra.mxu0 0
      %5211 = vmatprep.subr.bf16.mxu0 %v5192
      %5212 = vmatpush1.bf16.msra.mxu0 %v5189
      %5213 = vmatprep.subr.bf16.mxu0 0
      %5214 = vmatpush2.bf16.msra.mxu0 0
      %5215 = vmatprep.subr.bf16.mxu0 0
      %5216 = vmatpush2.bf16.msra.mxu0 0
      %5217 = vmatprep.subr.bf16.mxu0 0
      %5218 = vmatpush2.bf16.msra.mxu0 0
      %5219 = vmatprep.subr.bf16.mxu0 0
      %5220 = vmatpush2.bf16.msra.mxu0 0
      %5221 = vmatprep.subr.bf16.mxu0 0
      %5222 = vmatpush2.bf16.msra.mxu0 0
      %5223 = vmatprep.subr.bf16.mxu0 0
      %5224 = vmatpush2.bf16.msra.mxu0 0
      %5225 = vmatprep.subr.bf16.mxu0 0
      %5226 = vmatpush2.bf16.msra.mxu0 0
      %5227 = vmatprep.subr.bf16.mxu0 0
      %5228 = vmatpush2.bf16.msra.mxu0 0
      %5229 = vmatprep.mubr.bf16.mxu0 0
      %5230 = vmatmul.mubr.bf16.gmra.mxu0 %v5186
      %v5231 = vpop.f32.mrf.mxu0
      %v5232 = vadd.f32 0.0, %v5231
      %v5233 = vpop.f32.mrf.mxu0
      %v5234 = vadd.f32 0.0, %v5233
      %v5235 = vpop.f32.mrf.mxu0
      %v5236 = vpop.f32.mrf.mxu0
      %5237 = vdwg.mxu0
      %5238 = vmatprep.subr.bf16.mxu0 0
      %5239 = vmatpush1.bf16.msra.mxu0 0
      %5240 = vmatprep.subr.bf16.mxu0 0
      %5241 = vmatpush1.bf16.msra.mxu0 0
      %5242 = vmatprep.subr.bf16.mxu0 0
      %5243 = vmatpush1.bf16.msra.mxu0 0
      %5244 = vmatprep.subr.bf16.mxu0 0
      %5245 = vmatpush1.bf16.msra.mxu0 0
      %5246 = vmatprep.subr.bf16.mxu0 0
      %5247 = vmatpush1.bf16.msra.mxu0 0
      %5248 = vmatprep.subr.bf16.mxu0 0
      %5249 = vmatpush1.bf16.msra.mxu0 0
      %5250 = vmatprep.subr.bf16.mxu0 0
      %5251 = vmatpush1.bf16.msra.mxu0 0
      %5252 = vmatprep.subr.bf16.mxu0 0
      %5253 = vmatpush1.bf16.msra.mxu0 %v5195
      %5254 = vmatprep.subr.bf16.mxu0 0
      %5255 = vmatpush2.bf16.msra.mxu0 0
      %5256 = vmatprep.subr.bf16.mxu0 0
      %5257 = vmatpush2.bf16.msra.mxu0 0
      %5258 = vmatprep.subr.bf16.mxu0 0
      %5259 = vmatpush2.bf16.msra.mxu0 0
      %5260 = vmatprep.subr.bf16.mxu0 0
      %5261 = vmatpush2.bf16.msra.mxu0 0
      %5262 = vmatprep.subr.bf16.mxu0 0
      %5263 = vmatpush2.bf16.msra.mxu0 0
      %5264 = vmatprep.subr.bf16.mxu0 0
      %5265 = vmatpush2.bf16.msra.mxu0 0
      %5266 = vmatprep.subr.bf16.mxu0 0
      %5267 = vmatpush2.bf16.msra.mxu0 0
      %5268 = vmatprep.subr.bf16.mxu0 0
      %5269 = vmatpush2.bf16.msra.mxu0 0
      %5270 = vmatprep.mubr.bf16.mxu0 0
      %5271 = vmatmul.mubr.bf16.gmra.mxu0 %v5186
      %v5272 = vpop.f32.mrf.mxu0
      %v5273 = vadd.f32 0.0, %v5272
      %v5274 = vpop.f32.mrf.mxu0
      %v5275 = vpop.f32.mrf.mxu0
      %v5276 = vpop.f32.mrf.mxu0
      %5277 = vdwg.mxu0
      %v5278 = vadd.f32 %v5149, %v5232
      %v5279 = vadd.f32 %v5150, %v5234
      %v5280 = vadd.f32 %v5151, %v5273
      %5281 = vst [vmem:[#allocation2] sm:$0xff] %v5278
      %5282 = vst [vmem:[#allocation2 + $0x8] sm:$0xff] %v5279
      %5283 = vst [vmem:[#allocation2 + $0x10] sm:$0xff] %v5280
      %v5284 = vld [vmem:[#allocation2] sm:$0xff]
      %v5285 = vld [vmem:[#allocation2 + $0x8] sm:$0xff]
      %v5286 = vld [vmem:[#allocation2 + $0x10] sm:$0xff]
      %s5287 = scalar_lea.vmem %s0, 152
      %v5288 = vld [vmem:[%s5287] sm:$0xf]
      %v5289 = vld [vmem:[%s165] sm:$0xff]
      %v5291 = vcombine.high %v5289, %v5289
      %v5293 = vunpack.c.l.s4 1983009808
      %v5294 = vunpack.c.0.s8 %v5293
      %v5295 = vlaneseq
      %v5296 = vshrl.u32 %v5295, 7
      %v5297 = vsub.s32 %v5294, %v5296
      %v5298 = vrot.slane %v5289, %v5297
      %v5300 = vunpack.c.l.s4 1983009808
      %v5301 = vunpack.c.0.s8 %v5300
      %v5302 = vlaneseq
      %v5303 = vshrl.u32 %v5302, 7
      %v5304 = vsub.s32 %v5301, %v5303
      %v5305 = vrot.slane %v5291, %v5304
      %v5306 = vcombine.high %v5298, %v5298
      %v5307 = vcombine.high %v5305, %v5305
      %5308 = vrot.lane.b32.xlu0 %v5298, 15
      %v5309 = vpop.permute.xlu0 %5308
      %5310 = vrot.lane.b32.xlu0 %v5306, 15
      %v5311 = vpop.permute.xlu0 %5310
      %5312 = vrot.lane.b32.xlu0 %v5305, 15
      %v5313 = vpop.permute.xlu0 %5312
      %5314 = vrot.lane.b32.xlu0 %v5307, 15
      %v5315 = vpop.permute.xlu0 %5314
      %vm5316 = vcmask 121856
      %v5317 = vsel %vm5316, %v5309, %v5311
      %v5318 = vsel %vm5316, %v5311, %v5313
      %v5319 = vsel %vm5316, %v5313, %v5315
      %v5321 = vsel %vm191, %v5288, 0
      %v5324 = vsel %vm195, %v5317, 0
      %v5327 = vsel %vm195, %v5318, 0
      %v5330 = vsel %vm195, %v5319, 0
      %5332 = vmatprep.subr.bf16.mxu0 0
      %5333 = vmatpush1.bf16.msra.mxu0 0
      %5334 = vmatprep.subr.bf16.mxu0 0
      %5335 = vmatpush1.bf16.msra.mxu0 0
      %5336 = vmatprep.subr.bf16.mxu0 0
      %5337 = vmatpush1.bf16.msra.mxu0 0
      %5338 = vmatprep.subr.bf16.mxu0 0
      %5339 = vmatpush1.bf16.msra.mxu0 0
      %5340 = vmatprep.subr.bf16.mxu0 0
      %5341 = vmatpush1.bf16.msra.mxu0 0
      %5342 = vmatprep.subr.bf16.mxu0 0
      %5343 = vmatpush1.bf16.msra.mxu0 0
      %5344 = vmatprep.subr.bf16.mxu0 0
      %5345 = vmatpush1.bf16.msra.mxu0 0
      %5346 = vmatprep.subr.bf16.mxu0 %v5327
      %5347 = vmatpush1.bf16.msra.mxu0 %v5324
      %5348 = vmatprep.subr.bf16.mxu0 0
      %5349 = vmatpush2.bf16.msra.mxu0 0
      %5350 = vmatprep.subr.bf16.mxu0 0
      %5351 = vmatpush2.bf16.msra.mxu0 0
      %5352 = vmatprep.subr.bf16.mxu0 0
      %5353 = vmatpush2.bf16.msra.mxu0 0
      %5354 = vmatprep.subr.bf16.mxu0 0
      %5355 = vmatpush2.bf16.msra.mxu0 0
      %5356 = vmatprep.subr.bf16.mxu0 0
      %5357 = vmatpush2.bf16.msra.mxu0 0
      %5358 = vmatprep.subr.bf16.mxu0 0
      %5359 = vmatpush2.bf16.msra.mxu0 0
      %5360 = vmatprep.subr.bf16.mxu0 0
      %5361 = vmatpush2.bf16.msra.mxu0 0
      %5362 = vmatprep.subr.bf16.mxu0 0
      %5363 = vmatpush2.bf16.msra.mxu0 0
      %5364 = vmatprep.mubr.bf16.mxu0 0
      %5365 = vmatmul.mubr.bf16.gmra.mxu0 %v5321
      %v5366 = vpop.f32.mrf.mxu0
      %v5367 = vadd.f32 0.0, %v5366
      %v5368 = vpop.f32.mrf.mxu0
      %v5369 = vadd.f32 0.0, %v5368
      %v5370 = vpop.f32.mrf.mxu0
      %v5371 = vpop.f32.mrf.mxu0
      %5372 = vdwg.mxu0
      %5373 = vmatprep.subr.bf16.mxu0 0
      %5374 = vmatpush1.bf16.msra.mxu0 0
      %5375 = vmatprep.subr.bf16.mxu0 0
      %5376 = vmatpush1.bf16.msra.mxu0 0
      %5377 = vmatprep.subr.bf16.mxu0 0
      %5378 = vmatpush1.bf16.msra.mxu0 0
      %5379 = vmatprep.subr.bf16.mxu0 0
      %5380 = vmatpush1.bf16.msra.mxu0 0
      %5381 = vmatprep.subr.bf16.mxu0 0
      %5382 = vmatpush1.bf16.msra.mxu0 0
      %5383 = vmatprep.subr.bf16.mxu0 0
      %5384 = vmatpush1.bf16.msra.mxu0 0
      %5385 = vmatprep.subr.bf16.mxu0 0
      %5386 = vmatpush1.bf16.msra.mxu0 0
      %5387 = vmatprep.subr.bf16.mxu0 0
      %5388 = vmatpush1.bf16.msra.mxu0 %v5330
      %5389 = vmatprep.subr.bf16.mxu0 0
      %5390 = vmatpush2.bf16.msra.mxu0 0
      %5391 = vmatprep.subr.bf16.mxu0 0
      %5392 = vmatpush2.bf16.msra.mxu0 0
      %5393 = vmatprep.subr.bf16.mxu0 0
      %5394 = vmatpush2.bf16.msra.mxu0 0
      %5395 = vmatprep.subr.bf16.mxu0 0
      %5396 = vmatpush2.bf16.msra.mxu0 0
      %5397 = vmatprep.subr.bf16.mxu0 0
      %5398 = vmatpush2.bf16.msra.mxu0 0
      %5399 = vmatprep.subr.bf16.mxu0 0
      %5400 = vmatpush2.bf16.msra.mxu0 0
      %5401 = vmatprep.subr.bf16.mxu0 0
      %5402 = vmatpush2.bf16.msra.mxu0 0
      %5403 = vmatprep.subr.bf16.mxu0 0
      %5404 = vmatpush2.bf16.msra.mxu0 0
      %5405 = vmatprep.mubr.bf16.mxu0 0
      %5406 = vmatmul.mubr.bf16.gmra.mxu0 %v5321
      %v5407 = vpop.f32.mrf.mxu0
      %v5408 = vadd.f32 0.0, %v5407
      %v5409 = vpop.f32.mrf.mxu0
      %v5410 = vpop.f32.mrf.mxu0
      %v5411 = vpop.f32.mrf.mxu0
      %5412 = vdwg.mxu0
      %v5413 = vadd.f32 %v5284, %v5367
      %v5414 = vadd.f32 %v5285, %v5369
      %v5415 = vadd.f32 %v5286, %v5408
      %5416 = vst [vmem:[#allocation2] sm:$0xff] %v5413
      %5417 = vst [vmem:[#allocation2 + $0x8] sm:$0xff] %v5414
      %5418 = vst [vmem:[#allocation2 + $0x10] sm:$0xff] %v5415
      %v5419 = vld [vmem:[#allocation2] sm:$0xff]
      %v5420 = vld [vmem:[#allocation2 + $0x8] sm:$0xff]
      %v5421 = vld [vmem:[#allocation2 + $0x10] sm:$0xff]
      %s5422 = scalar_lea.vmem %s0, 156
      %v5423 = vld [vmem:[%s5422] sm:$0xf]
      %v5424 = vld [vmem:[%s165] sm:$0xff]
      %v5426 = vcombine.high %v5424, %v5424
      %v5428 = vunpack.c.l.s4 1983009808
      %v5429 = vunpack.c.0.s8 %v5428
      %v5430 = vlaneseq
      %v5431 = vshrl.u32 %v5430, 7
      %v5432 = vsub.s32 %v5429, %v5431
      %v5433 = vrot.slane %v5424, %v5432
      %v5435 = vunpack.c.l.s4 1983009808
      %v5436 = vunpack.c.0.s8 %v5435
      %v5437 = vlaneseq
      %v5438 = vshrl.u32 %v5437, 7
      %v5439 = vsub.s32 %v5436, %v5438
      %v5440 = vrot.slane %v5426, %v5439
      %v5441 = vcombine.high %v5433, %v5433
      %v5442 = vcombine.high %v5440, %v5440
      %5443 = vrot.lane.b32.xlu0 %v5433, 14
      %v5444 = vpop.permute.xlu0 %5443
      %5445 = vrot.lane.b32.xlu0 %v5441, 14
      %v5446 = vpop.permute.xlu0 %5445
      %5447 = vrot.lane.b32.xlu0 %v5440, 14
      %v5448 = vpop.permute.xlu0 %5447
      %5449 = vrot.lane.b32.xlu0 %v5442, 14
      %v5450 = vpop.permute.xlu0 %5449
      %vm5451 = vcmask 113664
      %v5452 = vsel %vm5451, %v5444, %v5446
      %v5453 = vsel %vm5451, %v5446, %v5448
      %v5454 = vsel %vm5451, %v5448, %v5450
      %v5456 = vsel %vm191, %v5423, 0
      %v5459 = vsel %vm195, %v5452, 0
      %v5462 = vsel %vm195, %v5453, 0
      %v5465 = vsel %vm195, %v5454, 0
      %5467 = vmatprep.subr.bf16.mxu0 0
      %5468 = vmatpush1.bf16.msra.mxu0 0
      %5469 = vmatprep.subr.bf16.mxu0 0
      %5470 = vmatpush1.bf16.msra.mxu0 0
      %5471 = vmatprep.subr.bf16.mxu0 0
      %5472 = vmatpush1.bf16.msra.mxu0 0
      %5473 = vmatprep.subr.bf16.mxu0 0
      %5474 = vmatpush1.bf16.msra.mxu0 0
      %5475 = vmatprep.subr.bf16.mxu0 0
      %5476 = vmatpush1.bf16.msra.mxu0 0
      %5477 = vmatprep.subr.bf16.mxu0 0
      %5478 = vmatpush1.bf16.msra.mxu0 0
      %5479 = vmatprep.subr.bf16.mxu0 0
      %5480 = vmatpush1.bf16.msra.mxu0 0
      %5481 = vmatprep.subr.bf16.mxu0 %v5462
      %5482 = vmatpush1.bf16.msra.mxu0 %v5459
      %5483 = vmatprep.subr.bf16.mxu0 0
      %5484 = vmatpush2.bf16.msra.mxu0 0
      %5485 = vmatprep.subr.bf16.mxu0 0
      %5486 = vmatpush2.bf16.msra.mxu0 0
      %5487 = vmatprep.subr.bf16.mxu0 0
      %5488 = vmatpush2.bf16.msra.mxu0 0
      %5489 = vmatprep.subr.bf16.mxu0 0
      %5490 = vmatpush2.bf16.msra.mxu0 0
      %5491 = vmatprep.subr.bf16.mxu0 0
      %5492 = vmatpush2.bf16.msra.mxu0 0
      %5493 = vmatprep.subr.bf16.mxu0 0
      %5494 = vmatpush2.bf16.msra.mxu0 0
      %5495 = vmatprep.subr.bf16.mxu0 0
      %5496 = vmatpush2.bf16.msra.mxu0 0
      %5497 = vmatprep.subr.bf16.mxu0 0
      %5498 = vmatpush2.bf16.msra.mxu0 0
      %5499 = vmatprep.mubr.bf16.mxu0 0
      %5500 = vmatmul.mubr.bf16.gmra.mxu0 %v5456
      %v5501 = vpop.f32.mrf.mxu0
      %v5502 = vadd.f32 0.0, %v5501
      %v5503 = vpop.f32.mrf.mxu0
      %v5504 = vadd.f32 0.0, %v5503
      %v5505 = vpop.f32.mrf.mxu0
      %v5506 = vpop.f32.mrf.mxu0
      %5507 = vdwg.mxu0
      %5508 = vmatprep.subr.bf16.mxu0 0
      %5509 = vmatpush1.bf16.msra.mxu0 0
      %5510 = vmatprep.subr.bf16.mxu0 0
      %5511 = vmatpush1.bf16.msra.mxu0 0
      %5512 = vmatprep.subr.bf16.mxu0 0
      %5513 = vmatpush1.bf16.msra.mxu0 0
      %5514 = vmatprep.subr.bf16.mxu0 0
      %5515 = vmatpush1.bf16.msra.mxu0 0
      %5516 = vmatprep.subr.bf16.mxu0 0
      %5517 = vmatpush1.bf16.msra.mxu0 0
      %5518 = vmatprep.subr.bf16.mxu0 0
      %5519 = vmatpush1.bf16.msra.mxu0 0
      %5520 = vmatprep.subr.bf16.mxu0 0
      %5521 = vmatpush1.bf16.msra.mxu0 0
      %5522 = vmatprep.subr.bf16.mxu0 0
      %5523 = vmatpush1.bf16.msra.mxu0 %v5465
      %5524 = vmatprep.subr.bf16.mxu0 0
      %5525 = vmatpush2.bf16.msra.mxu0 0
      %5526 = vmatprep.subr.bf16.mxu0 0
      %5527 = vmatpush2.bf16.msra.mxu0 0
      %5528 = vmatprep.subr.bf16.mxu0 0
      %5529 = vmatpush2.bf16.msra.mxu0 0
      %5530 = vmatprep.subr.bf16.mxu0 0
      %5531 = vmatpush2.bf16.msra.mxu0 0
      %5532 = vmatprep.subr.bf16.mxu0 0
      %5533 = vmatpush2.bf16.msra.mxu0 0
      %5534 = vmatprep.subr.bf16.mxu0 0
      %5535 = vmatpush2.bf16.msra.mxu0 0
      %5536 = vmatprep.subr.bf16.mxu0 0
      %5537 = vmatpush2.bf16.msra.mxu0 0
      %5538 = vmatprep.subr.bf16.mxu0 0
      %5539 = vmatpush2.bf16.msra.mxu0 0
      %5540 = vmatprep.mubr.bf16.mxu0 0
      %5541 = vmatmul.mubr.bf16.gmra.mxu0 %v5456
      %v5542 = vpop.f32.mrf.mxu0
      %v5543 = vadd.f32 0.0, %v5542
      %v5544 = vpop.f32.mrf.mxu0
      %v5545 = vpop.f32.mrf.mxu0
      %v5546 = vpop.f32.mrf.mxu0
      %5547 = vdwg.mxu0
      %v5548 = vadd.f32 %v5419, %v5502
      %v5549 = vadd.f32 %v5420, %v5504
      %v5550 = vadd.f32 %v5421, %v5543
      %5551 = vst [vmem:[#allocation2] sm:$0xff] %v5548
      %5552 = vst [vmem:[#allocation2 + $0x8] sm:$0xff] %v5549
      %5553 = vst [vmem:[#allocation2 + $0x10] sm:$0xff] %v5550
      %v5554 = vld [vmem:[#allocation2] sm:$0xff]
      %v5555 = vld [vmem:[#allocation2 + $0x8] sm:$0xff]
      %v5556 = vld [vmem:[#allocation2 + $0x10] sm:$0xff]
      %s5557 = scalar_lea.vmem %s0, 160
      %v5558 = vld [vmem:[%s5557] sm:$0xf]
      %v5559 = vld [vmem:[%s165] sm:$0xff]
      %v5561 = vcombine.high %v5559, %v5559
      %v5563 = vunpack.c.l.s4 1983009808
      %v5564 = vunpack.c.0.s8 %v5563
      %v5565 = vlaneseq
      %v5566 = vshrl.u32 %v5565, 7
      %v5567 = vsub.s32 %v5564, %v5566
      %v5568 = vrot.slane %v5559, %v5567
      %v5570 = vunpack.c.l.s4 1983009808
      %v5571 = vunpack.c.0.s8 %v5570
      %v5572 = vlaneseq
      %v5573 = vshrl.u32 %v5572, 7
      %v5574 = vsub.s32 %v5571, %v5573
      %v5575 = vrot.slane %v5561, %v5574
      %v5576 = vcombine.high %v5568, %v5568
      %v5577 = vcombine.high %v5575, %v5575
      %5578 = vrot.lane.b32.xlu0 %v5568, 13
      %v5579 = vpop.permute.xlu0 %5578
      %5580 = vrot.lane.b32.xlu0 %v5576, 13
      %v5581 = vpop.permute.xlu0 %5580
      %5582 = vrot.lane.b32.xlu0 %v5575, 13
      %v5583 = vpop.permute.xlu0 %5582
      %5584 = vrot.lane.b32.xlu0 %v5577, 13
      %v5585 = vpop.permute.xlu0 %5584
      %vm5586 = vcmask 105472
      %v5587 = vsel %vm5586, %v5579, %v5581
      %v5588 = vsel %vm5586, %v5581, %v5583
      %v5589 = vsel %vm5586, %v5583, %v5585
      %v5591 = vsel %vm191, %v5558, 0
      %v5594 = vsel %vm195, %v5587, 0
      %v5597 = vsel %vm195, %v5588, 0
      %v5600 = vsel %vm195, %v5589, 0
      %5602 = vmatprep.subr.bf16.mxu0 0
      %5603 = vmatpush1.bf16.msra.mxu0 0
      %5604 = vmatprep.subr.bf16.mxu0 0
      %5605 = vmatpush1.bf16.msra.mxu0 0
      %5606 = vmatprep.subr.bf16.mxu0 0
      %5607 = vmatpush1.bf16.msra.mxu0 0
      %5608 = vmatprep.subr.bf16.mxu0 0
      %5609 = vmatpush1.bf16.msra.mxu0 0
      %5610 = vmatprep.subr.bf16.mxu0 0
      %5611 = vmatpush1.bf16.msra.mxu0 0
      %5612 = vmatprep.subr.bf16.mxu0 0
      %5613 = vmatpush1.bf16.msra.mxu0 0
      %5614 = vmatprep.subr.bf16.mxu0 0
      %5615 = vmatpush1.bf16.msra.mxu0 0
      %5616 = vmatprep.subr.bf16.mxu0 %v5597
      %5617 = vmatpush1.bf16.msra.mxu0 %v5594
      %5618 = vmatprep.subr.bf16.mxu0 0
      %5619 = vmatpush2.bf16.msra.mxu0 0
      %5620 = vmatprep.subr.bf16.mxu0 0
      %5621 = vmatpush2.bf16.msra.mxu0 0
      %5622 = vmatprep.subr.bf16.mxu0 0
      %5623 = vmatpush2.bf16.msra.mxu0 0
      %5624 = vmatprep.subr.bf16.mxu0 0
      %5625 = vmatpush2.bf16.msra.mxu0 0
      %5626 = vmatprep.subr.bf16.mxu0 0
      %5627 = vmatpush2.bf16.msra.mxu0 0
      %5628 = vmatprep.subr.bf16.mxu0 0
      %5629 = vmatpush2.bf16.msra.mxu0 0
      %5630 = vmatprep.subr.bf16.mxu0 0
      %5631 = vmatpush2.bf16.msra.mxu0 0
      %5632 = vmatprep.subr.bf16.mxu0 0
      %5633 = vmatpush2.bf16.msra.mxu0 0
      %5634 = vmatprep.mubr.bf16.mxu0 0
      %5635 = vmatmul.mubr.bf16.gmra.mxu0 %v5591
      %v5636 = vpop.f32.mrf.mxu0
      %v5637 = vadd.f32 0.0, %v5636
      %v5638 = vpop.f32.mrf.mxu0
      %v5639 = vadd.f32 0.0, %v5638
      %v5640 = vpop.f32.mrf.mxu0
      %v5641 = vpop.f32.mrf.mxu0
      %5642 = vdwg.mxu0
      %5643 = vmatprep.subr.bf16.mxu0 0
      %5644 = vmatpush1.bf16.msra.mxu0 0
      %5645 = vmatprep.subr.bf16.mxu0 0
      %5646 = vmatpush1.bf16.msra.mxu0 0
      %5647 = vmatprep.subr.bf16.mxu0 0
      %5648 = vmatpush1.bf16.msra.mxu0 0
      %5649 = vmatprep.subr.bf16.mxu0 0
      %5650 = vmatpush1.bf16.msra.mxu0 0
      %5651 = vmatprep.subr.bf16.mxu0 0
      %5652 = vmatpush1.bf16.msra.mxu0 0
      %5653 = vmatprep.subr.bf16.mxu0 0
      %5654 = vmatpush1.bf16.msra.mxu0 0
      %5655 = vmatprep.subr.bf16.mxu0 0
      %5656 = vmatpush1.bf16.msra.mxu0 0
      %5657 = vmatprep.subr.bf16.mxu0 0
      %5658 = vmatpush1.bf16.msra.mxu0 %v5600
      %5659 = vmatprep.subr.bf16.mxu0 0
      %5660 = vmatpush2.bf16.msra.mxu0 0
      %5661 = vmatprep.subr.bf16.mxu0 0
      %5662 = vmatpush2.bf16.msra.mxu0 0
      %5663 = vmatprep.subr.bf16.mxu0 0
      %5664 = vmatpush2.bf16.msra.mxu0 0
      %5665 = vmatprep.subr.bf16.mxu0 0
      %5666 = vmatpush2.bf16.msra.mxu0 0
      %5667 = vmatprep.subr.bf16.mxu0 0
      %5668 = vmatpush2.bf16.msra.mxu0 0
      %5669 = vmatprep.subr.bf16.mxu0 0
      %5670 = vmatpush2.bf16.msra.mxu0 0
      %5671 = vmatprep.subr.bf16.mxu0 0
      %5672 = vmatpush2.bf16.msra.mxu0 0
      %5673 = vmatprep.subr.bf16.mxu0 0
      %5674 = vmatpush2.bf16.msra.mxu0 0
      %5675 = vmatprep.mubr.bf16.mxu0 0
      %5676 = vmatmul.mubr.bf16.gmra.mxu0 %v5591
      %v5677 = vpop.f32.mrf.mxu0
      %v5678 = vadd.f32 0.0, %v5677
      %v5679 = vpop.f32.mrf.mxu0
      %v5680 = vpop.f32.mrf.mxu0
      %v5681 = vpop.f32.mrf.mxu0
      %5682 = vdwg.mxu0
      %v5683 = vadd.f32 %v5554, %v5637
      %v5684 = vadd.f32 %v5555, %v5639
      %v5685 = vadd.f32 %v5556, %v5678
      %5686 = vst [vmem:[#allocation2] sm:$0xff] %v5683
      %5687 = vst [vmem:[#allocation2 + $0x8] sm:$0xff] %v5684
      %5688 = vst [vmem:[#allocation2 + $0x10] sm:$0xff] %v5685
      %v5689 = vld [vmem:[#allocation2] sm:$0xff]
      %v5690 = vld [vmem:[#allocation2 + $0x8] sm:$0xff]
      %v5691 = vld [vmem:[#allocation2 + $0x10] sm:$0xff]
      %s5692 = scalar_lea.vmem %s0, 164
      %v5693 = vld [vmem:[%s5692] sm:$0xf]
      %v5694 = vld [vmem:[%s165] sm:$0xff]
      %v5696 = vcombine.high %v5694, %v5694
      %v5698 = vunpack.c.l.s4 1983009808
      %v5699 = vunpack.c.0.s8 %v5698
      %v5700 = vlaneseq
      %v5701 = vshrl.u32 %v5700, 7
      %v5702 = vsub.s32 %v5699, %v5701
      %v5703 = vrot.slane %v5694, %v5702
      %v5705 = vunpack.c.l.s4 1983009808
      %v5706 = vunpack.c.0.s8 %v5705
      %v5707 = vlaneseq
      %v5708 = vshrl.u32 %v5707, 7
      %v5709 = vsub.s32 %v5706, %v5708
      %v5710 = vrot.slane %v5696, %v5709
      %v5711 = vcombine.high %v5703, %v5703
      %v5712 = vcombine.high %v5710, %v5710
      %5713 = vrot.lane.b32.xlu0 %v5703, 12
      %v5714 = vpop.permute.xlu0 %5713
      %5715 = vrot.lane.b32.xlu0 %v5711, 12
      %v5716 = vpop.permute.xlu0 %5715
      %5717 = vrot.lane.b32.xlu0 %v5710, 12
      %v5718 = vpop.permute.xlu0 %5717
      %5719 = vrot.lane.b32.xlu0 %v5712, 12
      %v5720 = vpop.permute.xlu0 %5719
      %vm5721 = vcmask 97280
      %v5722 = vsel %vm5721, %v5714, %v5716
      %v5723 = vsel %vm5721, %v5716, %v5718
      %v5724 = vsel %vm5721, %v5718, %v5720
      %v5726 = vsel %vm191, %v5693, 0
      %v5729 = vsel %vm195, %v5722, 0
      %v5732 = vsel %vm195, %v5723, 0
      %v5735 = vsel %vm195, %v5724, 0
      %5737 = vmatprep.subr.bf16.mxu0 0
      %5738 = vmatpush1.bf16.msra.mxu0 0
      %5739 = vmatprep.subr.bf16.mxu0 0
      %5740 = vmatpush1.bf16.msra.mxu0 0
      %5741 = vmatprep.subr.bf16.mxu0 0
      %5742 = vmatpush1.bf16.msra.mxu0 0
      %5743 = vmatprep.subr.bf16.mxu0 0
      %5744 = vmatpush1.bf16.msra.mxu0 0
      %5745 = vmatprep.subr.bf16.mxu0 0
      %5746 = vmatpush1.bf16.msra.mxu0 0
      %5747 = vmatprep.subr.bf16.mxu0 0
      %5748 = vmatpush1.bf16.msra.mxu0 0
      %5749 = vmatprep.subr.bf16.mxu0 0
      %5750 = vmatpush1.bf16.msra.mxu0 0
      %5751 = vmatprep.subr.bf16.mxu0 %v5732
      %5752 = vmatpush1.bf16.msra.mxu0 %v5729
      %5753 = vmatprep.subr.bf16.mxu0 0
      %5754 = vmatpush2.bf16.msra.mxu0 0
      %5755 = vmatprep.subr.bf16.mxu0 0
      %5756 = vmatpush2.bf16.msra.mxu0 0
      %5757 = vmatprep.subr.bf16.mxu0 0
      %5758 = vmatpush2.bf16.msra.mxu0 0
      %5759 = vmatprep.subr.bf16.mxu0 0
      %5760 = vmatpush2.bf16.msra.mxu0 0
      %5761 = vmatprep.subr.bf16.mxu0 0
      %5762 = vmatpush2.bf16.msra.mxu0 0
      %5763 = vmatprep.subr.bf16.mxu0 0
      %5764 = vmatpush2.bf16.msra.mxu0 0
      %5765 = vmatprep.subr.bf16.mxu0 0
      %5766 = vmatpush2.bf16.msra.mxu0 0
      %5767 = vmatprep.subr.bf16.mxu0 0
      %5768 = vmatpush2.bf16.msra.mxu0 0
      %5769 = vmatprep.mubr.bf16.mxu0 0
      %5770 = vmatmul.mubr.bf16.gmra.mxu0 %v5726
      %v5771 = vpop.f32.mrf.mxu0
      %v5772 = vadd.f32 0.0, %v5771
      %v5773 = vpop.f32.mrf.mxu0
      %v5774 = vadd.f32 0.0, %v5773
      %v5775 = vpop.f32.mrf.mxu0
      %v5776 = vpop.f32.mrf.mxu0
      %5777 = vdwg.mxu0
      %5778 = vmatprep.subr.bf16.mxu0 0
      %5779 = vmatpush1.bf16.msra.mxu0 0
      %5780 = vmatprep.subr.bf16.mxu0 0
      %5781 = vmatpush1.bf16.msra.mxu0 0
      %5782 = vmatprep.subr.bf16.mxu0 0
      %5783 = vmatpush1.bf16.msra.mxu0 0
      %5784 = vmatprep.subr.bf16.mxu0 0
      %5785 = vmatpush1.bf16.msra.mxu0 0
      %5786 = vmatprep.subr.bf16.mxu0 0
      %5787 = vmatpush1.bf16.msra.mxu0 0
      %5788 = vmatprep.subr.bf16.mxu0 0
      %5789 = vmatpush1.bf16.msra.mxu0 0
      %5790 = vmatprep.subr.bf16.mxu0 0
      %5791 = vmatpush1.bf16.msra.mxu0 0
      %5792 = vmatprep.subr.bf16.mxu0 0
      %5793 = vmatpush1.bf16.msra.mxu0 %v5735
      %5794 = vmatprep.subr.bf16.mxu0 0
      %5795 = vmatpush2.bf16.msra.mxu0 0
      %5796 = vmatprep.subr.bf16.mxu0 0
      %5797 = vmatpush2.bf16.msra.mxu0 0
      %5798 = vmatprep.subr.bf16.mxu0 0
      %5799 = vmatpush2.bf16.msra.mxu0 0
      %5800 = vmatprep.subr.bf16.mxu0 0
      %5801 = vmatpush2.bf16.msra.mxu0 0
      %5802 = vmatprep.subr.bf16.mxu0 0
      %5803 = vmatpush2.bf16.msra.mxu0 0
      %5804 = vmatprep.subr.bf16.mxu0 0
      %5805 = vmatpush2.bf16.msra.mxu0 0
      %5806 = vmatprep.subr.bf16.mxu0 0
      %5807 = vmatpush2.bf16.msra.mxu0 0
      %5808 = vmatprep.subr.bf16.mxu0 0
      %5809 = vmatpush2.bf16.msra.mxu0 0
      %5810 = vmatprep.mubr.bf16.mxu0 0
      %5811 = vmatmul.mubr.bf16.gmra.mxu0 %v5726
      %v5812 = vpop.f32.mrf.mxu0
      %v5813 = vadd.f32 0.0, %v5812
      %v5814 = vpop.f32.mrf.mxu0
      %v5815 = vpop.f32.mrf.mxu0
      %v5816 = vpop.f32.mrf.mxu0
      %5817 = vdwg.mxu0
      %v5818 = vadd.f32 %v5689, %v5772
      %v5819 = vadd.f32 %v5690, %v5774
      %v5820 = vadd.f32 %v5691, %v5813
      %5821 = vst [vmem:[#allocation2] sm:$0xff] %v5818
      %5822 = vst [vmem:[#allocation2 + $0x8] sm:$0xff] %v5819
      %5823 = vst [vmem:[#allocation2 + $0x10] sm:$0xff] %v5820
      %v5824 = vld [vmem:[#allocation2] sm:$0xff]
      %v5825 = vld [vmem:[#allocation2 + $0x8] sm:$0xff]
      %v5826 = vld [vmem:[#allocation2 + $0x10] sm:$0xff]
      %s5827 = scalar_lea.vmem %s0, 168
      %v5828 = vld [vmem:[%s5827] sm:$0xf]
      %v5829 = vld [vmem:[%s165 + $0x2] sm:$0xff]
      %v5831 = vcombine.high %v5829, %v5829
      %v5833 = vunpack.c.l.s4 1983009808
      %v5834 = vunpack.c.0.s8 %v5833
      %v5835 = vlaneseq
      %v5836 = vshrl.u32 %v5835, 7
      %v5837 = vsub.s32 %v5834, %v5836
      %v5838 = vrot.slane %v5829, %v5837
      %v5840 = vunpack.c.l.s4 1983009808
      %v5841 = vunpack.c.0.s8 %v5840
      %v5842 = vlaneseq
      %v5843 = vshrl.u32 %v5842, 7
      %v5844 = vsub.s32 %v5841, %v5843
      %v5845 = vrot.slane %v5831, %v5844
      %v5846 = vcombine.high %v5838, %v5838
      %v5847 = vcombine.high %v5845, %v5845
      %5848 = vrot.lane.b32.xlu0 %v5838, 124
      %v5849 = vpop.permute.xlu0 %5848
      %5850 = vrot.lane.b32.xlu0 %v5846, 124
      %v5851 = vpop.permute.xlu0 %5850
      %5852 = vrot.lane.b32.xlu0 %v5845, 124
      %v5853 = vpop.permute.xlu0 %5852
      %5854 = vrot.lane.b32.xlu0 %v5847, 124
      %v5855 = vpop.permute.xlu0 %5854
      %v5856 = vsel %vm726, %v5849, %v5851
      %v5857 = vsel %vm726, %v5851, %v5853
      %v5858 = vsel %vm726, %v5853, %v5855
      %v5860 = vsel %vm191, %v5828, 0
      %v5863 = vsel %vm195, %v5856, 0
      %v5866 = vsel %vm195, %v5857, 0
      %v5869 = vsel %vm195, %v5858, 0
      %5871 = vmatprep.subr.bf16.mxu0 0
      %5872 = vmatpush1.bf16.msra.mxu0 0
      %5873 = vmatprep.subr.bf16.mxu0 0
      %5874 = vmatpush1.bf16.msra.mxu0 0
      %5875 = vmatprep.subr.bf16.mxu0 0
      %5876 = vmatpush1.bf16.msra.mxu0 0
      %5877 = vmatprep.subr.bf16.mxu0 0
      %5878 = vmatpush1.bf16.msra.mxu0 0
      %5879 = vmatprep.subr.bf16.mxu0 0
      %5880 = vmatpush1.bf16.msra.mxu0 0
      %5881 = vmatprep.subr.bf16.mxu0 0
      %5882 = vmatpush1.bf16.msra.mxu0 0
      %5883 = vmatprep.subr.bf16.mxu0 0
      %5884 = vmatpush1.bf16.msra.mxu0 0
      %5885 = vmatprep.subr.bf16.mxu0 %v5866
      %5886 = vmatpush1.bf16.msra.mxu0 %v5863
      %5887 = vmatprep.subr.bf16.mxu0 0
      %5888 = vmatpush2.bf16.msra.mxu0 0
      %5889 = vmatprep.subr.bf16.mxu0 0
      %5890 = vmatpush2.bf16.msra.mxu0 0
      %5891 = vmatprep.subr.bf16.mxu0 0
      %5892 = vmatpush2.bf16.msra.mxu0 0
      %5893 = vmatprep.subr.bf16.mxu0 0
      %5894 = vmatpush2.bf16.msra.mxu0 0
      %5895 = vmatprep.subr.bf16.mxu0 0
      %5896 = vmatpush2.bf16.msra.mxu0 0
      %5897 = vmatprep.subr.bf16.mxu0 0
      %5898 = vmatpush2.bf16.msra.mxu0 0
      %5899 = vmatprep.subr.bf16.mxu0 0
      %5900 = vmatpush2.bf16.msra.mxu0 0
      %5901 = vmatprep.subr.bf16.mxu0 0
      %5902 = vmatpush2.bf16.msra.mxu0 0
      %5903 = vmatprep.mubr.bf16.mxu0 0
      %5904 = vmatmul.mubr.bf16.gmra.mxu0 %v5860
      %v5905 = vpop.f32.mrf.mxu0
      %v5906 = vadd.f32 0.0, %v5905
      %v5907 = vpop.f32.mrf.mxu0
      %v5908 = vadd.f32 0.0, %v5907
      %v5909 = vpop.f32.mrf.mxu0
      %v5910 = vpop.f32.mrf.mxu0
      %5911 = vdwg.mxu0
      %5912 = vmatprep.subr.bf16.mxu0 0
      %5913 = vmatpush1.bf16.msra.mxu0 0
      %5914 = vmatprep.subr.bf16.mxu0 0
      %5915 = vmatpush1.bf16.msra.mxu0 0
      %5916 = vmatprep.subr.bf16.mxu0 0
      %5917 = vmatpush1.bf16.msra.mxu0 0
      %5918 = vmatprep.subr.bf16.mxu0 0
      %5919 = vmatpush1.bf16.msra.mxu0 0
      %5920 = vmatprep.subr.bf16.mxu0 0
      %5921 = vmatpush1.bf16.msra.mxu0 0
      %5922 = vmatprep.subr.bf16.mxu0 0
      %5923 = vmatpush1.bf16.msra.mxu0 0
      %5924 = vmatprep.subr.bf16.mxu0 0
      %5925 = vmatpush1.bf16.msra.mxu0 0
      %5926 = vmatprep.subr.bf16.mxu0 0
      %5927 = vmatpush1.bf16.msra.mxu0 %v5869
      %5928 = vmatprep.subr.bf16.mxu0 0
      %5929 = vmatpush2.bf16.msra.mxu0 0
      %5930 = vmatprep.subr.bf16.mxu0 0
      %5931 = vmatpush2.bf16.msra.mxu0 0
      %5932 = vmatprep.subr.bf16.mxu0 0
      %5933 = vmatpush2.bf16.msra.mxu0 0
      %5934 = vmatprep.subr.bf16.mxu0 0
      %5935 = vmatpush2.bf16.msra.mxu0 0
      %5936 = vmatprep.subr.bf16.mxu0 0
      %5937 = vmatpush2.bf16.msra.mxu0 0
      %5938 = vmatprep.subr.bf16.mxu0 0
      %5939 = vmatpush2.bf16.msra.mxu0 0
      %5940 = vmatprep.subr.bf16.mxu0 0
      %5941 = vmatpush2.bf16.msra.mxu0 0
      %5942 = vmatprep.subr.bf16.mxu0 0
      %5943 = vmatpush2.bf16.msra.mxu0 0
      %5944 = vmatprep.mubr.bf16.mxu0 0
      %5945 = vmatmul.mubr.bf16.gmra.mxu0 %v5860
      %v5946 = vpop.f32.mrf.mxu0
      %v5947 = vadd.f32 0.0, %v5946
      %v5948 = vpop.f32.mrf.mxu0
      %v5949 = vpop.f32.mrf.mxu0
      %v5950 = vpop.f32.mrf.mxu0
      %5951 = vdwg.mxu0
      %v5952 = vadd.f32 %v5824, %v5906
      %v5953 = vadd.f32 %v5825, %v5908
      %v5954 = vadd.f32 %v5826, %v5947
      %5955 = vst [vmem:[#allocation2] sm:$0xff] %v5952
      %5956 = vst [vmem:[#allocation2 + $0x8] sm:$0xff] %v5953
      %5957 = vst [vmem:[#allocation2 + $0x10] sm:$0xff] %v5954
      %v5958 = vld [vmem:[#allocation2] sm:$0xff]
      %v5959 = vld [vmem:[#allocation2 + $0x8] sm:$0xff]
      %v5960 = vld [vmem:[#allocation2 + $0x10] sm:$0xff]
      %s5961 = scalar_lea.vmem %s0, 172
      %v5962 = vld [vmem:[%s5961] sm:$0xf]
      %v5963 = vld [vmem:[%s165 + $0x2] sm:$0xff]
      %v5965 = vcombine.high %v5963, %v5963
      %v5967 = vunpack.c.l.s4 1983009808
      %v5968 = vunpack.c.0.s8 %v5967
      %v5969 = vlaneseq
      %v5970 = vshrl.u32 %v5969, 7
      %v5971 = vsub.s32 %v5968, %v5970
      %v5972 = vrot.slane %v5963, %v5971
      %v5974 = vunpack.c.l.s4 1983009808
      %v5975 = vunpack.c.0.s8 %v5974
      %v5976 = vlaneseq
      %v5977 = vshrl.u32 %v5976, 7
      %v5978 = vsub.s32 %v5975, %v5977
      %v5979 = vrot.slane %v5965, %v5978
      %v5980 = vcombine.high %v5972, %v5972
      %v5981 = vcombine.high %v5979, %v5979
      %5982 = vrot.lane.b32.xlu0 %v5972, 123
      %v5983 = vpop.permute.xlu0 %5982
      %5984 = vrot.lane.b32.xlu0 %v5980, 123
      %v5985 = vpop.permute.xlu0 %5984
      %5986 = vrot.lane.b32.xlu0 %v5979, 123
      %v5987 = vpop.permute.xlu0 %5986
      %5988 = vrot.lane.b32.xlu0 %v5981, 123
      %v5989 = vpop.permute.xlu0 %5988
      %v5990 = vsel %vm861, %v5983, %v5985
      %v5991 = vsel %vm861, %v5985, %v5987
      %v5992 = vsel %vm861, %v5987, %v5989
      %v5994 = vsel %vm191, %v5962, 0
      %v5997 = vsel %vm195, %v5990, 0
      %v6000 = vsel %vm195, %v5991, 0
      %v6003 = vsel %vm195, %v5992, 0
      %6005 = vmatprep.subr.bf16.mxu0 0
      %6006 = vmatpush1.bf16.msra.mxu0 0
      %6007 = vmatprep.subr.bf16.mxu0 0
      %6008 = vmatpush1.bf16.msra.mxu0 0
      %6009 = vmatprep.subr.bf16.mxu0 0
      %6010 = vmatpush1.bf16.msra.mxu0 0
      %6011 = vmatprep.subr.bf16.mxu0 0
      %6012 = vmatpush1.bf16.msra.mxu0 0
      %6013 = vmatprep.subr.bf16.mxu0 0
      %6014 = vmatpush1.bf16.msra.mxu0 0
      %6015 = vmatprep.subr.bf16.mxu0 0
      %6016 = vmatpush1.bf16.msra.mxu0 0
      %6017 = vmatprep.subr.bf16.mxu0 0
      %6018 = vmatpush1.bf16.msra.mxu0 0
      %6019 = vmatprep.subr.bf16.mxu0 %v6000
      %6020 = vmatpush1.bf16.msra.mxu0 %v5997
      %6021 = vmatprep.subr.bf16.mxu0 0
      %6022 = vmatpush2.bf16.msra.mxu0 0
      %6023 = vmatprep.subr.bf16.mxu0 0
      %6024 = vmatpush2.bf16.msra.mxu0 0
      %6025 = vmatprep.subr.bf16.mxu0 0
      %6026 = vmatpush2.bf16.msra.mxu0 0
      %6027 = vmatprep.subr.bf16.mxu0 0
      %6028 = vmatpush2.bf16.msra.mxu0 0
      %6029 = vmatprep.subr.bf16.mxu0 0
      %6030 = vmatpush2.bf16.msra.mxu0 0
      %6031 = vmatprep.subr.bf16.mxu0 0
      %6032 = vmatpush2.bf16.msra.mxu0 0
      %6033 = vmatprep.subr.bf16.mxu0 0
      %6034 = vmatpush2.bf16.msra.mxu0 0
      %6035 = vmatprep.subr.bf16.mxu0 0
      %6036 = vmatpush2.bf16.msra.mxu0 0
      %6037 = vmatprep.mubr.bf16.mxu0 0
      %6038 = vmatmul.mubr.bf16.gmra.mxu0 %v5994
      %v6039 = vpop.f32.mrf.mxu0
      %v6040 = vadd.f32 0.0, %v6039
      %v6041 = vpop.f32.mrf.mxu0
      %v6042 = vadd.f32 0.0, %v6041
      %v6043 = vpop.f32.mrf.mxu0
      %v6044 = vpop.f32.mrf.mxu0
      %6045 = vdwg.mxu0
      %6046 = vmatprep.subr.bf16.mxu0 0
      %6047 = vmatpush1.bf16.msra.mxu0 0
      %6048 = vmatprep.subr.bf16.mxu0 0
      %6049 = vmatpush1.bf16.msra.mxu0 0
      %6050 = vmatprep.subr.bf16.mxu0 0
      %6051 = vmatpush1.bf16.msra.mxu0 0
      %6052 = vmatprep.subr.bf16.mxu0 0
      %6053 = vmatpush1.bf16.msra.mxu0 0
      %6054 = vmatprep.subr.bf16.mxu0 0
      %6055 = vmatpush1.bf16.msra.mxu0 0
      %6056 = vmatprep.subr.bf16.mxu0 0
      %6057 = vmatpush1.bf16.msra.mxu0 0
      %6058 = vmatprep.subr.bf16.mxu0 0
      %6059 = vmatpush1.bf16.msra.mxu0 0
      %6060 = vmatprep.subr.bf16.mxu0 0
      %6061 = vmatpush1.bf16.msra.mxu0 %v6003
      %6062 = vmatprep.subr.bf16.mxu0 0
      %6063 = vmatpush2.bf16.msra.mxu0 0
      %6064 = vmatprep.subr.bf16.mxu0 0
      %6065 = vmatpush2.bf16.msra.mxu0 0
      %6066 = vmatprep.subr.bf16.mxu0 0
      %6067 = vmatpush2.bf16.msra.mxu0 0
      %6068 = vmatprep.subr.bf16.mxu0 0
      %6069 = vmatpush2.bf16.msra.mxu0 0
      %6070 = vmatprep.subr.bf16.mxu0 0
      %6071 = vmatpush2.bf16.msra.mxu0 0
      %6072 = vmatprep.subr.bf16.mxu0 0
      %6073 = vmatpush2.bf16.msra.mxu0 0
      %6074 = vmatprep.subr.bf16.mxu0 0
      %6075 = vmatpush2.bf16.msra.mxu0 0
      %6076 = vmatprep.subr.bf16.mxu0 0
      %6077 = vmatpush2.bf16.msra.mxu0 0
      %6078 = vmatprep.mubr.bf16.mxu0 0
      %6079 = vmatmul.mubr.bf16.gmra.mxu0 %v5994
      %v6080 = vpop.f32.mrf.mxu0
      %v6081 = vadd.f32 0.0, %v6080
      %v6082 = vpop.f32.mrf.mxu0
      %v6083 = vpop.f32.mrf.mxu0
      %v6084 = vpop.f32.mrf.mxu0
      %6085 = vdwg.mxu0
      %v6086 = vadd.f32 %v5958, %v6040
      %v6087 = vadd.f32 %v5959, %v6042
      %v6088 = vadd.f32 %v5960, %v6081
      %6089 = vst [vmem:[#allocation2] sm:$0xff] %v6086
      %6090 = vst [vmem:[#allocation2 + $0x8] sm:$0xff] %v6087
      %6091 = vst [vmem:[#allocation2 + $0x10] sm:$0xff] %v6088
      %v6092 = vld [vmem:[#allocation2] sm:$0xff]
      %v6093 = vld [vmem:[#allocation2 + $0x8] sm:$0xff]
      %v6094 = vld [vmem:[#allocation2 + $0x10] sm:$0xff]
      %s6095 = scalar_lea.vmem %s0, 176
      %v6096 = vld [vmem:[%s6095] sm:$0xf]
      %v6097 = vld [vmem:[%s165 + $0x2] sm:$0xff]
      %v6099 = vcombine.high %v6097, %v6097
      %v6101 = vunpack.c.l.s4 1983009808
      %v6102 = vunpack.c.0.s8 %v6101
      %v6103 = vlaneseq
      %v6104 = vshrl.u32 %v6103, 7
      %v6105 = vsub.s32 %v6102, %v6104
      %v6106 = vrot.slane %v6097, %v6105
      %v6108 = vunpack.c.l.s4 1983009808
      %v6109 = vunpack.c.0.s8 %v6108
      %v6110 = vlaneseq
      %v6111 = vshrl.u32 %v6110, 7
      %v6112 = vsub.s32 %v6109, %v6111
      %v6113 = vrot.slane %v6099, %v6112
      %v6114 = vcombine.high %v6106, %v6106
      %v6115 = vcombine.high %v6113, %v6113
      %6116 = vrot.lane.b32.xlu0 %v6106, 122
      %v6117 = vpop.permute.xlu0 %6116
      %6118 = vrot.lane.b32.xlu0 %v6114, 122
      %v6119 = vpop.permute.xlu0 %6118
      %6120 = vrot.lane.b32.xlu0 %v6113, 122
      %v6121 = vpop.permute.xlu0 %6120
      %6122 = vrot.lane.b32.xlu0 %v6115, 122
      %v6123 = vpop.permute.xlu0 %6122
      %v6124 = vsel %vm996, %v6117, %v6119
      %v6125 = vsel %vm996, %v6119, %v6121
      %v6126 = vsel %vm996, %v6121, %v6123
      %v6128 = vsel %vm191, %v6096, 0
      %v6131 = vsel %vm195, %v6124, 0
      %v6134 = vsel %vm195, %v6125, 0
      %v6137 = vsel %vm195, %v6126, 0
      %6139 = vmatprep.subr.bf16.mxu0 0
      %6140 = vmatpush1.bf16.msra.mxu0 0
      %6141 = vmatprep.subr.bf16.mxu0 0
      %6142 = vmatpush1.bf16.msra.mxu0 0
      %6143 = vmatprep.subr.bf16.mxu0 0
      %6144 = vmatpush1.bf16.msra.mxu0 0
      %6145 = vmatprep.subr.bf16.mxu0 0
      %6146 = vmatpush1.bf16.msra.mxu0 0
      %6147 = vmatprep.subr.bf16.mxu0 0
      %6148 = vmatpush1.bf16.msra.mxu0 0
      %6149 = vmatprep.subr.bf16.mxu0 0
      %6150 = vmatpush1.bf16.msra.mxu0 0
      %6151 = vmatprep.subr.bf16.mxu0 0
      %6152 = vmatpush1.bf16.msra.mxu0 0
      %6153 = vmatprep.subr.bf16.mxu0 %v6134
      %6154 = vmatpush1.bf16.msra.mxu0 %v6131
      %6155 = vmatprep.subr.bf16.mxu0 0
      %6156 = vmatpush2.bf16.msra.mxu0 0
      %6157 = vmatprep.subr.bf16.mxu0 0
      %6158 = vmatpush2.bf16.msra.mxu0 0
      %6159 = vmatprep.subr.bf16.mxu0 0
      %6160 = vmatpush2.bf16.msra.mxu0 0
      %6161 = vmatprep.subr.bf16.mxu0 0
      %6162 = vmatpush2.bf16.msra.mxu0 0
      %6163 = vmatprep.subr.bf16.mxu0 0
      %6164 = vmatpush2.bf16.msra.mxu0 0
      %6165 = vmatprep.subr.bf16.mxu0 0
      %6166 = vmatpush2.bf16.msra.mxu0 0
      %6167 = vmatprep.subr.bf16.mxu0 0
      %6168 = vmatpush2.bf16.msra.mxu0 0
      %6169 = vmatprep.subr.bf16.mxu0 0
      %6170 = vmatpush2.bf16.msra.mxu0 0
      %6171 = vmatprep.mubr.bf16.mxu0 0
      %6172 = vmatmul.mubr.bf16.gmra.mxu0 %v6128
      %v6173 = vpop.f32.mrf.mxu0
      %v6174 = vadd.f32 0.0, %v6173
      %v6175 = vpop.f32.mrf.mxu0
      %v6176 = vadd.f32 0.0, %v6175
      %v6177 = vpop.f32.mrf.mxu0
      %v6178 = vpop.f32.mrf.mxu0
      %6179 = vdwg.mxu0
      %6180 = vmatprep.subr.bf16.mxu0 0
      %6181 = vmatpush1.bf16.msra.mxu0 0
      %6182 = vmatprep.subr.bf16.mxu0 0
      %6183 = vmatpush1.bf16.msra.mxu0 0
      %6184 = vmatprep.subr.bf16.mxu0 0
      %6185 = vmatpush1.bf16.msra.mxu0 0
      %6186 = vmatprep.subr.bf16.mxu0 0
      %6187 = vmatpush1.bf16.msra.mxu0 0
      %6188 = vmatprep.subr.bf16.mxu0 0
      %6189 = vmatpush1.bf16.msra.mxu0 0
      %6190 = vmatprep.subr.bf16.mxu0 0
      %6191 = vmatpush1.bf16.msra.mxu0 0
      %6192 = vmatprep.subr.bf16.mxu0 0
      %6193 = vmatpush1.bf16.msra.mxu0 0
      %6194 = vmatprep.subr.bf16.mxu0 0
      %6195 = vmatpush1.bf16.msra.mxu0 %v6137
      %6196 = vmatprep.subr.bf16.mxu0 0
      %6197 = vmatpush2.bf16.msra.mxu0 0
      %6198 = vmatprep.subr.bf16.mxu0 0
      %6199 = vmatpush2.bf16.msra.mxu0 0
      %6200 = vmatprep.subr.bf16.mxu0 0
      %6201 = vmatpush2.bf16.msra.mxu0 0
      %6202 = vmatprep.subr.bf16.mxu0 0
      %6203 = vmatpush2.bf16.msra.mxu0 0
      %6204 = vmatprep.subr.bf16.mxu0 0
      %6205 = vmatpush2.bf16.msra.mxu0 0
      %6206 = vmatprep.subr.bf16.mxu0 0
      %6207 = vmatpush2.bf16.msra.mxu0 0
      %6208 = vmatprep.subr.bf16.mxu0 0
      %6209 = vmatpush2.bf16.msra.mxu0 0
      %6210 = vmatprep.subr.bf16.mxu0 0
      %6211 = vmatpush2.bf16.msra.mxu0 0
      %6212 = vmatprep.mubr.bf16.mxu0 0
      %6213 = vmatmul.mubr.bf16.gmra.mxu0 %v6128
      %v6214 = vpop.f32.mrf.mxu0
      %v6215 = vadd.f32 0.0, %v6214
      %v6216 = vpop.f32.mrf.mxu0
      %v6217 = vpop.f32.mrf.mxu0
      %v6218 = vpop.f32.mrf.mxu0
      %6219 = vdwg.mxu0
      %v6220 = vadd.f32 %v6092, %v6174
      %v6221 = vadd.f32 %v6093, %v6176
      %v6222 = vadd.f32 %v6094, %v6215
      %6223 = vst [vmem:[#allocation2] sm:$0xff] %v6220
      %6224 = vst [vmem:[#allocation2 + $0x8] sm:$0xff] %v6221
      %6225 = vst [vmem:[#allocation2 + $0x10] sm:$0xff] %v6222
      %v6226 = vld [vmem:[#allocation2] sm:$0xff]
      %v6227 = vld [vmem:[#allocation2 + $0x8] sm:$0xff]
      %v6228 = vld [vmem:[#allocation2 + $0x10] sm:$0xff]
      %s6229 = scalar_lea.vmem %s0, 180
      %v6230 = vld [vmem:[%s6229] sm:$0xf]
      %v6231 = vld [vmem:[%s165 + $0x2] sm:$0xff]
      %v6233 = vcombine.high %v6231, %v6231
      %v6235 = vunpack.c.l.s4 1983009808
      %v6236 = vunpack.c.0.s8 %v6235
      %v6237 = vlaneseq
      %v6238 = vshrl.u32 %v6237, 7
      %v6239 = vsub.s32 %v6236, %v6238
      %v6240 = vrot.slane %v6231, %v6239
      %v6242 = vunpack.c.l.s4 1983009808
      %v6243 = vunpack.c.0.s8 %v6242
      %v6244 = vlaneseq
      %v6245 = vshrl.u32 %v6244, 7
      %v6246 = vsub.s32 %v6243, %v6245
      %v6247 = vrot.slane %v6233, %v6246
      %v6248 = vcombine.high %v6240, %v6240
      %v6249 = vcombine.high %v6247, %v6247
      %6250 = vrot.lane.b32.xlu0 %v6240, 121
      %v6251 = vpop.permute.xlu0 %6250
      %6252 = vrot.lane.b32.xlu0 %v6248, 121
      %v6253 = vpop.permute.xlu0 %6252
      %6254 = vrot.lane.b32.xlu0 %v6247, 121
      %v6255 = vpop.permute.xlu0 %6254
      %6256 = vrot.lane.b32.xlu0 %v6249, 121
      %v6257 = vpop.permute.xlu0 %6256
      %vm6258 = vcmask 990208
      %v6259 = vsel %vm6258, %v6251, %v6253
      %v6260 = vsel %vm6258, %v6253, %v6255
      %v6261 = vsel %vm6258, %v6255, %v6257
      %v6263 = vsel %vm191, %v6230, 0
      %v6266 = vsel %vm195, %v6259, 0
      %v6269 = vsel %vm195, %v6260, 0
      %v6272 = vsel %vm195, %v6261, 0
      %6274 = vmatprep.subr.bf16.mxu0 0
      %6275 = vmatpush1.bf16.msra.mxu0 0
      %6276 = vmatprep.subr.bf16.mxu0 0
      %6277 = vmatpush1.bf16.msra.mxu0 0
      %6278 = vmatprep.subr.bf16.mxu0 0
      %6279 = vmatpush1.bf16.msra.mxu0 0
      %6280 = vmatprep.subr.bf16.mxu0 0
      %6281 = vmatpush1.bf16.msra.mxu0 0
      %6282 = vmatprep.subr.bf16.mxu0 0
      %6283 = vmatpush1.bf16.msra.mxu0 0
      %6284 = vmatprep.subr.bf16.mxu0 0
      %6285 = vmatpush1.bf16.msra.mxu0 0
      %6286 = vmatprep.subr.bf16.mxu0 0
      %6287 = vmatpush1.bf16.msra.mxu0 0
      %6288 = vmatprep.subr.bf16.mxu0 %v6269
      %6289 = vmatpush1.bf16.msra.mxu0 %v6266
      %6290 = vmatprep.subr.bf16.mxu0 0
      %6291 = vmatpush2.bf16.msra.mxu0 0
      %6292 = vmatprep.subr.bf16.mxu0 0
      %6293 = vmatpush2.bf16.msra.mxu0 0
      %6294 = vmatprep.subr.bf16.mxu0 0
      %6295 = vmatpush2.bf16.msra.mxu0 0
      %6296 = vmatprep.subr.bf16.mxu0 0
      %6297 = vmatpush2.bf16.msra.mxu0 0
      %6298 = vmatprep.subr.bf16.mxu0 0
      %6299 = vmatpush2.bf16.msra.mxu0 0
      %6300 = vmatprep.subr.bf16.mxu0 0
      %6301 = vmatpush2.bf16.msra.mxu0 0
      %6302 = vmatprep.subr.bf16.mxu0 0
      %6303 = vmatpush2.bf16.msra.mxu0 0
      %6304 = vmatprep.subr.bf16.mxu0 0
      %6305 = vmatpush2.bf16.msra.mxu0 0
      %6306 = vmatprep.mubr.bf16.mxu0 0
      %6307 = vmatmul.mubr.bf16.gmra.mxu0 %v6263
      %v6308 = vpop.f32.mrf.mxu0
      %v6309 = vadd.f32 0.0, %v6308
      %v6310 = vpop.f32.mrf.mxu0
      %v6311 = vadd.f32 0.0, %v6310
      %v6312 = vpop.f32.mrf.mxu0
      %v6313 = vpop.f32.mrf.mxu0
      %6314 = vdwg.mxu0
      %6315 = vmatprep.subr.bf16.mxu0 0
      %6316 = vmatpush1.bf16.msra.mxu0 0
      %6317 = vmatprep.subr.bf16.mxu0 0
      %6318 = vmatpush1.bf16.msra.mxu0 0
      %6319 = vmatprep.subr.bf16.mxu0 0
      %6320 = vmatpush1.bf16.msra.mxu0 0
      %6321 = vmatprep.subr.bf16.mxu0 0
      %6322 = vmatpush1.bf16.msra.mxu0 0
      %6323 = vmatprep.subr.bf16.mxu0 0
      %6324 = vmatpush1.bf16.msra.mxu0 0
      %6325 = vmatprep.subr.bf16.mxu0 0
      %6326 = vmatpush1.bf16.msra.mxu0 0
      %6327 = vmatprep.subr.bf16.mxu0 0
      %6328 = vmatpush1.bf16.msra.mxu0 0
      %6329 = vmatprep.subr.bf16.mxu0 0
      %6330 = vmatpush1.bf16.msra.mxu0 %v6272
      %6331 = vmatprep.subr.bf16.mxu0 0
      %6332 = vmatpush2.bf16.msra.mxu0 0
      %6333 = vmatprep.subr.bf16.mxu0 0
      %6334 = vmatpush2.bf16.msra.mxu0 0
      %6335 = vmatprep.subr.bf16.mxu0 0
      %6336 = vmatpush2.bf16.msra.mxu0 0
      %6337 = vmatprep.subr.bf16.mxu0 0
      %6338 = vmatpush2.bf16.msra.mxu0 0
      %6339 = vmatprep.subr.bf16.mxu0 0
      %6340 = vmatpush2.bf16.msra.mxu0 0
      %6341 = vmatprep.subr.bf16.mxu0 0
      %6342 = vmatpush2.bf16.msra.mxu0 0
      %6343 = vmatprep.subr.bf16.mxu0 0
      %6344 = vmatpush2.bf16.msra.mxu0 0
      %6345 = vmatprep.subr.bf16.mxu0 0
      %6346 = vmatpush2.bf16.msra.mxu0 0
      %6347 = vmatprep.mubr.bf16.mxu0 0
      %6348 = vmatmul.mubr.bf16.gmra.mxu0 %v6263
      %v6349 = vpop.f32.mrf.mxu0
      %v6350 = vadd.f32 0.0, %v6349
      %v6351 = vpop.f32.mrf.mxu0
      %v6352 = vpop.f32.mrf.mxu0
      %v6353 = vpop.f32.mrf.mxu0
      %6354 = vdwg.mxu0
      %v6355 = vadd.f32 %v6226, %v6309
      %v6356 = vadd.f32 %v6227, %v6311
      %v6357 = vadd.f32 %v6228, %v6350
      %6358 = vst [vmem:[#allocation2] sm:$0xff] %v6355
      %6359 = vst [vmem:[#allocation2 + $0x8] sm:$0xff] %v6356
      %6360 = vst [vmem:[#allocation2 + $0x10] sm:$0xff] %v6357
      %v6361 = vld [vmem:[#allocation2] sm:$0xff]
      %v6362 = vld [vmem:[#allocation2 + $0x8] sm:$0xff]
      %v6363 = vld [vmem:[#allocation2 + $0x10] sm:$0xff]
      %s6364 = scalar_lea.vmem %s0, 184
      %v6365 = vld [vmem:[%s6364] sm:$0xf]
      %v6366 = vld [vmem:[%s165 + $0x2] sm:$0xff]
      %v6368 = vcombine.high %v6366, %v6366
      %v6370 = vunpack.c.l.s4 1983009808
      %v6371 = vunpack.c.0.s8 %v6370
      %v6372 = vlaneseq
      %v6373 = vshrl.u32 %v6372, 7
      %v6374 = vsub.s32 %v6371, %v6373
      %v6375 = vrot.slane %v6366, %v6374
      %v6377 = vunpack.c.l.s4 1983009808
      %v6378 = vunpack.c.0.s8 %v6377
      %v6379 = vlaneseq
      %v6380 = vshrl.u32 %v6379, 7
      %v6381 = vsub.s32 %v6378, %v6380
      %v6382 = vrot.slane %v6368, %v6381
      %v6383 = vcombine.high %v6375, %v6375
      %v6384 = vcombine.high %v6382, %v6382
      %6385 = vrot.lane.b32.xlu0 %v6375, 120
      %v6386 = vpop.permute.xlu0 %6385
      %6387 = vrot.lane.b32.xlu0 %v6383, 120
      %v6388 = vpop.permute.xlu0 %6387
      %6389 = vrot.lane.b32.xlu0 %v6382, 120
      %v6390 = vpop.permute.xlu0 %6389
      %6391 = vrot.lane.b32.xlu0 %v6384, 120
      %v6392 = vpop.permute.xlu0 %6391
      %vm6393 = vcmask 982016
      %v6394 = vsel %vm6393, %v6386, %v6388
      %v6395 = vsel %vm6393, %v6388, %v6390
      %v6396 = vsel %vm6393, %v6390, %v6392
      %v6398 = vsel %vm191, %v6365, 0
      %v6401 = vsel %vm195, %v6394, 0
      %v6404 = vsel %vm195, %v6395, 0
      %v6407 = vsel %vm195, %v6396, 0
      %6409 = vmatprep.subr.bf16.mxu0 0
      %6410 = vmatpush1.bf16.msra.mxu0 0
      %6411 = vmatprep.subr.bf16.mxu0 0
      %6412 = vmatpush1.bf16.msra.mxu0 0
      %6413 = vmatprep.subr.bf16.mxu0 0
      %6414 = vmatpush1.bf16.msra.mxu0 0
      %6415 = vmatprep.subr.bf16.mxu0 0
      %6416 = vmatpush1.bf16.msra.mxu0 0
      %6417 = vmatprep.subr.bf16.mxu0 0
      %6418 = vmatpush1.bf16.msra.mxu0 0
      %6419 = vmatprep.subr.bf16.mxu0 0
      %6420 = vmatpush1.bf16.msra.mxu0 0
      %6421 = vmatprep.subr.bf16.mxu0 0
      %6422 = vmatpush1.bf16.msra.mxu0 0
      %6423 = vmatprep.subr.bf16.mxu0 %v6404
      %6424 = vmatpush1.bf16.msra.mxu0 %v6401
      %6425 = vmatprep.subr.bf16.mxu0 0
      %6426 = vmatpush2.bf16.msra.mxu0 0
      %6427 = vmatprep.subr.bf16.mxu0 0
      %6428 = vmatpush2.bf16.msra.mxu0 0
      %6429 = vmatprep.subr.bf16.mxu0 0
      %6430 = vmatpush2.bf16.msra.mxu0 0
      %6431 = vmatprep.subr.bf16.mxu0 0
      %6432 = vmatpush2.bf16.msra.mxu0 0
      %6433 = vmatprep.subr.bf16.mxu0 0
      %6434 = vmatpush2.bf16.msra.mxu0 0
      %6435 = vmatprep.subr.bf16.mxu0 0
      %6436 = vmatpush2.bf16.msra.mxu0 0
      %6437 = vmatprep.subr.bf16.mxu0 0
      %6438 = vmatpush2.bf16.msra.mxu0 0
      %6439 = vmatprep.subr.bf16.mxu0 0
      %6440 = vmatpush2.bf16.msra.mxu0 0
      %6441 = vmatprep.mubr.bf16.mxu0 0
      %6442 = vmatmul.mubr.bf16.gmra.mxu0 %v6398
      %v6443 = vpop.f32.mrf.mxu0
      %v6444 = vadd.f32 0.0, %v6443
      %v6445 = vpop.f32.mrf.mxu0
      %v6446 = vadd.f32 0.0, %v6445
      %v6447 = vpop.f32.mrf.mxu0
      %v6448 = vpop.f32.mrf.mxu0
      %6449 = vdwg.mxu0
      %6450 = vmatprep.subr.bf16.mxu0 0
      %6451 = vmatpush1.bf16.msra.mxu0 0
      %6452 = vmatprep.subr.bf16.mxu0 0
      %6453 = vmatpush1.bf16.msra.mxu0 0
      %6454 = vmatprep.subr.bf16.mxu0 0
      %6455 = vmatpush1.bf16.msra.mxu0 0
      %6456 = vmatprep.subr.bf16.mxu0 0
      %6457 = vmatpush1.bf16.msra.mxu0 0
      %6458 = vmatprep.subr.bf16.mxu0 0
      %6459 = vmatpush1.bf16.msra.mxu0 0
      %6460 = vmatprep.subr.bf16.mxu0 0
      %6461 = vmatpush1.bf16.msra.mxu0 0
      %6462 = vmatprep.subr.bf16.mxu0 0
      %6463 = vmatpush1.bf16.msra.mxu0 0
      %6464 = vmatprep.subr.bf16.mxu0 0
      %6465 = vmatpush1.bf16.msra.mxu0 %v6407
      %6466 = vmatprep.subr.bf16.mxu0 0
      %6467 = vmatpush2.bf16.msra.mxu0 0
      %6468 = vmatprep.subr.bf16.mxu0 0
      %6469 = vmatpush2.bf16.msra.mxu0 0
      %6470 = vmatprep.subr.bf16.mxu0 0
      %6471 = vmatpush2.bf16.msra.mxu0 0
      %6472 = vmatprep.subr.bf16.mxu0 0
      %6473 = vmatpush2.bf16.msra.mxu0 0
      %6474 = vmatprep.subr.bf16.mxu0 0
      %6475 = vmatpush2.bf16.msra.mxu0 0
      %6476 = vmatprep.subr.bf16.mxu0 0
      %6477 = vmatpush2.bf16.msra.mxu0 0
      %6478 = vmatprep.subr.bf16.mxu0 0
      %6479 = vmatpush2.bf16.msra.mxu0 0
      %6480 = vmatprep.subr.bf16.mxu0 0
      %6481 = vmatpush2.bf16.msra.mxu0 0
      %6482 = vmatprep.mubr.bf16.mxu0 0
      %6483 = vmatmul.mubr.bf16.gmra.mxu0 %v6398
      %v6484 = vpop.f32.mrf.mxu0
      %v6485 = vadd.f32 0.0, %v6484
      %v6486 = vpop.f32.mrf.mxu0
      %v6487 = vpop.f32.mrf.mxu0
      %v6488 = vpop.f32.mrf.mxu0
      %6489 = vdwg.mxu0
      %v6490 = vadd.f32 %v6361, %v6444
      %v6491 = vadd.f32 %v6362, %v6446
      %v6492 = vadd.f32 %v6363, %v6485
      %6493 = vst [vmem:[#allocation2] sm:$0xff] %v6490
      %6494 = vst [vmem:[#allocation2 + $0x8] sm:$0xff] %v6491
      %6495 = vst [vmem:[#allocation2 + $0x10] sm:$0xff] %v6492
      %v6496 = vld [vmem:[#allocation2] sm:$0xff]
      %v6497 = vld [vmem:[#allocation2 + $0x8] sm:$0xff]
      %v6498 = vld [vmem:[#allocation2 + $0x10] sm:$0xff]
      %s6499 = scalar_lea.vmem %s0, 188
      %v6500 = vld [vmem:[%s6499] sm:$0xf]
      %v6501 = vld [vmem:[%s165 + $0x2] sm:$0xff]
      %v6503 = vcombine.high %v6501, %v6501
      %v6505 = vunpack.c.l.s4 1983009808
      %v6506 = vunpack.c.0.s8 %v6505
      %v6507 = vlaneseq
      %v6508 = vshrl.u32 %v6507, 7
      %v6509 = vsub.s32 %v6506, %v6508
      %v6510 = vrot.slane %v6501, %v6509
      %v6512 = vunpack.c.l.s4 1983009808
      %v6513 = vunpack.c.0.s8 %v6512
      %v6514 = vlaneseq
      %v6515 = vshrl.u32 %v6514, 7
      %v6516 = vsub.s32 %v6513, %v6515
      %v6517 = vrot.slane %v6503, %v6516
      %v6518 = vcombine.high %v6510, %v6510
      %v6519 = vcombine.high %v6517, %v6517
      %6520 = vrot.lane.b32.xlu0 %v6510, 119
      %v6521 = vpop.permute.xlu0 %6520
      %6522 = vrot.lane.b32.xlu0 %v6518, 119
      %v6523 = vpop.permute.xlu0 %6522
      %6524 = vrot.lane.b32.xlu0 %v6517, 119
      %v6525 = vpop.permute.xlu0 %6524
      %6526 = vrot.lane.b32.xlu0 %v6519, 119
      %v6527 = vpop.permute.xlu0 %6526
      %vm6528 = vcmask 973824
      %v6529 = vsel %vm6528, %v6521, %v6523
      %v6530 = vsel %vm6528, %v6523, %v6525
      %v6531 = vsel %vm6528, %v6525, %v6527
      %v6533 = vsel %vm191, %v6500, 0
      %v6536 = vsel %vm195, %v6529, 0
      %v6539 = vsel %vm195, %v6530, 0
      %v6542 = vsel %vm195, %v6531, 0
      %6544 = vmatprep.subr.bf16.mxu0 0
      %6545 = vmatpush1.bf16.msra.mxu0 0
      %6546 = vmatprep.subr.bf16.mxu0 0
      %6547 = vmatpush1.bf16.msra.mxu0 0
      %6548 = vmatprep.subr.bf16.mxu0 0
      %6549 = vmatpush1.bf16.msra.mxu0 0
      %6550 = vmatprep.subr.bf16.mxu0 0
      %6551 = vmatpush1.bf16.msra.mxu0 0
      %6552 = vmatprep.subr.bf16.mxu0 0
      %6553 = vmatpush1.bf16.msra.mxu0 0
      %6554 = vmatprep.subr.bf16.mxu0 0
      %6555 = vmatpush1.bf16.msra.mxu0 0
      %6556 = vmatprep.subr.bf16.mxu0 0
      %6557 = vmatpush1.bf16.msra.mxu0 0
      %6558 = vmatprep.subr.bf16.mxu0 %v6539
      %6559 = vmatpush1.bf16.msra.mxu0 %v6536
      %6560 = vmatprep.subr.bf16.mxu0 0
      %6561 = vmatpush2.bf16.msra.mxu0 0
      %6562 = vmatprep.subr.bf16.mxu0 0
      %6563 = vmatpush2.bf16.msra.mxu0 0
      %6564 = vmatprep.subr.bf16.mxu0 0
      %6565 = vmatpush2.bf16.msra.mxu0 0
      %6566 = vmatprep.subr.bf16.mxu0 0
      %6567 = vmatpush2.bf16.msra.mxu0 0
      %6568 = vmatprep.subr.bf16.mxu0 0
      %6569 = vmatpush2.bf16.msra.mxu0 0
      %6570 = vmatprep.subr.bf16.mxu0 0
      %6571 = vmatpush2.bf16.msra.mxu0 0
      %6572 = vmatprep.subr.bf16.mxu0 0
      %6573 = vmatpush2.bf16.msra.mxu0 0
      %6574 = vmatprep.subr.bf16.mxu0 0
      %6575 = vmatpush2.bf16.msra.mxu0 0
      %6576 = vmatprep.mubr.bf16.mxu0 0
      %6577 = vmatmul.mubr.bf16.gmra.mxu0 %v6533
      %v6578 = vpop.f32.mrf.mxu0
      %v6579 = vadd.f32 0.0, %v6578
      %v6580 = vpop.f32.mrf.mxu0
      %v6581 = vadd.f32 0.0, %v6580
      %v6582 = vpop.f32.mrf.mxu0
      %v6583 = vpop.f32.mrf.mxu0
      %6584 = vdwg.mxu0
      %6585 = vmatprep.subr.bf16.mxu0 0
      %6586 = vmatpush1.bf16.msra.mxu0 0
      %6587 = vmatprep.subr.bf16.mxu0 0
      %6588 = vmatpush1.bf16.msra.mxu0 0
      %6589 = vmatprep.subr.bf16.mxu0 0
      %6590 = vmatpush1.bf16.msra.mxu0 0
      %6591 = vmatprep.subr.bf16.mxu0 0
      %6592 = vmatpush1.bf16.msra.mxu0 0
      %6593 = vmatprep.subr.bf16.mxu0 0
      %6594 = vmatpush1.bf16.msra.mxu0 0
      %6595 = vmatprep.subr.bf16.mxu0 0
      %6596 = vmatpush1.bf16.msra.mxu0 0
      %6597 = vmatprep.subr.bf16.mxu0 0
      %6598 = vmatpush1.bf16.msra.mxu0 0
      %6599 = vmatprep.subr.bf16.mxu0 0
      %6600 = vmatpush1.bf16.msra.mxu0 %v6542
      %6601 = vmatprep.subr.bf16.mxu0 0
      %6602 = vmatpush2.bf16.msra.mxu0 0
      %6603 = vmatprep.subr.bf16.mxu0 0
      %6604 = vmatpush2.bf16.msra.mxu0 0
      %6605 = vmatprep.subr.bf16.mxu0 0
      %6606 = vmatpush2.bf16.msra.mxu0 0
      %6607 = vmatprep.subr.bf16.mxu0 0
      %6608 = vmatpush2.bf16.msra.mxu0 0
      %6609 = vmatprep.subr.bf16.mxu0 0
      %6610 = vmatpush2.bf16.msra.mxu0 0
      %6611 = vmatprep.subr.bf16.mxu0 0
      %6612 = vmatpush2.bf16.msra.mxu0 0
      %6613 = vmatprep.subr.bf16.mxu0 0
      %6614 = vmatpush2.bf16.msra.mxu0 0
      %6615 = vmatprep.subr.bf16.mxu0 0
      %6616 = vmatpush2.bf16.msra.mxu0 0
      %6617 = vmatprep.mubr.bf16.mxu0 0
      %6618 = vmatmul.mubr.bf16.gmra.mxu0 %v6533
      %v6619 = vpop.f32.mrf.mxu0
      %v6620 = vadd.f32 0.0, %v6619
      %v6621 = vpop.f32.mrf.mxu0
      %v6622 = vpop.f32.mrf.mxu0
      %v6623 = vpop.f32.mrf.mxu0
      %6624 = vdwg.mxu0
      %v6625 = vadd.f32 %v6496, %v6579
      %v6626 = vadd.f32 %v6497, %v6581
      %v6627 = vadd.f32 %v6498, %v6620
      %6628 = vst [vmem:[#allocation2] sm:$0xff] %v6625
      %6629 = vst [vmem:[#allocation2 + $0x8] sm:$0xff] %v6626
      %6630 = vst [vmem:[#allocation2 + $0x10] sm:$0xff] %v6627
      %v6631 = vld [vmem:[#allocation2] sm:$0xff]
      %v6632 = vld [vmem:[#allocation2 + $0x8] sm:$0xff]
      %v6633 = vld [vmem:[#allocation2 + $0x10] sm:$0xff]
      %s6634 = scalar_lea.vmem %s0, 192
      %v6635 = vld [vmem:[%s6634] sm:$0xf]
      %v6636 = vld [vmem:[%s165 + $0x2] sm:$0xff]
      %v6638 = vcombine.high %v6636, %v6636
      %v6640 = vunpack.c.l.s4 1983009808
      %v6641 = vunpack.c.0.s8 %v6640
      %v6642 = vlaneseq
      %v6643 = vshrl.u32 %v6642, 7
      %v6644 = vsub.s32 %v6641, %v6643
      %v6645 = vrot.slane %v6636, %v6644
      %v6647 = vunpack.c.l.s4 1983009808
      %v6648 = vunpack.c.0.s8 %v6647
      %v6649 = vlaneseq
      %v6650 = vshrl.u32 %v6649, 7
      %v6651 = vsub.s32 %v6648, %v6650
      %v6652 = vrot.slane %v6638, %v6651
      %v6653 = vcombine.high %v6645, %v6645
      %v6654 = vcombine.high %v6652, %v6652
      %6655 = vrot.lane.b32.xlu0 %v6645, 118
      %v6656 = vpop.permute.xlu0 %6655
      %6657 = vrot.lane.b32.xlu0 %v6653, 118
      %v6658 = vpop.permute.xlu0 %6657
      %6659 = vrot.lane.b32.xlu0 %v6652, 118
      %v6660 = vpop.permute.xlu0 %6659
      %6661 = vrot.lane.b32.xlu0 %v6654, 118
      %v6662 = vpop.permute.xlu0 %6661
      %vm6663 = vcmask 965632
      %v6664 = vsel %vm6663, %v6656, %v6658
      %v6665 = vsel %vm6663, %v6658, %v6660
      %v6666 = vsel %vm6663, %v6660, %v6662
      %v6668 = vsel %vm191, %v6635, 0
      %v6671 = vsel %vm195, %v6664, 0
      %v6674 = vsel %vm195, %v6665, 0
      %v6677 = vsel %vm195, %v6666, 0
      %6679 = vmatprep.subr.bf16.mxu0 0
      %6680 = vmatpush1.bf16.msra.mxu0 0
      %6681 = vmatprep.subr.bf16.mxu0 0
      %6682 = vmatpush1.bf16.msra.mxu0 0
      %6683 = vmatprep.subr.bf16.mxu0 0
      %6684 = vmatpush1.bf16.msra.mxu0 0
      %6685 = vmatprep.subr.bf16.mxu0 0
      %6686 = vmatpush1.bf16.msra.mxu0 0
      %6687 = vmatprep.subr.bf16.mxu0 0
      %6688 = vmatpush1.bf16.msra.mxu0 0
      %6689 = vmatprep.subr.bf16.mxu0 0
      %6690 = vmatpush1.bf16.msra.mxu0 0
      %6691 = vmatprep.subr.bf16.mxu0 0
      %6692 = vmatpush1.bf16.msra.mxu0 0
      %6693 = vmatprep.subr.bf16.mxu0 %v6674
      %6694 = vmatpush1.bf16.msra.mxu0 %v6671
      %6695 = vmatprep.subr.bf16.mxu0 0
      %6696 = vmatpush2.bf16.msra.mxu0 0
      %6697 = vmatprep.subr.bf16.mxu0 0
      %6698 = vmatpush2.bf16.msra.mxu0 0
      %6699 = vmatprep.subr.bf16.mxu0 0
      %6700 = vmatpush2.bf16.msra.mxu0 0
      %6701 = vmatprep.subr.bf16.mxu0 0
      %6702 = vmatpush2.bf16.msra.mxu0 0
      %6703 = vmatprep.subr.bf16.mxu0 0
      %6704 = vmatpush2.bf16.msra.mxu0 0
      %6705 = vmatprep.subr.bf16.mxu0 0
      %6706 = vmatpush2.bf16.msra.mxu0 0
      %6707 = vmatprep.subr.bf16.mxu0 0
      %6708 = vmatpush2.bf16.msra.mxu0 0
      %6709 = vmatprep.subr.bf16.mxu0 0
      %6710 = vmatpush2.bf16.msra.mxu0 0
      %6711 = vmatprep.mubr.bf16.mxu0 0
      %6712 = vmatmul.mubr.bf16.gmra.mxu0 %v6668
      %v6713 = vpop.f32.mrf.mxu0
      %v6714 = vadd.f32 0.0, %v6713
      %v6715 = vpop.f32.mrf.mxu0
      %v6716 = vadd.f32 0.0, %v6715
      %v6717 = vpop.f32.mrf.mxu0
      %v6718 = vpop.f32.mrf.mxu0
      %6719 = vdwg.mxu0
      %6720 = vmatprep.subr.bf16.mxu0 0
      %6721 = vmatpush1.bf16.msra.mxu0 0
      %6722 = vmatprep.subr.bf16.mxu0 0
      %6723 = vmatpush1.bf16.msra.mxu0 0
      %6724 = vmatprep.subr.bf16.mxu0 0
      %6725 = vmatpush1.bf16.msra.mxu0 0
      %6726 = vmatprep.subr.bf16.mxu0 0
      %6727 = vmatpush1.bf16.msra.mxu0 0
      %6728 = vmatprep.subr.bf16.mxu0 0
      %6729 = vmatpush1.bf16.msra.mxu0 0
      %6730 = vmatprep.subr.bf16.mxu0 0
      %6731 = vmatpush1.bf16.msra.mxu0 0
      %6732 = vmatprep.subr.bf16.mxu0 0
      %6733 = vmatpush1.bf16.msra.mxu0 0
      %6734 = vmatprep.subr.bf16.mxu0 0
      %6735 = vmatpush1.bf16.msra.mxu0 %v6677
      %6736 = vmatprep.subr.bf16.mxu0 0
      %6737 = vmatpush2.bf16.msra.mxu0 0
      %6738 = vmatprep.subr.bf16.mxu0 0
      %6739 = vmatpush2.bf16.msra.mxu0 0
      %6740 = vmatprep.subr.bf16.mxu0 0
      %6741 = vmatpush2.bf16.msra.mxu0 0
      %6742 = vmatprep.subr.bf16.mxu0 0
      %6743 = vmatpush2.bf16.msra.mxu0 0
      %6744 = vmatprep.subr.bf16.mxu0 0
      %6745 = vmatpush2.bf16.msra.mxu0 0
      %6746 = vmatprep.subr.bf16.mxu0 0
      %6747 = vmatpush2.bf16.msra.mxu0 0
      %6748 = vmatprep.subr.bf16.mxu0 0
      %6749 = vmatpush2.bf16.msra.mxu0 0
      %6750 = vmatprep.subr.bf16.mxu0 0
      %6751 = vmatpush2.bf16.msra.mxu0 0
      %6752 = vmatprep.mubr.bf16.mxu0 0
      %6753 = vmatmul.mubr.bf16.gmra.mxu0 %v6668
      %v6754 = vpop.f32.mrf.mxu0
      %v6755 = vadd.f32 0.0, %v6754
      %v6756 = vpop.f32.mrf.mxu0
      %v6757 = vpop.f32.mrf.mxu0
      %v6758 = vpop.f32.mrf.mxu0
      %6759 = vdwg.mxu0
      %v6760 = vadd.f32 %v6631, %v6714
      %v6761 = vadd.f32 %v6632, %v6716
      %v6762 = vadd.f32 %v6633, %v6755
      %6763 = vst [vmem:[#allocation2] sm:$0xff] %v6760
      %6764 = vst [vmem:[#allocation2 + $0x8] sm:$0xff] %v6761
      %6765 = vst [vmem:[#allocation2 + $0x10] sm:$0xff] %v6762
      %v6766 = vld [vmem:[#allocation2] sm:$0xff]
      %v6767 = vld [vmem:[#allocation2 + $0x8] sm:$0xff]
      %v6768 = vld [vmem:[#allocation2 + $0x10] sm:$0xff]
      %v6769 = vld [vmem:[%s1] sm:$0xff]
      %6771 = vset.pattern.permute.xlu0 0
      %6772 = vperm.xlu0 %6771, %v6769
      %v6773 = vpop.permute.xlu0 %6772
      %v6775 = vadd.f32 %v6766, %v6773
      %v6776 = vadd.f32 %v6767, %v6773
      %v6777 = vadd.f32 %v6768, %v6773
      %vm6778 = vcmp.gt.f32.partialorder %v6775, 0.0
      %vm6779 = vcmp.gt.f32.partialorder %v6776, 0.0
      %vm6780 = vcmp.gt.f32.partialorder %v6777, 0.0
      %v6781 = vmul.f32 %v6775, 0.0
      %v6782 = vmul.f32 %v6776, 0.0
      %v6783 = vmul.f32 %v6777, 0.0
      %v6784 = vsel %vm6778, %v6775, %v6781
      %v6785 = vsel %vm6779, %v6776, %v6782
      %v6786 = vsel %vm6780, %v6777, %v6783
      %v6787 = vpack.c.bf16 %v6784, %v6784
      %v6788 = vpack.c.bf16 %v6785, %v6785
      %v6789 = vpack.c.bf16 %v6786, %v6786
      %v6793 = vunpack.c.l.b16 %v6787
      %v6794 = vunpack.c.l.b16 %v6788
      %v6795 = vunpack.c.l.b16 %v6789
      %v6796 = vpack.c.b16 %v6794, %v6793
      %v6797 = vpack.c.b16 %v6795, %v6795
      %6800 = vst [vmem:[%s170] sm:$0xff] %v6796
      %6801 = vst [vmem:[%s170 + $0x8] sm:$0xf] %v6797
      %p6802 = scmp.lt.s32.totalorder %s14, 1
      %s6803 = scalar_select %p6802, %s14, 1
      %s6804 = smul.addr %s6803, 3
      %s6805 = smul.addr %s6804, 4
      %s6806 = scalar_lea.vmem %s3, %s6805
      // Predicated region
      $region33: #{encoder_forward.4} parent=31 // pred_check
        %p6807 = pneg %p100
      $region34: #{encoder_forward.4} parent=31 // pred_check_branch
        %6809 = sbr.rel (%p6807) target = $region36
      $region35: #{encoder_forward.4} parent=31 // pred_region
        _
      $region36: #{encoder_forward.4} parent=31 // pred_fallthru
        _
    $region32: #{encoder_forward.4} parent=5 // pred_fallthru
      _
    %p6810 = scmp.le.s32.totalorder 2, %s9
    // Predicated region
    $region37: #{encoder_forward.4} parent=5 // pred_check
      %p6811 = pneg %p6810
    $region38: #{encoder_forward.4} parent=5 // pred_check_branch
      %6813 = sbr.rel (%p6811) target = $region40
    $region39: #{encoder_forward.4} parent=5 // pred_region
      %s6814 = ssub.s32 %s9, 2
      // Predicated region
      $region41: #{encoder_forward.4} parent=39 // pred_check
        %p6815 = pneg %p106
      $region42: #{encoder_forward.4} parent=39 // pred_check_branch
        %6817 = sbr.rel (%p6815) target = $region44
      $region43: #{encoder_forward.4} parent=39 // pred_region
        %p6818 = scmp.lt.s32.totalorder %s15, 1
        %s6819 = scalar_select %p6818, %s15, 1
        %s6820 = smul.addr %s6819, 3
        %s6821 = smul.addr %s6820, 4
        %s6822 = scalar_lea.vmem %s3, %s6821
      $region44: #{encoder_forward.4} parent=39 // pred_fallthru
        _
    $region40: #{encoder_forward.4} parent=5 // pred_fallthru
      _
  $region6: #{encoder_forward.4} parent=0 // loop_footer
    %s13 = sadd.s32 1, %s9
  $region7: #{encoder_forward.4} parent=0 // loop_footer_branch
    %8 = sbr.rel target = $region3
  $region8: #{encoder_forward.4} parent=0 // loop_exit
    _

// kernel: encoder_forward.7
$region0: #{encoder_forward.7}
  #allocation0 [shape = 'u32[]', space=smem, size = 0x4, offset = 0x4, fixed_abs, tag = 'smem constant byte address 0x4 - core index']
  #allocation1 [shape = 'u32[144,128]{1,0:T(1,128)}', space=vmem, size = 0x12000, scoped, tag = 'internal scratch']
  #allocation2 [shape = 'f32[64,128]{1,0:T(8,128)}', space=vmem, size = 0x8000, scoped, tag = 'scratch operand']
  %s0 = inlined_call_operand.vmem [shape: bf16[4,64,128], index: 0, kind: input, shape index: {}]
  %s1 = inlined_call_operand.vmem [shape: f32[64,1], index: 1, kind: input, shape index: {}]
  %s2 = inlined_call_operand.vmem [shape: bf16[2,128,256], index: 2, kind: input, shape index: {}]
  %s3 = inlined_call_operand.vmem [shape: f32[2,64,128], index: 3, kind: output, shape index: {}]
  %s4 = sld [smem:[#allocation0]]
  $region45: #{encoder_forward.7} parent=0
    _
  %s6 = ssub.s32 1, %s4
  %s7 = scalar_select 0, %s6, %s4
  loop: start=0, step=1, limit=4
  $region2: #{encoder_forward.7} parent=0 // loop_pre_header
    _
  $region3: #{encoder_forward.7} parent=0 // loop_header
    %s9 = sphi 0, %s13
    %p10 = scmp.ge.s32.totalorder %s9, 4
    %s17 = sphi 0, %s17
    %s19 = sphi 0, %s17
    %s20 = sphi 0, %s19
    %s34 = sphi 0, %s20
    %s38 = sphi 0, %s38
    %s40 = sphi 0, %s38
    %s41 = sphi 0, %s40
    %s55 = sphi 0, %s41
    %s61 = sphi 0, %s63
    %s64 = sphi 0, %s61
    %s65 = sphi 0, %s64
    %s81 = sphi 0, %s65
    %s87 = sphi 0, %s89
    %s90 = sphi 0, %s87
    %s91 = sphi 0, %s90
    %s107 = sphi 0, %s91
  $region4: #{encoder_forward.7} parent=0 // loop_header_branch
    %12 = sbr.rel (%p10) target = $region8
  $region5: #{encoder_forward.7} parent=0 // loop_body
    %s14 = ssub.s32 %s9, 1
    %s15 = ssub.s32 %s9, 2
    %s16 = sadd.s32 %s9, 1
    %s18 = sadd.s32 %s17, 1
    %p21 = scmp.eq.s32.totalorder %s9, 1
    %p22 = scmp.ne.s32.totalorder %s17, %s19
    %p23 = scmp.eq.s32.totalorder %s9, 0
    %p24 = por %p22, %p23
    %p25 = scmp.ne.s32.totalorder %s17, %s19
    %p26 = scmp.eq.s32.totalorder %s14, 1
    %p27 = por %p25, %p26
    %p28 = scmp.ne.s32.totalorder %s19, %s20
    %p29 = scmp.eq.s32.totalorder %s14, 0
    %p30 = por %p28, %p29
    %p31 = scmp.ne.s32.totalorder %s19, %s20
    %p32 = scmp.eq.s32.totalorder %s15, 1
    %p33 = por %p31, %p32
    %p35 = scmp.ne.s32.totalorder %s20, %s34
    %p36 = scmp.eq.s32.totalorder %s15, 0
    %p37 = por %p35, %p36
    %s39 = sadd.s32 %s38, 1
    %p42 = scmp.eq.s32.totalorder %s9, 1
    %p43 = scmp.ne.s32.totalorder %s38, %s40
    %p44 = scmp.eq.s32.totalorder %s9, 0
    %p45 = por %p43, %p44
    %p46 = scmp.ne.s32.totalorder %s38, %s40
    %p47 = scmp.eq.s32.totalorder %s14, 1
    %p48 = por %p46, %p47
    %p49 = scmp.ne.s32.totalorder %s40, %s41
    %p50 = scmp.eq.s32.totalorder %s14, 0
    %p51 = por %p49, %p50
    %p52 = scmp.ne.s32.totalorder %s40, %s41
    %p53 = scmp.eq.s32.totalorder %s15, 1
    %p54 = por %p52, %p53
    %p56 = scmp.ne.s32.totalorder %s41, %s55
    %p57 = scmp.eq.s32.totalorder %s15, 0
    %p58 = por %p56, %p57
    %s59 = ssub.s32 %s9, %s16
    %p60 = scmp.eq.s32.totalorder %s59, 0
    %s62 = sadd.s32 %s61, 1
    %s63 = scalar_select %p60, %s61, %s62
    %p66 = pneg %p60
    %p67 = scmp.eq.s32.totalorder %s9, 1
    %p68 = por %p66, %p67
    %p69 = scmp.ne.s32.totalorder %s61, %s64
    %p70 = scmp.eq.s32.totalorder %s9, 0
    %p71 = por %p69, %p70
    %p72 = scmp.ne.s32.totalorder %s61, %s64
    %p73 = scmp.eq.s32.totalorder %s14, 1
    %p74 = por %p72, %p73
    %p75 = scmp.ne.s32.totalorder %s64, %s65
    %p76 = scmp.eq.s32.totalorder %s14, 0
    %p77 = por %p75, %p76
    %p78 = scmp.ne.s32.totalorder %s64, %s65
    %p79 = scmp.eq.s32.totalorder %s15, 1
    %p80 = por %p78, %p79
    %p82 = scmp.ne.s32.totalorder %s65, %s81
    %p83 = scmp.eq.s32.totalorder %s15, 0
    %p84 = por %p82, %p83
    %s85 = ssub.s32 %s9, %s16
    %p86 = scmp.eq.s32.totalorder %s85, 0
    %s88 = sadd.s32 %s87, 1
    %s89 = scalar_select %p86, %s87, %s88
    %p92 = pneg %p86
    %p93 = scmp.eq.s32.totalorder %s9, 1
    %p94 = por %p92, %p93
    %p95 = scmp.ne.s32.totalorder %s87, %s90
    %p96 = scmp.eq.s32.totalorder %s9, 0
    %p97 = por %p95, %p96
    %p98 = scmp.ne.s32.totalorder %s87, %s90
    %p99 = scmp.eq.s32.totalorder %s14, 1
    %p100 = por %p98, %p99
    %p101 = scmp.ne.s32.totalorder %s90, %s91
    %p102 = scmp.eq.s32.totalorder %s14, 0
    %p103 = por %p101, %p102
    %p104 = scmp.ne.s32.totalorder %s90, %s91
    %p105 = scmp.eq.s32.totalorder %s15, 1
    %p106 = por %p104, %p105
    %p108 = scmp.ne.s32.totalorder %s91, %s107
    %p109 = scmp.eq.s32.totalorder %s15, 0
    %p110 = por %p108, %p109
    %p111 = scmp.le.s32.totalorder 1, %s9
    %p112 = scmp.lt.s32.totalorder %s9, 3
    %p113 = pnand %p111, %p112
    %p114 = pneg %p113
    // Predicated region
    $region9: #{encoder_forward.7} parent=5 // pred_check
      _
    $region10: #{encoder_forward.7} parent=5 // pred_check_branch
      %116 = sbr.rel (%p113) target = $region12
    $region11: #{encoder_forward.7} parent=5 // pred_region
      %s117 = ssub.s32 %s9, 1
      // Predicated region
      $region13: #{encoder_forward.7} parent=11 // pred_check
        %p118 = pneg %p30
      $region14: #{encoder_forward.7} parent=11 // pred_check_branch
        %120 = sbr.rel (%p118) target = $region16
      $region15: #{encoder_forward.7} parent=11 // pred_region
        _
      $region16: #{encoder_forward.7} parent=11 // pred_fallthru
        _
      // Predicated region
      $region17: #{encoder_forward.7} parent=11 // pred_check
        %p121 = pneg %p51
      $region18: #{encoder_forward.7} parent=11 // pred_check_branch
        %123 = sbr.rel (%p121) target = $region20
      $region19: #{encoder_forward.7} parent=11 // pred_region
        _
      $region20: #{encoder_forward.7} parent=11 // pred_fallthru
        _
    $region12: #{encoder_forward.7} parent=5 // pred_fallthru
      _
    %p124 = scmp.lt.s32.totalorder %s9, 2
    // Predicated region
    $region21: #{encoder_forward.7} parent=5 // pred_check
      %p125 = pneg %p124
    $region22: #{encoder_forward.7} parent=5 // pred_check_branch
      %127 = sbr.rel (%p125) target = $region24
    $region23: #{encoder_forward.7} parent=5 // pred_region
      // Predicated region
      $region25: #{encoder_forward.7} parent=23 // pred_check
        %p128 = pneg %p71
      $region26: #{encoder_forward.7} parent=23 // pred_check_branch
        %130 = sbr.rel (%p128) target = $region28
      $region27: #{encoder_forward.7} parent=23 // pred_region
        %p131 = scmp.lt.s32.totalorder %s9, 1
        %s132 = scalar_select %p131, %s9, 1
        %s133 = smul.addr %s132, 32
        %s134 = smul.addr %s133, 4
        %s135 = scalar_lea.vmem %s2, %s134
      $region28: #{encoder_forward.7} parent=23 // pred_fallthru
        _
    $region24: #{encoder_forward.7} parent=5 // pred_fallthru
      _
    %p136 = scmp.le.s32.totalorder 1, %s9
    %p137 = scmp.lt.s32.totalorder %s9, 3
    %p138 = pnand %p136, %p137
    %p139 = pneg %p138
    // Predicated region
    $region29: #{encoder_forward.7} parent=5 // pred_check
      _
    $region30: #{encoder_forward.7} parent=5 // pred_check_branch
      %141 = sbr.rel (%p138) target = $region32
    $region31: #{encoder_forward.7} parent=5 // pred_region
      %s142 = ssub.s32 %s9, 1
      %p143 = pneg %p30
      %p144 = pneg %p27
      %p145 = pneg %p51
      %p146 = pneg %p48
      %p147 = scmp.lt.s32.totalorder %s14, 1
      %s148 = scalar_select %p147, %s14, 1
      %s149 = smul.addr %s148, 32
      %s150 = smul.addr %s149, 4
      %s151 = scalar_lea.vmem %s2, %s150
      %p152 = pneg %p77
      %p153 = pneg %p74
      %p154 = pneg %p103
      %p155 = pneg %p100
      %p156 = scmp.lt.s32.totalorder %s14, 1
      %s157 = scalar_select %p156, %s14, 1
      %s158 = smul.addr %s157, 8
      %s159 = smul.addr %s158, 8
      %s160 = scalar_lea.vmem %s3, %s159
      %p161 = scmp.lt.s32.totalorder %s14, 1
      %s162 = scalar_select %p161, %s14, 1
      %s163 = smul.addr %s162, 32
      %s164 = smul.addr %s163, 4
      %s165 = scalar_lea.vmem %s2, %s164
      %p166 = scmp.lt.s32.totalorder %s14, 1
      %s167 = scalar_select %p166, %s14, 1
      %s168 = smul.addr %s167, 8
      %s169 = smul.addr %s168, 8
      %s170 = scalar_lea.vmem %s3, %s169
      %v172 = vld [vmem:[%s0] sm:$0xf]
      %v173 = vld [vmem:[%s0 + $0x4] sm:$0xf]
      %v174 = vld [vmem:[%s0 + $0x8] sm:$0xf]
      %v175 = vld [vmem:[%s0 + $0xc] sm:$0xf]
      %v176 = vld [vmem:[%s0 + $0x10] sm:$0xf]
      %v177 = vld [vmem:[%s0 + $0x14] sm:$0xf]
      %v178 = vld [vmem:[%s0 + $0x18] sm:$0xf]
      %v179 = vld [vmem:[%s0 + $0x1c] sm:$0xf]
      %v180 = vld [vmem:[%s165] sm:$0xf]
      %v181 = vld [vmem:[%s165 + $0x8] sm:$0xf]
      %v182 = vld [vmem:[%s165 + $0x10] sm:$0xf]
      %v183 = vld [vmem:[%s165 + $0x18] sm:$0xf]
      %v184 = vld [vmem:[%s165 + $0x20] sm:$0xf]
      %v185 = vld [vmem:[%s165 + $0x28] sm:$0xf]
      %v186 = vld [vmem:[%s165 + $0x30] sm:$0xf]
      %v187 = vld [vmem:[%s165 + $0x38] sm:$0xf]
      %v188 = vld [vmem:[%s165 + $0x40] sm:$0xf]
      %v189 = vld [vmem:[%s165 + $0x48] sm:$0xf]
      %v190 = vld [vmem:[%s165 + $0x50] sm:$0xf]
      %v191 = vld [vmem:[%s165 + $0x58] sm:$0xf]
      %v192 = vld [vmem:[%s165 + $0x60] sm:$0xf]
      %v193 = vld [vmem:[%s165 + $0x68] sm:$0xf]
      %v194 = vld [vmem:[%s165 + $0x70] sm:$0xf]
      %v195 = vld [vmem:[%s165 + $0x78] sm:$0xf]
      %v204 = vunpack.c.l.b16 %v172
      %v205 = vunpack.c.l.b16 %v173
      %v206 = vunpack.c.l.b16 %v174
      %v207 = vunpack.c.l.b16 %v175
      %v208 = vunpack.c.l.b16 %v176
      %v209 = vunpack.c.l.b16 %v177
      %v210 = vunpack.c.l.b16 %v178
      %v211 = vunpack.c.l.b16 %v179
      %v212 = vpack.c.b16 %v205, %v204
      %v213 = vpack.c.b16 %v207, %v206
      %v214 = vpack.c.b16 %v209, %v208
      %v215 = vpack.c.b16 %v211, %v210
      %v236 = vunpack.c.l.b16 %v180
      %v237 = vunpack.c.l.b16 %v181
      %v238 = vunpack.c.l.b16 %v182
      %v239 = vunpack.c.l.b16 %v183
      %v240 = vunpack.c.l.b16 %v184
      %v241 = vunpack.c.l.b16 %v185
      %v242 = vunpack.c.l.b16 %v186
      %v243 = vunpack.c.l.b16 %v187
      %v244 = vunpack.c.l.b16 %v188
      %v245 = vunpack.c.l.b16 %v189
      %v246 = vunpack.c.l.b16 %v190
      %v247 = vunpack.c.l.b16 %v191
      %v248 = vunpack.c.l.b16 %v192
      %v249 = vunpack.c.l.b16 %v193
      %v250 = vunpack.c.l.b16 %v194
      %v251 = vunpack.c.l.b16 %v195
      %v252 = vpack.c.b16 %v237, %v236
      %v253 = vpack.c.b16 %v239, %v238
      %v254 = vpack.c.b16 %v241, %v240
      %v255 = vpack.c.b16 %v243, %v242
      %v256 = vpack.c.b16 %v245, %v244
      %v257 = vpack.c.b16 %v247, %v246
      %v258 = vpack.c.b16 %v249, %v248
      %v259 = vpack.c.b16 %v251, %v250
      %268 = vmatprep.subr.bf16.mxu0 0
      %269 = vmatpush1.bf16.msra.mxu0 %v259
      %270 = vmatprep.subr.bf16.mxu0 0
      %271 = vmatpush1.bf16.msra.mxu0 %v258
      %272 = vmatprep.subr.bf16.mxu0 0
      %273 = vmatpush1.bf16.msra.mxu0 %v257
      %274 = vmatprep.subr.bf16.mxu0 0
      %275 = vmatpush1.bf16.msra.mxu0 %v256
      %276 = vmatprep.subr.bf16.mxu0 0
      %277 = vmatpush1.bf16.msra.mxu0 %v255
      %278 = vmatprep.subr.bf16.mxu0 0
      %279 = vmatpush1.bf16.msra.mxu0 %v254
      %280 = vmatprep.subr.bf16.mxu0 0
      %281 = vmatpush1.bf16.msra.mxu0 %v253
      %282 = vmatprep.subr.bf16.mxu0 0
      %283 = vmatpush1.bf16.msra.mxu0 %v252
      %284 = vmatprep.subr.bf16.mxu0 0
      %285 = vmatpush2.bf16.msra.mxu0 0
      %286 = vmatprep.subr.bf16.mxu0 0
      %287 = vmatpush2.bf16.msra.mxu0 0
      %288 = vmatprep.subr.bf16.mxu0 0
      %289 = vmatpush2.bf16.msra.mxu0 0
      %290 = vmatprep.subr.bf16.mxu0 0
      %291 = vmatpush2.bf16.msra.mxu0 0
      %292 = vmatprep.subr.bf16.mxu0 0
      %293 = vmatpush2.bf16.msra.mxu0 0
      %294 = vmatprep.subr.bf16.mxu0 0
      %295 = vmatpush2.bf16.msra.mxu0 0
      %296 = vmatprep.subr.bf16.mxu0 0
      %297 = vmatpush2.bf16.msra.mxu0 0
      %298 = vmatprep.subr.bf16.mxu0 0
      %299 = vmatpush2.bf16.msra.mxu0 0
      %300 = vmatprep.mubr.bf16.mxu0 0
      %301 = vmatmul.mubr.bf16.gmra.mxu0 %v212
      %v302 = vpop.f32.mrf.mxu0
      %v303 = vadd.f32 0.0, %v302
      %v304 = vpop.f32.mrf.mxu0
      %v305 = vpop.f32.mrf.mxu0
      %v306 = vadd.f32 0.0, %v305
      %v307 = vpop.f32.mrf.mxu0
      %308 = vmatprep.mubr.bf16.mxu0 0
      %309 = vmatmul.mubr.bf16.gmra.mxu0 %v213
      %v310 = vpop.f32.mrf.mxu0
      %v311 = vadd.f32 0.0, %v310
      %v312 = vpop.f32.mrf.mxu0
      %v313 = vpop.f32.mrf.mxu0
      %v314 = vadd.f32 0.0, %v313
      %v315 = vpop.f32.mrf.mxu0
      %316 = vmatprep.mubr.bf16.mxu0 0
      %317 = vmatmul.mubr.bf16.gmra.mxu0 %v214
      %v318 = vpop.f32.mrf.mxu0
      %v319 = vadd.f32 0.0, %v318
      %v320 = vpop.f32.mrf.mxu0
      %v321 = vpop.f32.mrf.mxu0
      %v322 = vadd.f32 0.0, %v321
      %v323 = vpop.f32.mrf.mxu0
      %324 = vmatprep.mubr.bf16.mxu0 0
      %325 = vmatmul.mubr.bf16.gmra.mxu0 %v215
      %v326 = vpop.f32.mrf.mxu0
      %v327 = vadd.f32 0.0, %v326
      %v328 = vpop.f32.mrf.mxu0
      %v329 = vpop.f32.mrf.mxu0
      %v330 = vadd.f32 0.0, %v329
      %v331 = vpop.f32.mrf.mxu0
      %332 = vdwg.mxu0
      %333 = vst [vmem:[#allocation2] sm:$0xff] %v303
      %334 = vst [vmem:[#allocation2 + $0x8] sm:$0xff] %v306
      %335 = vst [vmem:[#allocation2 + $0x10] sm:$0xff] %v311
      %336 = vst [vmem:[#allocation2 + $0x18] sm:$0xff] %v314
      %337 = vst [vmem:[#allocation2 + $0x20] sm:$0xff] %v319
      %338 = vst [vmem:[#allocation2 + $0x28] sm:$0xff] %v322
      %339 = vst [vmem:[#allocation2 + $0x30] sm:$0xff] %v327
      %340 = vst [vmem:[#allocation2 + $0x38] sm:$0xff] %v330
      %v341 = vld [vmem:[#allocation2] sm:$0xff]
      %v342 = vld [vmem:[#allocation2 + $0x8] sm:$0xff]
      %v343 = vld [vmem:[#allocation2 + $0x10] sm:$0xff]
      %v344 = vld [vmem:[#allocation2 + $0x18] sm:$0xff]
      %v345 = vld [vmem:[#allocation2 + $0x20] sm:$0xff]
      %v346 = vld [vmem:[#allocation2 + $0x28] sm:$0xff]
      %v347 = vld [vmem:[#allocation2 + $0x30] sm:$0xff]
      %v348 = vld [vmem:[#allocation2 + $0x38] sm:$0xff]
      %s349 = scalar_lea.vmem %s0, 32
      %v350 = vld [vmem:[%s349] sm:$0xf]
      %v351 = vld [vmem:[%s349 + $0x4] sm:$0xf]
      %v352 = vld [vmem:[%s349 + $0x8] sm:$0xf]
      %v353 = vld [vmem:[%s349 + $0xc] sm:$0xf]
      %v354 = vld [vmem:[%s349 + $0x10] sm:$0xf]
      %v355 = vld [vmem:[%s349 + $0x14] sm:$0xf]
      %v356 = vld [vmem:[%s349 + $0x18] sm:$0xf]
      %v357 = vld [vmem:[%s349 + $0x1c] sm:$0xf]
      %v358 = vld [vmem:[%s165] sm:$0xff]
      %v359 = vld [vmem:[%s165 + $0x8] sm:$0xff]
      %v360 = vld [vmem:[%s165 + $0x10] sm:$0xff]
      %v361 = vld [vmem:[%s165 + $0x18] sm:$0xff]
      %v362 = vld [vmem:[%s165 + $0x20] sm:$0xff]
      %v363 = vld [vmem:[%s165 + $0x28] sm:$0xff]
      %v364 = vld [vmem:[%s165 + $0x30] sm:$0xff]
      %v365 = vld [vmem:[%s165 + $0x38] sm:$0xff]
      %v366 = vld [vmem:[%s165 + $0x40] sm:$0xff]
      %v367 = vld [vmem:[%s165 + $0x48] sm:$0xff]
      %v368 = vld [vmem:[%s165 + $0x50] sm:$0xff]
      %v369 = vld [vmem:[%s165 + $0x58] sm:$0xff]
      %v370 = vld [vmem:[%s165 + $0x60] sm:$0xff]
      %v371 = vld [vmem:[%s165 + $0x68] sm:$0xff]
      %v372 = vld [vmem:[%s165 + $0x70] sm:$0xff]
      %v373 = vld [vmem:[%s165 + $0x78] sm:$0xff]
      %v382 = vunpack.c.l.b16 %v350
      %v383 = vunpack.c.l.b16 %v351
      %v384 = vunpack.c.l.b16 %v352
      %v385 = vunpack.c.l.b16 %v353
      %v386 = vunpack.c.l.b16 %v354
      %v387 = vunpack.c.l.b16 %v355
      %v388 = vunpack.c.l.b16 %v356
      %v389 = vunpack.c.l.b16 %v357
      %v390 = vpack.c.b16 %v383, %v382
      %v391 = vpack.c.b16 %v385, %v384
      %v392 = vpack.c.b16 %v387, %v386
      %v393 = vpack.c.b16 %v389, %v388
      %v414 = vunpack.c.l.b16 %v358
      %v415 = vunpack.c.h.b16 %v358
      %v416 = vunpack.c.l.b16 %v359
      %v417 = vunpack.c.h.b16 %v359
      %v418 = vunpack.c.l.b16 %v360
      %v419 = vunpack.c.h.b16 %v360
      %v420 = vunpack.c.l.b16 %v361
      %v421 = vunpack.c.h.b16 %v361
      %v422 = vunpack.c.l.b16 %v362
      %v423 = vunpack.c.h.b16 %v362
      %v424 = vunpack.c.l.b16 %v363
      %v425 = vunpack.c.h.b16 %v363
      %v426 = vunpack.c.l.b16 %v364
      %v427 = vunpack.c.h.b16 %v364
      %v428 = vunpack.c.l.b16 %v365
      %v429 = vunpack.c.h.b16 %v365
      %v430 = vunpack.c.l.b16 %v366
      %v431 = vunpack.c.h.b16 %v366
      %v432 = vunpack.c.l.b16 %v367
      %v433 = vunpack.c.h.b16 %v367
      %v434 = vunpack.c.l.b16 %v368
      %v435 = vunpack.c.h.b16 %v368
      %v436 = vunpack.c.l.b16 %v369
      %v437 = vunpack.c.h.b16 %v369
      %v438 = vunpack.c.l.b16 %v370
      %v439 = vunpack.c.h.b16 %v370
      %v440 = vunpack.c.l.b16 %v371
      %v441 = vunpack.c.h.b16 %v371
      %v442 = vunpack.c.l.b16 %v372
      %v443 = vunpack.c.h.b16 %v372
      %v444 = vunpack.c.l.b16 %v373
      %v445 = vunpack.c.h.b16 %v373
      %v446 = vpack.c.b16 %v416, %v414
      %v447 = vpack.c.b16 %v417, %v415
      %v448 = vpack.c.b16 %v420, %v418
      %v449 = vpack.c.b16 %v421, %v419
      %v450 = vpack.c.b16 %v424, %v422
      %v451 = vpack.c.b16 %v425, %v423
      %v452 = vpack.c.b16 %v428, %v426
      %v453 = vpack.c.b16 %v429, %v427
      %v454 = vpack.c.b16 %v432, %v430
      %v455 = vpack.c.b16 %v433, %v431
      %v456 = vpack.c.b16 %v436, %v434
      %v457 = vpack.c.b16 %v437, %v435
      %v458 = vpack.c.b16 %v440, %v438
      %v459 = vpack.c.b16 %v441, %v439
      %v460 = vpack.c.b16 %v444, %v442
      %v461 = vpack.c.b16 %v445, %v443
      %462 = vrot.lane.b32.xlu0 %v446, 127
      %v463 = vpop.permute.xlu0 %462
      %464 = vrot.lane.b32.xlu0 %v447, 127
      %v465 = vpop.permute.xlu0 %464
      %466 = vrot.lane.b32.xlu0 %v448, 127
      %v467 = vpop.permute.xlu0 %466
      %468 = vrot.lane.b32.xlu0 %v449, 127
      %v469 = vpop.permute.xlu0 %468
      %470 = vrot.lane.b32.xlu0 %v450, 127
      %v471 = vpop.permute.xlu0 %470
      %472 = vrot.lane.b32.xlu0 %v451, 127
      %v473 = vpop.permute.xlu0 %472
      %474 = vrot.lane.b32.xlu0 %v452, 127
      %v475 = vpop.permute.xlu0 %474
      %476 = vrot.lane.b32.xlu0 %v453, 127
      %v477 = vpop.permute.xlu0 %476
      %478 = vrot.lane.b32.xlu0 %v454, 127
      %v479 = vpop.permute.xlu0 %478
      %480 = vrot.lane.b32.xlu0 %v455, 127
      %v481 = vpop.permute.xlu0 %480
      %482 = vrot.lane.b32.xlu0 %v456, 127
      %v483 = vpop.permute.xlu0 %482
      %484 = vrot.lane.b32.xlu0 %v457, 127
      %v485 = vpop.permute.xlu0 %484
      %486 = vrot.lane.b32.xlu0 %v458, 127
      %v487 = vpop.permute.xlu0 %486
      %488 = vrot.lane.b32.xlu0 %v459, 127
      %v489 = vpop.permute.xlu0 %488
      %490 = vrot.lane.b32.xlu0 %v460, 127
      %v491 = vpop.permute.xlu0 %490
      %492 = vrot.lane.b32.xlu0 %v461, 127
      %v493 = vpop.permute.xlu0 %492
      %vm494 = vcmask 1039360
      %v495 = vsel %vm494, %v463, %v465
      %v496 = vsel %vm494, %v467, %v469
      %v497 = vsel %vm494, %v471, %v473
      %v498 = vsel %vm494, %v475, %v477
      %v499 = vsel %vm494, %v479, %v481
      %v500 = vsel %vm494, %v483, %v485
      %v501 = vsel %vm494, %v487, %v489
      %v502 = vsel %vm494, %v491, %v493
      %511 = vmatprep.subr.bf16.mxu0 0
      %512 = vmatpush1.bf16.msra.mxu0 %v502
      %513 = vmatprep.subr.bf16.mxu0 0
      %514 = vmatpush1.bf16.msra.mxu0 %v501
      %515 = vmatprep.subr.bf16.mxu0 0
      %516 = vmatpush1.bf16.msra.mxu0 %v500
      %517 = vmatprep.subr.bf16.mxu0 0
      %518 = vmatpush1.bf16.msra.mxu0 %v499
      %519 = vmatprep.subr.bf16.mxu0 0
      %520 = vmatpush1.bf16.msra.mxu0 %v498
      %521 = vmatprep.subr.bf16.mxu0 0
      %522 = vmatpush1.bf16.msra.mxu0 %v497
      %523 = vmatprep.subr.bf16.mxu0 0
      %524 = vmatpush1.bf16.msra.mxu0 %v496
      %525 = vmatprep.subr.bf16.mxu0 0
      %526 = vmatpush1.bf16.msra.mxu0 %v495
      %527 = vmatprep.subr.bf16.mxu0 0
      %528 = vmatpush2.bf16.msra.mxu0 0
      %529 = vmatprep.subr.bf16.mxu0 0
      %530 = vmatpush2.bf16.msra.mxu0 0
      %531 = vmatprep.subr.bf16.mxu0 0
      %532 = vmatpush2.bf16.msra.mxu0 0
      %533 = vmatprep.subr.bf16.mxu0 0
      %534 = vmatpush2.bf16.msra.mxu0 0
      %535 = vmatprep.subr.bf16.mxu0 0
      %536 = vmatpush2.bf16.msra.mxu0 0
      %537 = vmatprep.subr.bf16.mxu0 0
      %538 = vmatpush2.bf16.msra.mxu0 0
      %539 = vmatprep.subr.bf16.mxu0 0
      %540 = vmatpush2.bf16.msra.mxu0 0
      %541 = vmatprep.subr.bf16.mxu0 0
      %542 = vmatpush2.bf16.msra.mxu0 0
      %543 = vmatprep.mubr.bf16.mxu0 0
      %544 = vmatmul.mubr.bf16.gmra.mxu0 %v390
      %v545 = vpop.f32.mrf.mxu0
      %v546 = vadd.f32 0.0, %v545
      %v547 = vpop.f32.mrf.mxu0
      %v548 = vpop.f32.mrf.mxu0
      %v549 = vadd.f32 0.0, %v548
      %v550 = vpop.f32.mrf.mxu0
      %551 = vmatprep.mubr.bf16.mxu0 0
      %552 = vmatmul.mubr.bf16.gmra.mxu0 %v391
      %v553 = vpop.f32.mrf.mxu0
      %v554 = vadd.f32 0.0, %v553
      %v555 = vpop.f32.mrf.mxu0
      %v556 = vpop.f32.mrf.mxu0
      %v557 = vadd.f32 0.0, %v556
      %v558 = vpop.f32.mrf.mxu0
      %559 = vmatprep.mubr.bf16.mxu0 0
      %560 = vmatmul.mubr.bf16.gmra.mxu0 %v392
      %v561 = vpop.f32.mrf.mxu0
      %v562 = vadd.f32 0.0, %v561
      %v563 = vpop.f32.mrf.mxu0
      %v564 = vpop.f32.mrf.mxu0
      %v565 = vadd.f32 0.0, %v564
      %v566 = vpop.f32.mrf.mxu0
      %567 = vmatprep.mubr.bf16.mxu0 0
      %568 = vmatmul.mubr.bf16.gmra.mxu0 %v393
      %v569 = vpop.f32.mrf.mxu0
      %v570 = vadd.f32 0.0, %v569
      %v571 = vpop.f32.mrf.mxu0
      %v572 = vpop.f32.mrf.mxu0
      %v573 = vadd.f32 0.0, %v572
      %v574 = vpop.f32.mrf.mxu0
      %575 = vdwg.mxu0
      %v576 = vadd.f32 %v341, %v546
      %v577 = vadd.f32 %v342, %v549
      %v578 = vadd.f32 %v343, %v554
      %v579 = vadd.f32 %v344, %v557
      %v580 = vadd.f32 %v345, %v562
      %v581 = vadd.f32 %v346, %v565
      %v582 = vadd.f32 %v347, %v570
      %v583 = vadd.f32 %v348, %v573
      %584 = vst [vmem:[#allocation2] sm:$0xff] %v576
      %585 = vst [vmem:[#allocation2 + $0x8] sm:$0xff] %v577
      %586 = vst [vmem:[#allocation2 + $0x10] sm:$0xff] %v578
      %587 = vst [vmem:[#allocation2 + $0x18] sm:$0xff] %v579
      %588 = vst [vmem:[#allocation2 + $0x20] sm:$0xff] %v580
      %589 = vst [vmem:[#allocation2 + $0x28] sm:$0xff] %v581
      %590 = vst [vmem:[#allocation2 + $0x30] sm:$0xff] %v582
      %591 = vst [vmem:[#allocation2 + $0x38] sm:$0xff] %v583
      %v592 = vld [vmem:[#allocation2] sm:$0xff]
      %v593 = vld [vmem:[#allocation2 + $0x8] sm:$0xff]
      %v594 = vld [vmem:[#allocation2 + $0x10] sm:$0xff]
      %v595 = vld [vmem:[#allocation2 + $0x18] sm:$0xff]
      %v596 = vld [vmem:[#allocation2 + $0x20] sm:$0xff]
      %v597 = vld [vmem:[#allocation2 + $0x28] sm:$0xff]
      %v598 = vld [vmem:[#allocation2 + $0x30] sm:$0xff]
      %v599 = vld [vmem:[#allocation2 + $0x38] sm:$0xff]
      %s600 = scalar_lea.vmem %s0, 64
      %v601 = vld [vmem:[%s600] sm:$0xf]
      %v602 = vld [vmem:[%s600 + $0x4] sm:$0xf]
      %v603 = vld [vmem:[%s600 + $0x8] sm:$0xf]
      %v604 = vld [vmem:[%s600 + $0xc] sm:$0xf]
      %v605 = vld [vmem:[%s600 + $0x10] sm:$0xf]
      %v606 = vld [vmem:[%s600 + $0x14] sm:$0xf]
      %v607 = vld [vmem:[%s600 + $0x18] sm:$0xf]
      %v608 = vld [vmem:[%s600 + $0x1c] sm:$0xf]
      %v609 = vld [vmem:[%s165] sm:$0xff]
      %v610 = vld [vmem:[%s165 + $0x8] sm:$0xff]
      %v611 = vld [vmem:[%s165 + $0x10] sm:$0xff]
      %v612 = vld [vmem:[%s165 + $0x18] sm:$0xff]
      %v613 = vld [vmem:[%s165 + $0x20] sm:$0xff]
      %v614 = vld [vmem:[%s165 + $0x28] sm:$0xff]
      %v615 = vld [vmem:[%s165 + $0x30] sm:$0xff]
      %v616 = vld [vmem:[%s165 + $0x38] sm:$0xff]
      %v617 = vld [vmem:[%s165 + $0x40] sm:$0xff]
      %v618 = vld [vmem:[%s165 + $0x48] sm:$0xff]
      %v619 = vld [vmem:[%s165 + $0x50] sm:$0xff]
      %v620 = vld [vmem:[%s165 + $0x58] sm:$0xff]
      %v621 = vld [vmem:[%s165 + $0x60] sm:$0xff]
      %v622 = vld [vmem:[%s165 + $0x68] sm:$0xff]
      %v623 = vld [vmem:[%s165 + $0x70] sm:$0xff]
      %v624 = vld [vmem:[%s165 + $0x78] sm:$0xff]
      %v633 = vunpack.c.l.b16 %v601
      %v634 = vunpack.c.l.b16 %v602
      %v635 = vunpack.c.l.b16 %v603
      %v636 = vunpack.c.l.b16 %v604
      %v637 = vunpack.c.l.b16 %v605
      %v638 = vunpack.c.l.b16 %v606
      %v639 = vunpack.c.l.b16 %v607
      %v640 = vunpack.c.l.b16 %v608
      %v641 = vpack.c.b16 %v634, %v633
      %v642 = vpack.c.b16 %v636, %v635
      %v643 = vpack.c.b16 %v638, %v637
      %v644 = vpack.c.b16 %v640, %v639
      %v665 = vunpack.c.l.b16 %v609
      %v666 = vunpack.c.h.b16 %v609
      %v667 = vunpack.c.l.b16 %v610
      %v668 = vunpack.c.h.b16 %v610
      %v669 = vunpack.c.l.b16 %v611
      %v670 = vunpack.c.h.b16 %v611
      %v671 = vunpack.c.l.b16 %v612
      %v672 = vunpack.c.h.b16 %v612
      %v673 = vunpack.c.l.b16 %v613
      %v674 = vunpack.c.h.b16 %v613
      %v675 = vunpack.c.l.b16 %v614
      %v676 = vunpack.c.h.b16 %v614
      %v677 = vunpack.c.l.b16 %v615
      %v678 = vunpack.c.h.b16 %v615
      %v679 = vunpack.c.l.b16 %v616
      %v680 = vunpack.c.h.b16 %v616
      %v681 = vunpack.c.l.b16 %v617
      %v682 = vunpack.c.h.b16 %v617
      %v683 = vunpack.c.l.b16 %v618
      %v684 = vunpack.c.h.b16 %v618
      %v685 = vunpack.c.l.b16 %v619
      %v686 = vunpack.c.h.b16 %v619
      %v687 = vunpack.c.l.b16 %v620
      %v688 = vunpack.c.h.b16 %v620
      %v689 = vunpack.c.l.b16 %v621
      %v690 = vunpack.c.h.b16 %v621
      %v691 = vunpack.c.l.b16 %v622
      %v692 = vunpack.c.h.b16 %v622
      %v693 = vunpack.c.l.b16 %v623
      %v694 = vunpack.c.h.b16 %v623
      %v695 = vunpack.c.l.b16 %v624
      %v696 = vunpack.c.h.b16 %v624
      %v697 = vpack.c.b16 %v667, %v665
      %v698 = vpack.c.b16 %v668, %v666
      %v699 = vpack.c.b16 %v671, %v669
      %v700 = vpack.c.b16 %v672, %v670
      %v701 = vpack.c.b16 %v675, %v673
      %v702 = vpack.c.b16 %v676, %v674
      %v703 = vpack.c.b16 %v679, %v677
      %v704 = vpack.c.b16 %v680, %v678
      %v705 = vpack.c.b16 %v683, %v681
      %v706 = vpack.c.b16 %v684, %v682
      %v707 = vpack.c.b16 %v687, %v685
      %v708 = vpack.c.b16 %v688, %v686
      %v709 = vpack.c.b16 %v691, %v689
      %v710 = vpack.c.b16 %v692, %v690
      %v711 = vpack.c.b16 %v695, %v693
      %v712 = vpack.c.b16 %v696, %v694
      %713 = vrot.lane.b32.xlu0 %v697, 125
      %v714 = vpop.permute.xlu0 %713
      %715 = vrot.lane.b32.xlu0 %v698, 125
      %v716 = vpop.permute.xlu0 %715
      %717 = vrot.lane.b32.xlu0 %v699, 125
      %v718 = vpop.permute.xlu0 %717
      %719 = vrot.lane.b32.xlu0 %v700, 125
      %v720 = vpop.permute.xlu0 %719
      %721 = vrot.lane.b32.xlu0 %v701, 125
      %v722 = vpop.permute.xlu0 %721
      %723 = vrot.lane.b32.xlu0 %v702, 125
      %v724 = vpop.permute.xlu0 %723
      %725 = vrot.lane.b32.xlu0 %v703, 125
      %v726 = vpop.permute.xlu0 %725
      %727 = vrot.lane.b32.xlu0 %v704, 125
      %v728 = vpop.permute.xlu0 %727
      %729 = vrot.lane.b32.xlu0 %v705, 125
      %v730 = vpop.permute.xlu0 %729
      %731 = vrot.lane.b32.xlu0 %v706, 125
      %v732 = vpop.permute.xlu0 %731
      %733 = vrot.lane.b32.xlu0 %v707, 125
      %v734 = vpop.permute.xlu0 %733
      %735 = vrot.lane.b32.xlu0 %v708, 125
      %v736 = vpop.permute.xlu0 %735
      %737 = vrot.lane.b32.xlu0 %v709, 125
      %v738 = vpop.permute.xlu0 %737
      %739 = vrot.lane.b32.xlu0 %v710, 125
      %v740 = vpop.permute.xlu0 %739
      %741 = vrot.lane.b32.xlu0 %v711, 125
      %v742 = vpop.permute.xlu0 %741
      %743 = vrot.lane.b32.xlu0 %v712, 125
      %v744 = vpop.permute.xlu0 %743
      %vm745 = vcmask 1022976
      %v746 = vsel %vm745, %v714, %v716
      %v747 = vsel %vm745, %v718, %v720
      %v748 = vsel %vm745, %v722, %v724
      %v749 = vsel %vm745, %v726, %v728
      %v750 = vsel %vm745, %v730, %v732
      %v751 = vsel %vm745, %v734, %v736
      %v752 = vsel %vm745, %v738, %v740
      %v753 = vsel %vm745, %v742, %v744
      %762 = vmatprep.subr.bf16.mxu0 0
      %763 = vmatpush1.bf16.msra.mxu0 %v753
      %764 = vmatprep.subr.bf16.mxu0 0
      %765 = vmatpush1.bf16.msra.mxu0 %v752
      %766 = vmatprep.subr.bf16.mxu0 0
      %767 = vmatpush1.bf16.msra.mxu0 %v751
      %768 = vmatprep.subr.bf16.mxu0 0
      %769 = vmatpush1.bf16.msra.mxu0 %v750
      %770 = vmatprep.subr.bf16.mxu0 0
      %771 = vmatpush1.bf16.msra.mxu0 %v749
      %772 = vmatprep.subr.bf16.mxu0 0
      %773 = vmatpush1.bf16.msra.mxu0 %v748
      %774 = vmatprep.subr.bf16.mxu0 0
      %775 = vmatpush1.bf16.msra.mxu0 %v747
      %776 = vmatprep.subr.bf16.mxu0 0
      %777 = vmatpush1.bf16.msra.mxu0 %v746
      %778 = vmatprep.subr.bf16.mxu0 0
      %779 = vmatpush2.bf16.msra.mxu0 0
      %780 = vmatprep.subr.bf16.mxu0 0
      %781 = vmatpush2.bf16.msra.mxu0 0
      %782 = vmatprep.subr.bf16.mxu0 0
      %783 = vmatpush2.bf16.msra.mxu0 0
      %784 = vmatprep.subr.bf16.mxu0 0
      %785 = vmatpush2.bf16.msra.mxu0 0
      %786 = vmatprep.subr.bf16.mxu0 0
      %787 = vmatpush2.bf16.msra.mxu0 0
      %788 = vmatprep.subr.bf16.mxu0 0
      %789 = vmatpush2.bf16.msra.mxu0 0
      %790 = vmatprep.subr.bf16.mxu0 0
      %791 = vmatpush2.bf16.msra.mxu0 0
      %792 = vmatprep.subr.bf16.mxu0 0
      %793 = vmatpush2.bf16.msra.mxu0 0
      %794 = vmatprep.mubr.bf16.mxu0 0
      %795 = vmatmul.mubr.bf16.gmra.mxu0 %v641
      %v796 = vpop.f32.mrf.mxu0
      %v797 = vadd.f32 0.0, %v796
      %v798 = vpop.f32.mrf.mxu0
      %v799 = vpop.f32.mrf.mxu0
      %v800 = vadd.f32 0.0, %v799
      %v801 = vpop.f32.mrf.mxu0
      %802 = vmatprep.mubr.bf16.mxu0 0
      %803 = vmatmul.mubr.bf16.gmra.mxu0 %v642
      %v804 = vpop.f32.mrf.mxu0
      %v805 = vadd.f32 0.0, %v804
      %v806 = vpop.f32.mrf.mxu0
      %v807 = vpop.f32.mrf.mxu0
      %v808 = vadd.f32 0.0, %v807
      %v809 = vpop.f32.mrf.mxu0
      %810 = vmatprep.mubr.bf16.mxu0 0
      %811 = vmatmul.mubr.bf16.gmra.mxu0 %v643
      %v812 = vpop.f32.mrf.mxu0
      %v813 = vadd.f32 0.0, %v812
      %v814 = vpop.f32.mrf.mxu0
      %v815 = vpop.f32.mrf.mxu0
      %v816 = vadd.f32 0.0, %v815
      %v817 = vpop.f32.mrf.mxu0
      %818 = vmatprep.mubr.bf16.mxu0 0
      %819 = vmatmul.mubr.bf16.gmra.mxu0 %v644
      %v820 = vpop.f32.mrf.mxu0
      %v821 = vadd.f32 0.0, %v820
      %v822 = vpop.f32.mrf.mxu0
      %v823 = vpop.f32.mrf.mxu0
      %v824 = vadd.f32 0.0, %v823
      %v825 = vpop.f32.mrf.mxu0
      %826 = vdwg.mxu0
      %v827 = vadd.f32 %v592, %v797
      %v828 = vadd.f32 %v593, %v800
      %v829 = vadd.f32 %v594, %v805
      %v830 = vadd.f32 %v595, %v808
      %v831 = vadd.f32 %v596, %v813
      %v832 = vadd.f32 %v597, %v816
      %v833 = vadd.f32 %v598, %v821
      %v834 = vadd.f32 %v599, %v824
      %835 = vst [vmem:[#allocation2] sm:$0xff] %v827
      %836 = vst [vmem:[#allocation2 + $0x8] sm:$0xff] %v828
      %837 = vst [vmem:[#allocation2 + $0x10] sm:$0xff] %v829
      %838 = vst [vmem:[#allocation2 + $0x18] sm:$0xff] %v830
      %839 = vst [vmem:[#allocation2 + $0x20] sm:$0xff] %v831
      %840 = vst [vmem:[#allocation2 + $0x28] sm:$0xff] %v832
      %841 = vst [vmem:[#allocation2 + $0x30] sm:$0xff] %v833
      %842 = vst [vmem:[#allocation2 + $0x38] sm:$0xff] %v834
      %v843 = vld [vmem:[#allocation2] sm:$0xff]
      %v844 = vld [vmem:[#allocation2 + $0x8] sm:$0xff]
      %v845 = vld [vmem:[#allocation2 + $0x10] sm:$0xff]
      %v846 = vld [vmem:[#allocation2 + $0x18] sm:$0xff]
      %v847 = vld [vmem:[#allocation2 + $0x20] sm:$0xff]
      %v848 = vld [vmem:[#allocation2 + $0x28] sm:$0xff]
      %v849 = vld [vmem:[#allocation2 + $0x30] sm:$0xff]
      %v850 = vld [vmem:[#allocation2 + $0x38] sm:$0xff]
      %s851 = scalar_lea.vmem %s0, 96
      %v852 = vld [vmem:[%s851] sm:$0xf]
      %v853 = vld [vmem:[%s851 + $0x4] sm:$0xf]
      %v854 = vld [vmem:[%s851 + $0x8] sm:$0xf]
      %v855 = vld [vmem:[%s851 + $0xc] sm:$0xf]
      %v856 = vld [vmem:[%s851 + $0x10] sm:$0xf]
      %v857 = vld [vmem:[%s851 + $0x14] sm:$0xf]
      %v858 = vld [vmem:[%s851 + $0x18] sm:$0xf]
      %v859 = vld [vmem:[%s851 + $0x1c] sm:$0xf]
      %v860 = vld [vmem:[%s165] sm:$0xff]
      %v861 = vld [vmem:[%s165 + $0x8] sm:$0xff]
      %v862 = vld [vmem:[%s165 + $0x10] sm:$0xff]
      %v863 = vld [vmem:[%s165 + $0x18] sm:$0xff]
      %v864 = vld [vmem:[%s165 + $0x20] sm:$0xff]
      %v865 = vld [vmem:[%s165 + $0x28] sm:$0xff]
      %v866 = vld [vmem:[%s165 + $0x30] sm:$0xff]
      %v867 = vld [vmem:[%s165 + $0x38] sm:$0xff]
      %v868 = vld [vmem:[%s165 + $0x40] sm:$0xff]
      %v869 = vld [vmem:[%s165 + $0x48] sm:$0xff]
      %v870 = vld [vmem:[%s165 + $0x50] sm:$0xff]
      %v871 = vld [vmem:[%s165 + $0x58] sm:$0xff]
      %v872 = vld [vmem:[%s165 + $0x60] sm:$0xff]
      %v873 = vld [vmem:[%s165 + $0x68] sm:$0xff]
      %v874 = vld [vmem:[%s165 + $0x70] sm:$0xff]
      %v875 = vld [vmem:[%s165 + $0x78] sm:$0xff]
      %v884 = vunpack.c.l.b16 %v852
      %v885 = vunpack.c.l.b16 %v853
      %v886 = vunpack.c.l.b16 %v854
      %v887 = vunpack.c.l.b16 %v855
      %v888 = vunpack.c.l.b16 %v856
      %v889 = vunpack.c.l.b16 %v857
      %v890 = vunpack.c.l.b16 %v858
      %v891 = vunpack.c.l.b16 %v859
      %v892 = vpack.c.b16 %v885, %v884
      %v893 = vpack.c.b16 %v887, %v886
      %v894 = vpack.c.b16 %v889, %v888
      %v895 = vpack.c.b16 %v891, %v890
      %v916 = vunpack.c.l.b16 %v860
      %v917 = vunpack.c.h.b16 %v860
      %v918 = vunpack.c.l.b16 %v861
      %v919 = vunpack.c.h.b16 %v861
      %v920 = vunpack.c.l.b16 %v862
      %v921 = vunpack.c.h.b16 %v862
      %v922 = vunpack.c.l.b16 %v863
      %v923 = vunpack.c.h.b16 %v863
      %v924 = vunpack.c.l.b16 %v864
      %v925 = vunpack.c.h.b16 %v864
      %v926 = vunpack.c.l.b16 %v865
      %v927 = vunpack.c.h.b16 %v865
      %v928 = vunpack.c.l.b16 %v866
      %v929 = vunpack.c.h.b16 %v866
      %v930 = vunpack.c.l.b16 %v867
      %v931 = vunpack.c.h.b16 %v867
      %v932 = vunpack.c.l.b16 %v868
      %v933 = vunpack.c.h.b16 %v868
      %v934 = vunpack.c.l.b16 %v869
      %v935 = vunpack.c.h.b16 %v869
      %v936 = vunpack.c.l.b16 %v870
      %v937 = vunpack.c.h.b16 %v870
      %v938 = vunpack.c.l.b16 %v871
      %v939 = vunpack.c.h.b16 %v871
      %v940 = vunpack.c.l.b16 %v872
      %v941 = vunpack.c.h.b16 %v872
      %v942 = vunpack.c.l.b16 %v873
      %v943 = vunpack.c.h.b16 %v873
      %v944 = vunpack.c.l.b16 %v874
      %v945 = vunpack.c.h.b16 %v874
      %v946 = vunpack.c.l.b16 %v875
      %v947 = vunpack.c.h.b16 %v875
      %v948 = vpack.c.b16 %v918, %v916
      %v949 = vpack.c.b16 %v919, %v917
      %v950 = vpack.c.b16 %v922, %v920
      %v951 = vpack.c.b16 %v923, %v921
      %v952 = vpack.c.b16 %v926, %v924
      %v953 = vpack.c.b16 %v927, %v925
      %v954 = vpack.c.b16 %v930, %v928
      %v955 = vpack.c.b16 %v931, %v929
      %v956 = vpack.c.b16 %v934, %v932
      %v957 = vpack.c.b16 %v935, %v933
      %v958 = vpack.c.b16 %v938, %v936
      %v959 = vpack.c.b16 %v939, %v937
      %v960 = vpack.c.b16 %v942, %v940
      %v961 = vpack.c.b16 %v943, %v941
      %v962 = vpack.c.b16 %v946, %v944
      %v963 = vpack.c.b16 %v947, %v945
      %964 = vrot.lane.b32.xlu0 %v948, 124
      %v965 = vpop.permute.xlu0 %964
      %966 = vrot.lane.b32.xlu0 %v949, 124
      %v967 = vpop.permute.xlu0 %966
      %968 = vrot.lane.b32.xlu0 %v950, 124
      %v969 = vpop.permute.xlu0 %968
      %970 = vrot.lane.b32.xlu0 %v951, 124
      %v971 = vpop.permute.xlu0 %970
      %972 = vrot.lane.b32.xlu0 %v952, 124
      %v973 = vpop.permute.xlu0 %972
      %974 = vrot.lane.b32.xlu0 %v953, 124
      %v975 = vpop.permute.xlu0 %974
      %976 = vrot.lane.b32.xlu0 %v954, 124
      %v977 = vpop.permute.xlu0 %976
      %978 = vrot.lane.b32.xlu0 %v955, 124
      %v979 = vpop.permute.xlu0 %978
      %980 = vrot.lane.b32.xlu0 %v956, 124
      %v981 = vpop.permute.xlu0 %980
      %982 = vrot.lane.b32.xlu0 %v957, 124
      %v983 = vpop.permute.xlu0 %982
      %984 = vrot.lane.b32.xlu0 %v958, 124
      %v985 = vpop.permute.xlu0 %984
      %986 = vrot.lane.b32.xlu0 %v959, 124
      %v987 = vpop.permute.xlu0 %986
      %988 = vrot.lane.b32.xlu0 %v960, 124
      %v989 = vpop.permute.xlu0 %988
      %990 = vrot.lane.b32.xlu0 %v961, 124
      %v991 = vpop.permute.xlu0 %990
      %992 = vrot.lane.b32.xlu0 %v962, 124
      %v993 = vpop.permute.xlu0 %992
      %994 = vrot.lane.b32.xlu0 %v963, 124
      %v995 = vpop.permute.xlu0 %994
      %vm996 = vcmask 1014784
      %v997 = vsel %vm996, %v965, %v967
      %v998 = vsel %vm996, %v969, %v971
      %v999 = vsel %vm996, %v973, %v975
      %v1000 = vsel %vm996, %v977, %v979
      %v1001 = vsel %vm996, %v981, %v983
      %v1002 = vsel %vm996, %v985, %v987
      %v1003 = vsel %vm996, %v989, %v991
      %v1004 = vsel %vm996, %v993, %v995
      %1013 = vmatprep.subr.bf16.mxu0 0
      %1014 = vmatpush1.bf16.msra.mxu0 %v1004
      %1015 = vmatprep.subr.bf16.mxu0 0
      %1016 = vmatpush1.bf16.msra.mxu0 %v1003
      %1017 = vmatprep.subr.bf16.mxu0 0
      %1018 = vmatpush1.bf16.msra.mxu0 %v1002
      %1019 = vmatprep.subr.bf16.mxu0 0
      %1020 = vmatpush1.bf16.msra.mxu0 %v1001
      %1021 = vmatprep.subr.bf16.mxu0 0
      %1022 = vmatpush1.bf16.msra.mxu0 %v1000
      %1023 = vmatprep.subr.bf16.mxu0 0
      %1024 = vmatpush1.bf16.msra.mxu0 %v999
      %1025 = vmatprep.subr.bf16.mxu0 0
      %1026 = vmatpush1.bf16.msra.mxu0 %v998
      %1027 = vmatprep.subr.bf16.mxu0 0
      %1028 = vmatpush1.bf16.msra.mxu0 %v997
      %1029 = vmatprep.subr.bf16.mxu0 0
      %1030 = vmatpush2.bf16.msra.mxu0 0
      %1031 = vmatprep.subr.bf16.mxu0 0
      %1032 = vmatpush2.bf16.msra.mxu0 0
      %1033 = vmatprep.subr.bf16.mxu0 0
      %1034 = vmatpush2.bf16.msra.mxu0 0
      %1035 = vmatprep.subr.bf16.mxu0 0
      %1036 = vmatpush2.bf16.msra.mxu0 0
      %1037 = vmatprep.subr.bf16.mxu0 0
      %1038 = vmatpush2.bf16.msra.mxu0 0
      %1039 = vmatprep.subr.bf16.mxu0 0
      %1040 = vmatpush2.bf16.msra.mxu0 0
      %1041 = vmatprep.subr.bf16.mxu0 0
      %1042 = vmatpush2.bf16.msra.mxu0 0
      %1043 = vmatprep.subr.bf16.mxu0 0
      %1044 = vmatpush2.bf16.msra.mxu0 0
      %1045 = vmatprep.mubr.bf16.mxu0 0
      %1046 = vmatmul.mubr.bf16.gmra.mxu0 %v892
      %v1047 = vpop.f32.mrf.mxu0
      %v1048 = vadd.f32 0.0, %v1047
      %v1049 = vpop.f32.mrf.mxu0
      %v1050 = vpop.f32.mrf.mxu0
      %v1051 = vadd.f32 0.0, %v1050
      %v1052 = vpop.f32.mrf.mxu0
      %1053 = vmatprep.mubr.bf16.mxu0 0
      %1054 = vmatmul.mubr.bf16.gmra.mxu0 %v893
      %v1055 = vpop.f32.mrf.mxu0
      %v1056 = vadd.f32 0.0, %v1055
      %v1057 = vpop.f32.mrf.mxu0
      %v1058 = vpop.f32.mrf.mxu0
      %v1059 = vadd.f32 0.0, %v1058
      %v1060 = vpop.f32.mrf.mxu0
      %1061 = vmatprep.mubr.bf16.mxu0 0
      %1062 = vmatmul.mubr.bf16.gmra.mxu0 %v894
      %v1063 = vpop.f32.mrf.mxu0
      %v1064 = vadd.f32 0.0, %v1063
      %v1065 = vpop.f32.mrf.mxu0
      %v1066 = vpop.f32.mrf.mxu0
      %v1067 = vadd.f32 0.0, %v1066
      %v1068 = vpop.f32.mrf.mxu0
      %1069 = vmatprep.mubr.bf16.mxu0 0
      %1070 = vmatmul.mubr.bf16.gmra.mxu0 %v895
      %v1071 = vpop.f32.mrf.mxu0
      %v1072 = vadd.f32 0.0, %v1071
      %v1073 = vpop.f32.mrf.mxu0
      %v1074 = vpop.f32.mrf.mxu0
      %v1075 = vadd.f32 0.0, %v1074
      %v1076 = vpop.f32.mrf.mxu0
      %1077 = vdwg.mxu0
      %v1078 = vadd.f32 %v843, %v1048
      %v1079 = vadd.f32 %v844, %v1051
      %v1080 = vadd.f32 %v845, %v1056
      %v1081 = vadd.f32 %v846, %v1059
      %v1082 = vadd.f32 %v847, %v1064
      %v1083 = vadd.f32 %v848, %v1067
      %v1084 = vadd.f32 %v849, %v1072
      %v1085 = vadd.f32 %v850, %v1075
      %1086 = vst [vmem:[#allocation2] sm:$0xff] %v1078
      %1087 = vst [vmem:[#allocation2 + $0x8] sm:$0xff] %v1079
      %1088 = vst [vmem:[#allocation2 + $0x10] sm:$0xff] %v1080
      %1089 = vst [vmem:[#allocation2 + $0x18] sm:$0xff] %v1081
      %1090 = vst [vmem:[#allocation2 + $0x20] sm:$0xff] %v1082
      %1091 = vst [vmem:[#allocation2 + $0x28] sm:$0xff] %v1083
      %1092 = vst [vmem:[#allocation2 + $0x30] sm:$0xff] %v1084
      %1093 = vst [vmem:[#allocation2 + $0x38] sm:$0xff] %v1085
      %v1094 = vld [vmem:[#allocation2] sm:$0xff]
      %v1095 = vld [vmem:[#allocation2 + $0x8] sm:$0xff]
      %v1096 = vld [vmem:[#allocation2 + $0x10] sm:$0xff]
      %v1097 = vld [vmem:[#allocation2 + $0x18] sm:$0xff]
      %v1098 = vld [vmem:[#allocation2 + $0x20] sm:$0xff]
      %v1099 = vld [vmem:[#allocation2 + $0x28] sm:$0xff]
      %v1100 = vld [vmem:[#allocation2 + $0x30] sm:$0xff]
      %v1101 = vld [vmem:[#allocation2 + $0x38] sm:$0xff]
      %v1102 = vld [vmem:[%s1] sm:$0xff]
      %v1103 = vld [vmem:[%s1 + $0x8] sm:$0xff]
      %v1104 = vld [vmem:[%s1 + $0x10] sm:$0xff]
      %v1105 = vld [vmem:[%s1 + $0x18] sm:$0xff]
      %v1106 = vld [vmem:[%s1 + $0x20] sm:$0xff]
      %v1107 = vld [vmem:[%s1 + $0x28] sm:$0xff]
      %v1108 = vld [vmem:[%s1 + $0x30] sm:$0xff]
      %v1109 = vld [vmem:[%s1 + $0x38] sm:$0xff]
      %1111 = vset.pattern.permute.xlu0 0
      %1112 = vperm.xlu0 %1111, %v1102
      %v1113 = vpop.permute.xlu0 %1112
      %1116 = vset.pattern.permute.xlu0 0
      %1117 = vperm.xlu0 %1116, %v1103
      %v1118 = vpop.permute.xlu0 %1117
      %1121 = vset.pattern.permute.xlu0 0
      %1122 = vperm.xlu0 %1121, %v1104
      %v1123 = vpop.permute.xlu0 %1122
      %1126 = vset.pattern.permute.xlu0 0
      %1127 = vperm.xlu0 %1126, %v1105
      %v1128 = vpop.permute.xlu0 %1127
      %1131 = vset.pattern.permute.xlu0 0
      %1132 = vperm.xlu0 %1131, %v1106
      %v1133 = vpop.permute.xlu0 %1132
      %1136 = vset.pattern.permute.xlu0 0
      %1137 = vperm.xlu0 %1136, %v1107
      %v1138 = vpop.permute.xlu0 %1137
      %1141 = vset.pattern.permute.xlu0 0
      %1142 = vperm.xlu0 %1141, %v1108
      %v1143 = vpop.permute.xlu0 %1142
      %1146 = vset.pattern.permute.xlu0 0
      %1147 = vperm.xlu0 %1146, %v1109
      %v1148 = vpop.permute.xlu0 %1147
      %v1150 = vadd.f32 %v1094, %v1113
      %v1151 = vadd.f32 %v1095, %v1118
      %v1152 = vadd.f32 %v1096, %v1123
      %v1153 = vadd.f32 %v1097, %v1128
      %v1154 = vadd.f32 %v1098, %v1133
      %v1155 = vadd.f32 %v1099, %v1138
      %v1156 = vadd.f32 %v1100, %v1143
      %v1157 = vadd.f32 %v1101, %v1148
      %vm1158 = vcmp.gt.f32.partialorder %v1150, 0.0
      %vm1159 = vcmp.gt.f32.partialorder %v1151, 0.0
      %vm1160 = vcmp.gt.f32.partialorder %v1152, 0.0
      %vm1161 = vcmp.gt.f32.partialorder %v1153, 0.0
      %vm1162 = vcmp.gt.f32.partialorder %v1154, 0.0
      %vm1163 = vcmp.gt.f32.partialorder %v1155, 0.0
      %vm1164 = vcmp.gt.f32.partialorder %v1156, 0.0
      %vm1165 = vcmp.gt.f32.partialorder %v1157, 0.0
      %v1166 = vmul.f32 %v1150, 0.0
      %v1167 = vmul.f32 %v1151, 0.0
      %v1168 = vmul.f32 %v1152, 0.0
      %v1169 = vmul.f32 %v1153, 0.0
      %v1170 = vmul.f32 %v1154, 0.0
      %v1171 = vmul.f32 %v1155, 0.0
      %v1172 = vmul.f32 %v1156, 0.0
      %v1173 = vmul.f32 %v1157, 0.0
      %v1174 = vsel %vm1158, %v1150, %v1166
      %v1175 = vsel %vm1159, %v1151, %v1167
      %v1176 = vsel %vm1160, %v1152, %v1168
      %v1177 = vsel %vm1161, %v1153, %v1169
      %v1178 = vsel %vm1162, %v1154, %v1170
      %v1179 = vsel %vm1163, %v1155, %v1171
      %v1180 = vsel %vm1164, %v1156, %v1172
      %v1181 = vsel %vm1165, %v1157, %v1173
      %1182 = vst [vmem:[%s170] sm:$0xff] %v1174
      %1183 = vst [vmem:[%s170 + $0x8] sm:$0xff] %v1175
      %1184 = vst [vmem:[%s170 + $0x10] sm:$0xff] %v1176
      %1185 = vst [vmem:[%s170 + $0x18] sm:$0xff] %v1177
      %1186 = vst [vmem:[%s170 + $0x20] sm:$0xff] %v1178
      %1187 = vst [vmem:[%s170 + $0x28] sm:$0xff] %v1179
      %1188 = vst [vmem:[%s170 + $0x30] sm:$0xff] %v1180
      %1189 = vst [vmem:[%s170 + $0x38] sm:$0xff] %v1181
      %p1190 = scmp.lt.s32.totalorder %s14, 1
      %s1191 = scalar_select %p1190, %s14, 1
      %s1192 = smul.addr %s1191, 8
      %s1193 = smul.addr %s1192, 8
      %s1194 = scalar_lea.vmem %s3, %s1193
      // Predicated region
      $region33: #{encoder_forward.7} parent=31 // pred_check
        %p1195 = pneg %p100
      $region34: #{encoder_forward.7} parent=31 // pred_check_branch
        %1197 = sbr.rel (%p1195) target = $region36
      $region35: #{encoder_forward.7} parent=31 // pred_region
        _
      $region36: #{encoder_forward.7} parent=31 // pred_fallthru
        _
    $region32: #{encoder_forward.7} parent=5 // pred_fallthru
      _
    %p1198 = scmp.le.s32.totalorder 2, %s9
    // Predicated region
    $region37: #{encoder_forward.7} parent=5 // pred_check
      %p1199 = pneg %p1198
    $region38: #{encoder_forward.7} parent=5 // pred_check_branch
      %1201 = sbr.rel (%p1199) target = $region40
    $region39: #{encoder_forward.7} parent=5 // pred_region
      %s1202 = ssub.s32 %s9, 2
      // Predicated region
      $region41: #{encoder_forward.7} parent=39 // pred_check
        %p1203 = pneg %p106
      $region42: #{encoder_forward.7} parent=39 // pred_check_branch
        %1205 = sbr.rel (%p1203) target = $region44
      $region43: #{encoder_forward.7} parent=39 // pred_region
        %p1206 = scmp.lt.s32.totalorder %s15, 1
        %s1207 = scalar_select %p1206, %s15, 1
        %s1208 = smul.addr %s1207, 8
        %s1209 = smul.addr %s1208, 8
        %s1210 = scalar_lea.vmem %s3, %s1209
      $region44: #{encoder_forward.7} parent=39 // pred_fallthru
        _
    $region40: #{encoder_forward.7} parent=5 // pred_fallthru
      _
  $region6: #{encoder_forward.7} parent=0 // loop_footer
    %s13 = sadd.s32 1, %s9
  $region7: #{encoder_forward.7} parent=0 // loop_footer_branch
    %8 = sbr.rel target = $region3
  $region8: #{encoder_forward.7} parent=0 // loop_exit
    _

</llo_original>
